<compile_context>
chip_gen: v5e
topology: v5e:2x2
jax: 0.10.0
libtpu: 0.0.40
codegen_flags: <defaults>
</compile_context>

<pallas_src>
import functools

import jax
import jax.numpy as jnp
import numpy as np
from jax.experimental import pallas as pl
from jax.experimental.pallas import tpu as pltpu

_BN_EPS = 1e-5
_LANES = 128


# ----------------------------------------------------------------------------
# small helpers
# ----------------------------------------------------------------------------
def _round_up(x, m):
    return (x + m - 1) // m * m


def _pad_cols(mat2d, cols):
    r, c = mat2d.shape
    if c == cols:
        return mat2d
    return jnp.pad(mat2d, ((0, 0), (0, cols - c)))


def _vmem_limit_bytes():
    """Generation-aware scoped-VMEM limit (v5e/v6e: 128 MiB parts, v7x: 64)."""
    cap = 64 << 20
    try:
        cap = int(pltpu.get_tpu_info().vmem_capacity_bytes)
    except Exception:
        pass
    if cap >= (128 << 20):
        return 100 << 20           # v5e / v6e: big bands, deep pipelining
    return 48 << 20                # v7x-safe (64 MiB per TensorCore)


def _pick_row_block(m, cap):
    """Largest divisor of m that is a multiple of 8 (sublane aligned) and <= cap."""
    divs = [d for d in range(1, m + 1) if m % d == 0 and d <= cap]
    cands = [d for d in divs if d % 8 == 0] or divs
    return max(cands)


def _pick_band_rows(H, W, c_in_total, c_pad, budget_bytes):
    """Row-band height th (divides H) sized against a double-buffered VMEM budget."""
    def fits(th):
        band = (th + 2) * (W + 2) * c_in_total * 4
        y_tile = th * W * c_pad * 4
        return 2 * (band + y_tile) <= budget_bytes

    divs = [d for d in range(1, H + 1) if H % d == 0]
    cands = ([d for d in divs if d % 8 == 0 and fits(d)]
             or [d for d in divs if fits(d)]
             or [divs[0]])
    return max(cands)


def _band_with_halo(x_nhwc, th):
    """(N,H,W,C) -> (N, H//th, th+2, W+2, C): row bands with a 1-pixel halo.

    # TODO(synk): eliminate this HBM materialization (pl.Element-offset index
    # maps over the once-padded array, or emit conv1's output directly in the
    # banded layout conv2 consumes).
    """
    N, H, W, C = x_nhwc.shape
    xp = jnp.pad(x_nhwc, ((0, 0), (1, 1), (1, 1), (0, 0)))
    nb = H // th
    bands = [xp[:, i * th:i * th + th + 2] for i in range(nb)]
    return jnp.stack(bands, axis=1)


# ----------------------------------------------------------------------------
# Pallas kernels
# ----------------------------------------------------------------------------
def _upconv_kernel(x_ref, w_ref, b_ref, o_ref):
    # x: (tm, Cin), w: (Cin, Cp), b: (1, Cp) -> o: (tm, Cp)   (Cp = 128-padded)
    x = x_ref[...].astype(w_ref.dtype)
    o_ref[...] = (jnp.dot(x, w_ref[...], preferred_element_type=jnp.float32)
                  + b_ref[...])


def _conv_stats_kernel(*refs, n_in, th, W):
    """Pass 1: conv3x3 for one (th, W) band as ONE matmul (K = 9*c_in_total),
    store pre-BN result y (lane-dense, 128-padded channels) and accumulate
    per-batch sum / sum-of-squares for the global BN statistics."""
    x_refs = refs[:n_in]                      # each (th+2, W+2, c_i) halo'd band
    w_ref = refs[n_in]                        # (9*c_in_total, c_pad), mxu dtype
    bias_ref = refs[n_in + 1]                 # (1, c_pad) f32
    y_ref = refs[n_in + 2]                    # (th*W, c_pad) output block
    stats_ref = refs[n_in + 3]                # (2, c_pad) per-batch output block
    acc_ref = refs[n_in + 4]                  # (2, c_pad) VMEM scratch

    @pl.when(pl.program_id(1) == 0)           # new batch image -> reset stats
    def _():
        acc_ref[...] = jnp.zeros_like(acc_ref)

    mxu_dtype = w_ref.dtype
    xts = [x_ref[...].astype(mxu_dtype) for x_ref in x_refs]   # cast once/part

    # Merge all 9 taps (and all input parts) along lanes -> one MXU matmul.
    taps = []
    for dy in range(3):
        for dx in range(3):
            for xt in xts:
                taps.append(xt[dy:dy + th, dx:dx + W, :])
    patch = jnp.concatenate(taps, axis=-1)                  # (th, W, 9*c_total)
    a = patch.reshape(th * W, patch.shape[-1])
    y = jnp.dot(a, w_ref[...], preferred_element_type=jnp.float32) + bias_ref[...]

    y_ref[...] = y
    acc_ref[0:1, :] = acc_ref[0:1, :] + jnp.sum(y, axis=0, keepdims=True)
    acc_ref[1:2, :] = acc_ref[1:2, :] + jnp.sum(y * y, axis=0, keepdims=True)
    stats_ref[...] = acc_ref[...]


def _bn_relu_kernel(y_ref, scale_ref, shift_ref, o_ref):
    """Pass 2: fused BN scale/shift + ReLU (pure VPU, lane-dense 128 cols)."""
    o_ref[...] = jnp.maximum(y_ref[...] * scale_ref[...] + shift_ref[...], 0.0)


# ----------------------------------------------------------------------------
# conv3x3 (implicit concat) + BatchNorm(train) + ReLU
# ----------------------------------------------------------------------------
def _conv3x3_bn_relu(parts_nhwc, w_oihw, bias, gamma, beta, *, th, mxu_dtype,
                     vmem_limit):
    N, H, W, _ = parts_nhwc[0].shape
    assert H % th == 0, "row-band height must divide H"
    c_out = w_oihw.shape[0]
    c_in_total = w_oihw.shape[1]
    assert sum(p.shape[-1] for p in parts_nhwc) == c_in_total
    c_pad = _round_up(c_out, _LANES)
    n_in = len(parts_nhwc)
    HB = H // th

    # Halo'd row bands (the only extra copy of each conv input).
    banded = [_band_with_halo(x, th) for x in parts_nhwc]

    # Single merged weight slab, rows ordered (dy, dx, ci) to match the patch
    # matrix; columns padded to 128 lanes; pre-cast to the MXU dtype.
    w_slab = jnp.transpose(w_oihw, (2, 3, 1, 0)).reshape(9 * c_in_total, c_out)
    w_slab = _pad_cols(w_slab, c_pad).astype(mxu_dtype)
    bias_row = _pad_cols(bias.reshape(1, c_out), c_pad)

    x_specs = [pl.BlockSpec((None, None, th + 2, W + 2, x.shape[-1]),
                            lambda n, hb: (n, hb, 0, 0, 0)) for x in parts_nhwc]
    w_spec = pl.BlockSpec((9 * c_in_total, c_pad), lambda n, hb: (0, 0))
    row_spec = pl.BlockSpec((1, c_pad), lambda n, hb: (0, 0))

    flops = 2 * N * H * W * 9 * c_in_total * c_out
    band_bytes = sum(int(b.size) * b.dtype.itemsize for b in banded)
    w_bytes = int(w_slab.size) * w_slab.dtype.itemsize

    # ---- pass 1: conv (one matmul/tile) + per-batch partial BN stats --------
    y, stats = pl.pallas_call(
        functools.partial(_conv_stats_kernel, n_in=n_in, th=th, W=W),
        out_shape=(jax.ShapeDtypeStruct((N, H * W, c_pad), jnp.float32),
                   jax.ShapeDtypeStruct((N, 2, c_pad), jnp.float32)),
        grid_spec=pltpu.PrefetchScalarGridSpec(
            num_scalar_prefetch=0,
            grid=(N, HB),
            in_specs=x_specs + [w_spec, row_spec],
            out_specs=(
                pl.BlockSpec((None, th * W, c_pad), lambda n, hb: (n, hb, 0)),
                pl.BlockSpec((None, 2, c_pad), lambda n, hb: (n, 0, 0)),
            ),
            scratch_shapes=[pltpu.VMEM((2, c_pad), jnp.float32)],
        ),
        compiler_params=pltpu.CompilerParams(
            # batch axis parallel (v7x megacore); band axis carries the
            # per-batch stats accumulator -> sequential.
            dimension_semantics=("parallel", "arbitrary"),
            vmem_limit_bytes=vmem_limit,
        ),
        cost_estimate=pl.CostEstimate(
            flops=flops, transcendentals=0,
            bytes_accessed=band_bytes + w_bytes + 4 * N * H * W * c_pad),
    )(*banded, w_slab, bias_row)

    # Fused BN scale/shift from global batch statistics (training-mode BN).
    m_count = float(N * H * W)
    tot = jnp.sum(stats, axis=0)                       # (2, c_pad)
    mean = tot[0:1, :] / m_count
    var = tot[1:2, :] / m_count - mean * mean          # biased batch variance
    # TODO(synk): sum/sumsq can cancel when |mean| >> std; switch to per-band
    # (mean, M2) Welford merges if that regime ever shows up.
    gamma_row = _pad_cols(gamma.reshape(1, c_out), c_pad)
    beta_row = _pad_cols(beta.reshape(1, c_out), c_pad)
    scale = gamma_row * jax.lax.rsqrt(var + _BN_EPS)
    shift = beta_row - mean * scale

    # ---- pass 2: elementwise scale/shift + ReLU (aliased in-place over y) ---
    y2 = y.reshape(N * H * W, c_pad)
    tm = _pick_row_block(N * H * W, cap=4096)
    h = pl.pallas_call(
        _bn_relu_kernel,
        out_shape=jax.ShapeDtypeStruct((N * H * W, c_pad), jnp.float32),
        grid_spec=pltpu.PrefetchScalarGridSpec(
            num_scalar_prefetch=0,
            grid=(N * H * W // tm,),
            in_specs=[pl.BlockSpec((tm, c_pad), lambda i: (i, 0)),
                      pl.BlockSpec((1, c_pad), lambda i: (0, 0)),
                      pl.BlockSpec((1, c_pad), lambda i: (0, 0))],
            out_specs=pl.BlockSpec((tm, c_pad), lambda i: (i, 0)),
        ),
        input_output_aliases={0: 0},
        compiler_params=pltpu.CompilerParams(
            dimension_semantics=("parallel",),
            vmem_limit_bytes=vmem_limit,
        ),
        cost_estimate=pl.CostEstimate(
            flops=2 * N * H * W * c_out, transcendentals=0,
            bytes_accessed=8 * N * H * W * c_pad),
    )(y2, scale, shift)

    return h[:, :c_out].reshape(N, H, W, c_out)


# ----------------------------------------------------------------------------
# DecoderBlock forward (NCHW in / NCHW out, PyTorch semantics)
# ----------------------------------------------------------------------------
def decoder_block_forward(params, x_nchw, x_down_nchw, *,
                          mxu_dtype=jnp.bfloat16, block_rows=None):
    N, Cin, Hs, Ws = x_nchw.shape
    Co2 = params["b_up"].shape[0]             # out_channels // 2
    H, W = 2 * Hs, 2 * Ws
    vmem_limit = _vmem_limit_bytes()

    # --- up_conv: ConvTranspose2d(k=2, s=2) as one tiled matmul -------------
    x_nhwc = jnp.transpose(x_nchw, (0, 2, 3, 1))
    x_flat = x_nhwc.reshape(N * Hs * Ws, Cin)
    co4 = 4 * Co2
    co4_pad = _round_up(co4, _LANES)           # dense, unmasked stores
    w_up_mat = jnp.transpose(params["w_up"], (0, 2, 3, 1)).reshape(Cin, co4)
    w_up_mat = _pad_cols(w_up_mat, co4_pad).astype(mxu_dtype)
    b_up_row = _pad_cols(jnp.tile(params["b_up"], 4).reshape(1, co4), co4_pad)
    tm_up = _pick_row_block(N * Hs * Ws, cap=2048)

    y_up = pl.pallas_call(
        _upconv_kernel,
        out_shape=jax.ShapeDtypeStruct((N * Hs * Ws, co4_pad), jnp.float32),
        grid_spec=pltpu.PrefetchScalarGridSpec(
            num_scalar_prefetch=0,
            grid=(N * Hs * Ws // tm_up,),
            in_specs=[pl.BlockSpec((tm_up, Cin), lambda i: (i, 0)),
                      pl.BlockSpec((Cin, co4_pad), lambda i: (0, 0)),
                      pl.BlockSpec((1, co4_pad), lambda i: (0, 0))],
            out_specs=pl.BlockSpec((tm_up, co4_pad), lambda i: (i, 0)),
        ),
        compiler_params=pltpu.CompilerParams(
            dimension_semantics=("parallel",),
            vmem_limit_bytes=vmem_limit,
        ),
        cost_estimate=pl.CostEstimate(
            flops=2 * N * Hs * Ws * Cin * co4, transcendentals=0,
            bytes_accessed=4 * (N * Hs * Ws * (Cin + co4) + Cin * co4)),
    )(x_flat, w_up_mat, b_up_row)

    # 2x2 pixel-shuffle (stride-2 transposed-conv scatter) on the small
    # source-resolution tensor.
    # TODO(synk): fold the pixel-shuffle + up-conv into conv1's pass-1 pipeline.
    y_up = y_up[:, :co4].reshape(N, Hs, Ws, 2, 2, Co2)
    up_nhwc = jnp.transpose(y_up, (0, 1, 3, 2, 4, 5)).reshape(N, H, W, Co2)

    x_down_nhwc = jnp.transpose(x_down_nchw, (0, 2, 3, 1))

    if block_rows is None:
        block_rows = _pick_band_rows(H, W, 2 * Co2, _round_up(Co2, _LANES),
                                     budget_bytes=vmem_limit // 6)

    # conv1+bn1+relu1: channel-concat is implicit (two inputs, merged weights).
    h1 = _conv3x3_bn_relu([up_nhwc, x_down_nhwc], params["w1"], params["b1"],
                          params["g1"], params["beta1"],
                          th=block_rows, mxu_dtype=mxu_dtype,
                          vmem_limit=vmem_limit)
    # conv2+bn2+relu2
    h2 = _conv3x3_bn_relu([h1], params["w2"], params["b2"],
                          params["g2"], params["beta2"],
                          th=block_rows, mxu_dtype=mxu_dtype,
                          vmem_limit=vmem_limit)

    # TODO(synk): emit NCHW (or the next block's banded layout) directly from
    # the pass-2 kernel instead of this XLA transpose.
    return jnp.transpose(h2, (0, 3, 1, 2))


# ----------------------------------------------------------------------------
# Pure-JAX reference (PyTorch semantics) for the correctness check
# ----------------------------------------------------------------------------
def _bn_relu_ref(y, gamma, beta):
    mean = jnp.mean(y, axis=(0, 2, 3), keepdims=True)
    var = jnp.mean((y - mean) ** 2, axis=(0, 2, 3), keepdims=True)
    y_hat = (y - mean) / jnp.sqrt(var + _BN_EPS)
    out = y_hat * gamma[None, :, None, None] + beta[None, :, None, None]
    return jnp.maximum(out, 0.0)


def decoder_block_reference(params, x, x_down):
    N, Cin, Hs, Ws = x.shape
    Co2 = params["b_up"].shape[0]
    hp = jax.lax.Precision.HIGHEST
    tmp = jnp.einsum("ncij,cokl->noijkl", x, params["w_up"], precision=hp)
    up = jnp.transpose(tmp, (0, 1, 2, 4, 3, 5)).reshape(N, Co2, 2 * Hs, 2 * Ws)
    up = up + params["b_up"][None, :, None, None]
    cat = jnp.concatenate([up, x_down], axis=1)

    dn = ("NCHW", "OIHW", "NCHW")
    y1 = jax.lax.conv_general_dilated(
        cat, params["w1"], (1, 1), ((1, 1), (1, 1)),
        dimension_numbers=dn, precision=hp) + params["b1"][None, :, None, None]
    h1 = _bn_relu_ref(y1, params["g1"], params["beta1"])

    y2 = jax.lax.conv_general_dilated(
        h1, params["w2"], (1, 1), ((1, 1), (1, 1)),
        dimension_numbers=dn, precision=hp) + params["b2"][None, :, None, None]
    return _bn_relu_ref(y2, params["g2"], params["beta2"])


# ----------------------------------------------------------------------------
if __name__ == "__main__":
    in_channels, out_channels = 8, 8
    Co2 = out_channels // 2                   # 4
    N, Hs, Ws = 2, 16, 16                     # decoder output: (N, Co2, 32, 32)

    key = jax.random.PRNGKey(0)
    ks = jax.random.split(key, 12)
    params = {
        # ConvTranspose2d weight: (in_channels, out_channels//2, 2, 2)
        "w_up": 0.1 * jax.random.normal(ks[0], (in_channels, Co2, 2, 2), jnp.float32),
        "b_up": 0.1 * jax.random.normal(ks[1], (Co2,), jnp.float32),
        # Conv2d(out_channels -> out_channels//2, 3x3, padding=1)
        "w1": 0.1 * jax.random.normal(ks[2], (Co2, out_channels, 3, 3), jnp.float32),
        "b1": 0.1 * jax.random.normal(ks[3], (Co2,), jnp.float32),
        "g1": 1.0 + 0.1 * jax.random.normal(ks[4], (Co2,), jnp.float32),
        "beta1": 0.1 * jax.random.normal(ks[5], (Co2,), jnp.float32),
        # Conv2d(out_channels//2 -> out_channels//2, 3x3, padding=1)
        "w2": 0.1 * jax.random.normal(ks[6], (Co2, Co2, 3, 3), jnp.float32),
        "b2": 0.1 * jax.random.normal(ks[7], (Co2,), jnp.float32),
        "g2": 1.0 + 0.1 * jax.random.normal(ks[8], (Co2,), jnp.float32),
        "beta2": 0.1 * jax.random.normal(ks[9], (Co2,), jnp.float32),
    }

    x = jax.random.normal(ks[10], (N, in_channels, Hs, Ws), jnp.float32)
    x_down = jax.random.normal(ks[11], (N, Co2, 2 * Hs, 2 * Ws), jnp.float32)

    ref = decoder_block_reference(params, x, x_down)

    # f32 MXU path with block_rows=8 -> multi-band grid (2, 4): exercises the
    # halo taps, the merged-K matmul, the per-batch stats accumulator and the
    # two-pass BN + aliased ReLU epilogue.
    fwd_f32 = jax.jit(functools.partial(decoder_block_forward,
                                        mxu_dtype=jnp.float32, block_rows=8))
    out_f32 = jax.block_until_ready(fwd_f32(params, x, x_down))
    np.testing.assert_allclose(np.asarray(out_f32), np.asarray(ref),
                               rtol=1e-3, atol=1e-3)

    # bf16 MXU fast path (f32 accumulation, f32 BN epilogue) with automatic,
    # generation-aware band sizing (single band per image at this shape).
    fwd_bf16 = jax.jit(functools.partial(decoder_block_forward,
                                         mxu_dtype=jnp.bfloat16))
    out_bf16 = jax.block_until_ready(fwd_bf16(params, x, x_down))
    np.testing.assert_allclose(np.asarray(out_bf16), np.asarray(ref),
                               rtol=1e-1, atol=1e-1)

    assert out_f32.shape == (N, Co2, 2 * Hs, 2 * Ws)
    print("KERNEL_OK")
</pallas_src>

<mosaic_0001>
module attributes {stable_mosaic.version = 11 : i64} {
  func.func @_upconv_kernel(%arg0: i32, %arg1: memref<512x8xf32, #tpu.memory_space<vmem>>, %arg2: memref<8x128xf32, #tpu.memory_space<vmem>>, %arg3: memref<1x128xf32, #tpu.memory_space<vmem>>, %arg4: memref<512x128xf32, #tpu.memory_space<vmem>>) attributes {dimension_semantics = [#tpu.dimension_semantics<parallel>], iteration_bounds = array<i64: 1>, scalar_prefetch = 0 : i64, scratch_operands = 0 : i64, tpu.core_type = #tpu.core_type<tc>, window_params = [{transform_indices = @transform_0, window_bounds = array<i64: 512, 8>}, {pipeline_mode = #tpu.pipeline_mode<synchronous>, transform_indices = @transform_1, window_bounds = array<i64: 8, 128>}, {pipeline_mode = #tpu.pipeline_mode<synchronous>, transform_indices = @transform_2, window_bounds = array<i64: 1, 128>}, {transform_indices = @transform_3, window_bounds = array<i64: 512, 128>}]} {
    %c0 = arith.constant 0 : index
    %c0_0 = arith.constant 0 : index
    %0 = vector.load %arg1[%c0, %c0_0] : memref<512x8xf32, #tpu.memory_space<vmem>>, vector<512x8xf32>
    %c0_1 = arith.constant 0 : index
    %c0_2 = arith.constant 0 : index
    %1 = vector.load %arg2[%c0_1, %c0_2] : memref<8x128xf32, #tpu.memory_space<vmem>>, vector<8x128xf32>
    %cst = arith.constant dense<0.000000e+00> : vector<512x128xf32>
    %2 = tpu.matmul %0, %1, %cst {dimension_numbers = #tpu.dot_dimension_numbers<[1], [0], [0], [1], [0, 0, 1, 1], [], []>} : vector<512x8xf32>, vector<8x128xf32>, vector<512x128xf32> -> vector<512x128xf32>
    %c0_3 = arith.constant 0 : index
    %c0_4 = arith.constant 0 : index
    %3 = vector.load %arg3[%c0_3, %c0_4] : memref<1x128xf32, #tpu.memory_space<vmem>>, vector<1x128xf32>
    %4 = vector.broadcast %3 : vector<1x128xf32> to vector<512x128xf32>
    %5 = arith.addf %2, %4 : vector<512x128xf32>
    %c0_5 = arith.constant 0 : index
    %c0_6 = arith.constant 0 : index
    %6 = vector.load %arg4[%c0_5, %c0_6] : memref<512x128xf32, #tpu.memory_space<vmem>>, vector<512x128xf32>
    tpu.vector_store %arg4[%c0_5, %c0_6], %5 {strides = array<i32>} : memref<512x128xf32, #tpu.memory_space<vmem>>, vector<512x128xf32>,
    return
  }
  func.func @transform_0(%arg0: i32) -> (i32, i32) {
    %c0_i32 = arith.constant 0 : i32
    %c0_i32_0 = arith.constant 0 : i32
    return %arg0, %c0_i32 : i32, i32
  }
  func.func @transform_1(%arg0: i32) -> (i32, i32) {
    %c0_i32 = arith.constant 0 : i32
    %c0_i32_0 = arith.constant 0 : i32
    %c0_i32_1 = arith.constant 0 : i32
    return %c0_i32, %c0_i32_0 : i32, i32
  }
  func.func @transform_2(%arg0: i32) -> (i32, i32) {
    %c0_i32 = arith.constant 0 : i32
    %c0_i32_0 = arith.constant 0 : i32
    %c0_i32_1 = arith.constant 0 : i32
    return %c0_i32, %c0_i32_0 : i32, i32
  }
  func.func @transform_3(%arg0: i32) -> (i32, i32) {
    %c0_i32 = arith.constant 0 : i32
    %c0_i32_0 = arith.constant 0 : i32
    return %arg0, %c0_i32 : i32, i32
  }
}

module attributes {stable_mosaic.version = 11 : i64} {
  func.func @_conv_stats_kernel(%arg0: i32, %arg1: i32, %arg2: memref<1x1x10x34x4xf32, #tpu.memory_space<vmem>>, %arg3: memref<1x1x10x34x4xf32, #tpu.memory_space<vmem>>, %arg4: memref<72x128xf32, #tpu.memory_space<vmem>>, %arg5: memref<1x128xf32, #tpu.memory_space<vmem>>, %arg6: memref<1x256x128xf32, #tpu.memory_space<vmem>>, %arg7: memref<1x2x128xf32, #tpu.memory_space<vmem>>, %arg8: memref<2x128xf32, #tpu.memory_space<vmem>>) attributes {dimension_semantics = [#tpu.dimension_semantics<parallel>, #tpu.dimension_semantics<arbitrary>], iteration_bounds = array<i64: 2, 4>, scalar_prefetch = 0 : i64, scratch_operands = 1 : i64, tpu.core_type = #tpu.core_type<tc>, window_params = [{transform_indices = @transform_0, window_bounds = array<i64: 1, 1, 10, 34, 4>}, {transform_indices = @transform_1, window_bounds = array<i64: 1, 1, 10, 34, 4>}, {pipeline_mode = #tpu.pipeline_mode<synchronous>, transform_indices = @transform_2, window_bounds = array<i64: 72, 128>}, {pipeline_mode = #tpu.pipeline_mode<synchronous>, transform_indices = @transform_3, window_bounds = array<i64: 1, 128>}, {transform_indices = @transform_4, window_bounds = array<i64: 1, 256, 128>}, {transform_indices = @transform_5, window_bounds = array<i64: 1, 2, 128>}]} {
    %c0_i32 = arith.constant 0 : i32
    %0 = arith.cmpi eq, %arg1, %c0_i32 : i32
    %1 = arith.extui %0 : i1 to i32
    %c0_i32_0 = arith.constant 0 : i32
    %2 = arith.cmpi ne, %1, %c0_i32_0 : i32
    scf.if %2 {
      %cst_31 = arith.constant 0.000000e+00 : f32
      %52 = vector.broadcast %cst_31 : f32 to vector<2x128xf32>
      %c0_32 = arith.constant 0 : index
      %c0_33 = arith.constant 0 : index
      %53 = vector.load %arg8[%c0_32, %c0_33] : memref<2x128xf32, #tpu.memory_space<vmem>>, vector<2x128xf32>
      tpu.vector_store %arg8[%c0_32, %c0_33], %52 {strides = array<i32>} : memref<2x128xf32, #tpu.memory_space<vmem>>, vector<2x128xf32>,
    } else {
    }
    %c0 = arith.constant 0 : index
    %c0_1 = arith.constant 0 : index
    %c0_2 = arith.constant 0 : index
    %c0_3 = arith.constant 0 : index
    %c0_4 = arith.constant 0 : index
    %3 = vector.load %arg2[%c0, %c0_1, %c0_2, %c0_3, %c0_4] : memref<1x1x10x34x4xf32, #tpu.memory_space<vmem>>, vector<1x1x10x34x4xf32>
    %4 = vector.shape_cast %3 : vector<1x1x10x34x4xf32> to vector<10x34x4xf32>
    %c0_5 = arith.constant 0 : index
    %c0_6 = arith.constant 0 : index
    %c0_7 = arith.constant 0 : index
    %c0_8 = arith.constant 0 : index
    %c0_9 = arith.constant 0 : index
    %5 = vector.load %arg3[%c0_5, %c0_6, %c0_7, %c0_8, %c0_9] : memref<1x1x10x34x4xf32, #tpu.memory_space<vmem>>, vector<1x1x10x34x4xf32>
    %6 = vector.shape_cast %5 : vector<1x1x10x34x4xf32> to vector<10x34x4xf32>
    %7 = vector.extract_strided_slice %4 {offsets = [0, 0, 0], sizes = [8, 32, 4], strides = [1, 1, 1]} : vector<10x34x4xf32> to vector<8x32x4xf32>
    %8 = vector.extract_strided_slice %6 {offsets = [0, 0, 0], sizes = [8, 32, 4], strides = [1, 1, 1]} : vector<10x34x4xf32> to vector<8x32x4xf32>
    %9 = vector.extract_strided_slice %4 {offsets = [0, 1, 0], sizes = [8, 32, 4], strides = [1, 1, 1]} : vector<10x34x4xf32> to vector<8x32x4xf32>
    %10 = vector.extract_strided_slice %6 {offsets = [0, 1, 0], sizes = [8, 32, 4], strides = [1, 1, 1]} : vector<10x34x4xf32> to vector<8x32x4xf32>
    %11 = vector.extract_strided_slice %4 {offsets = [0, 2, 0], sizes = [8, 32, 4], strides = [1, 1, 1]} : vector<10x34x4xf32> to vector<8x32x4xf32>
    %12 = vector.extract_strided_slice %6 {offsets = [0, 2, 0], sizes = [8, 32, 4], strides = [1, 1, 1]} : vector<10x34x4xf32> to vector<8x32x4xf32>
    %13 = vector.extract_strided_slice %4 {offsets = [1, 0, 0], sizes = [8, 32, 4], strides = [1, 1, 1]} : vector<10x34x4xf32> to vector<8x32x4xf32>
    %14 = vector.extract_strided_slice %6 {offsets = [1, 0, 0], sizes = [8, 32, 4], strides = [1, 1, 1]} : vector<10x34x4xf32> to vector<8x32x4xf32>
    %15 = vector.extract_strided_slice %4 {offsets = [1, 1, 0], sizes = [8, 32, 4], strides = [1, 1, 1]} : vector<10x34x4xf32> to vector<8x32x4xf32>
    %16 = vector.extract_strided_slice %6 {offsets = [1, 1, 0], sizes = [8, 32, 4], strides = [1, 1, 1]} : vector<10x34x4xf32> to vector<8x32x4xf32>
    %17 = vector.extract_strided_slice %4 {offsets = [1, 2, 0], sizes = [8, 32, 4], strides = [1, 1, 1]} : vector<10x34x4xf32> to vector<8x32x4xf32>
    %18 = vector.extract_strided_slice %6 {offsets = [1, 2, 0], sizes = [8, 32, 4], strides = [1, 1, 1]} : vector<10x34x4xf32> to vector<8x32x4xf32>
    %19 = vector.extract_strided_slice %4 {offsets = [2, 0, 0], sizes = [8, 32, 4], strides = [1, 1, 1]} : vector<10x34x4xf32> to vector<8x32x4xf32>
    %20 = vector.extract_strided_slice %6 {offsets = [2, 0, 0], sizes = [8, 32, 4], strides = [1, 1, 1]} : vector<10x34x4xf32> to vector<8x32x4xf32>
    %21 = vector.extract_strided_slice %4 {offsets = [2, 1, 0], sizes = [8, 32, 4], strides = [1, 1, 1]} : vector<10x34x4xf32> to vector<8x32x4xf32>
    %22 = vector.extract_strided_slice %6 {offsets = [2, 1, 0], sizes = [8, 32, 4], strides = [1, 1, 1]} : vector<10x34x4xf32> to vector<8x32x4xf32>
    %23 = vector.extract_strided_slice %4 {offsets = [2, 2, 0], sizes = [8, 32, 4], strides = [1, 1, 1]} : vector<10x34x4xf32> to vector<8x32x4xf32>
    %24 = vector.extract_strided_slice %6 {offsets = [2, 2, 0], sizes = [8, 32, 4], strides = [1, 1, 1]} : vector<10x34x4xf32> to vector<8x32x4xf32>
    %25 = tpu.concatenate %7, %8, %9, %10, %11, %12, %13, %14, %15, %16, %17, %18, %19, %20, %21, %22 in 2 : vector<8x32x4xf32>, vector<8x32x4xf32>, vector<8x32x4xf32>, vector<8x32x4xf32>, vector<8x32x4xf32>, vector<8x32x4xf32>, vector<8x32x4xf32>, vector<8x32x4xf32>, vector<8x32x4xf32>, vector<8x32x4xf32>, vector<8x32x4xf32>, vector<8x32x4xf32>, vector<8x32x4xf32>, vector<8x32x4xf32>, vector<8x32x4xf32>, vector<8x32x4xf32> -> vector<8x32x64xf32>
    %26 = tpu.concatenate %23, %24 in 2 : vector<8x32x4xf32>, vector<8x32x4xf32> -> vector<8x32x8xf32>
    %27 = tpu.concatenate %25, %26 in 2 : vector<8x32x64xf32>, vector<8x32x8xf32> -> vector<8x32x72xf32>
    %28 = vector.shape_cast %27 : vector<8x32x72xf32> to vector<256x72xf32>
    %c0_10 = arith.constant 0 : index
    %c0_11 = arith.constant 0 : index
    %29 = vector.load %arg4[%c0_10, %c0_11] : memref<72x128xf32, #tpu.memory_space<vmem>>, vector<72x128xf32>
    %cst = arith.constant dense<0.000000e+00> : vector<256x128xf32>
    %30 = tpu.matmul %28, %29, %cst {dimension_numbers = #tpu.dot_dimension_numbers<[1], [0], [0], [1], [0, 0, 1, 1], [], []>} : vector<256x72xf32>, vector<72x128xf32>, vector<256x128xf32> -> vector<256x128xf32>
    %c0_12 = arith.constant 0 : index
    %c0_13 = arith.constant 0 : index
    %31 = vector.load %arg5[%c0_12, %c0_13] : memref<1x128xf32, #tpu.memory_space<vmem>>, vector<1x128xf32>
    %32 = vector.broadcast %31 : vector<1x128xf32> to vector<256x128xf32>
    %33 = arith.addf %30, %32 : vector<256x128xf32>
    %c0_14 = arith.constant 0 : index
    %c0_15 = arith.constant 0 : index
    %c0_16 = arith.constant 0 : index
    %34 = vector.load %arg6[%c0_14, %c0_15, %c0_16] : memref<1x256x128xf32, #tpu.memory_space<vmem>>, vector<1x256x128xf32>
    %35 = vector.shape_cast %34 : vector<1x256x128xf32> to vector<256x128xf32>
    %36 = vector.shape_cast %33 : vector<256x128xf32> to vector<1x256x128xf32>
    tpu.vector_store %arg6[%c0_14, %c0_15, %c0_16], %36 {strides = array<i32>} : memref<1x256x128xf32, #tpu.memory_space<vmem>>, vector<1x256x128xf32>,
    %c0_17 = arith.constant 0 : index
    %c0_18 = arith.constant 0 : index
    %37 = vector.load %arg8[%c0_17, %c0_18] : memref<2x128xf32, #tpu.memory_space<vmem>>, vector<1x128xf32>
    %cst_19 = arith.constant dense<0.000000e+00> : vector<128xf32>
    %38 = vector.multi_reduction <add>, %33, %cst_19 [0] : vector<256x128xf32> to vector<128xf32>
    %39 = vector.shape_cast %38 : vector<128xf32> to vector<1x128xf32>
    %40 = arith.addf %37, %39 : vector<1x128xf32>
    %c0_20 = arith.constant 0 : index
    %c0_21 = arith.constant 0 : index
    %41 = vector.load %arg8[%c0_20, %c0_21] : memref<2x128xf32, #tpu.memory_space<vmem>>, vector<1x128xf32>
    tpu.vector_store %arg8[%c0_20, %c0_21], %40 {strides = array<i32>} : memref<2x128xf32, #tpu.memory_space<vmem>>, vector<1x128xf32>,
    %c1 = arith.constant 1 : index
    %c0_22 = arith.constant 0 : index
    %42 = vector.load %arg8[%c1, %c0_22] : memref<2x128xf32, #tpu.memory_space<vmem>>, vector<1x128xf32>
    %43 = arith.mulf %33, %33 : vector<256x128xf32>
    %cst_23 = arith.constant dense<0.000000e+00> : vector<128xf32>
    %44 = vector.multi_reduction <add>, %43, %cst_23 [0] : vector<256x128xf32> to vector<128xf32>
    %45 = vector.shape_cast %44 : vector<128xf32> to vector<1x128xf32>
    %46 = arith.addf %42, %45 : vector<1x128xf32>
    %c1_24 = arith.constant 1 : index
    %c0_25 = arith.constant 0 : index
    %47 = vector.load %arg8[%c1_24, %c0_25] : memref<2x128xf32, #tpu.memory_space<vmem>>, vector<1x128xf32>
    tpu.vector_store %arg8[%c1_24, %c0_25], %46 {strides = array<i32>} : memref<2x128xf32, #tpu.memory_space<vmem>>, vector<1x128xf32>,
    %c0_26 = arith.constant 0 : index
    %c0_27 = arith.constant 0 : index
    %48 = vector.load %arg8[%c0_26, %c0_27] : memref<2x128xf32, #tpu.memory_space<vmem>>, vector<2x128xf32>
    %c0_28 = arith.constant 0 : index
    %c0_29 = arith.constant 0 : index
    %c0_30 = arith.constant 0 : index
    %49 = vector.load %arg7[%c0_28, %c0_29, %c0_30] : memref<1x2x128xf32, #tpu.memory_space<vmem>>, vector<1x2x128xf32>
    %50 = vector.shape_cast %49 : vector<1x2x128xf32> to vector<2x128xf32>
    %51 = vector.shape_cast %48 : vector<2x128xf32> to vector<1x2x128xf32>
    tpu.vector_store %arg7[%c0_28, %c0_29, %c0_30], %51 {strides = array<i32>} : memref<1x2x128xf32, #tpu.memory_space<vmem>>, vector<1x2x128xf32>,
    return
  }
  func.func @transform_0(%arg0: i32, %arg1: i32) -> (i32, i32, i32, i32, i32) {
    %c0_i32 = arith.constant 0 : i32
    %c0_i32_0 = arith.constant 0 : i32
    %c0_i32_1 = arith.constant 0 : i32
    %c0_i32_2 = arith.constant 0 : i32
    return %arg0, %arg1, %c0_i32, %c0_i32_0, %c0_i32_1 : i32, i32, i32, i32, i32
  }
  func.func @transform_1(%arg0: i32, %arg1: i32) -> (i32, i32, i32, i32, i32) {
    %c0_i32 = arith.constant 0 : i32
    %c0_i32_0 = arith.constant 0 : i32
    %c0_i32_1 = arith.constant 0 : i32
    %c0_i32_2 = arith.constant 0 : i32
    return %arg0, %arg1, %c0_i32, %c0_i32_0, %c0_i32_1 : i32, i32, i32, i32, i32
  }
  func.func @transform_2(%arg0: i32, %arg1: i32) -> (i32, i32) {
    %c0_i32 = arith.constant 0 : i32
    %c0_i32_0 = arith.constant 0 : i32
    %c0_i32_1 = arith.constant 0 : i32
    return %c0_i32, %c0_i32_0 : i32, i32
  }
  func.func @transform_3(%arg0: i32, %arg1: i32) -> (i32, i32) {
    %c0_i32 = arith.constant 0 : i32
    %c0_i32_0 = arith.constant 0 : i32
    %c0_i32_1 = arith.constant 0 : i32
    return %c0_i32, %c0_i32_0 : i32, i32
  }
  func.func @transform_4(%arg0: i32, %arg1: i32) -> (i32, i32, i32) {
    %c0_i32 = arith.constant 0 : i32
    %c0_i32_0 = arith.constant 0 : i32
    return %arg0, %arg1, %c0_i32 : i32, i32, i32
  }
  func.func @transform_5(%arg0: i32, %arg1: i32) -> (i32, i32, i32) {
    %c0_i32 = arith.constant 0 : i32
    %c0_i32_0 = arith.constant 0 : i32
    %c0_i32_1 = arith.constant 0 : i32
    return %arg0, %c0_i32, %c0_i32_0 : i32, i32, i32
  }
}

module attributes {stable_mosaic.version = 11 : i64} {
  func.func @_bn_relu_kernel(%arg0: i32, %arg1: memref<2048x128xf32, #tpu.memory_space<vmem>>, %arg2: memref<1x128xf32, #tpu.memory_space<vmem>>, %arg3: memref<1x128xf32, #tpu.memory_space<vmem>>, %arg4: memref<2048x128xf32, #tpu.memory_space<vmem>>) attributes {dimension_semantics = [#tpu.dimension_semantics<parallel>], iteration_bounds = array<i64: 1>, scalar_prefetch = 0 : i64, scratch_operands = 0 : i64, tpu.core_type = #tpu.core_type<tc>, window_params = [{transform_indices = @transform_0, window_bounds = array<i64: 2048, 128>}, {pipeline_mode = #tpu.pipeline_mode<synchronous>, transform_indices = @transform_1, window_bounds = array<i64: 1, 128>}, {pipeline_mode = #tpu.pipeline_mode<synchronous>, transform_indices = @transform_2, window_bounds = array<i64: 1, 128>}, {transform_indices = @transform_3, window_bounds = array<i64: 2048, 128>}]} {
    %c0 = arith.constant 0 : index
    %c0_0 = arith.constant 0 : index
    %0 = vector.load %arg1[%c0, %c0_0] : memref<2048x128xf32, #tpu.memory_space<vmem>>, vector<2048x128xf32>
    %c0_1 = arith.constant 0 : index
    %c0_2 = arith.constant 0 : index
    %1 = vector.load %arg2[%c0_1, %c0_2] : memref<1x128xf32, #tpu.memory_space<vmem>>, vector<1x128xf32>
    %2 = vector.broadcast %1 : vector<1x128xf32> to vector<2048x128xf32>
    %3 = arith.mulf %0, %2 : vector<2048x128xf32>
    %c0_3 = arith.constant 0 : index
    %c0_4 = arith.constant 0 : index
    %4 = vector.load %arg3[%c0_3, %c0_4] : memref<1x128xf32, #tpu.memory_space<vmem>>, vector<1x128xf32>
    %5 = vector.broadcast %4 : vector<1x128xf32> to vector<2048x128xf32>
    %6 = arith.addf %3, %5 : vector<2048x128xf32>
    %cst = arith.constant 0.000000e+00 : f32
    %7 = vector.broadcast %cst : f32 to vector<2048x128xf32>
    %8 = arith.maximumf %6, %7 : vector<2048x128xf32>
    %c0_5 = arith.constant 0 : index
    %c0_6 = arith.constant 0 : index
    %9 = vector.load %arg4[%c0_5, %c0_6] : memref<2048x128xf32, #tpu.memory_space<vmem>>, vector<2048x128xf32>
    tpu.vector_store %arg4[%c0_5, %c0_6], %8 {strides = array<i32>} : memref<2048x128xf32, #tpu.memory_space<vmem>>, vector<2048x128xf32>,
    return
  }
  func.func @transform_0(%arg0: i32) -> (i32, i32) {
    %c0_i32 = arith.constant 0 : i32
    %c0_i32_0 = arith.constant 0 : i32
    return %arg0, %c0_i32 : i32, i32
  }
  func.func @transform_1(%arg0: i32) -> (i32, i32) {
    %c0_i32 = arith.constant 0 : i32
    %c0_i32_0 = arith.constant 0 : i32
    %c0_i32_1 = arith.constant 0 : i32
    return %c0_i32, %c0_i32_0 : i32, i32
  }
  func.func @transform_2(%arg0: i32) -> (i32, i32) {
    %c0_i32 = arith.constant 0 : i32
    %c0_i32_0 = arith.constant 0 : i32
    %c0_i32_1 = arith.constant 0 : i32
    return %c0_i32, %c0_i32_0 : i32, i32
  }
  func.func @transform_3(%arg0: i32) -> (i32, i32) {
    %c0_i32 = arith.constant 0 : i32
    %c0_i32_0 = arith.constant 0 : i32
    return %arg0, %c0_i32 : i32, i32
  }
}

module attributes {stable_mosaic.version = 11 : i64} {
  func.func @_conv_stats_kernel(%arg0: i32, %arg1: i32, %arg2: memref<1x1x10x34x4xf32, #tpu.memory_space<vmem>>, %arg3: memref<36x128xf32, #tpu.memory_space<vmem>>, %arg4: memref<1x128xf32, #tpu.memory_space<vmem>>, %arg5: memref<1x256x128xf32, #tpu.memory_space<vmem>>, %arg6: memref<1x2x128xf32, #tpu.memory_space<vmem>>, %arg7: memref<2x128xf32, #tpu.memory_space<vmem>>) attributes {dimension_semantics = [#tpu.dimension_semantics<parallel>, #tpu.dimension_semantics<arbitrary>], iteration_bounds = array<i64: 2, 4>, scalar_prefetch = 0 : i64, scratch_operands = 1 : i64, tpu.core_type = #tpu.core_type<tc>, window_params = [{transform_indices = @transform_0, window_bounds = array<i64: 1, 1, 10, 34, 4>}, {pipeline_mode = #tpu.pipeline_mode<synchronous>, transform_indices = @transform_1, window_bounds = array<i64: 36, 128>}, {pipeline_mode = #tpu.pipeline_mode<synchronous>, transform_indices = @transform_2, window_bounds = array<i64: 1, 128>}, {transform_indices = @transform_3, window_bounds = array<i64: 1, 256, 128>}, {transform_indices = @transform_4, window_bounds = array<i64: 1, 2, 128>}]} {
    %c0_i32 = arith.constant 0 : i32
    %0 = arith.cmpi eq, %arg1, %c0_i32 : i32
    %1 = arith.extui %0 : i1 to i32
    %c0_i32_0 = arith.constant 0 : i32
    %2 = arith.cmpi ne, %1, %c0_i32_0 : i32
    scf.if %2 {
      %cst_26 = arith.constant 0.000000e+00 : f32
      %39 = vector.broadcast %cst_26 : f32 to vector<2x128xf32>
      %c0_27 = arith.constant 0 : index
      %c0_28 = arith.constant 0 : index
      %40 = vector.load %arg7[%c0_27, %c0_28] : memref<2x128xf32, #tpu.memory_space<vmem>>, vector<2x128xf32>
      tpu.vector_store %arg7[%c0_27, %c0_28], %39 {strides = array<i32>} : memref<2x128xf32, #tpu.memory_space<vmem>>, vector<2x128xf32>,
    } else {
    }
    %c0 = arith.constant 0 : index
    %c0_1 = arith.constant 0 : index
    %c0_2 = arith.constant 0 : index
    %c0_3 = arith.constant 0 : index
    %c0_4 = arith.constant 0 : index
    %3 = vector.load %arg2[%c0, %c0_1, %c0_2, %c0_3, %c0_4] : memref<1x1x10x34x4xf32, #tpu.memory_space<vmem>>, vector<1x1x10x34x4xf32>
    %4 = vector.shape_cast %3 : vector<1x1x10x34x4xf32> to vector<10x34x4xf32>
    %5 = vector.extract_strided_slice %4 {offsets = [0, 0, 0], sizes = [8, 32, 4], strides = [1, 1, 1]} : vector<10x34x4xf32> to vector<8x32x4xf32>
    %6 = vector.extract_strided_slice %4 {offsets = [0, 1, 0], sizes = [8, 32, 4], strides = [1, 1, 1]} : vector<10x34x4xf32> to vector<8x32x4xf32>
    %7 = vector.extract_strided_slice %4 {offsets = [0, 2, 0], sizes = [8, 32, 4], strides = [1, 1, 1]} : vector<10x34x4xf32> to vector<8x32x4xf32>
    %8 = vector.extract_strided_slice %4 {offsets = [1, 0, 0], sizes = [8, 32, 4], strides = [1, 1, 1]} : vector<10x34x4xf32> to vector<8x32x4xf32>
    %9 = vector.extract_strided_slice %4 {offsets = [1, 1, 0], sizes = [8, 32, 4], strides = [1, 1, 1]} : vector<10x34x4xf32> to vector<8x32x4xf32>
    %10 = vector.extract_strided_slice %4 {offsets = [1, 2, 0], sizes = [8, 32, 4], strides = [1, 1, 1]} : vector<10x34x4xf32> to vector<8x32x4xf32>
    %11 = vector.extract_strided_slice %4 {offsets = [2, 0, 0], sizes = [8, 32, 4], strides = [1, 1, 1]} : vector<10x34x4xf32> to vector<8x32x4xf32>
    %12 = vector.extract_strided_slice %4 {offsets = [2, 1, 0], sizes = [8, 32, 4], strides = [1, 1, 1]} : vector<10x34x4xf32> to vector<8x32x4xf32>
    %13 = vector.extract_strided_slice %4 {offsets = [2, 2, 0], sizes = [8, 32, 4], strides = [1, 1, 1]} : vector<10x34x4xf32> to vector<8x32x4xf32>
    %14 = tpu.concatenate %5, %6, %7, %8, %9, %10, %11, %12, %13 in 2 : vector<8x32x4xf32>, vector<8x32x4xf32>, vector<8x32x4xf32>, vector<8x32x4xf32>, vector<8x32x4xf32>, vector<8x32x4xf32>, vector<8x32x4xf32>, vector<8x32x4xf32>, vector<8x32x4xf32> -> vector<8x32x36xf32>
    %15 = vector.shape_cast %14 : vector<8x32x36xf32> to vector<256x36xf32>
    %c0_5 = arith.constant 0 : index
    %c0_6 = arith.constant 0 : index
    %16 = vector.load %arg3[%c0_5, %c0_6] : memref<36x128xf32, #tpu.memory_space<vmem>>, vector<36x128xf32>
    %cst = arith.constant dense<0.000000e+00> : vector<256x128xf32>
    %17 = tpu.matmul %15, %16, %cst {dimension_numbers = #tpu.dot_dimension_numbers<[1], [0], [0], [1], [0, 0, 1, 1], [], []>} : vector<256x36xf32>, vector<36x128xf32>, vector<256x128xf32> -> vector<256x128xf32>
    %c0_7 = arith.constant 0 : index
    %c0_8 = arith.constant 0 : index
    %18 = vector.load %arg4[%c0_7, %c0_8] : memref<1x128xf32, #tpu.memory_space<vmem>>, vector<1x128xf32>
    %19 = vector.broadcast %18 : vector<1x128xf32> to vector<256x128xf32>
    %20 = arith.addf %17, %19 : vector<256x128xf32>
    %c0_9 = arith.constant 0 : index
    %c0_10 = arith.constant 0 : index
    %c0_11 = arith.constant 0 : index
    %21 = vector.load %arg5[%c0_9, %c0_10, %c0_11] : memref<1x256x128xf32, #tpu.memory_space<vmem>>, vector<1x256x128xf32>
    %22 = vector.shape_cast %21 : vector<1x256x128xf32> to vector<256x128xf32>
    %23 = vector.shape_cast %20 : vector<256x128xf32> to vector<1x256x128xf32>
    tpu.vector_store %arg5[%c0_9, %c0_10, %c0_11], %23 {strides = array<i32>} : memref<1x256x128xf32, #tpu.memory_space<vmem>>, vector<1x256x128xf32>,
    %c0_12 = arith.constant 0 : index
    %c0_13 = arith.constant 0 : index
    %24 = vector.load %arg7[%c0_12, %c0_13] : memref<2x128xf32, #tpu.memory_space<vmem>>, vector<1x128xf32>
    %cst_14 = arith.constant dense<0.000000e+00> : vector<128xf32>
    %25 = vector.multi_reduction <add>, %20, %cst_14 [0] : vector<256x128xf32> to vector<128xf32>
    %26 = vector.shape_cast %25 : vector<128xf32> to vector<1x128xf32>
    %27 = arith.addf %24, %26 : vector<1x128xf32>
    %c0_15 = arith.constant 0 : index
    %c0_16 = arith.constant 0 : index
    %28 = vector.load %arg7[%c0_15, %c0_16] : memref<2x128xf32, #tpu.memory_space<vmem>>, vector<1x128xf32>
    tpu.vector_store %arg7[%c0_15, %c0_16], %27 {strides = array<i32>} : memref<2x128xf32, #tpu.memory_space<vmem>>, vector<1x128xf32>,
    %c1 = arith.constant 1 : index
    %c0_17 = arith.constant 0 : index
    %29 = vector.load %arg7[%c1, %c0_17] : memref<2x128xf32, #tpu.memory_space<vmem>>, vector<1x128xf32>
    %30 = arith.mulf %20, %20 : vector<256x128xf32>
    %cst_18 = arith.constant dense<0.000000e+00> : vector<128xf32>
    %31 = vector.multi_reduction <add>, %30, %cst_18 [0] : vector<256x128xf32> to vector<128xf32>
    %32 = vector.shape_cast %31 : vector<128xf32> to vector<1x128xf32>
    %33 = arith.addf %29, %32 : vector<1x128xf32>
    %c1_19 = arith.constant 1 : index
    %c0_20 = arith.constant 0 : index
    %34 = vector.load %arg7[%c1_19, %c0_20] : memref<2x128xf32, #tpu.memory_space<vmem>>, vector<1x128xf32>
    tpu.vector_store %arg7[%c1_19, %c0_20], %33 {strides = array<i32>} : memref<2x128xf32, #tpu.memory_space<vmem>>, vector<1x128xf32>,
    %c0_21 = arith.constant 0 : index
    %c0_22 = arith.constant 0 : index
    %35 = vector.load %arg7[%c0_21, %c0_22] : memref<2x128xf32, #tpu.memory_space<vmem>>, vector<2x128xf32>
    %c0_23 = arith.constant 0 : index
    %c0_24 = arith.constant 0 : index
    %c0_25 = arith.constant 0 : index
    %36 = vector.load %arg6[%c0_23, %c0_24, %c0_25] : memref<1x2x128xf32, #tpu.memory_space<vmem>>, vector<1x2x128xf32>
    %37 = vector.shape_cast %36 : vector<1x2x128xf32> to vector<2x128xf32>
    %38 = vector.shape_cast %35 : vector<2x128xf32> to vector<1x2x128xf32>
    tpu.vector_store %arg6[%c0_23, %c0_24, %c0_25], %38 {strides = array<i32>} : memref<1x2x128xf32, #tpu.memory_space<vmem>>, vector<1x2x128xf32>,
    return
  }
  func.func @transform_0(%arg0: i32, %arg1: i32) -> (i32, i32, i32, i32, i32) {
    %c0_i32 = arith.constant 0 : i32
    %c0_i32_0 = arith.constant 0 : i32
    %c0_i32_1 = arith.constant 0 : i32
    %c0_i32_2 = arith.constant 0 : i32
    return %arg0, %arg1, %c0_i32, %c0_i32_0, %c0_i32_1 : i32, i32, i32, i32, i32
  }
  func.func @transform_1(%arg0: i32, %arg1: i32) -> (i32, i32) {
    %c0_i32 = arith.constant 0 : i32
    %c0_i32_0 = arith.constant 0 : i32
    %c0_i32_1 = arith.constant 0 : i32
    return %c0_i32, %c0_i32_0 : i32, i32
  }
  func.func @transform_2(%arg0: i32, %arg1: i32) -> (i32, i32) {
    %c0_i32 = arith.constant 0 : i32
    %c0_i32_0 = arith.constant 0 : i32
    %c0_i32_1 = arith.constant 0 : i32
    return %c0_i32, %c0_i32_0 : i32, i32
  }
  func.func @transform_3(%arg0: i32, %arg1: i32) -> (i32, i32, i32) {
    %c0_i32 = arith.constant 0 : i32
    %c0_i32_0 = arith.constant 0 : i32
    return %arg0, %arg1, %c0_i32 : i32, i32, i32
  }
  func.func @transform_4(%arg0: i32, %arg1: i32) -> (i32, i32, i32) {
    %c0_i32 = arith.constant 0 : i32
    %c0_i32_0 = arith.constant 0 : i32
    %c0_i32_1 = arith.constant 0 : i32
    return %arg0, %c0_i32, %c0_i32_0 : i32, i32, i32
  }
}

</mosaic_0001>

<llo_original>
// kernel: tile.8
$region0: #{tile.8}
  #allocation0 [shape = 's32[1]{0}', space=sflag, size = 0x4, scoped, tag = 'scoped memory for tile.8']
  %s0 = inlined_call_operand.vmem [shape: f32[4], index: 0, kind: input, shape index: {}]
  %s1 = inlined_call_operand.vmem [shape: f32[4,4], index: 1, kind: output, shape index: {}]
  // Predicated region
  $region2: #{tile.8} parent=0 // pred_check
    _
  $region3: #{tile.8} parent=0 // pred_check_branch
    %3 = sbr.rel (0) target = $region5
  $region4: #{tile.8} parent=0 // pred_region
    _
  $region5: #{tile.8} parent=0 // pred_fallthru
    _
  %v4 = vld [vmem:[%s0] ss:$0 sm:$0xff]
  %5 = vst [vmem:[%s1] sm:$0xf] %v4

// kernel: tile.9
$region0: #{tile.9}
  %s0 = inlined_call_operand.vmem [shape: f32[4,4], index: 0, kind: input, shape index: {}]
  %s1 = inlined_call_operand.vmem [shape: f32[1,16], index: 1, kind: output, shape index: {}]
  $region1: #{tile.9} parent=0
    #allocation0 [shape = 'u8[4096]{0}', space=vmem, size = 0x1000, scoped, tag = 'scoped mem for output reshape']
    #allocation1 [shape = 'u8[4096]{0}', space=vmem, size = 0x1000, scoped, tag = 'scoped mem for input reshape']
    %s3 = ssub.s32 16, 1
    %v4 = vld [vmem:[%s0] sm:%s3]
    %5 = vst [vmem:[#allocation1] sm:%s3] %v4
    %v6 = vld [vmem:[#allocation1] sm:$0x1]
    %vm7 = vcmask 31744
    %8 = vst.msk [vmem:[#allocation0] sm:$0x1] %vm7, %v6
    %s9 = scalar_lea.vmem [#allocation1], 3
    %v10 = vld [vmem:[%s9] sm:$0x1]
    %11 = vrot.lane.b32.xlu0 %v10, 12
    %v12 = vpop.permute.xlu0 %11
    %vm13 = vcmask 130144
    %14 = vst.msk [vmem:[#allocation0] sm:$0x1] %vm13, %v12
    %s15 = scalar_lea.vmem [#allocation1], 2
    %v16 = vld [vmem:[%s15] sm:$0x1]
    %17 = vrot.lane.b32.xlu0 %v16, 8
    %v18 = vpop.permute.xlu0 %17
    %vm19 = vcmask 97344
    %20 = vst.msk [vmem:[#allocation0] sm:$0x1] %vm19, %v18
    %s21 = scalar_lea.vmem [#allocation1], 1
    %v22 = vld [vmem:[%s21] sm:$0x1]
    %23 = vrot.lane.b32.xlu0 %v22, 4
    %v24 = vpop.permute.xlu0 %23
    %vm25 = vcmask 64544
    %26 = vst.msk [vmem:[#allocation0] sm:$0x1] %vm25, %v24
    %s28 = ssub.s32 2, 1
    %v29 = vld [vmem:[#allocation0] sm:%s28]
    %s31 = ssub.s32 2, 1
    %32 = vst [vmem:[%s1] sm:%s31] %v29

// kernel: decoder_block_forward.5
$region0: #{decoder_block_forward.5}
  #allocation0 [shape = 'u32[]', space=smem, size = 0x4, offset = 0x4, fixed_abs, tag = 'smem constant byte address 0x4 - core index']
  #allocation1 [shape = 'u32[72,128]{1,0:T(1,128)}', space=vmem, size = 0x9000, scoped, tag = 'internal scratch']
  %s0 = inlined_call_operand.vmem [shape: f32[512,8], index: 0, kind: input, shape index: {}]
  %s1 = inlined_call_operand.vmem [shape: f32[8,128], index: 1, kind: input, shape index: {}]
  %s2 = inlined_call_operand.vmem [shape: f32[1,128], index: 2, kind: input, shape index: {}]
  %s3 = inlined_call_operand.vmem [shape: f32[512,128], index: 3, kind: output, shape index: {}]
  %s4 = sld [smem:[#allocation0]]
  $region22: #{decoder_block_forward.5} parent=0
    _
  %s6 = ssub.s32 1, %s4
  %s7 = scalar_select 0, %s6, %s4
  // Predicated region
  $region2: #{decoder_block_forward.5} parent=0 // pred_check
    _
  $region3: #{decoder_block_forward.5} parent=0 // pred_check_branch
    %9 = sbr.rel (0) target = $region5
  $region4: #{decoder_block_forward.5} parent=0 // pred_region
    _
  $region5: #{decoder_block_forward.5} parent=0 // pred_fallthru
    _
  // Predicated region
  $region6: #{decoder_block_forward.5} parent=0 // pred_check
    _
  $region7: #{decoder_block_forward.5} parent=0 // pred_check_branch
    %11 = sbr.rel (0) target = $region9
  $region8: #{decoder_block_forward.5} parent=0 // pred_region
    _
  $region9: #{decoder_block_forward.5} parent=0 // pred_fallthru
    _
  // Predicated region
  $region10: #{decoder_block_forward.5} parent=0 // pred_check
    _
  $region11: #{decoder_block_forward.5} parent=0 // pred_check_branch
    %13 = sbr.rel (0) target = $region13
  $region12: #{decoder_block_forward.5} parent=0 // pred_region
    _
  $region13: #{decoder_block_forward.5} parent=0 // pred_fallthru
    _
  %v14 = vld [vmem:[%s0] sm:$0xff]
  %v15 = vld [vmem:[%s0 + $0x8] sm:$0xff]
  %v16 = vld [vmem:[%s0 + $0x10] sm:$0xff]
  %v17 = vld [vmem:[%s0 + $0x18] sm:$0xff]
  %v18 = vld [vmem:[%s0 + $0x20] sm:$0xff]
  %v19 = vld [vmem:[%s0 + $0x28] sm:$0xff]
  %v20 = vld [vmem:[%s0 + $0x30] sm:$0xff]
  %v21 = vld [vmem:[%s0 + $0x38] sm:$0xff]
  %v22 = vld [vmem:[%s0 + $0x40] sm:$0xff]
  %v23 = vld [vmem:[%s0 + $0x48] sm:$0xff]
  %v24 = vld [vmem:[%s0 + $0x50] sm:$0xff]
  %v25 = vld [vmem:[%s0 + $0x58] sm:$0xff]
  %v26 = vld [vmem:[%s0 + $0x60] sm:$0xff]
  %v27 = vld [vmem:[%s0 + $0x68] sm:$0xff]
  %v28 = vld [vmem:[%s0 + $0x70] sm:$0xff]
  %v29 = vld [vmem:[%s0 + $0x78] sm:$0xff]
  %v30 = vld [vmem:[%s0 + $0x80] sm:$0xff]
  %v31 = vld [vmem:[%s0 + $0x88] sm:$0xff]
  %v32 = vld [vmem:[%s0 + $0x90] sm:$0xff]
  %v33 = vld [vmem:[%s0 + $0x98] sm:$0xff]
  %v34 = vld [vmem:[%s0 + $0xa0] sm:$0xff]
  %v35 = vld [vmem:[%s0 + $0xa8] sm:$0xff]
  %v36 = vld [vmem:[%s0 + $0xb0] sm:$0xff]
  %v37 = vld [vmem:[%s0 + $0xb8] sm:$0xff]
  %v38 = vld [vmem:[%s0 + $0xc0] sm:$0xff]
  %v39 = vld [vmem:[%s0 + $0xc8] sm:$0xff]
  %v40 = vld [vmem:[%s0 + $0xd0] sm:$0xff]
  %v41 = vld [vmem:[%s0 + $0xd8] sm:$0xff]
  %v42 = vld [vmem:[%s0 + $0xe0] sm:$0xff]
  %v43 = vld [vmem:[%s0 + $0xe8] sm:$0xff]
  %v44 = vld [vmem:[%s0 + $0xf0] sm:$0xff]
  %v45 = vld [vmem:[%s0 + $0xf8] sm:$0xff]
  %v46 = vld [vmem:[%s0 + $0x100] sm:$0xff]
  %v47 = vld [vmem:[%s0 + $0x108] sm:$0xff]
  %v48 = vld [vmem:[%s0 + $0x110] sm:$0xff]
  %v49 = vld [vmem:[%s0 + $0x118] sm:$0xff]
  %v50 = vld [vmem:[%s0 + $0x120] sm:$0xff]
  %v51 = vld [vmem:[%s0 + $0x128] sm:$0xff]
  %v52 = vld [vmem:[%s0 + $0x130] sm:$0xff]
  %v53 = vld [vmem:[%s0 + $0x138] sm:$0xff]
  %v54 = vld [vmem:[%s0 + $0x140] sm:$0xff]
  %v55 = vld [vmem:[%s0 + $0x148] sm:$0xff]
  %v56 = vld [vmem:[%s0 + $0x150] sm:$0xff]
  %v57 = vld [vmem:[%s0 + $0x158] sm:$0xff]
  %v58 = vld [vmem:[%s0 + $0x160] sm:$0xff]
  %v59 = vld [vmem:[%s0 + $0x168] sm:$0xff]
  %v60 = vld [vmem:[%s0 + $0x170] sm:$0xff]
  %v61 = vld [vmem:[%s0 + $0x178] sm:$0xff]
  %v62 = vld [vmem:[%s0 + $0x180] sm:$0xff]
  %v63 = vld [vmem:[%s0 + $0x188] sm:$0xff]
  %v64 = vld [vmem:[%s0 + $0x190] sm:$0xff]
  %v65 = vld [vmem:[%s0 + $0x198] sm:$0xff]
  %v66 = vld [vmem:[%s0 + $0x1a0] sm:$0xff]
  %v67 = vld [vmem:[%s0 + $0x1a8] sm:$0xff]
  %v68 = vld [vmem:[%s0 + $0x1b0] sm:$0xff]
  %v69 = vld [vmem:[%s0 + $0x1b8] sm:$0xff]
  %v70 = vld [vmem:[%s0 + $0x1c0] sm:$0xff]
  %v71 = vld [vmem:[%s0 + $0x1c8] sm:$0xff]
  %v72 = vld [vmem:[%s0 + $0x1d0] sm:$0xff]
  %v73 = vld [vmem:[%s0 + $0x1d8] sm:$0xff]
  %v74 = vld [vmem:[%s0 + $0x1e0] sm:$0xff]
  %v75 = vld [vmem:[%s0 + $0x1e8] sm:$0xff]
  %v76 = vld [vmem:[%s0 + $0x1f0] sm:$0xff]
  %v77 = vld [vmem:[%s0 + $0x1f8] sm:$0xff]
  %v78 = vld [vmem:[%s1] sm:$0xff]
  %v79 = vld [vmem:[%s2] sm:$0x1]
  %v81 = vperm.slane %v79, 0
  %vm83 = vcmask 64512
  %v85 = vsel %vm83, %v14, 0
  %v88 = vsel %vm83, %v15, 0
  %v91 = vsel %vm83, %v16, 0
  %v94 = vsel %vm83, %v17, 0
  %v97 = vsel %vm83, %v18, 0
  %v100 = vsel %vm83, %v19, 0
  %v103 = vsel %vm83, %v20, 0
  %v106 = vsel %vm83, %v21, 0
  %v109 = vsel %vm83, %v22, 0
  %v112 = vsel %vm83, %v23, 0
  %v115 = vsel %vm83, %v24, 0
  %v118 = vsel %vm83, %v25, 0
  %v121 = vsel %vm83, %v26, 0
  %v124 = vsel %vm83, %v27, 0
  %v127 = vsel %vm83, %v28, 0
  %v130 = vsel %vm83, %v29, 0
  %v133 = vsel %vm83, %v30, 0
  %v136 = vsel %vm83, %v31, 0
  %v139 = vsel %vm83, %v32, 0
  %v142 = vsel %vm83, %v33, 0
  %v145 = vsel %vm83, %v34, 0
  %v148 = vsel %vm83, %v35, 0
  %v151 = vsel %vm83, %v36, 0
  %v154 = vsel %vm83, %v37, 0
  %v157 = vsel %vm83, %v38, 0
  %v160 = vsel %vm83, %v39, 0
  %v163 = vsel %vm83, %v40, 0
  %v166 = vsel %vm83, %v41, 0
  %v169 = vsel %vm83, %v42, 0
  %v172 = vsel %vm83, %v43, 0
  %v175 = vsel %vm83, %v44, 0
  %v178 = vsel %vm83, %v45, 0
  %v181 = vsel %vm83, %v46, 0
  %v184 = vsel %vm83, %v47, 0
  %v187 = vsel %vm83, %v48, 0
  %v190 = vsel %vm83, %v49, 0
  %v193 = vsel %vm83, %v50, 0
  %v196 = vsel %vm83, %v51, 0
  %v199 = vsel %vm83, %v52, 0
  %v202 = vsel %vm83, %v53, 0
  %v205 = vsel %vm83, %v54, 0
  %v208 = vsel %vm83, %v55, 0
  %v211 = vsel %vm83, %v56, 0
  %v214 = vsel %vm83, %v57, 0
  %v217 = vsel %vm83, %v58, 0
  %v220 = vsel %vm83, %v59, 0
  %v223 = vsel %vm83, %v60, 0
  %v226 = vsel %vm83, %v61, 0
  %v229 = vsel %vm83, %v62, 0
  %v232 = vsel %vm83, %v63, 0
  %v235 = vsel %vm83, %v64, 0
  %v238 = vsel %vm83, %v65, 0
  %v241 = vsel %vm83, %v66, 0
  %v244 = vsel %vm83, %v67, 0
  %v247 = vsel %vm83, %v68, 0
  %v250 = vsel %vm83, %v69, 0
  %v253 = vsel %vm83, %v70, 0
  %v256 = vsel %vm83, %v71, 0
  %v259 = vsel %vm83, %v72, 0
  %v262 = vsel %vm83, %v73, 0
  %v265 = vsel %vm83, %v74, 0
  %v268 = vsel %vm83, %v75, 0
  %v271 = vsel %vm83, %v76, 0
  %v274 = vsel %vm83, %v77, 0
  %276 = vmatpush.msra.mxu0 0.0
  %277 = vmatpush.msra.mxu0 0.0
  %278 = vmatpush.msra.mxu0 0.0
  %279 = vmatpush.msra.mxu0 0.0
  %280 = vmatpush.msra.mxu0 0.0
  %281 = vmatpush.msra.mxu0 0.0
  %282 = vmatpush.msra.mxu0 0.0
  %283 = vmatpush.msra.mxu0 0.0
  %284 = vmatpush.msra.mxu0 0.0
  %285 = vmatpush.msra.mxu0 0.0
  %286 = vmatpush.msra.mxu0 0.0
  %287 = vmatpush.msra.mxu0 0.0
  %288 = vmatpush.msra.mxu0 0.0
  %289 = vmatpush.msra.mxu0 0.0
  %290 = vmatpush.msra.mxu0 0.0
  %291 = vmatpush.msra.mxu0 %v78
  %292 = vmatmul.f32.gmra.mxu0 %v85
  %v293 = vpop.f32.mrf.mxu0
  %v294 = vadd.f32 %v81, %v293
  %295 = vmatmul.f32.gmra.mxu0 %v88
  %v296 = vpop.f32.mrf.mxu0
  %v297 = vadd.f32 %v81, %v296
  %298 = vmatmul.f32.gmra.mxu0 %v91
  %v299 = vpop.f32.mrf.mxu0
  %v300 = vadd.f32 %v81, %v299
  %301 = vmatmul.f32.gmra.mxu0 %v94
  %v302 = vpop.f32.mrf.mxu0
  %v303 = vadd.f32 %v81, %v302
  %304 = vmatmul.f32.gmra.mxu0 %v97
  %v305 = vpop.f32.mrf.mxu0
  %v306 = vadd.f32 %v81, %v305
  %307 = vmatmul.f32.gmra.mxu0 %v100
  %v308 = vpop.f32.mrf.mxu0
  %v309 = vadd.f32 %v81, %v308
  %310 = vmatmul.f32.gmra.mxu0 %v103
  %v311 = vpop.f32.mrf.mxu0
  %v312 = vadd.f32 %v81, %v311
  %313 = vmatmul.f32.gmra.mxu0 %v106
  %v314 = vpop.f32.mrf.mxu0
  %v315 = vadd.f32 %v81, %v314
  %316 = vmatmul.f32.gmra.mxu0 %v109
  %v317 = vpop.f32.mrf.mxu0
  %v318 = vadd.f32 %v81, %v317
  %319 = vmatmul.f32.gmra.mxu0 %v112
  %v320 = vpop.f32.mrf.mxu0
  %v321 = vadd.f32 %v81, %v320
  %322 = vmatmul.f32.gmra.mxu0 %v115
  %v323 = vpop.f32.mrf.mxu0
  %v324 = vadd.f32 %v81, %v323
  %325 = vmatmul.f32.gmra.mxu0 %v118
  %v326 = vpop.f32.mrf.mxu0
  %v327 = vadd.f32 %v81, %v326
  %328 = vmatmul.f32.gmra.mxu0 %v121
  %v329 = vpop.f32.mrf.mxu0
  %v330 = vadd.f32 %v81, %v329
  %331 = vmatmul.f32.gmra.mxu0 %v124
  %v332 = vpop.f32.mrf.mxu0
  %v333 = vadd.f32 %v81, %v332
  %334 = vmatmul.f32.gmra.mxu0 %v127
  %v335 = vpop.f32.mrf.mxu0
  %v336 = vadd.f32 %v81, %v335
  %337 = vmatmul.f32.gmra.mxu0 %v130
  %v338 = vpop.f32.mrf.mxu0
  %v339 = vadd.f32 %v81, %v338
  %340 = vmatmul.f32.gmra.mxu0 %v133
  %v341 = vpop.f32.mrf.mxu0
  %v342 = vadd.f32 %v81, %v341
  %343 = vmatmul.f32.gmra.mxu0 %v136
  %v344 = vpop.f32.mrf.mxu0
  %v345 = vadd.f32 %v81, %v344
  %346 = vmatmul.f32.gmra.mxu0 %v139
  %v347 = vpop.f32.mrf.mxu0
  %v348 = vadd.f32 %v81, %v347
  %349 = vmatmul.f32.gmra.mxu0 %v142
  %v350 = vpop.f32.mrf.mxu0
  %v351 = vadd.f32 %v81, %v350
  %352 = vmatmul.f32.gmra.mxu0 %v145
  %v353 = vpop.f32.mrf.mxu0
  %v354 = vadd.f32 %v81, %v353
  %355 = vmatmul.f32.gmra.mxu0 %v148
  %v356 = vpop.f32.mrf.mxu0
  %v357 = vadd.f32 %v81, %v356
  %358 = vmatmul.f32.gmra.mxu0 %v151
  %v359 = vpop.f32.mrf.mxu0
  %v360 = vadd.f32 %v81, %v359
  %361 = vmatmul.f32.gmra.mxu0 %v154
  %v362 = vpop.f32.mrf.mxu0
  %v363 = vadd.f32 %v81, %v362
  %364 = vmatmul.f32.gmra.mxu0 %v157
  %v365 = vpop.f32.mrf.mxu0
  %v366 = vadd.f32 %v81, %v365
  %367 = vmatmul.f32.gmra.mxu0 %v160
  %v368 = vpop.f32.mrf.mxu0
  %v369 = vadd.f32 %v81, %v368
  %370 = vmatmul.f32.gmra.mxu0 %v163
  %v371 = vpop.f32.mrf.mxu0
  %v372 = vadd.f32 %v81, %v371
  %373 = vmatmul.f32.gmra.mxu0 %v166
  %v374 = vpop.f32.mrf.mxu0
  %v375 = vadd.f32 %v81, %v374
  %376 = vmatmul.f32.gmra.mxu0 %v169
  %v377 = vpop.f32.mrf.mxu0
  %v378 = vadd.f32 %v81, %v377
  %379 = vmatmul.f32.gmra.mxu0 %v172
  %v380 = vpop.f32.mrf.mxu0
  %v381 = vadd.f32 %v81, %v380
  %382 = vmatmul.f32.gmra.mxu0 %v175
  %v383 = vpop.f32.mrf.mxu0
  %v384 = vadd.f32 %v81, %v383
  %385 = vmatmul.f32.gmra.mxu0 %v178
  %v386 = vpop.f32.mrf.mxu0
  %v387 = vadd.f32 %v81, %v386
  %388 = vmatmul.f32.gmra.mxu0 %v181
  %v389 = vpop.f32.mrf.mxu0
  %v390 = vadd.f32 %v81, %v389
  %391 = vmatmul.f32.gmra.mxu0 %v184
  %v392 = vpop.f32.mrf.mxu0
  %v393 = vadd.f32 %v81, %v392
  %394 = vmatmul.f32.gmra.mxu0 %v187
  %v395 = vpop.f32.mrf.mxu0
  %v396 = vadd.f32 %v81, %v395
  %397 = vmatmul.f32.gmra.mxu0 %v190
  %v398 = vpop.f32.mrf.mxu0
  %v399 = vadd.f32 %v81, %v398
  %400 = vmatmul.f32.gmra.mxu0 %v193
  %v401 = vpop.f32.mrf.mxu0
  %v402 = vadd.f32 %v81, %v401
  %403 = vmatmul.f32.gmra.mxu0 %v196
  %v404 = vpop.f32.mrf.mxu0
  %v405 = vadd.f32 %v81, %v404
  %406 = vmatmul.f32.gmra.mxu0 %v199
  %v407 = vpop.f32.mrf.mxu0
  %v408 = vadd.f32 %v81, %v407
  %409 = vmatmul.f32.gmra.mxu0 %v202
  %v410 = vpop.f32.mrf.mxu0
  %v411 = vadd.f32 %v81, %v410
  %412 = vmatmul.f32.gmra.mxu0 %v205
  %v413 = vpop.f32.mrf.mxu0
  %v414 = vadd.f32 %v81, %v413
  %415 = vmatmul.f32.gmra.mxu0 %v208
  %v416 = vpop.f32.mrf.mxu0
  %v417 = vadd.f32 %v81, %v416
  %418 = vmatmul.f32.gmra.mxu0 %v211
  %v419 = vpop.f32.mrf.mxu0
  %v420 = vadd.f32 %v81, %v419
  %421 = vmatmul.f32.gmra.mxu0 %v214
  %v422 = vpop.f32.mrf.mxu0
  %v423 = vadd.f32 %v81, %v422
  %424 = vmatmul.f32.gmra.mxu0 %v217
  %v425 = vpop.f32.mrf.mxu0
  %v426 = vadd.f32 %v81, %v425
  %427 = vmatmul.f32.gmra.mxu0 %v220
  %v428 = vpop.f32.mrf.mxu0
  %v429 = vadd.f32 %v81, %v428
  %430 = vmatmul.f32.gmra.mxu0 %v223
  %v431 = vpop.f32.mrf.mxu0
  %v432 = vadd.f32 %v81, %v431
  %433 = vmatmul.f32.gmra.mxu0 %v226
  %v434 = vpop.f32.mrf.mxu0
  %v435 = vadd.f32 %v81, %v434
  %436 = vmatmul.f32.gmra.mxu0 %v229
  %v437 = vpop.f32.mrf.mxu0
  %v438 = vadd.f32 %v81, %v437
  %439 = vmatmul.f32.gmra.mxu0 %v232
  %v440 = vpop.f32.mrf.mxu0
  %v441 = vadd.f32 %v81, %v440
  %442 = vmatmul.f32.gmra.mxu0 %v235
  %v443 = vpop.f32.mrf.mxu0
  %v444 = vadd.f32 %v81, %v443
  %445 = vmatmul.f32.gmra.mxu0 %v238
  %v446 = vpop.f32.mrf.mxu0
  %v447 = vadd.f32 %v81, %v446
  %448 = vmatmul.f32.gmra.mxu0 %v241
  %v449 = vpop.f32.mrf.mxu0
  %v450 = vadd.f32 %v81, %v449
  %451 = vmatmul.f32.gmra.mxu0 %v244
  %v452 = vpop.f32.mrf.mxu0
  %v453 = vadd.f32 %v81, %v452
  %454 = vmatmul.f32.gmra.mxu0 %v247
  %v455 = vpop.f32.mrf.mxu0
  %v456 = vadd.f32 %v81, %v455
  %457 = vmatmul.f32.gmra.mxu0 %v250
  %v458 = vpop.f32.mrf.mxu0
  %v459 = vadd.f32 %v81, %v458
  %460 = vmatmul.f32.gmra.mxu0 %v253
  %v461 = vpop.f32.mrf.mxu0
  %v462 = vadd.f32 %v81, %v461
  %463 = vmatmul.f32.gmra.mxu0 %v256
  %v464 = vpop.f32.mrf.mxu0
  %v465 = vadd.f32 %v81, %v464
  %466 = vmatmul.f32.gmra.mxu0 %v259
  %v467 = vpop.f32.mrf.mxu0
  %v468 = vadd.f32 %v81, %v467
  %469 = vmatmul.f32.gmra.mxu0 %v262
  %v470 = vpop.f32.mrf.mxu0
  %v471 = vadd.f32 %v81, %v470
  %472 = vmatmul.f32.gmra.mxu0 %v265
  %v473 = vpop.f32.mrf.mxu0
  %v474 = vadd.f32 %v81, %v473
  %475 = vmatmul.f32.gmra.mxu0 %v268
  %v476 = vpop.f32.mrf.mxu0
  %v477 = vadd.f32 %v81, %v476
  %478 = vmatmul.f32.gmra.mxu0 %v271
  %v479 = vpop.f32.mrf.mxu0
  %v480 = vadd.f32 %v81, %v479
  %481 = vmatmul.f32.gmra.mxu0 %v274
  %v482 = vpop.f32.mrf.mxu0
  %v483 = vadd.f32 %v81, %v482
  %484 = vdwg.mxu0
  %485 = vst [vmem:[%s3] sm:$0xff] %v294
  %486 = vst [vmem:[%s3 + $0x8] sm:$0xff] %v297
  %487 = vst [vmem:[%s3 + $0x10] sm:$0xff] %v300
  %488 = vst [vmem:[%s3 + $0x18] sm:$0xff] %v303
  %489 = vst [vmem:[%s3 + $0x20] sm:$0xff] %v306
  %490 = vst [vmem:[%s3 + $0x28] sm:$0xff] %v309
  %491 = vst [vmem:[%s3 + $0x30] sm:$0xff] %v312
  %492 = vst [vmem:[%s3 + $0x38] sm:$0xff] %v315
  %493 = vst [vmem:[%s3 + $0x40] sm:$0xff] %v318
  %494 = vst [vmem:[%s3 + $0x48] sm:$0xff] %v321
  %495 = vst [vmem:[%s3 + $0x50] sm:$0xff] %v324
  %496 = vst [vmem:[%s3 + $0x58] sm:$0xff] %v327
  %497 = vst [vmem:[%s3 + $0x60] sm:$0xff] %v330
  %498 = vst [vmem:[%s3 + $0x68] sm:$0xff] %v333
  %499 = vst [vmem:[%s3 + $0x70] sm:$0xff] %v336
  %500 = vst [vmem:[%s3 + $0x78] sm:$0xff] %v339
  %501 = vst [vmem:[%s3 + $0x80] sm:$0xff] %v342
  %502 = vst [vmem:[%s3 + $0x88] sm:$0xff] %v345
  %503 = vst [vmem:[%s3 + $0x90] sm:$0xff] %v348
  %504 = vst [vmem:[%s3 + $0x98] sm:$0xff] %v351
  %505 = vst [vmem:[%s3 + $0xa0] sm:$0xff] %v354
  %506 = vst [vmem:[%s3 + $0xa8] sm:$0xff] %v357
  %507 = vst [vmem:[%s3 + $0xb0] sm:$0xff] %v360
  %508 = vst [vmem:[%s3 + $0xb8] sm:$0xff] %v363
  %509 = vst [vmem:[%s3 + $0xc0] sm:$0xff] %v366
  %510 = vst [vmem:[%s3 + $0xc8] sm:$0xff] %v369
  %511 = vst [vmem:[%s3 + $0xd0] sm:$0xff] %v372
  %512 = vst [vmem:[%s3 + $0xd8] sm:$0xff] %v375
  %513 = vst [vmem:[%s3 + $0xe0] sm:$0xff] %v378
  %514 = vst [vmem:[%s3 + $0xe8] sm:$0xff] %v381
  %515 = vst [vmem:[%s3 + $0xf0] sm:$0xff] %v384
  %516 = vst [vmem:[%s3 + $0xf8] sm:$0xff] %v387
  %517 = vst [vmem:[%s3 + $0x100] sm:$0xff] %v390
  %518 = vst [vmem:[%s3 + $0x108] sm:$0xff] %v393
  %519 = vst [vmem:[%s3 + $0x110] sm:$0xff] %v396
  %520 = vst [vmem:[%s3 + $0x118] sm:$0xff] %v399
  %521 = vst [vmem:[%s3 + $0x120] sm:$0xff] %v402
  %522 = vst [vmem:[%s3 + $0x128] sm:$0xff] %v405
  %523 = vst [vmem:[%s3 + $0x130] sm:$0xff] %v408
  %524 = vst [vmem:[%s3 + $0x138] sm:$0xff] %v411
  %525 = vst [vmem:[%s3 + $0x140] sm:$0xff] %v414
  %526 = vst [vmem:[%s3 + $0x148] sm:$0xff] %v417
  %527 = vst [vmem:[%s3 + $0x150] sm:$0xff] %v420
  %528 = vst [vmem:[%s3 + $0x158] sm:$0xff] %v423
  %529 = vst [vmem:[%s3 + $0x160] sm:$0xff] %v426
  %530 = vst [vmem:[%s3 + $0x168] sm:$0xff] %v429
  %531 = vst [vmem:[%s3 + $0x170] sm:$0xff] %v432
  %532 = vst [vmem:[%s3 + $0x178] sm:$0xff] %v435
  %533 = vst [vmem:[%s3 + $0x180] sm:$0xff] %v438
  %534 = vst [vmem:[%s3 + $0x188] sm:$0xff] %v441
  %535 = vst [vmem:[%s3 + $0x190] sm:$0xff] %v444
  %536 = vst [vmem:[%s3 + $0x198] sm:$0xff] %v447
  %537 = vst [vmem:[%s3 + $0x1a0] sm:$0xff] %v450
  %538 = vst [vmem:[%s3 + $0x1a8] sm:$0xff] %v453
  %539 = vst [vmem:[%s3 + $0x1b0] sm:$0xff] %v456
  %540 = vst [vmem:[%s3 + $0x1b8] sm:$0xff] %v459
  %541 = vst [vmem:[%s3 + $0x1c0] sm:$0xff] %v462
  %542 = vst [vmem:[%s3 + $0x1c8] sm:$0xff] %v465
  %543 = vst [vmem:[%s3 + $0x1d0] sm:$0xff] %v468
  %544 = vst [vmem:[%s3 + $0x1d8] sm:$0xff] %v471
  %545 = vst [vmem:[%s3 + $0x1e0] sm:$0xff] %v474
  %546 = vst [vmem:[%s3 + $0x1e8] sm:$0xff] %v477
  %547 = vst [vmem:[%s3 + $0x1f0] sm:$0xff] %v480
  %548 = vst [vmem:[%s3 + $0x1f8] sm:$0xff] %v483
  // Predicated region
  $region14: #{decoder_block_forward.5} parent=0 // pred_check
    _
  $region15: #{decoder_block_forward.5} parent=0 // pred_check_branch
    %550 = sbr.rel (0) target = $region17
  $region16: #{decoder_block_forward.5} parent=0 // pred_region
    _
  $region17: #{decoder_block_forward.5} parent=0 // pred_fallthru
    _
  // Predicated region
  $region18: #{decoder_block_forward.5} parent=0 // pred_check
    _
  $region19: #{decoder_block_forward.5} parent=0 // pred_check_branch
    %552 = sbr.rel (0) target = $region21
  $region20: #{decoder_block_forward.5} parent=0 // pred_region
    _
  $region21: #{decoder_block_forward.5} parent=0 // pred_fallthru
    _

// kernel: decoder_block_forward.7
$region0: #{decoder_block_forward.7}
  #allocation0 [shape = 'u32[]', space=smem, size = 0x4, offset = 0x4, fixed_abs, tag = 'smem constant byte address 0x4 - core index']
  #allocation1 [shape = 'u32[72,128]{1,0:T(1,128)}', space=vmem, size = 0x9000, scoped, tag = 'internal scratch']
  %s0 = inlined_call_operand.vmem [shape: f32[2048,128], index: 0, kind: input, shape index: {}, may-alias: {0,3}]
  %s1 = inlined_call_operand.vmem [shape: f32[1,128], index: 1, kind: input, shape index: {}]
  %s2 = inlined_call_operand.vmem [shape: f32[1,128], index: 2, kind: input, shape index: {}]
  %s3 = inlined_call_operand.vmem [shape: f32[2048,128], index: 3, kind: output, shape index: {}, may-alias: {0,3}]
  %s4 = sld [smem:[#allocation0]]
  $region22: #{decoder_block_forward.7} parent=0
    _
  %s6 = ssub.s32 1, %s4
  %s7 = scalar_select 0, %s6, %s4
  // Predicated region
  $region2: #{decoder_block_forward.7} parent=0 // pred_check
    _
  $region3: #{decoder_block_forward.7} parent=0 // pred_check_branch
    %9 = sbr.rel (0) target = $region5
  $region4: #{decoder_block_forward.7} parent=0 // pred_region
    _
  $region5: #{decoder_block_forward.7} parent=0 // pred_fallthru
    _
  // Predicated region
  $region6: #{decoder_block_forward.7} parent=0 // pred_check
    _
  $region7: #{decoder_block_forward.7} parent=0 // pred_check_branch
    %11 = sbr.rel (0) target = $region9
  $region8: #{decoder_block_forward.7} parent=0 // pred_region
    _
  $region9: #{decoder_block_forward.7} parent=0 // pred_fallthru
    _
  // Predicated region
  $region10: #{decoder_block_forward.7} parent=0 // pred_check
    _
  $region11: #{decoder_block_forward.7} parent=0 // pred_check_branch
    %13 = sbr.rel (0) target = $region13
  $region12: #{decoder_block_forward.7} parent=0 // pred_region
    _
  $region13: #{decoder_block_forward.7} parent=0 // pred_fallthru
    _
  %v14 = vld [vmem:[%s0] sm:$0xff]
  %v15 = vld [vmem:[%s0 + $0x8] sm:$0xff]
  %v16 = vld [vmem:[%s0 + $0x10] sm:$0xff]
  %v17 = vld [vmem:[%s0 + $0x18] sm:$0xff]
  %v18 = vld [vmem:[%s0 + $0x20] sm:$0xff]
  %v19 = vld [vmem:[%s0 + $0x28] sm:$0xff]
  %v20 = vld [vmem:[%s0 + $0x30] sm:$0xff]
  %v21 = vld [vmem:[%s0 + $0x38] sm:$0xff]
  %v22 = vld [vmem:[%s0 + $0x40] sm:$0xff]
  %v23 = vld [vmem:[%s0 + $0x48] sm:$0xff]
  %v24 = vld [vmem:[%s0 + $0x50] sm:$0xff]
  %v25 = vld [vmem:[%s0 + $0x58] sm:$0xff]
  %v26 = vld [vmem:[%s0 + $0x60] sm:$0xff]
  %v27 = vld [vmem:[%s0 + $0x68] sm:$0xff]
  %v28 = vld [vmem:[%s0 + $0x70] sm:$0xff]
  %v29 = vld [vmem:[%s0 + $0x78] sm:$0xff]
  %v30 = vld [vmem:[%s0 + $0x80] sm:$0xff]
  %v31 = vld [vmem:[%s0 + $0x88] sm:$0xff]
  %v32 = vld [vmem:[%s0 + $0x90] sm:$0xff]
  %v33 = vld [vmem:[%s0 + $0x98] sm:$0xff]
  %v34 = vld [vmem:[%s0 + $0xa0] sm:$0xff]
  %v35 = vld [vmem:[%s0 + $0xa8] sm:$0xff]
  %v36 = vld [vmem:[%s0 + $0xb0] sm:$0xff]
  %v37 = vld [vmem:[%s0 + $0xb8] sm:$0xff]
  %v38 = vld [vmem:[%s0 + $0xc0] sm:$0xff]
  %v39 = vld [vmem:[%s0 + $0xc8] sm:$0xff]
  %v40 = vld [vmem:[%s0 + $0xd0] sm:$0xff]
  %v41 = vld [vmem:[%s0 + $0xd8] sm:$0xff]
  %v42 = vld [vmem:[%s0 + $0xe0] sm:$0xff]
  %v43 = vld [vmem:[%s0 + $0xe8] sm:$0xff]
  %v44 = vld [vmem:[%s0 + $0xf0] sm:$0xff]
  %v45 = vld [vmem:[%s0 + $0xf8] sm:$0xff]
  %v46 = vld [vmem:[%s0 + $0x100] sm:$0xff]
  %v47 = vld [vmem:[%s0 + $0x108] sm:$0xff]
  %v48 = vld [vmem:[%s0 + $0x110] sm:$0xff]
  %v49 = vld [vmem:[%s0 + $0x118] sm:$0xff]
  %v50 = vld [vmem:[%s0 + $0x120] sm:$0xff]
  %v51 = vld [vmem:[%s0 + $0x128] sm:$0xff]
  %v52 = vld [vmem:[%s0 + $0x130] sm:$0xff]
  %v53 = vld [vmem:[%s0 + $0x138] sm:$0xff]
  %v54 = vld [vmem:[%s0 + $0x140] sm:$0xff]
  %v55 = vld [vmem:[%s0 + $0x148] sm:$0xff]
  %v56 = vld [vmem:[%s0 + $0x150] sm:$0xff]
  %v57 = vld [vmem:[%s0 + $0x158] sm:$0xff]
  %v58 = vld [vmem:[%s0 + $0x160] sm:$0xff]
  %v59 = vld [vmem:[%s0 + $0x168] sm:$0xff]
  %v60 = vld [vmem:[%s0 + $0x170] sm:$0xff]
  %v61 = vld [vmem:[%s0 + $0x178] sm:$0xff]
  %v62 = vld [vmem:[%s0 + $0x180] sm:$0xff]
  %v63 = vld [vmem:[%s0 + $0x188] sm:$0xff]
  %v64 = vld [vmem:[%s0 + $0x190] sm:$0xff]
  %v65 = vld [vmem:[%s0 + $0x198] sm:$0xff]
  %v66 = vld [vmem:[%s0 + $0x1a0] sm:$0xff]
  %v67 = vld [vmem:[%s0 + $0x1a8] sm:$0xff]
  %v68 = vld [vmem:[%s0 + $0x1b0] sm:$0xff]
  %v69 = vld [vmem:[%s0 + $0x1b8] sm:$0xff]
  %v70 = vld [vmem:[%s0 + $0x1c0] sm:$0xff]
  %v71 = vld [vmem:[%s0 + $0x1c8] sm:$0xff]
  %v72 = vld [vmem:[%s0 + $0x1d0] sm:$0xff]
  %v73 = vld [vmem:[%s0 + $0x1d8] sm:$0xff]
  %v74 = vld [vmem:[%s0 + $0x1e0] sm:$0xff]
  %v75 = vld [vmem:[%s0 + $0x1e8] sm:$0xff]
  %v76 = vld [vmem:[%s0 + $0x1f0] sm:$0xff]
  %v77 = vld [vmem:[%s0 + $0x1f8] sm:$0xff]
  %v78 = vld [vmem:[%s0 + $0x200] sm:$0xff]
  %v79 = vld [vmem:[%s0 + $0x208] sm:$0xff]
  %v80 = vld [vmem:[%s0 + $0x210] sm:$0xff]
  %v81 = vld [vmem:[%s0 + $0x218] sm:$0xff]
  %v82 = vld [vmem:[%s0 + $0x220] sm:$0xff]
  %v83 = vld [vmem:[%s0 + $0x228] sm:$0xff]
  %v84 = vld [vmem:[%s0 + $0x230] sm:$0xff]
  %v85 = vld [vmem:[%s0 + $0x238] sm:$0xff]
  %v86 = vld [vmem:[%s0 + $0x240] sm:$0xff]
  %v87 = vld [vmem:[%s0 + $0x248] sm:$0xff]
  %v88 = vld [vmem:[%s0 + $0x250] sm:$0xff]
  %v89 = vld [vmem:[%s0 + $0x258] sm:$0xff]
  %v90 = vld [vmem:[%s0 + $0x260] sm:$0xff]
  %v91 = vld [vmem:[%s0 + $0x268] sm:$0xff]
  %v92 = vld [vmem:[%s0 + $0x270] sm:$0xff]
  %v93 = vld [vmem:[%s0 + $0x278] sm:$0xff]
  %v94 = vld [vmem:[%s0 + $0x280] sm:$0xff]
  %v95 = vld [vmem:[%s0 + $0x288] sm:$0xff]
  %v96 = vld [vmem:[%s0 + $0x290] sm:$0xff]
  %v97 = vld [vmem:[%s0 + $0x298] sm:$0xff]
  %v98 = vld [vmem:[%s0 + $0x2a0] sm:$0xff]
  %v99 = vld [vmem:[%s0 + $0x2a8] sm:$0xff]
  %v100 = vld [vmem:[%s0 + $0x2b0] sm:$0xff]
  %v101 = vld [vmem:[%s0 + $0x2b8] sm:$0xff]
  %v102 = vld [vmem:[%s0 + $0x2c0] sm:$0xff]
  %v103 = vld [vmem:[%s0 + $0x2c8] sm:$0xff]
  %v104 = vld [vmem:[%s0 + $0x2d0] sm:$0xff]
  %v105 = vld [vmem:[%s0 + $0x2d8] sm:$0xff]
  %v106 = vld [vmem:[%s0 + $0x2e0] sm:$0xff]
  %v107 = vld [vmem:[%s0 + $0x2e8] sm:$0xff]
  %v108 = vld [vmem:[%s0 + $0x2f0] sm:$0xff]
  %v109 = vld [vmem:[%s0 + $0x2f8] sm:$0xff]
  %v110 = vld [vmem:[%s0 + $0x300] sm:$0xff]
  %v111 = vld [vmem:[%s0 + $0x308] sm:$0xff]
  %v112 = vld [vmem:[%s0 + $0x310] sm:$0xff]
  %v113 = vld [vmem:[%s0 + $0x318] sm:$0xff]
  %v114 = vld [vmem:[%s0 + $0x320] sm:$0xff]
  %v115 = vld [vmem:[%s0 + $0x328] sm:$0xff]
  %v116 = vld [vmem:[%s0 + $0x330] sm:$0xff]
  %v117 = vld [vmem:[%s0 + $0x338] sm:$0xff]
  %v118 = vld [vmem:[%s0 + $0x340] sm:$0xff]
  %v119 = vld [vmem:[%s0 + $0x348] sm:$0xff]
  %v120 = vld [vmem:[%s0 + $0x350] sm:$0xff]
  %v121 = vld [vmem:[%s0 + $0x358] sm:$0xff]
  %v122 = vld [vmem:[%s0 + $0x360] sm:$0xff]
  %v123 = vld [vmem:[%s0 + $0x368] sm:$0xff]
  %v124 = vld [vmem:[%s0 + $0x370] sm:$0xff]
  %v125 = vld [vmem:[%s0 + $0x378] sm:$0xff]
  %v126 = vld [vmem:[%s0 + $0x380] sm:$0xff]
  %v127 = vld [vmem:[%s0 + $0x388] sm:$0xff]
  %v128 = vld [vmem:[%s0 + $0x390] sm:$0xff]
  %v129 = vld [vmem:[%s0 + $0x398] sm:$0xff]
  %v130 = vld [vmem:[%s0 + $0x3a0] sm:$0xff]
  %v131 = vld [vmem:[%s0 + $0x3a8] sm:$0xff]
  %v132 = vld [vmem:[%s0 + $0x3b0] sm:$0xff]
  %v133 = vld [vmem:[%s0 + $0x3b8] sm:$0xff]
  %v134 = vld [vmem:[%s0 + $0x3c0] sm:$0xff]
  %v135 = vld [vmem:[%s0 + $0x3c8] sm:$0xff]
  %v136 = vld [vmem:[%s0 + $0x3d0] sm:$0xff]
  %v137 = vld [vmem:[%s0 + $0x3d8] sm:$0xff]
  %v138 = vld [vmem:[%s0 + $0x3e0] sm:$0xff]
  %v139 = vld [vmem:[%s0 + $0x3e8] sm:$0xff]
  %v140 = vld [vmem:[%s0 + $0x3f0] sm:$0xff]
  %v141 = vld [vmem:[%s0 + $0x3f8] sm:$0xff]
  %v142 = vld [vmem:[%s0 + $0x400] sm:$0xff]
  %v143 = vld [vmem:[%s0 + $0x408] sm:$0xff]
  %v144 = vld [vmem:[%s0 + $0x410] sm:$0xff]
  %v145 = vld [vmem:[%s0 + $0x418] sm:$0xff]
  %v146 = vld [vmem:[%s0 + $0x420] sm:$0xff]
  %v147 = vld [vmem:[%s0 + $0x428] sm:$0xff]
  %v148 = vld [vmem:[%s0 + $0x430] sm:$0xff]
  %v149 = vld [vmem:[%s0 + $0x438] sm:$0xff]
  %v150 = vld [vmem:[%s0 + $0x440] sm:$0xff]
  %v151 = vld [vmem:[%s0 + $0x448] sm:$0xff]
  %v152 = vld [vmem:[%s0 + $0x450] sm:$0xff]
  %v153 = vld [vmem:[%s0 + $0x458] sm:$0xff]
  %v154 = vld [vmem:[%s0 + $0x460] sm:$0xff]
  %v155 = vld [vmem:[%s0 + $0x468] sm:$0xff]
  %v156 = vld [vmem:[%s0 + $0x470] sm:$0xff]
  %v157 = vld [vmem:[%s0 + $0x478] sm:$0xff]
  %v158 = vld [vmem:[%s0 + $0x480] sm:$0xff]
  %v159 = vld [vmem:[%s0 + $0x488] sm:$0xff]
  %v160 = vld [vmem:[%s0 + $0x490] sm:$0xff]
  %v161 = vld [vmem:[%s0 + $0x498] sm:$0xff]
  %v162 = vld [vmem:[%s0 + $0x4a0] sm:$0xff]
  %v163 = vld [vmem:[%s0 + $0x4a8] sm:$0xff]
  %v164 = vld [vmem:[%s0 + $0x4b0] sm:$0xff]
  %v165 = vld [vmem:[%s0 + $0x4b8] sm:$0xff]
  %v166 = vld [vmem:[%s0 + $0x4c0] sm:$0xff]
  %v167 = vld [vmem:[%s0 + $0x4c8] sm:$0xff]
  %v168 = vld [vmem:[%s0 + $0x4d0] sm:$0xff]
  %v169 = vld [vmem:[%s0 + $0x4d8] sm:$0xff]
  %v170 = vld [vmem:[%s0 + $0x4e0] sm:$0xff]
  %v171 = vld [vmem:[%s0 + $0x4e8] sm:$0xff]
  %v172 = vld [vmem:[%s0 + $0x4f0] sm:$0xff]
  %v173 = vld [vmem:[%s0 + $0x4f8] sm:$0xff]
  %v174 = vld [vmem:[%s0 + $0x500] sm:$0xff]
  %v175 = vld [vmem:[%s0 + $0x508] sm:$0xff]
  %v176 = vld [vmem:[%s0 + $0x510] sm:$0xff]
  %v177 = vld [vmem:[%s0 + $0x518] sm:$0xff]
  %v178 = vld [vmem:[%s0 + $0x520] sm:$0xff]
  %v179 = vld [vmem:[%s0 + $0x528] sm:$0xff]
  %v180 = vld [vmem:[%s0 + $0x530] sm:$0xff]
  %v181 = vld [vmem:[%s0 + $0x538] sm:$0xff]
  %v182 = vld [vmem:[%s0 + $0x540] sm:$0xff]
  %v183 = vld [vmem:[%s0 + $0x548] sm:$0xff]
  %v184 = vld [vmem:[%s0 + $0x550] sm:$0xff]
  %v185 = vld [vmem:[%s0 + $0x558] sm:$0xff]
  %v186 = vld [vmem:[%s0 + $0x560] sm:$0xff]
  %v187 = vld [vmem:[%s0 + $0x568] sm:$0xff]
  %v188 = vld [vmem:[%s0 + $0x570] sm:$0xff]
  %v189 = vld [vmem:[%s0 + $0x578] sm:$0xff]
  %v190 = vld [vmem:[%s0 + $0x580] sm:$0xff]
  %v191 = vld [vmem:[%s0 + $0x588] sm:$0xff]
  %v192 = vld [vmem:[%s0 + $0x590] sm:$0xff]
  %v193 = vld [vmem:[%s0 + $0x598] sm:$0xff]
  %v194 = vld [vmem:[%s0 + $0x5a0] sm:$0xff]
  %v195 = vld [vmem:[%s0 + $0x5a8] sm:$0xff]
  %v196 = vld [vmem:[%s0 + $0x5b0] sm:$0xff]
  %v197 = vld [vmem:[%s0 + $0x5b8] sm:$0xff]
  %v198 = vld [vmem:[%s0 + $0x5c0] sm:$0xff]
  %v199 = vld [vmem:[%s0 + $0x5c8] sm:$0xff]
  %v200 = vld [vmem:[%s0 + $0x5d0] sm:$0xff]
  %v201 = vld [vmem:[%s0 + $0x5d8] sm:$0xff]
  %v202 = vld [vmem:[%s0 + $0x5e0] sm:$0xff]
  %v203 = vld [vmem:[%s0 + $0x5e8] sm:$0xff]
  %v204 = vld [vmem:[%s0 + $0x5f0] sm:$0xff]
  %v205 = vld [vmem:[%s0 + $0x5f8] sm:$0xff]
  %v206 = vld [vmem:[%s0 + $0x600] sm:$0xff]
  %v207 = vld [vmem:[%s0 + $0x608] sm:$0xff]
  %v208 = vld [vmem:[%s0 + $0x610] sm:$0xff]
  %v209 = vld [vmem:[%s0 + $0x618] sm:$0xff]
  %v210 = vld [vmem:[%s0 + $0x620] sm:$0xff]
  %v211 = vld [vmem:[%s0 + $0x628] sm:$0xff]
  %v212 = vld [vmem:[%s0 + $0x630] sm:$0xff]
  %v213 = vld [vmem:[%s0 + $0x638] sm:$0xff]
  %v214 = vld [vmem:[%s0 + $0x640] sm:$0xff]
  %v215 = vld [vmem:[%s0 + $0x648] sm:$0xff]
  %v216 = vld [vmem:[%s0 + $0x650] sm:$0xff]
  %v217 = vld [vmem:[%s0 + $0x658] sm:$0xff]
  %v218 = vld [vmem:[%s0 + $0x660] sm:$0xff]
  %v219 = vld [vmem:[%s0 + $0x668] sm:$0xff]
  %v220 = vld [vmem:[%s0 + $0x670] sm:$0xff]
  %v221 = vld [vmem:[%s0 + $0x678] sm:$0xff]
  %v222 = vld [vmem:[%s0 + $0x680] sm:$0xff]
  %v223 = vld [vmem:[%s0 + $0x688] sm:$0xff]
  %v224 = vld [vmem:[%s0 + $0x690] sm:$0xff]
  %v225 = vld [vmem:[%s0 + $0x698] sm:$0xff]
  %v226 = vld [vmem:[%s0 + $0x6a0] sm:$0xff]
  %v227 = vld [vmem:[%s0 + $0x6a8] sm:$0xff]
  %v228 = vld [vmem:[%s0 + $0x6b0] sm:$0xff]
  %v229 = vld [vmem:[%s0 + $0x6b8] sm:$0xff]
  %v230 = vld [vmem:[%s0 + $0x6c0] sm:$0xff]
  %v231 = vld [vmem:[%s0 + $0x6c8] sm:$0xff]
  %v232 = vld [vmem:[%s0 + $0x6d0] sm:$0xff]
  %v233 = vld [vmem:[%s0 + $0x6d8] sm:$0xff]
  %v234 = vld [vmem:[%s0 + $0x6e0] sm:$0xff]
  %v235 = vld [vmem:[%s0 + $0x6e8] sm:$0xff]
  %v236 = vld [vmem:[%s0 + $0x6f0] sm:$0xff]
  %v237 = vld [vmem:[%s0 + $0x6f8] sm:$0xff]
  %v238 = vld [vmem:[%s0 + $0x700] sm:$0xff]
  %v239 = vld [vmem:[%s0 + $0x708] sm:$0xff]
  %v240 = vld [vmem:[%s0 + $0x710] sm:$0xff]
  %v241 = vld [vmem:[%s0 + $0x718] sm:$0xff]
  %v242 = vld [vmem:[%s0 + $0x720] sm:$0xff]
  %v243 = vld [vmem:[%s0 + $0x728] sm:$0xff]
  %v244 = vld [vmem:[%s0 + $0x730] sm:$0xff]
  %v245 = vld [vmem:[%s0 + $0x738] sm:$0xff]
  %v246 = vld [vmem:[%s0 + $0x740] sm:$0xff]
  %v247 = vld [vmem:[%s0 + $0x748] sm:$0xff]
  %v248 = vld [vmem:[%s0 + $0x750] sm:$0xff]
  %v249 = vld [vmem:[%s0 + $0x758] sm:$0xff]
  %v250 = vld [vmem:[%s0 + $0x760] sm:$0xff]
  %v251 = vld [vmem:[%s0 + $0x768] sm:$0xff]
  %v252 = vld [vmem:[%s0 + $0x770] sm:$0xff]
  %v253 = vld [vmem:[%s0 + $0x778] sm:$0xff]
  %v254 = vld [vmem:[%s0 + $0x780] sm:$0xff]
  %v255 = vld [vmem:[%s0 + $0x788] sm:$0xff]
  %v256 = vld [vmem:[%s0 + $0x790] sm:$0xff]
  %v257 = vld [vmem:[%s0 + $0x798] sm:$0xff]
  %v258 = vld [vmem:[%s0 + $0x7a0] sm:$0xff]
  %v259 = vld [vmem:[%s0 + $0x7a8] sm:$0xff]
  %v260 = vld [vmem:[%s0 + $0x7b0] sm:$0xff]
  %v261 = vld [vmem:[%s0 + $0x7b8] sm:$0xff]
  %v262 = vld [vmem:[%s0 + $0x7c0] sm:$0xff]
  %v263 = vld [vmem:[%s0 + $0x7c8] sm:$0xff]
  %v264 = vld [vmem:[%s0 + $0x7d0] sm:$0xff]
  %v265 = vld [vmem:[%s0 + $0x7d8] sm:$0xff]
  %v266 = vld [vmem:[%s0 + $0x7e0] sm:$0xff]
  %v267 = vld [vmem:[%s0 + $0x7e8] sm:$0xff]
  %v268 = vld [vmem:[%s0 + $0x7f0] sm:$0xff]
  %v269 = vld [vmem:[%s0 + $0x7f8] sm:$0xff]
  %v270 = vld [vmem:[%s1] sm:$0x1]
  %v272 = vperm.slane %v270, 0
  %v274 = vmul.f32 %v14, %v272
  %v275 = vmul.f32 %v15, %v272
  %v276 = vmul.f32 %v16, %v272
  %v277 = vmul.f32 %v17, %v272
  %v278 = vmul.f32 %v18, %v272
  %v279 = vmul.f32 %v19, %v272
  %v280 = vmul.f32 %v20, %v272
  %v281 = vmul.f32 %v21, %v272
  %v282 = vmul.f32 %v22, %v272
  %v283 = vmul.f32 %v23, %v272
  %v284 = vmul.f32 %v24, %v272
  %v285 = vmul.f32 %v25, %v272
  %v286 = vmul.f32 %v26, %v272
  %v287 = vmul.f32 %v27, %v272
  %v288 = vmul.f32 %v28, %v272
  %v289 = vmul.f32 %v29, %v272
  %v290 = vmul.f32 %v30, %v272
  %v291 = vmul.f32 %v31, %v272
  %v292 = vmul.f32 %v32, %v272
  %v293 = vmul.f32 %v33, %v272
  %v294 = vmul.f32 %v34, %v272
  %v295 = vmul.f32 %v35, %v272
  %v296 = vmul.f32 %v36, %v272
  %v297 = vmul.f32 %v37, %v272
  %v298 = vmul.f32 %v38, %v272
  %v299 = vmul.f32 %v39, %v272
  %v300 = vmul.f32 %v40, %v272
  %v301 = vmul.f32 %v41, %v272
  %v302 = vmul.f32 %v42, %v272
  %v303 = vmul.f32 %v43, %v272
  %v304 = vmul.f32 %v44, %v272
  %v305 = vmul.f32 %v45, %v272
  %v306 = vmul.f32 %v46, %v272
  %v307 = vmul.f32 %v47, %v272
  %v308 = vmul.f32 %v48, %v272
  %v309 = vmul.f32 %v49, %v272
  %v310 = vmul.f32 %v50, %v272
  %v311 = vmul.f32 %v51, %v272
  %v312 = vmul.f32 %v52, %v272
  %v313 = vmul.f32 %v53, %v272
  %v314 = vmul.f32 %v54, %v272
  %v315 = vmul.f32 %v55, %v272
  %v316 = vmul.f32 %v56, %v272
  %v317 = vmul.f32 %v57, %v272
  %v318 = vmul.f32 %v58, %v272
  %v319 = vmul.f32 %v59, %v272
  %v320 = vmul.f32 %v60, %v272
  %v321 = vmul.f32 %v61, %v272
  %v322 = vmul.f32 %v62, %v272
  %v323 = vmul.f32 %v63, %v272
  %v324 = vmul.f32 %v64, %v272
  %v325 = vmul.f32 %v65, %v272
  %v326 = vmul.f32 %v66, %v272
  %v327 = vmul.f32 %v67, %v272
  %v328 = vmul.f32 %v68, %v272
  %v329 = vmul.f32 %v69, %v272
  %v330 = vmul.f32 %v70, %v272
  %v331 = vmul.f32 %v71, %v272
  %v332 = vmul.f32 %v72, %v272
  %v333 = vmul.f32 %v73, %v272
  %v334 = vmul.f32 %v74, %v272
  %v335 = vmul.f32 %v75, %v272
  %v336 = vmul.f32 %v76, %v272
  %v337 = vmul.f32 %v77, %v272
  %v338 = vmul.f32 %v78, %v272
  %v339 = vmul.f32 %v79, %v272
  %v340 = vmul.f32 %v80, %v272
  %v341 = vmul.f32 %v81, %v272
  %v342 = vmul.f32 %v82, %v272
  %v343 = vmul.f32 %v83, %v272
  %v344 = vmul.f32 %v84, %v272
  %v345 = vmul.f32 %v85, %v272
  %v346 = vmul.f32 %v86, %v272
  %v347 = vmul.f32 %v87, %v272
  %v348 = vmul.f32 %v88, %v272
  %v349 = vmul.f32 %v89, %v272
  %v350 = vmul.f32 %v90, %v272
  %v351 = vmul.f32 %v91, %v272
  %v352 = vmul.f32 %v92, %v272
  %v353 = vmul.f32 %v93, %v272
  %v354 = vmul.f32 %v94, %v272
  %v355 = vmul.f32 %v95, %v272
  %v356 = vmul.f32 %v96, %v272
  %v357 = vmul.f32 %v97, %v272
  %v358 = vmul.f32 %v98, %v272
  %v359 = vmul.f32 %v99, %v272
  %v360 = vmul.f32 %v100, %v272
  %v361 = vmul.f32 %v101, %v272
  %v362 = vmul.f32 %v102, %v272
  %v363 = vmul.f32 %v103, %v272
  %v364 = vmul.f32 %v104, %v272
  %v365 = vmul.f32 %v105, %v272
  %v366 = vmul.f32 %v106, %v272
  %v367 = vmul.f32 %v107, %v272
  %v368 = vmul.f32 %v108, %v272
  %v369 = vmul.f32 %v109, %v272
  %v370 = vmul.f32 %v110, %v272
  %v371 = vmul.f32 %v111, %v272
  %v372 = vmul.f32 %v112, %v272
  %v373 = vmul.f32 %v113, %v272
  %v374 = vmul.f32 %v114, %v272
  %v375 = vmul.f32 %v115, %v272
  %v376 = vmul.f32 %v116, %v272
  %v377 = vmul.f32 %v117, %v272
  %v378 = vmul.f32 %v118, %v272
  %v379 = vmul.f32 %v119, %v272
  %v380 = vmul.f32 %v120, %v272
  %v381 = vmul.f32 %v121, %v272
  %v382 = vmul.f32 %v122, %v272
  %v383 = vmul.f32 %v123, %v272
  %v384 = vmul.f32 %v124, %v272
  %v385 = vmul.f32 %v125, %v272
  %v386 = vmul.f32 %v126, %v272
  %v387 = vmul.f32 %v127, %v272
  %v388 = vmul.f32 %v128, %v272
  %v389 = vmul.f32 %v129, %v272
  %v390 = vmul.f32 %v130, %v272
  %v391 = vmul.f32 %v131, %v272
  %v392 = vmul.f32 %v132, %v272
  %v393 = vmul.f32 %v133, %v272
  %v394 = vmul.f32 %v134, %v272
  %v395 = vmul.f32 %v135, %v272
  %v396 = vmul.f32 %v136, %v272
  %v397 = vmul.f32 %v137, %v272
  %v398 = vmul.f32 %v138, %v272
  %v399 = vmul.f32 %v139, %v272
  %v400 = vmul.f32 %v140, %v272
  %v401 = vmul.f32 %v141, %v272
  %v402 = vmul.f32 %v142, %v272
  %v403 = vmul.f32 %v143, %v272
  %v404 = vmul.f32 %v144, %v272
  %v405 = vmul.f32 %v145, %v272
  %v406 = vmul.f32 %v146, %v272
  %v407 = vmul.f32 %v147, %v272
  %v408 = vmul.f32 %v148, %v272
  %v409 = vmul.f32 %v149, %v272
  %v410 = vmul.f32 %v150, %v272
  %v411 = vmul.f32 %v151, %v272
  %v412 = vmul.f32 %v152, %v272
  %v413 = vmul.f32 %v153, %v272
  %v414 = vmul.f32 %v154, %v272
  %v415 = vmul.f32 %v155, %v272
  %v416 = vmul.f32 %v156, %v272
  %v417 = vmul.f32 %v157, %v272
  %v418 = vmul.f32 %v158, %v272
  %v419 = vmul.f32 %v159, %v272
  %v420 = vmul.f32 %v160, %v272
  %v421 = vmul.f32 %v161, %v272
  %v422 = vmul.f32 %v162, %v272
  %v423 = vmul.f32 %v163, %v272
  %v424 = vmul.f32 %v164, %v272
  %v425 = vmul.f32 %v165, %v272
  %v426 = vmul.f32 %v166, %v272
  %v427 = vmul.f32 %v167, %v272
  %v428 = vmul.f32 %v168, %v272
  %v429 = vmul.f32 %v169, %v272
  %v430 = vmul.f32 %v170, %v272
  %v431 = vmul.f32 %v171, %v272
  %v432 = vmul.f32 %v172, %v272
  %v433 = vmul.f32 %v173, %v272
  %v434 = vmul.f32 %v174, %v272
  %v435 = vmul.f32 %v175, %v272
  %v436 = vmul.f32 %v176, %v272
  %v437 = vmul.f32 %v177, %v272
  %v438 = vmul.f32 %v178, %v272
  %v439 = vmul.f32 %v179, %v272
  %v440 = vmul.f32 %v180, %v272
  %v441 = vmul.f32 %v181, %v272
  %v442 = vmul.f32 %v182, %v272
  %v443 = vmul.f32 %v183, %v272
  %v444 = vmul.f32 %v184, %v272
  %v445 = vmul.f32 %v185, %v272
  %v446 = vmul.f32 %v186, %v272
  %v447 = vmul.f32 %v187, %v272
  %v448 = vmul.f32 %v188, %v272
  %v449 = vmul.f32 %v189, %v272
  %v450 = vmul.f32 %v190, %v272
  %v451 = vmul.f32 %v191, %v272
  %v452 = vmul.f32 %v192, %v272
  %v453 = vmul.f32 %v193, %v272
  %v454 = vmul.f32 %v194, %v272
  %v455 = vmul.f32 %v195, %v272
  %v456 = vmul.f32 %v196, %v272
  %v457 = vmul.f32 %v197, %v272
  %v458 = vmul.f32 %v198, %v272
  %v459 = vmul.f32 %v199, %v272
  %v460 = vmul.f32 %v200, %v272
  %v461 = vmul.f32 %v201, %v272
  %v462 = vmul.f32 %v202, %v272
  %v463 = vmul.f32 %v203, %v272
  %v464 = vmul.f32 %v204, %v272
  %v465 = vmul.f32 %v205, %v272
  %v466 = vmul.f32 %v206, %v272
  %v467 = vmul.f32 %v207, %v272
  %v468 = vmul.f32 %v208, %v272
  %v469 = vmul.f32 %v209, %v272
  %v470 = vmul.f32 %v210, %v272
  %v471 = vmul.f32 %v211, %v272
  %v472 = vmul.f32 %v212, %v272
  %v473 = vmul.f32 %v213, %v272
  %v474 = vmul.f32 %v214, %v272
  %v475 = vmul.f32 %v215, %v272
  %v476 = vmul.f32 %v216, %v272
  %v477 = vmul.f32 %v217, %v272
  %v478 = vmul.f32 %v218, %v272
  %v479 = vmul.f32 %v219, %v272
  %v480 = vmul.f32 %v220, %v272
  %v481 = vmul.f32 %v221, %v272
  %v482 = vmul.f32 %v222, %v272
  %v483 = vmul.f32 %v223, %v272
  %v484 = vmul.f32 %v224, %v272
  %v485 = vmul.f32 %v225, %v272
  %v486 = vmul.f32 %v226, %v272
  %v487 = vmul.f32 %v227, %v272
  %v488 = vmul.f32 %v228, %v272
  %v489 = vmul.f32 %v229, %v272
  %v490 = vmul.f32 %v230, %v272
  %v491 = vmul.f32 %v231, %v272
  %v492 = vmul.f32 %v232, %v272
  %v493 = vmul.f32 %v233, %v272
  %v494 = vmul.f32 %v234, %v272
  %v495 = vmul.f32 %v235, %v272
  %v496 = vmul.f32 %v236, %v272
  %v497 = vmul.f32 %v237, %v272
  %v498 = vmul.f32 %v238, %v272
  %v499 = vmul.f32 %v239, %v272
  %v500 = vmul.f32 %v240, %v272
  %v501 = vmul.f32 %v241, %v272
  %v502 = vmul.f32 %v242, %v272
  %v503 = vmul.f32 %v243, %v272
  %v504 = vmul.f32 %v244, %v272
  %v505 = vmul.f32 %v245, %v272
  %v506 = vmul.f32 %v246, %v272
  %v507 = vmul.f32 %v247, %v272
  %v508 = vmul.f32 %v248, %v272
  %v509 = vmul.f32 %v249, %v272
  %v510 = vmul.f32 %v250, %v272
  %v511 = vmul.f32 %v251, %v272
  %v512 = vmul.f32 %v252, %v272
  %v513 = vmul.f32 %v253, %v272
  %v514 = vmul.f32 %v254, %v272
  %v515 = vmul.f32 %v255, %v272
  %v516 = vmul.f32 %v256, %v272
  %v517 = vmul.f32 %v257, %v272
  %v518 = vmul.f32 %v258, %v272
  %v519 = vmul.f32 %v259, %v272
  %v520 = vmul.f32 %v260, %v272
  %v521 = vmul.f32 %v261, %v272
  %v522 = vmul.f32 %v262, %v272
  %v523 = vmul.f32 %v263, %v272
  %v524 = vmul.f32 %v264, %v272
  %v525 = vmul.f32 %v265, %v272
  %v526 = vmul.f32 %v266, %v272
  %v527 = vmul.f32 %v267, %v272
  %v528 = vmul.f32 %v268, %v272
  %v529 = vmul.f32 %v269, %v272
  %v530 = vld [vmem:[%s2] sm:$0x1]
  %v532 = vperm.slane %v530, 0
  %v534 = vadd.f32 %v274, %v532
  %v535 = vadd.f32 %v275, %v532
  %v536 = vadd.f32 %v276, %v532
  %v537 = vadd.f32 %v277, %v532
  %v538 = vadd.f32 %v278, %v532
  %v539 = vadd.f32 %v279, %v532
  %v540 = vadd.f32 %v280, %v532
  %v541 = vadd.f32 %v281, %v532
  %v542 = vadd.f32 %v282, %v532
  %v543 = vadd.f32 %v283, %v532
  %v544 = vadd.f32 %v284, %v532
  %v545 = vadd.f32 %v285, %v532
  %v546 = vadd.f32 %v286, %v532
  %v547 = vadd.f32 %v287, %v532
  %v548 = vadd.f32 %v288, %v532
  %v549 = vadd.f32 %v289, %v532
  %v550 = vadd.f32 %v290, %v532
  %v551 = vadd.f32 %v291, %v532
  %v552 = vadd.f32 %v292, %v532
  %v553 = vadd.f32 %v293, %v532
  %v554 = vadd.f32 %v294, %v532
  %v555 = vadd.f32 %v295, %v532
  %v556 = vadd.f32 %v296, %v532
  %v557 = vadd.f32 %v297, %v532
  %v558 = vadd.f32 %v298, %v532
  %v559 = vadd.f32 %v299, %v532
  %v560 = vadd.f32 %v300, %v532
  %v561 = vadd.f32 %v301, %v532
  %v562 = vadd.f32 %v302, %v532
  %v563 = vadd.f32 %v303, %v532
  %v564 = vadd.f32 %v304, %v532
  %v565 = vadd.f32 %v305, %v532
  %v566 = vadd.f32 %v306, %v532
  %v567 = vadd.f32 %v307, %v532
  %v568 = vadd.f32 %v308, %v532
  %v569 = vadd.f32 %v309, %v532
  %v570 = vadd.f32 %v310, %v532
  %v571 = vadd.f32 %v311, %v532
  %v572 = vadd.f32 %v312, %v532
  %v573 = vadd.f32 %v313, %v532
  %v574 = vadd.f32 %v314, %v532
  %v575 = vadd.f32 %v315, %v532
  %v576 = vadd.f32 %v316, %v532
  %v577 = vadd.f32 %v317, %v532
  %v578 = vadd.f32 %v318, %v532
  %v579 = vadd.f32 %v319, %v532
  %v580 = vadd.f32 %v320, %v532
  %v581 = vadd.f32 %v321, %v532
  %v582 = vadd.f32 %v322, %v532
  %v583 = vadd.f32 %v323, %v532
  %v584 = vadd.f32 %v324, %v532
  %v585 = vadd.f32 %v325, %v532
  %v586 = vadd.f32 %v326, %v532
  %v587 = vadd.f32 %v327, %v532
  %v588 = vadd.f32 %v328, %v532
  %v589 = vadd.f32 %v329, %v532
  %v590 = vadd.f32 %v330, %v532
  %v591 = vadd.f32 %v331, %v532
  %v592 = vadd.f32 %v332, %v532
  %v593 = vadd.f32 %v333, %v532
  %v594 = vadd.f32 %v334, %v532
  %v595 = vadd.f32 %v335, %v532
  %v596 = vadd.f32 %v336, %v532
  %v597 = vadd.f32 %v337, %v532
  %v598 = vadd.f32 %v338, %v532
  %v599 = vadd.f32 %v339, %v532
  %v600 = vadd.f32 %v340, %v532
  %v601 = vadd.f32 %v341, %v532
  %v602 = vadd.f32 %v342, %v532
  %v603 = vadd.f32 %v343, %v532
  %v604 = vadd.f32 %v344, %v532
  %v605 = vadd.f32 %v345, %v532
  %v606 = vadd.f32 %v346, %v532
  %v607 = vadd.f32 %v347, %v532
  %v608 = vadd.f32 %v348, %v532
  %v609 = vadd.f32 %v349, %v532
  %v610 = vadd.f32 %v350, %v532
  %v611 = vadd.f32 %v351, %v532
  %v612 = vadd.f32 %v352, %v532
  %v613 = vadd.f32 %v353, %v532
  %v614 = vadd.f32 %v354, %v532
  %v615 = vadd.f32 %v355, %v532
  %v616 = vadd.f32 %v356, %v532
  %v617 = vadd.f32 %v357, %v532
  %v618 = vadd.f32 %v358, %v532
  %v619 = vadd.f32 %v359, %v532
  %v620 = vadd.f32 %v360, %v532
  %v621 = vadd.f32 %v361, %v532
  %v622 = vadd.f32 %v362, %v532
  %v623 = vadd.f32 %v363, %v532
  %v624 = vadd.f32 %v364, %v532
  %v625 = vadd.f32 %v365, %v532
  %v626 = vadd.f32 %v366, %v532
  %v627 = vadd.f32 %v367, %v532
  %v628 = vadd.f32 %v368, %v532
  %v629 = vadd.f32 %v369, %v532
  %v630 = vadd.f32 %v370, %v532
  %v631 = vadd.f32 %v371, %v532
  %v632 = vadd.f32 %v372, %v532
  %v633 = vadd.f32 %v373, %v532
  %v634 = vadd.f32 %v374, %v532
  %v635 = vadd.f32 %v375, %v532
  %v636 = vadd.f32 %v376, %v532
  %v637 = vadd.f32 %v377, %v532
  %v638 = vadd.f32 %v378, %v532
  %v639 = vadd.f32 %v379, %v532
  %v640 = vadd.f32 %v380, %v532
  %v641 = vadd.f32 %v381, %v532
  %v642 = vadd.f32 %v382, %v532
  %v643 = vadd.f32 %v383, %v532
  %v644 = vadd.f32 %v384, %v532
  %v645 = vadd.f32 %v385, %v532
  %v646 = vadd.f32 %v386, %v532
  %v647 = vadd.f32 %v387, %v532
  %v648 = vadd.f32 %v388, %v532
  %v649 = vadd.f32 %v389, %v532
  %v650 = vadd.f32 %v390, %v532
  %v651 = vadd.f32 %v391, %v532
  %v652 = vadd.f32 %v392, %v532
  %v653 = vadd.f32 %v393, %v532
  %v654 = vadd.f32 %v394, %v532
  %v655 = vadd.f32 %v395, %v532
  %v656 = vadd.f32 %v396, %v532
  %v657 = vadd.f32 %v397, %v532
  %v658 = vadd.f32 %v398, %v532
  %v659 = vadd.f32 %v399, %v532
  %v660 = vadd.f32 %v400, %v532
  %v661 = vadd.f32 %v401, %v532
  %v662 = vadd.f32 %v402, %v532
  %v663 = vadd.f32 %v403, %v532
  %v664 = vadd.f32 %v404, %v532
  %v665 = vadd.f32 %v405, %v532
  %v666 = vadd.f32 %v406, %v532
  %v667 = vadd.f32 %v407, %v532
  %v668 = vadd.f32 %v408, %v532
  %v669 = vadd.f32 %v409, %v532
  %v670 = vadd.f32 %v410, %v532
  %v671 = vadd.f32 %v411, %v532
  %v672 = vadd.f32 %v412, %v532
  %v673 = vadd.f32 %v413, %v532
  %v674 = vadd.f32 %v414, %v532
  %v675 = vadd.f32 %v415, %v532
  %v676 = vadd.f32 %v416, %v532
  %v677 = vadd.f32 %v417, %v532
  %v678 = vadd.f32 %v418, %v532
  %v679 = vadd.f32 %v419, %v532
  %v680 = vadd.f32 %v420, %v532
  %v681 = vadd.f32 %v421, %v532
  %v682 = vadd.f32 %v422, %v532
  %v683 = vadd.f32 %v423, %v532
  %v684 = vadd.f32 %v424, %v532
  %v685 = vadd.f32 %v425, %v532
  %v686 = vadd.f32 %v426, %v532
  %v687 = vadd.f32 %v427, %v532
  %v688 = vadd.f32 %v428, %v532
  %v689 = vadd.f32 %v429, %v532
  %v690 = vadd.f32 %v430, %v532
  %v691 = vadd.f32 %v431, %v532
  %v692 = vadd.f32 %v432, %v532
  %v693 = vadd.f32 %v433, %v532
  %v694 = vadd.f32 %v434, %v532
  %v695 = vadd.f32 %v435, %v532
  %v696 = vadd.f32 %v436, %v532
  %v697 = vadd.f32 %v437, %v532
  %v698 = vadd.f32 %v438, %v532
  %v699 = vadd.f32 %v439, %v532
  %v700 = vadd.f32 %v440, %v532
  %v701 = vadd.f32 %v441, %v532
  %v702 = vadd.f32 %v442, %v532
  %v703 = vadd.f32 %v443, %v532
  %v704 = vadd.f32 %v444, %v532
  %v705 = vadd.f32 %v445, %v532
  %v706 = vadd.f32 %v446, %v532
  %v707 = vadd.f32 %v447, %v532
  %v708 = vadd.f32 %v448, %v532
  %v709 = vadd.f32 %v449, %v532
  %v710 = vadd.f32 %v450, %v532
  %v711 = vadd.f32 %v451, %v532
  %v712 = vadd.f32 %v452, %v532
  %v713 = vadd.f32 %v453, %v532
  %v714 = vadd.f32 %v454, %v532
  %v715 = vadd.f32 %v455, %v532
  %v716 = vadd.f32 %v456, %v532
  %v717 = vadd.f32 %v457, %v532
  %v718 = vadd.f32 %v458, %v532
  %v719 = vadd.f32 %v459, %v532
  %v720 = vadd.f32 %v460, %v532
  %v721 = vadd.f32 %v461, %v532
  %v722 = vadd.f32 %v462, %v532
  %v723 = vadd.f32 %v463, %v532
  %v724 = vadd.f32 %v464, %v532
  %v725 = vadd.f32 %v465, %v532
  %v726 = vadd.f32 %v466, %v532
  %v727 = vadd.f32 %v467, %v532
  %v728 = vadd.f32 %v468, %v532
  %v729 = vadd.f32 %v469, %v532
  %v730 = vadd.f32 %v470, %v532
  %v731 = vadd.f32 %v471, %v532
  %v732 = vadd.f32 %v472, %v532
  %v733 = vadd.f32 %v473, %v532
  %v734 = vadd.f32 %v474, %v532
  %v735 = vadd.f32 %v475, %v532
  %v736 = vadd.f32 %v476, %v532
  %v737 = vadd.f32 %v477, %v532
  %v738 = vadd.f32 %v478, %v532
  %v739 = vadd.f32 %v479, %v532
  %v740 = vadd.f32 %v480, %v532
  %v741 = vadd.f32 %v481, %v532
  %v742 = vadd.f32 %v482, %v532
  %v743 = vadd.f32 %v483, %v532
  %v744 = vadd.f32 %v484, %v532
  %v745 = vadd.f32 %v485, %v532
  %v746 = vadd.f32 %v486, %v532
  %v747 = vadd.f32 %v487, %v532
  %v748 = vadd.f32 %v488, %v532
  %v749 = vadd.f32 %v489, %v532
  %v750 = vadd.f32 %v490, %v532
  %v751 = vadd.f32 %v491, %v532
  %v752 = vadd.f32 %v492, %v532
  %v753 = vadd.f32 %v493, %v532
  %v754 = vadd.f32 %v494, %v532
  %v755 = vadd.f32 %v495, %v532
  %v756 = vadd.f32 %v496, %v532
  %v757 = vadd.f32 %v497, %v532
  %v758 = vadd.f32 %v498, %v532
  %v759 = vadd.f32 %v499, %v532
  %v760 = vadd.f32 %v500, %v532
  %v761 = vadd.f32 %v501, %v532
  %v762 = vadd.f32 %v502, %v532
  %v763 = vadd.f32 %v503, %v532
  %v764 = vadd.f32 %v504, %v532
  %v765 = vadd.f32 %v505, %v532
  %v766 = vadd.f32 %v506, %v532
  %v767 = vadd.f32 %v507, %v532
  %v768 = vadd.f32 %v508, %v532
  %v769 = vadd.f32 %v509, %v532
  %v770 = vadd.f32 %v510, %v532
  %v771 = vadd.f32 %v511, %v532
  %v772 = vadd.f32 %v512, %v532
  %v773 = vadd.f32 %v513, %v532
  %v774 = vadd.f32 %v514, %v532
  %v775 = vadd.f32 %v515, %v532
  %v776 = vadd.f32 %v516, %v532
  %v777 = vadd.f32 %v517, %v532
  %v778 = vadd.f32 %v518, %v532
  %v779 = vadd.f32 %v519, %v532
  %v780 = vadd.f32 %v520, %v532
  %v781 = vadd.f32 %v521, %v532
  %v782 = vadd.f32 %v522, %v532
  %v783 = vadd.f32 %v523, %v532
  %v784 = vadd.f32 %v524, %v532
  %v785 = vadd.f32 %v525, %v532
  %v786 = vadd.f32 %v526, %v532
  %v787 = vadd.f32 %v527, %v532
  %v788 = vadd.f32 %v528, %v532
  %v789 = vadd.f32 %v529, %v532
  %v790 = vmax.f32 %v534, 0.0
  %v791 = vmax.f32 %v535, 0.0
  %v792 = vmax.f32 %v536, 0.0
  %v793 = vmax.f32 %v537, 0.0
  %v794 = vmax.f32 %v538, 0.0
  %v795 = vmax.f32 %v539, 0.0
  %v796 = vmax.f32 %v540, 0.0
  %v797 = vmax.f32 %v541, 0.0
  %v798 = vmax.f32 %v542, 0.0
  %v799 = vmax.f32 %v543, 0.0
  %v800 = vmax.f32 %v544, 0.0
  %v801 = vmax.f32 %v545, 0.0
  %v802 = vmax.f32 %v546, 0.0
  %v803 = vmax.f32 %v547, 0.0
  %v804 = vmax.f32 %v548, 0.0
  %v805 = vmax.f32 %v549, 0.0
  %v806 = vmax.f32 %v550, 0.0
  %v807 = vmax.f32 %v551, 0.0
  %v808 = vmax.f32 %v552, 0.0
  %v809 = vmax.f32 %v553, 0.0
  %v810 = vmax.f32 %v554, 0.0
  %v811 = vmax.f32 %v555, 0.0
  %v812 = vmax.f32 %v556, 0.0
  %v813 = vmax.f32 %v557, 0.0
  %v814 = vmax.f32 %v558, 0.0
  %v815 = vmax.f32 %v559, 0.0
  %v816 = vmax.f32 %v560, 0.0
  %v817 = vmax.f32 %v561, 0.0
  %v818 = vmax.f32 %v562, 0.0
  %v819 = vmax.f32 %v563, 0.0
  %v820 = vmax.f32 %v564, 0.0
  %v821 = vmax.f32 %v565, 0.0
  %v822 = vmax.f32 %v566, 0.0
  %v823 = vmax.f32 %v567, 0.0
  %v824 = vmax.f32 %v568, 0.0
  %v825 = vmax.f32 %v569, 0.0
  %v826 = vmax.f32 %v570, 0.0
  %v827 = vmax.f32 %v571, 0.0
  %v828 = vmax.f32 %v572, 0.0
  %v829 = vmax.f32 %v573, 0.0
  %v830 = vmax.f32 %v574, 0.0
  %v831 = vmax.f32 %v575, 0.0
  %v832 = vmax.f32 %v576, 0.0
  %v833 = vmax.f32 %v577, 0.0
  %v834 = vmax.f32 %v578, 0.0
  %v835 = vmax.f32 %v579, 0.0
  %v836 = vmax.f32 %v580, 0.0
  %v837 = vmax.f32 %v581, 0.0
  %v838 = vmax.f32 %v582, 0.0
  %v839 = vmax.f32 %v583, 0.0
  %v840 = vmax.f32 %v584, 0.0
  %v841 = vmax.f32 %v585, 0.0
  %v842 = vmax.f32 %v586, 0.0
  %v843 = vmax.f32 %v587, 0.0
  %v844 = vmax.f32 %v588, 0.0
  %v845 = vmax.f32 %v589, 0.0
  %v846 = vmax.f32 %v590, 0.0
  %v847 = vmax.f32 %v591, 0.0
  %v848 = vmax.f32 %v592, 0.0
  %v849 = vmax.f32 %v593, 0.0
  %v850 = vmax.f32 %v594, 0.0
  %v851 = vmax.f32 %v595, 0.0
  %v852 = vmax.f32 %v596, 0.0
  %v853 = vmax.f32 %v597, 0.0
  %v854 = vmax.f32 %v598, 0.0
  %v855 = vmax.f32 %v599, 0.0
  %v856 = vmax.f32 %v600, 0.0
  %v857 = vmax.f32 %v601, 0.0
  %v858 = vmax.f32 %v602, 0.0
  %v859 = vmax.f32 %v603, 0.0
  %v860 = vmax.f32 %v604, 0.0
  %v861 = vmax.f32 %v605, 0.0
  %v862 = vmax.f32 %v606, 0.0
  %v863 = vmax.f32 %v607, 0.0
  %v864 = vmax.f32 %v608, 0.0
  %v865 = vmax.f32 %v609, 0.0
  %v866 = vmax.f32 %v610, 0.0
  %v867 = vmax.f32 %v611, 0.0
  %v868 = vmax.f32 %v612, 0.0
  %v869 = vmax.f32 %v613, 0.0
  %v870 = vmax.f32 %v614, 0.0
  %v871 = vmax.f32 %v615, 0.0
  %v872 = vmax.f32 %v616, 0.0
  %v873 = vmax.f32 %v617, 0.0
  %v874 = vmax.f32 %v618, 0.0
  %v875 = vmax.f32 %v619, 0.0
  %v876 = vmax.f32 %v620, 0.0
  %v877 = vmax.f32 %v621, 0.0
  %v878 = vmax.f32 %v622, 0.0
  %v879 = vmax.f32 %v623, 0.0
  %v880 = vmax.f32 %v624, 0.0
  %v881 = vmax.f32 %v625, 0.0
  %v882 = vmax.f32 %v626, 0.0
  %v883 = vmax.f32 %v627, 0.0
  %v884 = vmax.f32 %v628, 0.0
  %v885 = vmax.f32 %v629, 0.0
  %v886 = vmax.f32 %v630, 0.0
  %v887 = vmax.f32 %v631, 0.0
  %v888 = vmax.f32 %v632, 0.0
  %v889 = vmax.f32 %v633, 0.0
  %v890 = vmax.f32 %v634, 0.0
  %v891 = vmax.f32 %v635, 0.0
  %v892 = vmax.f32 %v636, 0.0
  %v893 = vmax.f32 %v637, 0.0
  %v894 = vmax.f32 %v638, 0.0
  %v895 = vmax.f32 %v639, 0.0
  %v896 = vmax.f32 %v640, 0.0
  %v897 = vmax.f32 %v641, 0.0
  %v898 = vmax.f32 %v642, 0.0
  %v899 = vmax.f32 %v643, 0.0
  %v900 = vmax.f32 %v644, 0.0
  %v901 = vmax.f32 %v645, 0.0
  %v902 = vmax.f32 %v646, 0.0
  %v903 = vmax.f32 %v647, 0.0
  %v904 = vmax.f32 %v648, 0.0
  %v905 = vmax.f32 %v649, 0.0
  %v906 = vmax.f32 %v650, 0.0
  %v907 = vmax.f32 %v651, 0.0
  %v908 = vmax.f32 %v652, 0.0
  %v909 = vmax.f32 %v653, 0.0
  %v910 = vmax.f32 %v654, 0.0
  %v911 = vmax.f32 %v655, 0.0
  %v912 = vmax.f32 %v656, 0.0
  %v913 = vmax.f32 %v657, 0.0
  %v914 = vmax.f32 %v658, 0.0
  %v915 = vmax.f32 %v659, 0.0
  %v916 = vmax.f32 %v660, 0.0
  %v917 = vmax.f32 %v661, 0.0
  %v918 = vmax.f32 %v662, 0.0
  %v919 = vmax.f32 %v663, 0.0
  %v920 = vmax.f32 %v664, 0.0
  %v921 = vmax.f32 %v665, 0.0
  %v922 = vmax.f32 %v666, 0.0
  %v923 = vmax.f32 %v667, 0.0
  %v924 = vmax.f32 %v668, 0.0
  %v925 = vmax.f32 %v669, 0.0
  %v926 = vmax.f32 %v670, 0.0
  %v927 = vmax.f32 %v671, 0.0
  %v928 = vmax.f32 %v672, 0.0
  %v929 = vmax.f32 %v673, 0.0
  %v930 = vmax.f32 %v674, 0.0
  %v931 = vmax.f32 %v675, 0.0
  %v932 = vmax.f32 %v676, 0.0
  %v933 = vmax.f32 %v677, 0.0
  %v934 = vmax.f32 %v678, 0.0
  %v935 = vmax.f32 %v679, 0.0
  %v936 = vmax.f32 %v680, 0.0
  %v937 = vmax.f32 %v681, 0.0
  %v938 = vmax.f32 %v682, 0.0
  %v939 = vmax.f32 %v683, 0.0
  %v940 = vmax.f32 %v684, 0.0
  %v941 = vmax.f32 %v685, 0.0
  %v942 = vmax.f32 %v686, 0.0
  %v943 = vmax.f32 %v687, 0.0
  %v944 = vmax.f32 %v688, 0.0
  %v945 = vmax.f32 %v689, 0.0
  %v946 = vmax.f32 %v690, 0.0
  %v947 = vmax.f32 %v691, 0.0
  %v948 = vmax.f32 %v692, 0.0
  %v949 = vmax.f32 %v693, 0.0
  %v950 = vmax.f32 %v694, 0.0
  %v951 = vmax.f32 %v695, 0.0
  %v952 = vmax.f32 %v696, 0.0
  %v953 = vmax.f32 %v697, 0.0
  %v954 = vmax.f32 %v698, 0.0
  %v955 = vmax.f32 %v699, 0.0
  %v956 = vmax.f32 %v700, 0.0
  %v957 = vmax.f32 %v701, 0.0
  %v958 = vmax.f32 %v702, 0.0
  %v959 = vmax.f32 %v703, 0.0
  %v960 = vmax.f32 %v704, 0.0
  %v961 = vmax.f32 %v705, 0.0
  %v962 = vmax.f32 %v706, 0.0
  %v963 = vmax.f32 %v707, 0.0
  %v964 = vmax.f32 %v708, 0.0
  %v965 = vmax.f32 %v709, 0.0
  %v966 = vmax.f32 %v710, 0.0
  %v967 = vmax.f32 %v711, 0.0
  %v968 = vmax.f32 %v712, 0.0
  %v969 = vmax.f32 %v713, 0.0
  %v970 = vmax.f32 %v714, 0.0
  %v971 = vmax.f32 %v715, 0.0
  %v972 = vmax.f32 %v716, 0.0
  %v973 = vmax.f32 %v717, 0.0
  %v974 = vmax.f32 %v718, 0.0
  %v975 = vmax.f32 %v719, 0.0
  %v976 = vmax.f32 %v720, 0.0
  %v977 = vmax.f32 %v721, 0.0
  %v978 = vmax.f32 %v722, 0.0
  %v979 = vmax.f32 %v723, 0.0
  %v980 = vmax.f32 %v724, 0.0
  %v981 = vmax.f32 %v725, 0.0
  %v982 = vmax.f32 %v726, 0.0
  %v983 = vmax.f32 %v727, 0.0
  %v984 = vmax.f32 %v728, 0.0
  %v985 = vmax.f32 %v729, 0.0
  %v986 = vmax.f32 %v730, 0.0
  %v987 = vmax.f32 %v731, 0.0
  %v988 = vmax.f32 %v732, 0.0
  %v989 = vmax.f32 %v733, 0.0
  %v990 = vmax.f32 %v734, 0.0
  %v991 = vmax.f32 %v735, 0.0
  %v992 = vmax.f32 %v736, 0.0
  %v993 = vmax.f32 %v737, 0.0
  %v994 = vmax.f32 %v738, 0.0
  %v995 = vmax.f32 %v739, 0.0
  %v996 = vmax.f32 %v740, 0.0
  %v997 = vmax.f32 %v741, 0.0
  %v998 = vmax.f32 %v742, 0.0
  %v999 = vmax.f32 %v743, 0.0
  %v1000 = vmax.f32 %v744, 0.0
  %v1001 = vmax.f32 %v745, 0.0
  %v1002 = vmax.f32 %v746, 0.0
  %v1003 = vmax.f32 %v747, 0.0
  %v1004 = vmax.f32 %v748, 0.0
  %v1005 = vmax.f32 %v749, 0.0
  %v1006 = vmax.f32 %v750, 0.0
  %v1007 = vmax.f32 %v751, 0.0
  %v1008 = vmax.f32 %v752, 0.0
  %v1009 = vmax.f32 %v753, 0.0
  %v1010 = vmax.f32 %v754, 0.0
  %v1011 = vmax.f32 %v755, 0.0
  %v1012 = vmax.f32 %v756, 0.0
  %v1013 = vmax.f32 %v757, 0.0
  %v1014 = vmax.f32 %v758, 0.0
  %v1015 = vmax.f32 %v759, 0.0
  %v1016 = vmax.f32 %v760, 0.0
  %v1017 = vmax.f32 %v761, 0.0
  %v1018 = vmax.f32 %v762, 0.0
  %v1019 = vmax.f32 %v763, 0.0
  %v1020 = vmax.f32 %v764, 0.0
  %v1021 = vmax.f32 %v765, 0.0
  %v1022 = vmax.f32 %v766, 0.0
  %v1023 = vmax.f32 %v767, 0.0
  %v1024 = vmax.f32 %v768, 0.0
  %v1025 = vmax.f32 %v769, 0.0
  %v1026 = vmax.f32 %v770, 0.0
  %v1027 = vmax.f32 %v771, 0.0
  %v1028 = vmax.f32 %v772, 0.0
  %v1029 = vmax.f32 %v773, 0.0
  %v1030 = vmax.f32 %v774, 0.0
  %v1031 = vmax.f32 %v775, 0.0
  %v1032 = vmax.f32 %v776, 0.0
  %v1033 = vmax.f32 %v777, 0.0
  %v1034 = vmax.f32 %v778, 0.0
  %v1035 = vmax.f32 %v779, 0.0
  %v1036 = vmax.f32 %v780, 0.0
  %v1037 = vmax.f32 %v781, 0.0
  %v1038 = vmax.f32 %v782, 0.0
  %v1039 = vmax.f32 %v783, 0.0
  %v1040 = vmax.f32 %v784, 0.0
  %v1041 = vmax.f32 %v785, 0.0
  %v1042 = vmax.f32 %v786, 0.0
  %v1043 = vmax.f32 %v787, 0.0
  %v1044 = vmax.f32 %v788, 0.0
  %v1045 = vmax.f32 %v789, 0.0
  %1046 = vst [vmem:[%s3] sm:$0xff] %v790
  %1047 = vst [vmem:[%s3 + $0x8] sm:$0xff] %v791
  %1048 = vst [vmem:[%s3 + $0x10] sm:$0xff] %v792
  %1049 = vst [vmem:[%s3 + $0x18] sm:$0xff] %v793
  %1050 = vst [vmem:[%s3 + $0x20] sm:$0xff] %v794
  %1051 = vst [vmem:[%s3 + $0x28] sm:$0xff] %v795
  %1052 = vst [vmem:[%s3 + $0x30] sm:$0xff] %v796
  %1053 = vst [vmem:[%s3 + $0x38] sm:$0xff] %v797
  %1054 = vst [vmem:[%s3 + $0x40] sm:$0xff] %v798
  %1055 = vst [vmem:[%s3 + $0x48] sm:$0xff] %v799
  %1056 = vst [vmem:[%s3 + $0x50] sm:$0xff] %v800
  %1057 = vst [vmem:[%s3 + $0x58] sm:$0xff] %v801
  %1058 = vst [vmem:[%s3 + $0x60] sm:$0xff] %v802
  %1059 = vst [vmem:[%s3 + $0x68] sm:$0xff] %v803
  %1060 = vst [vmem:[%s3 + $0x70] sm:$0xff] %v804
  %1061 = vst [vmem:[%s3 + $0x78] sm:$0xff] %v805
  %1062 = vst [vmem:[%s3 + $0x80] sm:$0xff] %v806
  %1063 = vst [vmem:[%s3 + $0x88] sm:$0xff] %v807
  %1064 = vst [vmem:[%s3 + $0x90] sm:$0xff] %v808
  %1065 = vst [vmem:[%s3 + $0x98] sm:$0xff] %v809
  %1066 = vst [vmem:[%s3 + $0xa0] sm:$0xff] %v810
  %1067 = vst [vmem:[%s3 + $0xa8] sm:$0xff] %v811
  %1068 = vst [vmem:[%s3 + $0xb0] sm:$0xff] %v812
  %1069 = vst [vmem:[%s3 + $0xb8] sm:$0xff] %v813
  %1070 = vst [vmem:[%s3 + $0xc0] sm:$0xff] %v814
  %1071 = vst [vmem:[%s3 + $0xc8] sm:$0xff] %v815
  %1072 = vst [vmem:[%s3 + $0xd0] sm:$0xff] %v816
  %1073 = vst [vmem:[%s3 + $0xd8] sm:$0xff] %v817
  %1074 = vst [vmem:[%s3 + $0xe0] sm:$0xff] %v818
  %1075 = vst [vmem:[%s3 + $0xe8] sm:$0xff] %v819
  %1076 = vst [vmem:[%s3 + $0xf0] sm:$0xff] %v820
  %1077 = vst [vmem:[%s3 + $0xf8] sm:$0xff] %v821
  %1078 = vst [vmem:[%s3 + $0x100] sm:$0xff] %v822
  %1079 = vst [vmem:[%s3 + $0x108] sm:$0xff] %v823
  %1080 = vst [vmem:[%s3 + $0x110] sm:$0xff] %v824
  %1081 = vst [vmem:[%s3 + $0x118] sm:$0xff] %v825
  %1082 = vst [vmem:[%s3 + $0x120] sm:$0xff] %v826
  %1083 = vst [vmem:[%s3 + $0x128] sm:$0xff] %v827
  %1084 = vst [vmem:[%s3 + $0x130] sm:$0xff] %v828
  %1085 = vst [vmem:[%s3 + $0x138] sm:$0xff] %v829
  %1086 = vst [vmem:[%s3 + $0x140] sm:$0xff] %v830
  %1087 = vst [vmem:[%s3 + $0x148] sm:$0xff] %v831
  %1088 = vst [vmem:[%s3 + $0x150] sm:$0xff] %v832
  %1089 = vst [vmem:[%s3 + $0x158] sm:$0xff] %v833
  %1090 = vst [vmem:[%s3 + $0x160] sm:$0xff] %v834
  %1091 = vst [vmem:[%s3 + $0x168] sm:$0xff] %v835
  %1092 = vst [vmem:[%s3 + $0x170] sm:$0xff] %v836
  %1093 = vst [vmem:[%s3 + $0x178] sm:$0xff] %v837
  %1094 = vst [vmem:[%s3 + $0x180] sm:$0xff] %v838
  %1095 = vst [vmem:[%s3 + $0x188] sm:$0xff] %v839
  %1096 = vst [vmem:[%s3 + $0x190] sm:$0xff] %v840
  %1097 = vst [vmem:[%s3 + $0x198] sm:$0xff] %v841
  %1098 = vst [vmem:[%s3 + $0x1a0] sm:$0xff] %v842
  %1099 = vst [vmem:[%s3 + $0x1a8] sm:$0xff] %v843
  %1100 = vst [vmem:[%s3 + $0x1b0] sm:$0xff] %v844
  %1101 = vst [vmem:[%s3 + $0x1b8] sm:$0xff] %v845
  %1102 = vst [vmem:[%s3 + $0x1c0] sm:$0xff] %v846
  %1103 = vst [vmem:[%s3 + $0x1c8] sm:$0xff] %v847
  %1104 = vst [vmem:[%s3 + $0x1d0] sm:$0xff] %v848
  %1105 = vst [vmem:[%s3 + $0x1d8] sm:$0xff] %v849
  %1106 = vst [vmem:[%s3 + $0x1e0] sm:$0xff] %v850
  %1107 = vst [vmem:[%s3 + $0x1e8] sm:$0xff] %v851
  %1108 = vst [vmem:[%s3 + $0x1f0] sm:$0xff] %v852
  %1109 = vst [vmem:[%s3 + $0x1f8] sm:$0xff] %v853
  %1110 = vst [vmem:[%s3 + $0x200] sm:$0xff] %v854
  %1111 = vst [vmem:[%s3 + $0x208] sm:$0xff] %v855
  %1112 = vst [vmem:[%s3 + $0x210] sm:$0xff] %v856
  %1113 = vst [vmem:[%s3 + $0x218] sm:$0xff] %v857
  %1114 = vst [vmem:[%s3 + $0x220] sm:$0xff] %v858
  %1115 = vst [vmem:[%s3 + $0x228] sm:$0xff] %v859
  %1116 = vst [vmem:[%s3 + $0x230] sm:$0xff] %v860
  %1117 = vst [vmem:[%s3 + $0x238] sm:$0xff] %v861
  %1118 = vst [vmem:[%s3 + $0x240] sm:$0xff] %v862
  %1119 = vst [vmem:[%s3 + $0x248] sm:$0xff] %v863
  %1120 = vst [vmem:[%s3 + $0x250] sm:$0xff] %v864
  %1121 = vst [vmem:[%s3 + $0x258] sm:$0xff] %v865
  %1122 = vst [vmem:[%s3 + $0x260] sm:$0xff] %v866
  %1123 = vst [vmem:[%s3 + $0x268] sm:$0xff] %v867
  %1124 = vst [vmem:[%s3 + $0x270] sm:$0xff] %v868
  %1125 = vst [vmem:[%s3 + $0x278] sm:$0xff] %v869
  %1126 = vst [vmem:[%s3 + $0x280] sm:$0xff] %v870
  %1127 = vst [vmem:[%s3 + $0x288] sm:$0xff] %v871
  %1128 = vst [vmem:[%s3 + $0x290] sm:$0xff] %v872
  %1129 = vst [vmem:[%s3 + $0x298] sm:$0xff] %v873
  %1130 = vst [vmem:[%s3 + $0x2a0] sm:$0xff] %v874
  %1131 = vst [vmem:[%s3 + $0x2a8] sm:$0xff] %v875
  %1132 = vst [vmem:[%s3 + $0x2b0] sm:$0xff] %v876
  %1133 = vst [vmem:[%s3 + $0x2b8] sm:$0xff] %v877
  %1134 = vst [vmem:[%s3 + $0x2c0] sm:$0xff] %v878
  %1135 = vst [vmem:[%s3 + $0x2c8] sm:$0xff] %v879
  %1136 = vst [vmem:[%s3 + $0x2d0] sm:$0xff] %v880
  %1137 = vst [vmem:[%s3 + $0x2d8] sm:$0xff] %v881
  %1138 = vst [vmem:[%s3 + $0x2e0] sm:$0xff] %v882
  %1139 = vst [vmem:[%s3 + $0x2e8] sm:$0xff] %v883
  %1140 = vst [vmem:[%s3 + $0x2f0] sm:$0xff] %v884
  %1141 = vst [vmem:[%s3 + $0x2f8] sm:$0xff] %v885
  %1142 = vst [vmem:[%s3 + $0x300] sm:$0xff] %v886
  %1143 = vst [vmem:[%s3 + $0x308] sm:$0xff] %v887
  %1144 = vst [vmem:[%s3 + $0x310] sm:$0xff] %v888
  %1145 = vst [vmem:[%s3 + $0x318] sm:$0xff] %v889
  %1146 = vst [vmem:[%s3 + $0x320] sm:$0xff] %v890
  %1147 = vst [vmem:[%s3 + $0x328] sm:$0xff] %v891
  %1148 = vst [vmem:[%s3 + $0x330] sm:$0xff] %v892
  %1149 = vst [vmem:[%s3 + $0x338] sm:$0xff] %v893
  %1150 = vst [vmem:[%s3 + $0x340] sm:$0xff] %v894
  %1151 = vst [vmem:[%s3 + $0x348] sm:$0xff] %v895
  %1152 = vst [vmem:[%s3 + $0x350] sm:$0xff] %v896
  %1153 = vst [vmem:[%s3 + $0x358] sm:$0xff] %v897
  %1154 = vst [vmem:[%s3 + $0x360] sm:$0xff] %v898
  %1155 = vst [vmem:[%s3 + $0x368] sm:$0xff] %v899
  %1156 = vst [vmem:[%s3 + $0x370] sm:$0xff] %v900
  %1157 = vst [vmem:[%s3 + $0x378] sm:$0xff] %v901
  %1158 = vst [vmem:[%s3 + $0x380] sm:$0xff] %v902
  %1159 = vst [vmem:[%s3 + $0x388] sm:$0xff] %v903
  %1160 = vst [vmem:[%s3 + $0x390] sm:$0xff] %v904
  %1161 = vst [vmem:[%s3 + $0x398] sm:$0xff] %v905
  %1162 = vst [vmem:[%s3 + $0x3a0] sm:$0xff] %v906
  %1163 = vst [vmem:[%s3 + $0x3a8] sm:$0xff] %v907
  %1164 = vst [vmem:[%s3 + $0x3b0] sm:$0xff] %v908
  %1165 = vst [vmem:[%s3 + $0x3b8] sm:$0xff] %v909
  %1166 = vst [vmem:[%s3 + $0x3c0] sm:$0xff] %v910
  %1167 = vst [vmem:[%s3 + $0x3c8] sm:$0xff] %v911
  %1168 = vst [vmem:[%s3 + $0x3d0] sm:$0xff] %v912
  %1169 = vst [vmem:[%s3 + $0x3d8] sm:$0xff] %v913
  %1170 = vst [vmem:[%s3 + $0x3e0] sm:$0xff] %v914
  %1171 = vst [vmem:[%s3 + $0x3e8] sm:$0xff] %v915
  %1172 = vst [vmem:[%s3 + $0x3f0] sm:$0xff] %v916
  %1173 = vst [vmem:[%s3 + $0x3f8] sm:$0xff] %v917
  %1174 = vst [vmem:[%s3 + $0x400] sm:$0xff] %v918
  %1175 = vst [vmem:[%s3 + $0x408] sm:$0xff] %v919
  %1176 = vst [vmem:[%s3 + $0x410] sm:$0xff] %v920
  %1177 = vst [vmem:[%s3 + $0x418] sm:$0xff] %v921
  %1178 = vst [vmem:[%s3 + $0x420] sm:$0xff] %v922
  %1179 = vst [vmem:[%s3 + $0x428] sm:$0xff] %v923
  %1180 = vst [vmem:[%s3 + $0x430] sm:$0xff] %v924
  %1181 = vst [vmem:[%s3 + $0x438] sm:$0xff] %v925
  %1182 = vst [vmem:[%s3 + $0x440] sm:$0xff] %v926
  %1183 = vst [vmem:[%s3 + $0x448] sm:$0xff] %v927
  %1184 = vst [vmem:[%s3 + $0x450] sm:$0xff] %v928
  %1185 = vst [vmem:[%s3 + $0x458] sm:$0xff] %v929
  %1186 = vst [vmem:[%s3 + $0x460] sm:$0xff] %v930
  %1187 = vst [vmem:[%s3 + $0x468] sm:$0xff] %v931
  %1188 = vst [vmem:[%s3 + $0x470] sm:$0xff] %v932
  %1189 = vst [vmem:[%s3 + $0x478] sm:$0xff] %v933
  %1190 = vst [vmem:[%s3 + $0x480] sm:$0xff] %v934
  %1191 = vst [vmem:[%s3 + $0x488] sm:$0xff] %v935
  %1192 = vst [vmem:[%s3 + $0x490] sm:$0xff] %v936
  %1193 = vst [vmem:[%s3 + $0x498] sm:$0xff] %v937
  %1194 = vst [vmem:[%s3 + $0x4a0] sm:$0xff] %v938
  %1195 = vst [vmem:[%s3 + $0x4a8] sm:$0xff] %v939
  %1196 = vst [vmem:[%s3 + $0x4b0] sm:$0xff] %v940
  %1197 = vst [vmem:[%s3 + $0x4b8] sm:$0xff] %v941
  %1198 = vst [vmem:[%s3 + $0x4c0] sm:$0xff] %v942
  %1199 = vst [vmem:[%s3 + $0x4c8] sm:$0xff] %v943
  %1200 = vst [vmem:[%s3 + $0x4d0] sm:$0xff] %v944
  %1201 = vst [vmem:[%s3 + $0x4d8] sm:$0xff] %v945
  %1202 = vst [vmem:[%s3 + $0x4e0] sm:$0xff] %v946
  %1203 = vst [vmem:[%s3 + $0x4e8] sm:$0xff] %v947
  %1204 = vst [vmem:[%s3 + $0x4f0] sm:$0xff] %v948
  %1205 = vst [vmem:[%s3 + $0x4f8] sm:$0xff] %v949
  %1206 = vst [vmem:[%s3 + $0x500] sm:$0xff] %v950
  %1207 = vst [vmem:[%s3 + $0x508] sm:$0xff] %v951
  %1208 = vst [vmem:[%s3 + $0x510] sm:$0xff] %v952
  %1209 = vst [vmem:[%s3 + $0x518] sm:$0xff] %v953
  %1210 = vst [vmem:[%s3 + $0x520] sm:$0xff] %v954
  %1211 = vst [vmem:[%s3 + $0x528] sm:$0xff] %v955
  %1212 = vst [vmem:[%s3 + $0x530] sm:$0xff] %v956
  %1213 = vst [vmem:[%s3 + $0x538] sm:$0xff] %v957
  %1214 = vst [vmem:[%s3 + $0x540] sm:$0xff] %v958
  %1215 = vst [vmem:[%s3 + $0x548] sm:$0xff] %v959
  %1216 = vst [vmem:[%s3 + $0x550] sm:$0xff] %v960
  %1217 = vst [vmem:[%s3 + $0x558] sm:$0xff] %v961
  %1218 = vst [vmem:[%s3 + $0x560] sm:$0xff] %v962
  %1219 = vst [vmem:[%s3 + $0x568] sm:$0xff] %v963
  %1220 = vst [vmem:[%s3 + $0x570] sm:$0xff] %v964
  %1221 = vst [vmem:[%s3 + $0x578] sm:$0xff] %v965
  %1222 = vst [vmem:[%s3 + $0x580] sm:$0xff] %v966
  %1223 = vst [vmem:[%s3 + $0x588] sm:$0xff] %v967
  %1224 = vst [vmem:[%s3 + $0x590] sm:$0xff] %v968
  %1225 = vst [vmem:[%s3 + $0x598] sm:$0xff] %v969
  %1226 = vst [vmem:[%s3 + $0x5a0] sm:$0xff] %v970
  %1227 = vst [vmem:[%s3 + $0x5a8] sm:$0xff] %v971
  %1228 = vst [vmem:[%s3 + $0x5b0] sm:$0xff] %v972
  %1229 = vst [vmem:[%s3 + $0x5b8] sm:$0xff] %v973
  %1230 = vst [vmem:[%s3 + $0x5c0] sm:$0xff] %v974
  %1231 = vst [vmem:[%s3 + $0x5c8] sm:$0xff] %v975
  %1232 = vst [vmem:[%s3 + $0x5d0] sm:$0xff] %v976
  %1233 = vst [vmem:[%s3 + $0x5d8] sm:$0xff] %v977
  %1234 = vst [vmem:[%s3 + $0x5e0] sm:$0xff] %v978
  %1235 = vst [vmem:[%s3 + $0x5e8] sm:$0xff] %v979
  %1236 = vst [vmem:[%s3 + $0x5f0] sm:$0xff] %v980
  %1237 = vst [vmem:[%s3 + $0x5f8] sm:$0xff] %v981
  %1238 = vst [vmem:[%s3 + $0x600] sm:$0xff] %v982
  %1239 = vst [vmem:[%s3 + $0x608] sm:$0xff] %v983
  %1240 = vst [vmem:[%s3 + $0x610] sm:$0xff] %v984
  %1241 = vst [vmem:[%s3 + $0x618] sm:$0xff] %v985
  %1242 = vst [vmem:[%s3 + $0x620] sm:$0xff] %v986
  %1243 = vst [vmem:[%s3 + $0x628] sm:$0xff] %v987
  %1244 = vst [vmem:[%s3 + $0x630] sm:$0xff] %v988
  %1245 = vst [vmem:[%s3 + $0x638] sm:$0xff] %v989
  %1246 = vst [vmem:[%s3 + $0x640] sm:$0xff] %v990
  %1247 = vst [vmem:[%s3 + $0x648] sm:$0xff] %v991
  %1248 = vst [vmem:[%s3 + $0x650] sm:$0xff] %v992
  %1249 = vst [vmem:[%s3 + $0x658] sm:$0xff] %v993
  %1250 = vst [vmem:[%s3 + $0x660] sm:$0xff] %v994
  %1251 = vst [vmem:[%s3 + $0x668] sm:$0xff] %v995
  %1252 = vst [vmem:[%s3 + $0x670] sm:$0xff] %v996
  %1253 = vst [vmem:[%s3 + $0x678] sm:$0xff] %v997
  %1254 = vst [vmem:[%s3 + $0x680] sm:$0xff] %v998
  %1255 = vst [vmem:[%s3 + $0x688] sm:$0xff] %v999
  %1256 = vst [vmem:[%s3 + $0x690] sm:$0xff] %v1000
  %1257 = vst [vmem:[%s3 + $0x698] sm:$0xff] %v1001
  %1258 = vst [vmem:[%s3 + $0x6a0] sm:$0xff] %v1002
  %1259 = vst [vmem:[%s3 + $0x6a8] sm:$0xff] %v1003
  %1260 = vst [vmem:[%s3 + $0x6b0] sm:$0xff] %v1004
  %1261 = vst [vmem:[%s3 + $0x6b8] sm:$0xff] %v1005
  %1262 = vst [vmem:[%s3 + $0x6c0] sm:$0xff] %v1006
  %1263 = vst [vmem:[%s3 + $0x6c8] sm:$0xff] %v1007
  %1264 = vst [vmem:[%s3 + $0x6d0] sm:$0xff] %v1008
  %1265 = vst [vmem:[%s3 + $0x6d8] sm:$0xff] %v1009
  %1266 = vst [vmem:[%s3 + $0x6e0] sm:$0xff] %v1010
  %1267 = vst [vmem:[%s3 + $0x6e8] sm:$0xff] %v1011
  %1268 = vst [vmem:[%s3 + $0x6f0] sm:$0xff] %v1012
  %1269 = vst [vmem:[%s3 + $0x6f8] sm:$0xff] %v1013
  %1270 = vst [vmem:[%s3 + $0x700] sm:$0xff] %v1014
  %1271 = vst [vmem:[%s3 + $0x708] sm:$0xff] %v1015
  %1272 = vst [vmem:[%s3 + $0x710] sm:$0xff] %v1016
  %1273 = vst [vmem:[%s3 + $0x718] sm:$0xff] %v1017
  %1274 = vst [vmem:[%s3 + $0x720] sm:$0xff] %v1018
  %1275 = vst [vmem:[%s3 + $0x728] sm:$0xff] %v1019
  %1276 = vst [vmem:[%s3 + $0x730] sm:$0xff] %v1020
  %1277 = vst [vmem:[%s3 + $0x738] sm:$0xff] %v1021
  %1278 = vst [vmem:[%s3 + $0x740] sm:$0xff] %v1022
  %1279 = vst [vmem:[%s3 + $0x748] sm:$0xff] %v1023
  %1280 = vst [vmem:[%s3 + $0x750] sm:$0xff] %v1024
  %1281 = vst [vmem:[%s3 + $0x758] sm:$0xff] %v1025
  %1282 = vst [vmem:[%s3 + $0x760] sm:$0xff] %v1026
  %1283 = vst [vmem:[%s3 + $0x768] sm:$0xff] %v1027
  %1284 = vst [vmem:[%s3 + $0x770] sm:$0xff] %v1028
  %1285 = vst [vmem:[%s3 + $0x778] sm:$0xff] %v1029
  %1286 = vst [vmem:[%s3 + $0x780] sm:$0xff] %v1030
  %1287 = vst [vmem:[%s3 + $0x788] sm:$0xff] %v1031
  %1288 = vst [vmem:[%s3 + $0x790] sm:$0xff] %v1032
  %1289 = vst [vmem:[%s3 + $0x798] sm:$0xff] %v1033
  %1290 = vst [vmem:[%s3 + $0x7a0] sm:$0xff] %v1034
  %1291 = vst [vmem:[%s3 + $0x7a8] sm:$0xff] %v1035
  %1292 = vst [vmem:[%s3 + $0x7b0] sm:$0xff] %v1036
  %1293 = vst [vmem:[%s3 + $0x7b8] sm:$0xff] %v1037
  %1294 = vst [vmem:[%s3 + $0x7c0] sm:$0xff] %v1038
  %1295 = vst [vmem:[%s3 + $0x7c8] sm:$0xff] %v1039
  %1296 = vst [vmem:[%s3 + $0x7d0] sm:$0xff] %v1040
  %1297 = vst [vmem:[%s3 + $0x7d8] sm:$0xff] %v1041
  %1298 = vst [vmem:[%s3 + $0x7e0] sm:$0xff] %v1042
  %1299 = vst [vmem:[%s3 + $0x7e8] sm:$0xff] %v1043
  %1300 = vst [vmem:[%s3 + $0x7f0] sm:$0xff] %v1044
  %1301 = vst [vmem:[%s3 + $0x7f8] sm:$0xff] %v1045
  // Predicated region
  $region14: #{decoder_block_forward.7} parent=0 // pred_check
    _
  $region15: #{decoder_block_forward.7} parent=0 // pred_check_branch
    %1303 = sbr.rel (0) target = $region17
  $region16: #{decoder_block_forward.7} parent=0 // pred_region
    _
  $region17: #{decoder_block_forward.7} parent=0 // pred_fallthru
    _
  // Predicated region
  $region18: #{decoder_block_forward.7} parent=0 // pred_check
    _
  $region19: #{decoder_block_forward.7} parent=0 // pred_check_branch
    %1305 = sbr.rel (0) target = $region21
  $region20: #{decoder_block_forward.7} parent=0 // pred_region
    _
  $region21: #{decoder_block_forward.7} parent=0 // pred_fallthru
    _

// kernel: decoder_block_forward.6
$region0: #{decoder_block_forward.6}
  #allocation0 [shape = 'u32[]', space=smem, size = 0x4, offset = 0x4, fixed_abs, tag = 'smem constant byte address 0x4 - core index']
  #allocation1 [shape = 'u32[72,128]{1,0:T(1,128)}', space=vmem, size = 0x9000, scoped, tag = 'internal scratch']
  #allocation2 [shape = 'f32[2,128]{1,0:T(2,128)}', space=vmem, size = 0x400, scoped, tag = 'scratch operand']
  %s0 = inlined_call_operand.vmem [shape: f32[2,4,10,34,4], index: 0, kind: input, shape index: {}]
  %s1 = inlined_call_operand.vmem [shape: f32[2,4,10,34,4], index: 1, kind: input, shape index: {}]
  %s2 = inlined_call_operand.vmem [shape: f32[72,128], index: 2, kind: input, shape index: {}]
  %s3 = inlined_call_operand.vmem [shape: f32[1,128], index: 3, kind: input, shape index: {}]
  %s4 = inlined_call_operand.vmem [shape: f32[2,1024,128], index: 4, kind: output, shape index: {0}]
  %s5 = inlined_call_operand.vmem [shape: f32[2,2,128], index: 5, kind: output, shape index: {1}]
  %6 = xla_tuple %s4, %s5
  %s7 = sld [smem:[#allocation0]]
  $region61: #{decoder_block_forward.6} parent=0
    _
  %s9 = ssub.s32 1, %s7
  %s10 = scalar_select 0, %s9, %s7
  loop: start=0, step=1, limit=10
  $region2: #{decoder_block_forward.6} parent=0 // loop_pre_header
    _
  $region3: #{decoder_block_forward.6} parent=0 // loop_header
    %s12 = sphi 0, %s16
    %p13 = scmp.ge.s32.totalorder %s12, 10
    %s19 = sphi 0, %s31
    %s20 = sphi 0, %s27
    %s21 = sphi 0, %s19
    %s22 = sphi 0, %s20
    %s23 = sphi 0, %s21
    %s24 = sphi 0, %s22
    %s36 = sphi 0, %s38
    %s39 = sphi 0, %s36
    %s40 = sphi 0, %s39
    %s56 = sphi 0, %s40
    %s64 = sphi 0, %s66
    %s67 = sphi 0, %s64
    %s68 = sphi 0, %s67
    %s84 = sphi 0, %s68
    %s88 = sphi 0, %s88
    %s90 = sphi 0, %s88
    %s91 = sphi 0, %s90
    %s105 = sphi 0, %s91
    %s109 = sphi 0, %s109
    %s111 = sphi 0, %s109
    %s112 = sphi 0, %s111
    %s126 = sphi 0, %s112
    %s134 = sphi 0, %s136
    %s137 = sphi 0, %s134
    %s138 = sphi 0, %s137
    %s154 = sphi 0, %s138
    %s160 = sphi 0, %s162
    %s163 = sphi 0, %s160
    %s164 = sphi 0, %s163
    %s180 = sphi 0, %s164
  $region4: #{decoder_block_forward.6} parent=0 // loop_header_branch
    %15 = sbr.rel (%p13) target = $region8
  $region5: #{decoder_block_forward.6} parent=0 // loop_body
    %s17 = ssub.s32 %s12, 1
    %s18 = ssub.s32 %s12, 2
    %s25 = sadd.s32 1, %s20
    %p26 = scmp.ge.s32.totalorder %s25, 4
    %s27 = scalar_select %p26, 0, %s25
    %s28 = sadd.s32 1, %s19
    %s29 = scalar_select %p26, %s28, %s19
    %p30 = scmp.ge.s32.totalorder %s29, 2
    %s31 = scalar_select %p30, 0, %s29
    %s32 = ssub.s32 %s19, %s31
    %s33 = ssub.s32 %s20, %s27
    %s34 = sor.u32 %s32, %s33
    %p35 = scmp.eq.s32.totalorder %s34, 0
    %s37 = sadd.s32 %s36, 1
    %s38 = scalar_select %p35, %s36, %s37
    %p41 = pneg %p35
    %p42 = scmp.eq.s32.totalorder %s12, 7
    %p43 = por %p41, %p42
    %p44 = scmp.ne.s32.totalorder %s36, %s39
    %p45 = scmp.eq.s32.totalorder %s12, 0
    %p46 = por %p44, %p45
    %p47 = scmp.ne.s32.totalorder %s36, %s39
    %p48 = scmp.eq.s32.totalorder %s17, 7
    %p49 = por %p47, %p48
    %p50 = scmp.ne.s32.totalorder %s39, %s40
    %p51 = scmp.eq.s32.totalorder %s17, 0
    %p52 = por %p50, %p51
    %p53 = scmp.ne.s32.totalorder %s39, %s40
    %p54 = scmp.eq.s32.totalorder %s18, 7
    %p55 = por %p53, %p54
    %p57 = scmp.ne.s32.totalorder %s40, %s56
    %p58 = scmp.eq.s32.totalorder %s18, 0
    %p59 = por %p57, %p58
    %s60 = ssub.s32 %s19, %s31
    %s61 = ssub.s32 %s20, %s27
    %s62 = sor.u32 %s60, %s61
    %p63 = scmp.eq.s32.totalorder %s62, 0
    %s65 = sadd.s32 %s64, 1
    %s66 = scalar_select %p63, %s64, %s65
    %p69 = pneg %p63
    %p70 = scmp.eq.s32.totalorder %s12, 7
    %p71 = por %p69, %p70
    %p72 = scmp.ne.s32.totalorder %s64, %s67
    %p73 = scmp.eq.s32.totalorder %s12, 0
    %p74 = por %p72, %p73
    %p75 = scmp.ne.s32.totalorder %s64, %s67
    %p76 = scmp.eq.s32.totalorder %s17, 7
    %p77 = por %p75, %p76
    %p78 = scmp.ne.s32.totalorder %s67, %s68
    %p79 = scmp.eq.s32.totalorder %s17, 0
    %p80 = por %p78, %p79
    %p81 = scmp.ne.s32.totalorder %s67, %s68
    %p82 = scmp.eq.s32.totalorder %s18, 7
    %p83 = por %p81, %p82
    %p85 = scmp.ne.s32.totalorder %s68, %s84
    %p86 = scmp.eq.s32.totalorder %s18, 0
    %p87 = por %p85, %p86
    %s89 = sadd.s32 %s88, 1
    %p92 = scmp.eq.s32.totalorder %s12, 7
    %p93 = scmp.ne.s32.totalorder %s88, %s90
    %p94 = scmp.eq.s32.totalorder %s12, 0
    %p95 = por %p93, %p94
    %p96 = scmp.ne.s32.totalorder %s88, %s90
    %p97 = scmp.eq.s32.totalorder %s17, 7
    %p98 = por %p96, %p97
    %p99 = scmp.ne.s32.totalorder %s90, %s91
    %p100 = scmp.eq.s32.totalorder %s17, 0
    %p101 = por %p99, %p100
    %p102 = scmp.ne.s32.totalorder %s90, %s91
    %p103 = scmp.eq.s32.totalorder %s18, 7
    %p104 = por %p102, %p103
    %p106 = scmp.ne.s32.totalorder %s91, %s105
    %p107 = scmp.eq.s32.totalorder %s18, 0
    %p108 = por %p106, %p107
    %s110 = sadd.s32 %s109, 1
    %p113 = scmp.eq.s32.totalorder %s12, 7
    %p114 = scmp.ne.s32.totalorder %s109, %s111
    %p115 = scmp.eq.s32.totalorder %s12, 0
    %p116 = por %p114, %p115
    %p117 = scmp.ne.s32.totalorder %s109, %s111
    %p118 = scmp.eq.s32.totalorder %s17, 7
    %p119 = por %p117, %p118
    %p120 = scmp.ne.s32.totalorder %s111, %s112
    %p121 = scmp.eq.s32.totalorder %s17, 0
    %p122 = por %p120, %p121
    %p123 = scmp.ne.s32.totalorder %s111, %s112
    %p124 = scmp.eq.s32.totalorder %s18, 7
    %p125 = por %p123, %p124
    %p127 = scmp.ne.s32.totalorder %s112, %s126
    %p128 = scmp.eq.s32.totalorder %s18, 0
    %p129 = por %p127, %p128
    %s130 = ssub.s32 %s19, %s31
    %s131 = ssub.s32 %s20, %s27
    %s132 = sor.u32 %s130, %s131
    %p133 = scmp.eq.s32.totalorder %s132, 0
    %s135 = sadd.s32 %s134, 1
    %s136 = scalar_select %p133, %s134, %s135
    %p139 = pneg %p133
    %p140 = scmp.eq.s32.totalorder %s12, 7
    %p141 = por %p139, %p140
    %p142 = scmp.ne.s32.totalorder %s134, %s137
    %p143 = scmp.eq.s32.totalorder %s12, 0
    %p144 = por %p142, %p143
    %p145 = scmp.ne.s32.totalorder %s134, %s137
    %p146 = scmp.eq.s32.totalorder %s17, 7
    %p147 = por %p145, %p146
    %p148 = scmp.ne.s32.totalorder %s137, %s138
    %p149 = scmp.eq.s32.totalorder %s17, 0
    %p150 = por %p148, %p149
    %p151 = scmp.ne.s32.totalorder %s137, %s138
    %p152 = scmp.eq.s32.totalorder %s18, 7
    %p153 = por %p151, %p152
    %p155 = scmp.ne.s32.totalorder %s138, %s154
    %p156 = scmp.eq.s32.totalorder %s18, 0
    %p157 = por %p155, %p156
    %s158 = ssub.s32 %s19, %s31
    %p159 = scmp.eq.s32.totalorder %s158, 0
    %s161 = sadd.s32 %s160, 1
    %s162 = scalar_select %p159, %s160, %s161
    %p165 = pneg %p159
    %p166 = scmp.eq.s32.totalorder %s12, 7
    %p167 = por %p165, %p166
    %p168 = scmp.ne.s32.totalorder %s160, %s163
    %p169 = scmp.eq.s32.totalorder %s12, 0
    %p170 = por %p168, %p169
    %p171 = scmp.ne.s32.totalorder %s160, %s163
    %p172 = scmp.eq.s32.totalorder %s17, 7
    %p173 = por %p171, %p172
    %p174 = scmp.ne.s32.totalorder %s163, %s164
    %p175 = scmp.eq.s32.totalorder %s17, 0
    %p176 = por %p174, %p175
    %p177 = scmp.ne.s32.totalorder %s163, %s164
    %p178 = scmp.eq.s32.totalorder %s18, 7
    %p179 = por %p177, %p178
    %p181 = scmp.ne.s32.totalorder %s164, %s180
    %p182 = scmp.eq.s32.totalorder %s18, 0
    %p183 = por %p181, %p182
    %p184 = scmp.le.s32.totalorder 1, %s12
    %p185 = scmp.lt.s32.totalorder %s12, 9
    %p186 = pnand %p184, %p185
    %p187 = pneg %p186
    // Predicated region
    $region9: #{decoder_block_forward.6} parent=5 // pred_check
      _
    $region10: #{decoder_block_forward.6} parent=5 // pred_check_branch
      %189 = sbr.rel (%p186) target = $region12
    $region11: #{decoder_block_forward.6} parent=5 // pred_region
      %s190 = ssub.s32 %s12, 1
      // Predicated region
      $region13: #{decoder_block_forward.6} parent=11 // pred_check
        %p191 = pneg %p101
      $region14: #{decoder_block_forward.6} parent=11 // pred_check_branch
        %193 = sbr.rel (%p191) target = $region16
      $region15: #{decoder_block_forward.6} parent=11 // pred_region
        _
      $region16: #{decoder_block_forward.6} parent=11 // pred_fallthru
        _
      // Predicated region
      $region17: #{decoder_block_forward.6} parent=11 // pred_check
        %p194 = pneg %p122
      $region18: #{decoder_block_forward.6} parent=11 // pred_check_branch
        %196 = sbr.rel (%p194) target = $region20
      $region19: #{decoder_block_forward.6} parent=11 // pred_region
        _
      $region20: #{decoder_block_forward.6} parent=11 // pred_fallthru
        _
    $region12: #{decoder_block_forward.6} parent=5 // pred_fallthru
      _
    %p197 = scmp.lt.s32.totalorder %s12, 8
    // Predicated region
    $region21: #{decoder_block_forward.6} parent=5 // pred_check
      %p198 = pneg %p197
    $region22: #{decoder_block_forward.6} parent=5 // pred_check_branch
      %200 = sbr.rel (%p198) target = $region24
    $region23: #{decoder_block_forward.6} parent=5 // pred_region
      // Predicated region
      $region25: #{decoder_block_forward.6} parent=23 // pred_check
        %p201 = pneg %p46
      $region26: #{decoder_block_forward.6} parent=23 // pred_check_branch
        %203 = sbr.rel (%p201) target = $region28
      $region27: #{decoder_block_forward.6} parent=23 // pred_region
        %p204 = scmp.lt.s32.totalorder %s19, 1
        %s205 = scalar_select %p204, %s19, 1
        %p206 = scmp.lt.s32.totalorder %s20, 3
        %s207 = scalar_select %p206, %s20, 3
        %s208 = smul.addr %s207, 50
        %s209 = smul.addr %s205, 200
        %s210 = sadd.s32 %s208, %s209
        %s211 = smul.addr %s210, 8
        %s212 = scalar_lea.vmem %s0, %s211
      $region28: #{decoder_block_forward.6} parent=23 // pred_fallthru
        _
      // Predicated region
      $region29: #{decoder_block_forward.6} parent=23 // pred_check
        %p213 = pneg %p74
      $region30: #{decoder_block_forward.6} parent=23 // pred_check_branch
        %215 = sbr.rel (%p213) target = $region32
      $region31: #{decoder_block_forward.6} parent=23 // pred_region
        %p216 = scmp.lt.s32.totalorder %s19, 1
        %s217 = scalar_select %p216, %s19, 1
        %p218 = scmp.lt.s32.totalorder %s20, 3
        %s219 = scalar_select %p218, %s20, 3
        %s220 = smul.addr %s219, 50
        %s221 = smul.addr %s217, 200
        %s222 = sadd.s32 %s220, %s221
        %s223 = smul.addr %s222, 8
        %s224 = scalar_lea.vmem %s1, %s223
      $region32: #{decoder_block_forward.6} parent=23 // pred_fallthru
        _
    $region24: #{decoder_block_forward.6} parent=5 // pred_fallthru
      _
    %p225 = scmp.le.s32.totalorder 1, %s12
    %p226 = scmp.lt.s32.totalorder %s12, 9
    %p227 = pnand %p225, %p226
    %p228 = pneg %p227
    // Predicated region
    $region33: #{decoder_block_forward.6} parent=5 // pred_check
      _
    $region34: #{decoder_block_forward.6} parent=5 // pred_check_branch
      %230 = sbr.rel (%p227) target = $region36
    $region35: #{decoder_block_forward.6} parent=5 // pred_region
      %s231 = ssub.s32 %s12, 1
      %p232 = scmp.lt.s32.totalorder %s21, 1
      %s233 = scalar_select %p232, %s21, 1
      %p234 = scmp.lt.s32.totalorder %s22, 3
      %s235 = scalar_select %p234, %s22, 3
      %s236 = smul.addr %s235, 50
      %s237 = smul.addr %s233, 200
      %s238 = sadd.s32 %s236, %s237
      %s239 = smul.addr %s238, 8
      %s240 = scalar_lea.vmem %s0, %s239
      %p241 = pneg %p52
      %p242 = pneg %p49
      %p243 = scmp.lt.s32.totalorder %s21, 1
      %s244 = scalar_select %p243, %s21, 1
      %p245 = scmp.lt.s32.totalorder %s22, 3
      %s246 = scalar_select %p245, %s22, 3
      %s247 = smul.addr %s246, 50
      %s248 = smul.addr %s244, 200
      %s249 = sadd.s32 %s247, %s248
      %s250 = smul.addr %s249, 8
      %s251 = scalar_lea.vmem %s1, %s250
      %p252 = pneg %p80
      %p253 = pneg %p77
      %p254 = pneg %p101
      %p255 = pneg %p98
      %p256 = pneg %p122
      %p257 = pneg %p119
      %p258 = pneg %p150
      %p259 = pneg %p147
      %s260 = smul.u32 32, %s22
      %p261 = scmp.lt.s32.totalorder %s21, 1
      %s262 = scalar_select %p261, %s21, 1
      %p263 = scmp.lt.s32.totalorder %s260, 127
      %s264 = scalar_select %p263, %s260, 127
      %s265 = smul.addr %s262, 128
      %s266 = sadd.s32 %s264, %s265
      %s267 = smul.addr %s266, 8
      %s268 = scalar_lea.vmem %s4, %s267
      %p269 = pneg %p176
      %p270 = pneg %p173
      %p271 = scmp.lt.s32.totalorder %s21, 1
      %s272 = scalar_select %p271, %s21, 1
      %s273 = smul.addr %s272, 2
      %s274 = scalar_lea.vmem %s5, %s273
      %p275 = scmp.lt.s32.totalorder %s21, 1
      %s276 = scalar_select %p275, %s21, 1
      %p277 = scmp.lt.s32.totalorder %s22, 3
      %s278 = scalar_select %p277, %s22, 3
      %s279 = smul.addr %s278, 50
      %s280 = smul.addr %s276, 200
      %s281 = sadd.s32 %s279, %s280
      %s282 = smul.addr %s281, 8
      %s283 = scalar_lea.vmem %s0, %s282
      %p284 = scmp.lt.s32.totalorder %s21, 1
      %s285 = scalar_select %p284, %s21, 1
      %p286 = scmp.lt.s32.totalorder %s22, 3
      %s287 = scalar_select %p286, %s22, 3
      %s288 = smul.addr %s287, 50
      %s289 = smul.addr %s285, 200
      %s290 = sadd.s32 %s288, %s289
      %s291 = smul.addr %s290, 8
      %s292 = scalar_lea.vmem %s1, %s291
      %s293 = smul.u32 32, %s22
      %p294 = scmp.lt.s32.totalorder %s21, 1
      %s295 = scalar_select %p294, %s21, 1
      %p296 = scmp.lt.s32.totalorder %s293, 127
      %s297 = scalar_select %p296, %s293, 127
      %s298 = smul.addr %s295, 128
      %s299 = sadd.s32 %s297, %s298
      %s300 = smul.addr %s299, 8
      %s301 = scalar_lea.vmem %s4, %s300
      %s302 = smul.u32 32, %s22
      %p303 = scmp.lt.s32.totalorder %s21, 1
      %s304 = scalar_select %p303, %s21, 1
      %s305 = smul.addr %s304, 2
      %s306 = scalar_lea.vmem %s5, %s305
      %p307 = scmp.eq.s32.totalorder %s22, 0
      // Predicated region
      $region37: #{decoder_block_forward.6} parent=35 // pred_check
        %p308 = pneg %p307
      $region38: #{decoder_block_forward.6} parent=35 // pred_check_branch
        %310 = sbr.rel (%p308) target = $region40
      $region39: #{decoder_block_forward.6} parent=35 // pred_region
        %311 = vst [vmem:[#allocation2] sm:$0x3] 0.0
      $region40: #{decoder_block_forward.6} parent=35 // pred_fallthru
        _
      %v312 = vld [vmem:[%s283] sm:$0xff]
      %v313 = vld [vmem:[%s283 + $0x8] sm:$0xff]
      %v314 = vld [vmem:[%s283 + $0x10] sm:$0xff]
      %v315 = vld [vmem:[%s283 + $0x18] sm:$0xff]
      %v316 = vld [vmem:[%s283 + $0x20] sm:$0x3]
      %v317 = vld [vmem:[%s283 + $0x28] sm:$0xff]
      %v318 = vld [vmem:[%s283 + $0x30] sm:$0xff]
      %v319 = vld [vmem:[%s283 + $0x38] sm:$0xff]
      %v320 = vld [vmem:[%s283 + $0x40] sm:$0xff]
      %v321 = vld [vmem:[%s283 + $0x48] sm:$0x3]
      %v322 = vld [vmem:[%s283 + $0x50] sm:$0xff]
      %v323 = vld [vmem:[%s283 + $0x58] sm:$0xff]
      %v324 = vld [vmem:[%s283 + $0x60] sm:$0xff]
      %v325 = vld [vmem:[%s283 + $0x68] sm:$0xff]
      %v326 = vld [vmem:[%s283 + $0x70] sm:$0x3]
      %v327 = vld [vmem:[%s283 + $0x78] sm:$0xff]
      %v328 = vld [vmem:[%s283 + $0x80] sm:$0xff]
      %v329 = vld [vmem:[%s283 + $0x88] sm:$0xff]
      %v330 = vld [vmem:[%s283 + $0x90] sm:$0xff]
      %v331 = vld [vmem:[%s283 + $0x98] sm:$0x3]
      %v332 = vld [vmem:[%s283 + $0xa0] sm:$0xff]
      %v333 = vld [vmem:[%s283 + $0xa8] sm:$0xff]
      %v334 = vld [vmem:[%s283 + $0xb0] sm:$0xff]
      %v335 = vld [vmem:[%s283 + $0xb8] sm:$0xff]
      %v336 = vld [vmem:[%s283 + $0xc0] sm:$0x3]
      %v337 = vld [vmem:[%s283 + $0xc8] sm:$0xff]
      %v338 = vld [vmem:[%s283 + $0xd0] sm:$0xff]
      %v339 = vld [vmem:[%s283 + $0xd8] sm:$0xff]
      %v340 = vld [vmem:[%s283 + $0xe0] sm:$0xff]
      %v341 = vld [vmem:[%s283 + $0xe8] sm:$0x3]
      %v342 = vld [vmem:[%s283 + $0xf0] sm:$0xff]
      %v343 = vld [vmem:[%s283 + $0xf8] sm:$0xff]
      %v344 = vld [vmem:[%s283 + $0x100] sm:$0xff]
      %v345 = vld [vmem:[%s283 + $0x108] sm:$0xff]
      %v346 = vld [vmem:[%s283 + $0x110] sm:$0x3]
      %v347 = vld [vmem:[%s283 + $0x118] sm:$0xff]
      %v348 = vld [vmem:[%s283 + $0x120] sm:$0xff]
      %v349 = vld [vmem:[%s283 + $0x128] sm:$0xff]
      %v350 = vld [vmem:[%s283 + $0x130] sm:$0xff]
      %v351 = vld [vmem:[%s283 + $0x138] sm:$0x3]
      %v352 = vld [vmem:[%s283 + $0x140] sm:$0xff]
      %v353 = vld [vmem:[%s283 + $0x148] sm:$0xff]
      %v354 = vld [vmem:[%s283 + $0x150] sm:$0xff]
      %v355 = vld [vmem:[%s283 + $0x158] sm:$0xff]
      %v356 = vld [vmem:[%s283 + $0x160] sm:$0x3]
      %v357 = vld [vmem:[%s283 + $0x168] sm:$0xff]
      %v358 = vld [vmem:[%s283 + $0x170] sm:$0xff]
      %v359 = vld [vmem:[%s283 + $0x178] sm:$0xff]
      %v360 = vld [vmem:[%s283 + $0x180] sm:$0xff]
      %v361 = vld [vmem:[%s283 + $0x188] sm:$0x3]
      %v362 = vld [vmem:[%s292] sm:$0xff]
      %v363 = vld [vmem:[%s292 + $0x8] sm:$0xff]
      %v364 = vld [vmem:[%s292 + $0x10] sm:$0xff]
      %v365 = vld [vmem:[%s292 + $0x18] sm:$0xff]
      %v366 = vld [vmem:[%s292 + $0x20] sm:$0x3]
      %v367 = vld [vmem:[%s292 + $0x28] sm:$0xff]
      %v368 = vld [vmem:[%s292 + $0x30] sm:$0xff]
      %v369 = vld [vmem:[%s292 + $0x38] sm:$0xff]
      %v370 = vld [vmem:[%s292 + $0x40] sm:$0xff]
      %v371 = vld [vmem:[%s292 + $0x48] sm:$0x3]
      %v372 = vld [vmem:[%s292 + $0x50] sm:$0xff]
      %v373 = vld [vmem:[%s292 + $0x58] sm:$0xff]
      %v374 = vld [vmem:[%s292 + $0x60] sm:$0xff]
      %v375 = vld [vmem:[%s292 + $0x68] sm:$0xff]
      %v376 = vld [vmem:[%s292 + $0x70] sm:$0x3]
      %v377 = vld [vmem:[%s292 + $0x78] sm:$0xff]
      %v378 = vld [vmem:[%s292 + $0x80] sm:$0xff]
      %v379 = vld [vmem:[%s292 + $0x88] sm:$0xff]
      %v380 = vld [vmem:[%s292 + $0x90] sm:$0xff]
      %v381 = vld [vmem:[%s292 + $0x98] sm:$0x3]
      %v382 = vld [vmem:[%s292 + $0xa0] sm:$0xff]
      %v383 = vld [vmem:[%s292 + $0xa8] sm:$0xff]
      %v384 = vld [vmem:[%s292 + $0xb0] sm:$0xff]
      %v385 = vld [vmem:[%s292 + $0xb8] sm:$0xff]
      %v386 = vld [vmem:[%s292 + $0xc0] sm:$0x3]
      %v387 = vld [vmem:[%s292 + $0xc8] sm:$0xff]
      %v388 = vld [vmem:[%s292 + $0xd0] sm:$0xff]
      %v389 = vld [vmem:[%s292 + $0xd8] sm:$0xff]
      %v390 = vld [vmem:[%s292 + $0xe0] sm:$0xff]
      %v391 = vld [vmem:[%s292 + $0xe8] sm:$0x3]
      %v392 = vld [vmem:[%s292 + $0xf0] sm:$0xff]
      %v393 = vld [vmem:[%s292 + $0xf8] sm:$0xff]
      %v394 = vld [vmem:[%s292 + $0x100] sm:$0xff]
      %v395 = vld [vmem:[%s292 + $0x108] sm:$0xff]
      %v396 = vld [vmem:[%s292 + $0x110] sm:$0x3]
      %v397 = vld [vmem:[%s292 + $0x118] sm:$0xff]
      %v398 = vld [vmem:[%s292 + $0x120] sm:$0xff]
      %v399 = vld [vmem:[%s292 + $0x128] sm:$0xff]
      %v400 = vld [vmem:[%s292 + $0x130] sm:$0xff]
      %v401 = vld [vmem:[%s292 + $0x138] sm:$0x3]
      %v402 = vld [vmem:[%s292 + $0x140] sm:$0xff]
      %v403 = vld [vmem:[%s292 + $0x148] sm:$0xff]
      %v404 = vld [vmem:[%s292 + $0x150] sm:$0xff]
      %v405 = vld [vmem:[%s292 + $0x158] sm:$0xff]
      %v406 = vld [vmem:[%s292 + $0x160] sm:$0x3]
      %v407 = vld [vmem:[%s292 + $0x168] sm:$0xff]
      %v408 = vld [vmem:[%s292 + $0x170] sm:$0xff]
      %v409 = vld [vmem:[%s292 + $0x178] sm:$0xff]
      %v410 = vld [vmem:[%s292 + $0x180] sm:$0xff]
      %v411 = vld [vmem:[%s292 + $0x188] sm:$0x3]
      %444 = vrot.lane.b32.xlu0 %v362, 4
      %v445 = vpop.permute.xlu0 %444
      %446 = vrot.lane.b32.xlu0 %v363, 4
      %v447 = vpop.permute.xlu0 %446
      %448 = vrot.lane.b32.xlu0 %v364, 4
      %v449 = vpop.permute.xlu0 %448
      %450 = vrot.lane.b32.xlu0 %v365, 4
      %v451 = vpop.permute.xlu0 %450
      %452 = vrot.lane.b32.xlu0 %v367, 4
      %v453 = vpop.permute.xlu0 %452
      %454 = vrot.lane.b32.xlu0 %v368, 4
      %v455 = vpop.permute.xlu0 %454
      %456 = vrot.lane.b32.xlu0 %v369, 4
      %v457 = vpop.permute.xlu0 %456
      %458 = vrot.lane.b32.xlu0 %v370, 4
      %v459 = vpop.permute.xlu0 %458
      %460 = vrot.lane.b32.xlu0 %v372, 4
      %v461 = vpop.permute.xlu0 %460
      %462 = vrot.lane.b32.xlu0 %v373, 4
      %v463 = vpop.permute.xlu0 %462
      %464 = vrot.lane.b32.xlu0 %v374, 4
      %v465 = vpop.permute.xlu0 %464
      %466 = vrot.lane.b32.xlu0 %v375, 4
      %v467 = vpop.permute.xlu0 %466
      %468 = vrot.lane.b32.xlu0 %v377, 4
      %v469 = vpop.permute.xlu0 %468
      %470 = vrot.lane.b32.xlu0 %v378, 4
      %v471 = vpop.permute.xlu0 %470
      %472 = vrot.lane.b32.xlu0 %v379, 4
      %v473 = vpop.permute.xlu0 %472
      %474 = vrot.lane.b32.xlu0 %v380, 4
      %v475 = vpop.permute.xlu0 %474
      %476 = vrot.lane.b32.xlu0 %v382, 4
      %v477 = vpop.permute.xlu0 %476
      %478 = vrot.lane.b32.xlu0 %v383, 4
      %v479 = vpop.permute.xlu0 %478
      %480 = vrot.lane.b32.xlu0 %v384, 4
      %v481 = vpop.permute.xlu0 %480
      %482 = vrot.lane.b32.xlu0 %v385, 4
      %v483 = vpop.permute.xlu0 %482
      %484 = vrot.lane.b32.xlu0 %v387, 4
      %v485 = vpop.permute.xlu0 %484
      %486 = vrot.lane.b32.xlu0 %v388, 4
      %v487 = vpop.permute.xlu0 %486
      %488 = vrot.lane.b32.xlu0 %v389, 4
      %v489 = vpop.permute.xlu0 %488
      %490 = vrot.lane.b32.xlu0 %v390, 4
      %v491 = vpop.permute.xlu0 %490
      %492 = vrot.lane.b32.xlu0 %v392, 4
      %v493 = vpop.permute.xlu0 %492
      %494 = vrot.lane.b32.xlu0 %v393, 4
      %v495 = vpop.permute.xlu0 %494
      %496 = vrot.lane.b32.xlu0 %v394, 4
      %v497 = vpop.permute.xlu0 %496
      %498 = vrot.lane.b32.xlu0 %v395, 4
      %v499 = vpop.permute.xlu0 %498
      %500 = vrot.lane.b32.xlu0 %v397, 4
      %v501 = vpop.permute.xlu0 %500
      %502 = vrot.lane.b32.xlu0 %v398, 4
      %v503 = vpop.permute.xlu0 %502
      %504 = vrot.lane.b32.xlu0 %v399, 4
      %v505 = vpop.permute.xlu0 %504
      %506 = vrot.lane.b32.xlu0 %v400, 4
      %v507 = vpop.permute.xlu0 %506
      %vm580 = vcmask 1046528
      %v581 = vrot.slane %v312, 1
      %v582 = vrot.slane %v313, 1
      %v583 = vsel %vm580, %v581, %v582
      %v584 = vrot.slane %v314, 1
      %v585 = vsel %vm580, %v582, %v584
      %v586 = vrot.slane %v315, 1
      %v587 = vsel %vm580, %v584, %v586
      %v588 = vrot.slane %v316, 1
      %v589 = vsel %vm580, %v586, %v588
      %v590 = vrot.slane %v317, 1
      %v591 = vrot.slane %v318, 1
      %v592 = vsel %vm580, %v590, %v591
      %v593 = vrot.slane %v319, 1
      %v594 = vsel %vm580, %v591, %v593
      %v595 = vrot.slane %v320, 1
      %v596 = vsel %vm580, %v593, %v595
      %v597 = vrot.slane %v321, 1
      %v598 = vsel %vm580, %v595, %v597
      %v599 = vrot.slane %v322, 1
      %v600 = vrot.slane %v323, 1
      %v601 = vsel %vm580, %v599, %v600
      %v602 = vrot.slane %v324, 1
      %v603 = vsel %vm580, %v600, %v602
      %v604 = vrot.slane %v325, 1
      %v605 = vsel %vm580, %v602, %v604
      %v606 = vrot.slane %v326, 1
      %v607 = vsel %vm580, %v604, %v606
      %v608 = vrot.slane %v327, 1
      %v609 = vrot.slane %v328, 1
      %v610 = vsel %vm580, %v608, %v609
      %v611 = vrot.slane %v329, 1
      %v612 = vsel %vm580, %v609, %v611
      %v613 = vrot.slane %v330, 1
      %v614 = vsel %vm580, %v611, %v613
      %v615 = vrot.slane %v331, 1
      %v616 = vsel %vm580, %v613, %v615
      %v617 = vrot.slane %v332, 1
      %v618 = vrot.slane %v333, 1
      %v619 = vsel %vm580, %v617, %v618
      %v620 = vrot.slane %v334, 1
      %v621 = vsel %vm580, %v618, %v620
      %v622 = vrot.slane %v335, 1
      %v623 = vsel %vm580, %v620, %v622
      %v624 = vrot.slane %v336, 1
      %v625 = vsel %vm580, %v622, %v624
      %v626 = vrot.slane %v337, 1
      %v627 = vrot.slane %v338, 1
      %v628 = vsel %vm580, %v626, %v627
      %v629 = vrot.slane %v339, 1
      %v630 = vsel %vm580, %v627, %v629
      %v631 = vrot.slane %v340, 1
      %v632 = vsel %vm580, %v629, %v631
      %v633 = vrot.slane %v341, 1
      %v634 = vsel %vm580, %v631, %v633
      %v635 = vrot.slane %v342, 1
      %v636 = vrot.slane %v343, 1
      %v637 = vsel %vm580, %v635, %v636
      %v638 = vrot.slane %v344, 1
      %v639 = vsel %vm580, %v636, %v638
      %v640 = vrot.slane %v345, 1
      %v641 = vsel %vm580, %v638, %v640
      %v642 = vrot.slane %v346, 1
      %v643 = vsel %vm580, %v640, %v642
      %v644 = vrot.slane %v347, 1
      %v645 = vrot.slane %v348, 1
      %v646 = vsel %vm580, %v644, %v645
      %v647 = vrot.slane %v349, 1
      %v648 = vsel %vm580, %v645, %v647
      %v649 = vrot.slane %v350, 1
      %v650 = vsel %vm580, %v647, %v649
      %v651 = vrot.slane %v351, 1
      %v652 = vsel %vm580, %v649, %v651
      %653 = vrot.lane.b32.xlu0 %v583, 8
      %v654 = vpop.permute.xlu0 %653
      %655 = vrot.lane.b32.xlu0 %v585, 8
      %v656 = vpop.permute.xlu0 %655
      %657 = vrot.lane.b32.xlu0 %v587, 8
      %v658 = vpop.permute.xlu0 %657
      %659 = vrot.lane.b32.xlu0 %v589, 8
      %v660 = vpop.permute.xlu0 %659
      %661 = vrot.lane.b32.xlu0 %v592, 8
      %v662 = vpop.permute.xlu0 %661
      %663 = vrot.lane.b32.xlu0 %v594, 8
      %v664 = vpop.permute.xlu0 %663
      %665 = vrot.lane.b32.xlu0 %v596, 8
      %v666 = vpop.permute.xlu0 %665
      %667 = vrot.lane.b32.xlu0 %v598, 8
      %v668 = vpop.permute.xlu0 %667
      %669 = vrot.lane.b32.xlu0 %v601, 8
      %v670 = vpop.permute.xlu0 %669
      %671 = vrot.lane.b32.xlu0 %v603, 8
      %v672 = vpop.permute.xlu0 %671
      %673 = vrot.lane.b32.xlu0 %v605, 8
      %v674 = vpop.permute.xlu0 %673
      %675 = vrot.lane.b32.xlu0 %v607, 8
      %v676 = vpop.permute.xlu0 %675
      %677 = vrot.lane.b32.xlu0 %v610, 8
      %v678 = vpop.permute.xlu0 %677
      %679 = vrot.lane.b32.xlu0 %v612, 8
      %v680 = vpop.permute.xlu0 %679
      %681 = vrot.lane.b32.xlu0 %v614, 8
      %v682 = vpop.permute.xlu0 %681
      %683 = vrot.lane.b32.xlu0 %v616, 8
      %v684 = vpop.permute.xlu0 %683
      %685 = vrot.lane.b32.xlu0 %v619, 8
      %v686 = vpop.permute.xlu0 %685
      %687 = vrot.lane.b32.xlu0 %v621, 8
      %v688 = vpop.permute.xlu0 %687
      %689 = vrot.lane.b32.xlu0 %v623, 8
      %v690 = vpop.permute.xlu0 %689
      %691 = vrot.lane.b32.xlu0 %v625, 8
      %v692 = vpop.permute.xlu0 %691
      %693 = vrot.lane.b32.xlu0 %v628, 8
      %v694 = vpop.permute.xlu0 %693
      %695 = vrot.lane.b32.xlu0 %v630, 8
      %v696 = vpop.permute.xlu0 %695
      %697 = vrot.lane.b32.xlu0 %v632, 8
      %v698 = vpop.permute.xlu0 %697
      %699 = vrot.lane.b32.xlu0 %v634, 8
      %v700 = vpop.permute.xlu0 %699
      %701 = vrot.lane.b32.xlu0 %v637, 8
      %v702 = vpop.permute.xlu0 %701
      %703 = vrot.lane.b32.xlu0 %v639, 8
      %v704 = vpop.permute.xlu0 %703
      %705 = vrot.lane.b32.xlu0 %v641, 8
      %v706 = vpop.permute.xlu0 %705
      %707 = vrot.lane.b32.xlu0 %v643, 8
      %v708 = vpop.permute.xlu0 %707
      %709 = vrot.lane.b32.xlu0 %v646, 8
      %v710 = vpop.permute.xlu0 %709
      %711 = vrot.lane.b32.xlu0 %v648, 8
      %v712 = vpop.permute.xlu0 %711
      %713 = vrot.lane.b32.xlu0 %v650, 8
      %v714 = vpop.permute.xlu0 %713
      %715 = vrot.lane.b32.xlu0 %v652, 8
      %v716 = vpop.permute.xlu0 %715
      %v757 = vrot.slane %v362, 1
      %v758 = vrot.slane %v363, 1
      %v759 = vsel %vm580, %v757, %v758
      %v760 = vrot.slane %v364, 1
      %v761 = vsel %vm580, %v758, %v760
      %v762 = vrot.slane %v365, 1
      %v763 = vsel %vm580, %v760, %v762
      %v764 = vrot.slane %v366, 1
      %v765 = vsel %vm580, %v762, %v764
      %v766 = vrot.slane %v367, 1
      %v767 = vrot.slane %v368, 1
      %v768 = vsel %vm580, %v766, %v767
      %v769 = vrot.slane %v369, 1
      %v770 = vsel %vm580, %v767, %v769
      %v771 = vrot.slane %v370, 1
      %v772 = vsel %vm580, %v769, %v771
      %v773 = vrot.slane %v371, 1
      %v774 = vsel %vm580, %v771, %v773
      %v775 = vrot.slane %v372, 1
      %v776 = vrot.slane %v373, 1
      %v777 = vsel %vm580, %v775, %v776
      %v778 = vrot.slane %v374, 1
      %v779 = vsel %vm580, %v776, %v778
      %v780 = vrot.slane %v375, 1
      %v781 = vsel %vm580, %v778, %v780
      %v782 = vrot.slane %v376, 1
      %v783 = vsel %vm580, %v780, %v782
      %v784 = vrot.slane %v377, 1
      %v785 = vrot.slane %v378, 1
      %v786 = vsel %vm580, %v784, %v785
      %v787 = vrot.slane %v379, 1
      %v788 = vsel %vm580, %v785, %v787
      %v789 = vrot.slane %v380, 1
      %v790 = vsel %vm580, %v787, %v789
      %v791 = vrot.slane %v381, 1
      %v792 = vsel %vm580, %v789, %v791
      %v793 = vrot.slane %v382, 1
      %v794 = vrot.slane %v383, 1
      %v795 = vsel %vm580, %v793, %v794
      %v796 = vrot.slane %v384, 1
      %v797 = vsel %vm580, %v794, %v796
      %v798 = vrot.slane %v385, 1
      %v799 = vsel %vm580, %v796, %v798
      %v800 = vrot.slane %v386, 1
      %v801 = vsel %vm580, %v798, %v800
      %v802 = vrot.slane %v387, 1
      %v803 = vrot.slane %v388, 1
      %v804 = vsel %vm580, %v802, %v803
      %v805 = vrot.slane %v389, 1
      %v806 = vsel %vm580, %v803, %v805
      %v807 = vrot.slane %v390, 1
      %v808 = vsel %vm580, %v805, %v807
      %v809 = vrot.slane %v391, 1
      %v810 = vsel %vm580, %v807, %v809
      %v811 = vrot.slane %v392, 1
      %v812 = vrot.slane %v393, 1
      %v813 = vsel %vm580, %v811, %v812
      %v814 = vrot.slane %v394, 1
      %v815 = vsel %vm580, %v812, %v814
      %v816 = vrot.slane %v395, 1
      %v817 = vsel %vm580, %v814, %v816
      %v818 = vrot.slane %v396, 1
      %v819 = vsel %vm580, %v816, %v818
      %v820 = vrot.slane %v397, 1
      %v821 = vrot.slane %v398, 1
      %v822 = vsel %vm580, %v820, %v821
      %v823 = vrot.slane %v399, 1
      %v824 = vsel %vm580, %v821, %v823
      %v825 = vrot.slane %v400, 1
      %v826 = vsel %vm580, %v823, %v825
      %v827 = vrot.slane %v401, 1
      %v828 = vsel %vm580, %v825, %v827
      %829 = vrot.lane.b32.xlu0 %v759, 12
      %v830 = vpop.permute.xlu0 %829
      %831 = vrot.lane.b32.xlu0 %v761, 12
      %v832 = vpop.permute.xlu0 %831
      %833 = vrot.lane.b32.xlu0 %v763, 12
      %v834 = vpop.permute.xlu0 %833
      %835 = vrot.lane.b32.xlu0 %v765, 12
      %v836 = vpop.permute.xlu0 %835
      %837 = vrot.lane.b32.xlu0 %v768, 12
      %v838 = vpop.permute.xlu0 %837
      %839 = vrot.lane.b32.xlu0 %v770, 12
      %v840 = vpop.permute.xlu0 %839
      %841 = vrot.lane.b32.xlu0 %v772, 12
      %v842 = vpop.permute.xlu0 %841
      %843 = vrot.lane.b32.xlu0 %v774, 12
      %v844 = vpop.permute.xlu0 %843
      %845 = vrot.lane.b32.xlu0 %v777, 12
      %v846 = vpop.permute.xlu0 %845
      %847 = vrot.lane.b32.xlu0 %v779, 12
      %v848 = vpop.permute.xlu0 %847
      %849 = vrot.lane.b32.xlu0 %v781, 12
      %v850 = vpop.permute.xlu0 %849
      %851 = vrot.lane.b32.xlu0 %v783, 12
      %v852 = vpop.permute.xlu0 %851
      %853 = vrot.lane.b32.xlu0 %v786, 12
      %v854 = vpop.permute.xlu0 %853
      %855 = vrot.lane.b32.xlu0 %v788, 12
      %v856 = vpop.permute.xlu0 %855
      %857 = vrot.lane.b32.xlu0 %v790, 12
      %v858 = vpop.permute.xlu0 %857
      %859 = vrot.lane.b32.xlu0 %v792, 12
      %v860 = vpop.permute.xlu0 %859
      %861 = vrot.lane.b32.xlu0 %v795, 12
      %v862 = vpop.permute.xlu0 %861
      %863 = vrot.lane.b32.xlu0 %v797, 12
      %v864 = vpop.permute.xlu0 %863
      %865 = vrot.lane.b32.xlu0 %v799, 12
      %v866 = vpop.permute.xlu0 %865
      %867 = vrot.lane.b32.xlu0 %v801, 12
      %v868 = vpop.permute.xlu0 %867
      %869 = vrot.lane.b32.xlu0 %v804, 12
      %v870 = vpop.permute.xlu0 %869
      %871 = vrot.lane.b32.xlu0 %v806, 12
      %v872 = vpop.permute.xlu0 %871
      %873 = vrot.lane.b32.xlu0 %v808, 12
      %v874 = vpop.permute.xlu0 %873
      %875 = vrot.lane.b32.xlu0 %v810, 12
      %v876 = vpop.permute.xlu0 %875
      %877 = vrot.lane.b32.xlu0 %v813, 12
      %v878 = vpop.permute.xlu0 %877
      %879 = vrot.lane.b32.xlu0 %v815, 12
      %v880 = vpop.permute.xlu0 %879
      %881 = vrot.lane.b32.xlu0 %v817, 12
      %v882 = vpop.permute.xlu0 %881
      %883 = vrot.lane.b32.xlu0 %v819, 12
      %v884 = vpop.permute.xlu0 %883
      %885 = vrot.lane.b32.xlu0 %v822, 12
      %v886 = vpop.permute.xlu0 %885
      %887 = vrot.lane.b32.xlu0 %v824, 12
      %v888 = vpop.permute.xlu0 %887
      %889 = vrot.lane.b32.xlu0 %v826, 12
      %v890 = vpop.permute.xlu0 %889
      %891 = vrot.lane.b32.xlu0 %v828, 12
      %v892 = vpop.permute.xlu0 %891
      %vm925 = vcmask 1045504
      %v926 = vrot.slane %v312, 2
      %v927 = vrot.slane %v313, 2
      %v928 = vsel %vm925, %v926, %v927
      %v929 = vrot.slane %v314, 2
      %v930 = vsel %vm925, %v927, %v929
      %v931 = vrot.slane %v315, 2
      %v932 = vsel %vm925, %v929, %v931
      %v933 = vrot.slane %v316, 2
      %v934 = vsel %vm925, %v931, %v933
      %v935 = vrot.slane %v317, 2
      %v936 = vrot.slane %v318, 2
      %v937 = vsel %vm925, %v935, %v936
      %v938 = vrot.slane %v319, 2
      %v939 = vsel %vm925, %v936, %v938
      %v940 = vrot.slane %v320, 2
      %v941 = vsel %vm925, %v938, %v940
      %v942 = vrot.slane %v321, 2
      %v943 = vsel %vm925, %v940, %v942
      %v944 = vrot.slane %v322, 2
      %v945 = vrot.slane %v323, 2
      %v946 = vsel %vm925, %v944, %v945
      %v947 = vrot.slane %v324, 2
      %v948 = vsel %vm925, %v945, %v947
      %v949 = vrot.slane %v325, 2
      %v950 = vsel %vm925, %v947, %v949
      %v951 = vrot.slane %v326, 2
      %v952 = vsel %vm925, %v949, %v951
      %v953 = vrot.slane %v327, 2
      %v954 = vrot.slane %v328, 2
      %v955 = vsel %vm925, %v953, %v954
      %v956 = vrot.slane %v329, 2
      %v957 = vsel %vm925, %v954, %v956
      %v958 = vrot.slane %v330, 2
      %v959 = vsel %vm925, %v956, %v958
      %v960 = vrot.slane %v331, 2
      %v961 = vsel %vm925, %v958, %v960
      %v962 = vrot.slane %v332, 2
      %v963 = vrot.slane %v333, 2
      %v964 = vsel %vm925, %v962, %v963
      %v965 = vrot.slane %v334, 2
      %v966 = vsel %vm925, %v963, %v965
      %v967 = vrot.slane %v335, 2
      %v968 = vsel %vm925, %v965, %v967
      %v969 = vrot.slane %v336, 2
      %v970 = vsel %vm925, %v967, %v969
      %v971 = vrot.slane %v337, 2
      %v972 = vrot.slane %v338, 2
      %v973 = vsel %vm925, %v971, %v972
      %v974 = vrot.slane %v339, 2
      %v975 = vsel %vm925, %v972, %v974
      %v976 = vrot.slane %v340, 2
      %v977 = vsel %vm925, %v974, %v976
      %v978 = vrot.slane %v341, 2
      %v979 = vsel %vm925, %v976, %v978
      %v980 = vrot.slane %v342, 2
      %v981 = vrot.slane %v343, 2
      %v982 = vsel %vm925, %v980, %v981
      %v983 = vrot.slane %v344, 2
      %v984 = vsel %vm925, %v981, %v983
      %v985 = vrot.slane %v345, 2
      %v986 = vsel %vm925, %v983, %v985
      %v987 = vrot.slane %v346, 2
      %v988 = vsel %vm925, %v985, %v987
      %v989 = vrot.slane %v347, 2
      %v990 = vrot.slane %v348, 2
      %v991 = vsel %vm925, %v989, %v990
      %v992 = vrot.slane %v349, 2
      %v993 = vsel %vm925, %v990, %v992
      %v994 = vrot.slane %v350, 2
      %v995 = vsel %vm925, %v992, %v994
      %v996 = vrot.slane %v351, 2
      %v997 = vsel %vm925, %v994, %v996
      %998 = vrot.lane.b32.xlu0 %v928, 16
      %v999 = vpop.permute.xlu0 %998
      %1000 = vrot.lane.b32.xlu0 %v930, 16
      %v1001 = vpop.permute.xlu0 %1000
      %1002 = vrot.lane.b32.xlu0 %v932, 16
      %v1003 = vpop.permute.xlu0 %1002
      %1004 = vrot.lane.b32.xlu0 %v934, 16
      %v1005 = vpop.permute.xlu0 %1004
      %1006 = vrot.lane.b32.xlu0 %v937, 16
      %v1007 = vpop.permute.xlu0 %1006
      %1008 = vrot.lane.b32.xlu0 %v939, 16
      %v1009 = vpop.permute.xlu0 %1008
      %1010 = vrot.lane.b32.xlu0 %v941, 16
      %v1011 = vpop.permute.xlu0 %1010
      %1012 = vrot.lane.b32.xlu0 %v943, 16
      %v1013 = vpop.permute.xlu0 %1012
      %1014 = vrot.lane.b32.xlu0 %v946, 16
      %v1015 = vpop.permute.xlu0 %1014
      %1016 = vrot.lane.b32.xlu0 %v948, 16
      %v1017 = vpop.permute.xlu0 %1016
      %1018 = vrot.lane.b32.xlu0 %v950, 16
      %v1019 = vpop.permute.xlu0 %1018
      %1020 = vrot.lane.b32.xlu0 %v952, 16
      %v1021 = vpop.permute.xlu0 %1020
      %1022 = vrot.lane.b32.xlu0 %v955, 16
      %v1023 = vpop.permute.xlu0 %1022
      %1024 = vrot.lane.b32.xlu0 %v957, 16
      %v1025 = vpop.permute.xlu0 %1024
      %1026 = vrot.lane.b32.xlu0 %v959, 16
      %v1027 = vpop.permute.xlu0 %1026
      %1028 = vrot.lane.b32.xlu0 %v961, 16
      %v1029 = vpop.permute.xlu0 %1028
      %1030 = vrot.lane.b32.xlu0 %v964, 16
      %v1031 = vpop.permute.xlu0 %1030
      %1032 = vrot.lane.b32.xlu0 %v966, 16
      %v1033 = vpop.permute.xlu0 %1032
      %1034 = vrot.lane.b32.xlu0 %v968, 16
      %v1035 = vpop.permute.xlu0 %1034
      %1036 = vrot.lane.b32.xlu0 %v970, 16
      %v1037 = vpop.permute.xlu0 %1036
      %1038 = vrot.lane.b32.xlu0 %v973, 16
      %v1039 = vpop.permute.xlu0 %1038
      %1040 = vrot.lane.b32.xlu0 %v975, 16
      %v1041 = vpop.permute.xlu0 %1040
      %1042 = vrot.lane.b32.xlu0 %v977, 16
      %v1043 = vpop.permute.xlu0 %1042
      %1044 = vrot.lane.b32.xlu0 %v979, 16
      %v1045 = vpop.permute.xlu0 %1044
      %1046 = vrot.lane.b32.xlu0 %v982, 16
      %v1047 = vpop.permute.xlu0 %1046
      %1048 = vrot.lane.b32.xlu0 %v984, 16
      %v1049 = vpop.permute.xlu0 %1048
      %1050 = vrot.lane.b32.xlu0 %v986, 16
      %v1051 = vpop.permute.xlu0 %1050
      %1052 = vrot.lane.b32.xlu0 %v988, 16
      %v1053 = vpop.permute.xlu0 %1052
      %1054 = vrot.lane.b32.xlu0 %v991, 16
      %v1055 = vpop.permute.xlu0 %1054
      %1056 = vrot.lane.b32.xlu0 %v993, 16
      %v1057 = vpop.permute.xlu0 %1056
      %1058 = vrot.lane.b32.xlu0 %v995, 16
      %v1059 = vpop.permute.xlu0 %1058
      %1060 = vrot.lane.b32.xlu0 %v997, 16
      %v1061 = vpop.permute.xlu0 %1060
      %v1094 = vrot.slane %v362, 2
      %v1095 = vrot.slane %v363, 2
      %v1096 = vsel %vm925, %v1094, %v1095
      %v1097 = vrot.slane %v364, 2
      %v1098 = vsel %vm925, %v1095, %v1097
      %v1099 = vrot.slane %v365, 2
      %v1100 = vsel %vm925, %v1097, %v1099
      %v1101 = vrot.slane %v366, 2
      %v1102 = vsel %vm925, %v1099, %v1101
      %v1103 = vrot.slane %v367, 2
      %v1104 = vrot.slane %v368, 2
      %v1105 = vsel %vm925, %v1103, %v1104
      %v1106 = vrot.slane %v369, 2
      %v1107 = vsel %vm925, %v1104, %v1106
      %v1108 = vrot.slane %v370, 2
      %v1109 = vsel %vm925, %v1106, %v1108
      %v1110 = vrot.slane %v371, 2
      %v1111 = vsel %vm925, %v1108, %v1110
      %v1112 = vrot.slane %v372, 2
      %v1113 = vrot.slane %v373, 2
      %v1114 = vsel %vm925, %v1112, %v1113
      %v1115 = vrot.slane %v374, 2
      %v1116 = vsel %vm925, %v1113, %v1115
      %v1117 = vrot.slane %v375, 2
      %v1118 = vsel %vm925, %v1115, %v1117
      %v1119 = vrot.slane %v376, 2
      %v1120 = vsel %vm925, %v1117, %v1119
      %v1121 = vrot.slane %v377, 2
      %v1122 = vrot.slane %v378, 2
      %v1123 = vsel %vm925, %v1121, %v1122
      %v1124 = vrot.slane %v379, 2
      %v1125 = vsel %vm925, %v1122, %v1124
      %v1126 = vrot.slane %v380, 2
      %v1127 = vsel %vm925, %v1124, %v1126
      %v1128 = vrot.slane %v381, 2
      %v1129 = vsel %vm925, %v1126, %v1128
      %v1130 = vrot.slane %v382, 2
      %v1131 = vrot.slane %v383, 2
      %v1132 = vsel %vm925, %v1130, %v1131
      %v1133 = vrot.slane %v384, 2
      %v1134 = vsel %vm925, %v1131, %v1133
      %v1135 = vrot.slane %v385, 2
      %v1136 = vsel %vm925, %v1133, %v1135
      %v1137 = vrot.slane %v386, 2
      %v1138 = vsel %vm925, %v1135, %v1137
      %v1139 = vrot.slane %v387, 2
      %v1140 = vrot.slane %v388, 2
      %v1141 = vsel %vm925, %v1139, %v1140
      %v1142 = vrot.slane %v389, 2
      %v1143 = vsel %vm925, %v1140, %v1142
      %v1144 = vrot.slane %v390, 2
      %v1145 = vsel %vm925, %v1142, %v1144
      %v1146 = vrot.slane %v391, 2
      %v1147 = vsel %vm925, %v1144, %v1146
      %v1148 = vrot.slane %v392, 2
      %v1149 = vrot.slane %v393, 2
      %v1150 = vsel %vm925, %v1148, %v1149
      %v1151 = vrot.slane %v394, 2
      %v1152 = vsel %vm925, %v1149, %v1151
      %v1153 = vrot.slane %v395, 2
      %v1154 = vsel %vm925, %v1151, %v1153
      %v1155 = vrot.slane %v396, 2
      %v1156 = vsel %vm925, %v1153, %v1155
      %v1157 = vrot.slane %v397, 2
      %v1158 = vrot.slane %v398, 2
      %v1159 = vsel %vm925, %v1157, %v1158
      %v1160 = vrot.slane %v399, 2
      %v1161 = vsel %vm925, %v1158, %v1160
      %v1162 = vrot.slane %v400, 2
      %v1163 = vsel %vm925, %v1160, %v1162
      %v1164 = vrot.slane %v401, 2
      %v1165 = vsel %vm925, %v1162, %v1164
      %1166 = vrot.lane.b32.xlu0 %v1096, 20
      %v1167 = vpop.permute.xlu0 %1166
      %1168 = vrot.lane.b32.xlu0 %v1098, 20
      %v1169 = vpop.permute.xlu0 %1168
      %1170 = vrot.lane.b32.xlu0 %v1100, 20
      %v1171 = vpop.permute.xlu0 %1170
      %1172 = vrot.lane.b32.xlu0 %v1102, 20
      %v1173 = vpop.permute.xlu0 %1172
      %1174 = vrot.lane.b32.xlu0 %v1105, 20
      %v1175 = vpop.permute.xlu0 %1174
      %1176 = vrot.lane.b32.xlu0 %v1107, 20
      %v1177 = vpop.permute.xlu0 %1176
      %1178 = vrot.lane.b32.xlu0 %v1109, 20
      %v1179 = vpop.permute.xlu0 %1178
      %1180 = vrot.lane.b32.xlu0 %v1111, 20
      %v1181 = vpop.permute.xlu0 %1180
      %1182 = vrot.lane.b32.xlu0 %v1114, 20
      %v1183 = vpop.permute.xlu0 %1182
      %1184 = vrot.lane.b32.xlu0 %v1116, 20
      %v1185 = vpop.permute.xlu0 %1184
      %1186 = vrot.lane.b32.xlu0 %v1118, 20
      %v1187 = vpop.permute.xlu0 %1186
      %1188 = vrot.lane.b32.xlu0 %v1120, 20
      %v1189 = vpop.permute.xlu0 %1188
      %1190 = vrot.lane.b32.xlu0 %v1123, 20
      %v1191 = vpop.permute.xlu0 %1190
      %1192 = vrot.lane.b32.xlu0 %v1125, 20
      %v1193 = vpop.permute.xlu0 %1192
      %1194 = vrot.lane.b32.xlu0 %v1127, 20
      %v1195 = vpop.permute.xlu0 %1194
      %1196 = vrot.lane.b32.xlu0 %v1129, 20
      %v1197 = vpop.permute.xlu0 %1196
      %1198 = vrot.lane.b32.xlu0 %v1132, 20
      %v1199 = vpop.permute.xlu0 %1198
      %1200 = vrot.lane.b32.xlu0 %v1134, 20
      %v1201 = vpop.permute.xlu0 %1200
      %1202 = vrot.lane.b32.xlu0 %v1136, 20
      %v1203 = vpop.permute.xlu0 %1202
      %1204 = vrot.lane.b32.xlu0 %v1138, 20
      %v1205 = vpop.permute.xlu0 %1204
      %1206 = vrot.lane.b32.xlu0 %v1141, 20
      %v1207 = vpop.permute.xlu0 %1206
      %1208 = vrot.lane.b32.xlu0 %v1143, 20
      %v1209 = vpop.permute.xlu0 %1208
      %1210 = vrot.lane.b32.xlu0 %v1145, 20
      %v1211 = vpop.permute.xlu0 %1210
      %1212 = vrot.lane.b32.xlu0 %v1147, 20
      %v1213 = vpop.permute.xlu0 %1212
      %1214 = vrot.lane.b32.xlu0 %v1150, 20
      %v1215 = vpop.permute.xlu0 %1214
      %1216 = vrot.lane.b32.xlu0 %v1152, 20
      %v1217 = vpop.permute.xlu0 %1216
      %1218 = vrot.lane.b32.xlu0 %v1154, 20
      %v1219 = vpop.permute.xlu0 %1218
      %1220 = vrot.lane.b32.xlu0 %v1156, 20
      %v1221 = vpop.permute.xlu0 %1220
      %1222 = vrot.lane.b32.xlu0 %v1159, 20
      %v1223 = vpop.permute.xlu0 %1222
      %1224 = vrot.lane.b32.xlu0 %v1161, 20
      %v1225 = vpop.permute.xlu0 %1224
      %1226 = vrot.lane.b32.xlu0 %v1163, 20
      %v1227 = vpop.permute.xlu0 %1226
      %1228 = vrot.lane.b32.xlu0 %v1165, 20
      %v1229 = vpop.permute.xlu0 %1228
      %1266 = vrot.lane.b32.xlu0 %v317, 24
      %v1267 = vpop.permute.xlu0 %1266
      %1268 = vrot.lane.b32.xlu0 %v318, 24
      %v1269 = vpop.permute.xlu0 %1268
      %1270 = vrot.lane.b32.xlu0 %v319, 24
      %v1271 = vpop.permute.xlu0 %1270
      %1272 = vrot.lane.b32.xlu0 %v320, 24
      %v1273 = vpop.permute.xlu0 %1272
      %1274 = vrot.lane.b32.xlu0 %v322, 24
      %v1275 = vpop.permute.xlu0 %1274
      %1276 = vrot.lane.b32.xlu0 %v323, 24
      %v1277 = vpop.permute.xlu0 %1276
      %1278 = vrot.lane.b32.xlu0 %v324, 24
      %v1279 = vpop.permute.xlu0 %1278
      %1280 = vrot.lane.b32.xlu0 %v325, 24
      %v1281 = vpop.permute.xlu0 %1280
      %1282 = vrot.lane.b32.xlu0 %v327, 24
      %v1283 = vpop.permute.xlu0 %1282
      %1284 = vrot.lane.b32.xlu0 %v328, 24
      %v1285 = vpop.permute.xlu0 %1284
      %1286 = vrot.lane.b32.xlu0 %v329, 24
      %v1287 = vpop.permute.xlu0 %1286
      %1288 = vrot.lane.b32.xlu0 %v330, 24
      %v1289 = vpop.permute.xlu0 %1288
      %1290 = vrot.lane.b32.xlu0 %v332, 24
      %v1291 = vpop.permute.xlu0 %1290
      %1292 = vrot.lane.b32.xlu0 %v333, 24
      %v1293 = vpop.permute.xlu0 %1292
      %1294 = vrot.lane.b32.xlu0 %v334, 24
      %v1295 = vpop.permute.xlu0 %1294
      %1296 = vrot.lane.b32.xlu0 %v335, 24
      %v1297 = vpop.permute.xlu0 %1296
      %1298 = vrot.lane.b32.xlu0 %v337, 24
      %v1299 = vpop.permute.xlu0 %1298
      %1300 = vrot.lane.b32.xlu0 %v338, 24
      %v1301 = vpop.permute.xlu0 %1300
      %1302 = vrot.lane.b32.xlu0 %v339, 24
      %v1303 = vpop.permute.xlu0 %1302
      %1304 = vrot.lane.b32.xlu0 %v340, 24
      %v1305 = vpop.permute.xlu0 %1304
      %1306 = vrot.lane.b32.xlu0 %v342, 24
      %v1307 = vpop.permute.xlu0 %1306
      %1308 = vrot.lane.b32.xlu0 %v343, 24
      %v1309 = vpop.permute.xlu0 %1308
      %1310 = vrot.lane.b32.xlu0 %v344, 24
      %v1311 = vpop.permute.xlu0 %1310
      %1312 = vrot.lane.b32.xlu0 %v345, 24
      %v1313 = vpop.permute.xlu0 %1312
      %1314 = vrot.lane.b32.xlu0 %v347, 24
      %v1315 = vpop.permute.xlu0 %1314
      %1316 = vrot.lane.b32.xlu0 %v348, 24
      %v1317 = vpop.permute.xlu0 %1316
      %1318 = vrot.lane.b32.xlu0 %v349, 24
      %v1319 = vpop.permute.xlu0 %1318
      %1320 = vrot.lane.b32.xlu0 %v350, 24
      %v1321 = vpop.permute.xlu0 %1320
      %1322 = vrot.lane.b32.xlu0 %v352, 24
      %v1323 = vpop.permute.xlu0 %1322
      %1324 = vrot.lane.b32.xlu0 %v353, 24
      %v1325 = vpop.permute.xlu0 %1324
      %1326 = vrot.lane.b32.xlu0 %v354, 24
      %v1327 = vpop.permute.xlu0 %1326
      %1328 = vrot.lane.b32.xlu0 %v355, 24
      %v1329 = vpop.permute.xlu0 %1328
      %1366 = vrot.lane.b32.xlu0 %v367, 28
      %v1367 = vpop.permute.xlu0 %1366
      %1368 = vrot.lane.b32.xlu0 %v368, 28
      %v1369 = vpop.permute.xlu0 %1368
      %1370 = vrot.lane.b32.xlu0 %v369, 28
      %v1371 = vpop.permute.xlu0 %1370
      %1372 = vrot.lane.b32.xlu0 %v370, 28
      %v1373 = vpop.permute.xlu0 %1372
      %1374 = vrot.lane.b32.xlu0 %v372, 28
      %v1375 = vpop.permute.xlu0 %1374
      %1376 = vrot.lane.b32.xlu0 %v373, 28
      %v1377 = vpop.permute.xlu0 %1376
      %1378 = vrot.lane.b32.xlu0 %v374, 28
      %v1379 = vpop.permute.xlu0 %1378
      %1380 = vrot.lane.b32.xlu0 %v375, 28
      %v1381 = vpop.permute.xlu0 %1380
      %1382 = vrot.lane.b32.xlu0 %v377, 28
      %v1383 = vpop.permute.xlu0 %1382
      %1384 = vrot.lane.b32.xlu0 %v378, 28
      %v1385 = vpop.permute.xlu0 %1384
      %1386 = vrot.lane.b32.xlu0 %v379, 28
      %v1387 = vpop.permute.xlu0 %1386
      %1388 = vrot.lane.b32.xlu0 %v380, 28
      %v1389 = vpop.permute.xlu0 %1388
      %1390 = vrot.lane.b32.xlu0 %v382, 28
      %v1391 = vpop.permute.xlu0 %1390
      %1392 = vrot.lane.b32.xlu0 %v383, 28
      %v1393 = vpop.permute.xlu0 %1392
      %1394 = vrot.lane.b32.xlu0 %v384, 28
      %v1395 = vpop.permute.xlu0 %1394
      %1396 = vrot.lane.b32.xlu0 %v385, 28
      %v1397 = vpop.permute.xlu0 %1396
      %1398 = vrot.lane.b32.xlu0 %v387, 28
      %v1399 = vpop.permute.xlu0 %1398
      %1400 = vrot.lane.b32.xlu0 %v388, 28
      %v1401 = vpop.permute.xlu0 %1400
      %1402 = vrot.lane.b32.xlu0 %v389, 28
      %v1403 = vpop.permute.xlu0 %1402
      %1404 = vrot.lane.b32.xlu0 %v390, 28
      %v1405 = vpop.permute.xlu0 %1404
      %1406 = vrot.lane.b32.xlu0 %v392, 28
      %v1407 = vpop.permute.xlu0 %1406
      %1408 = vrot.lane.b32.xlu0 %v393, 28
      %v1409 = vpop.permute.xlu0 %1408
      %1410 = vrot.lane.b32.xlu0 %v394, 28
      %v1411 = vpop.permute.xlu0 %1410
      %1412 = vrot.lane.b32.xlu0 %v395, 28
      %v1413 = vpop.permute.xlu0 %1412
      %1414 = vrot.lane.b32.xlu0 %v397, 28
      %v1415 = vpop.permute.xlu0 %1414
      %1416 = vrot.lane.b32.xlu0 %v398, 28
      %v1417 = vpop.permute.xlu0 %1416
      %1418 = vrot.lane.b32.xlu0 %v399, 28
      %v1419 = vpop.permute.xlu0 %1418
      %1420 = vrot.lane.b32.xlu0 %v400, 28
      %v1421 = vpop.permute.xlu0 %1420
      %1422 = vrot.lane.b32.xlu0 %v402, 28
      %v1423 = vpop.permute.xlu0 %1422
      %1424 = vrot.lane.b32.xlu0 %v403, 28
      %v1425 = vpop.permute.xlu0 %1424
      %1426 = vrot.lane.b32.xlu0 %v404, 28
      %v1427 = vpop.permute.xlu0 %1426
      %1428 = vrot.lane.b32.xlu0 %v405, 28
      %v1429 = vpop.permute.xlu0 %1428
      %v1463 = vrot.slane %v352, 1
      %v1464 = vrot.slane %v353, 1
      %v1465 = vsel %vm580, %v1463, %v1464
      %v1466 = vrot.slane %v354, 1
      %v1467 = vsel %vm580, %v1464, %v1466
      %v1468 = vrot.slane %v355, 1
      %v1469 = vsel %vm580, %v1466, %v1468
      %v1470 = vrot.slane %v356, 1
      %v1471 = vsel %vm580, %v1468, %v1470
      %1472 = vrot.lane.b32.xlu0 %v592, 32
      %v1473 = vpop.permute.xlu0 %1472
      %1474 = vrot.lane.b32.xlu0 %v594, 32
      %v1475 = vpop.permute.xlu0 %1474
      %1476 = vrot.lane.b32.xlu0 %v596, 32
      %v1477 = vpop.permute.xlu0 %1476
      %1478 = vrot.lane.b32.xlu0 %v598, 32
      %v1479 = vpop.permute.xlu0 %1478
      %1480 = vrot.lane.b32.xlu0 %v601, 32
      %v1481 = vpop.permute.xlu0 %1480
      %1482 = vrot.lane.b32.xlu0 %v603, 32
      %v1483 = vpop.permute.xlu0 %1482
      %1484 = vrot.lane.b32.xlu0 %v605, 32
      %v1485 = vpop.permute.xlu0 %1484
      %1486 = vrot.lane.b32.xlu0 %v607, 32
      %v1487 = vpop.permute.xlu0 %1486
      %1488 = vrot.lane.b32.xlu0 %v610, 32
      %v1489 = vpop.permute.xlu0 %1488
      %1490 = vrot.lane.b32.xlu0 %v612, 32
      %v1491 = vpop.permute.xlu0 %1490
      %1492 = vrot.lane.b32.xlu0 %v614, 32
      %v1493 = vpop.permute.xlu0 %1492
      %1494 = vrot.lane.b32.xlu0 %v616, 32
      %v1495 = vpop.permute.xlu0 %1494
      %1496 = vrot.lane.b32.xlu0 %v619, 32
      %v1497 = vpop.permute.xlu0 %1496
      %1498 = vrot.lane.b32.xlu0 %v621, 32
      %v1499 = vpop.permute.xlu0 %1498
      %1500 = vrot.lane.b32.xlu0 %v623, 32
      %v1501 = vpop.permute.xlu0 %1500
      %1502 = vrot.lane.b32.xlu0 %v625, 32
      %v1503 = vpop.permute.xlu0 %1502
      %1504 = vrot.lane.b32.xlu0 %v628, 32
      %v1505 = vpop.permute.xlu0 %1504
      %1506 = vrot.lane.b32.xlu0 %v630, 32
      %v1507 = vpop.permute.xlu0 %1506
      %1508 = vrot.lane.b32.xlu0 %v632, 32
      %v1509 = vpop.permute.xlu0 %1508
      %1510 = vrot.lane.b32.xlu0 %v634, 32
      %v1511 = vpop.permute.xlu0 %1510
      %1512 = vrot.lane.b32.xlu0 %v637, 32
      %v1513 = vpop.permute.xlu0 %1512
      %1514 = vrot.lane.b32.xlu0 %v639, 32
      %v1515 = vpop.permute.xlu0 %1514
      %1516 = vrot.lane.b32.xlu0 %v641, 32
      %v1517 = vpop.permute.xlu0 %1516
      %1518 = vrot.lane.b32.xlu0 %v643, 32
      %v1519 = vpop.permute.xlu0 %1518
      %1520 = vrot.lane.b32.xlu0 %v646, 32
      %v1521 = vpop.permute.xlu0 %1520
      %1522 = vrot.lane.b32.xlu0 %v648, 32
      %v1523 = vpop.permute.xlu0 %1522
      %1524 = vrot.lane.b32.xlu0 %v650, 32
      %v1525 = vpop.permute.xlu0 %1524
      %1526 = vrot.lane.b32.xlu0 %v652, 32
      %v1527 = vpop.permute.xlu0 %1526
      %1528 = vrot.lane.b32.xlu0 %v1465, 32
      %v1529 = vpop.permute.xlu0 %1528
      %1530 = vrot.lane.b32.xlu0 %v1467, 32
      %v1531 = vpop.permute.xlu0 %1530
      %1532 = vrot.lane.b32.xlu0 %v1469, 32
      %v1533 = vpop.permute.xlu0 %1532
      %1534 = vrot.lane.b32.xlu0 %v1471, 32
      %v1535 = vpop.permute.xlu0 %1534
      %v1569 = vrot.slane %v402, 1
      %v1570 = vrot.slane %v403, 1
      %v1571 = vsel %vm580, %v1569, %v1570
      %v1572 = vrot.slane %v404, 1
      %v1573 = vsel %vm580, %v1570, %v1572
      %v1574 = vrot.slane %v405, 1
      %v1575 = vsel %vm580, %v1572, %v1574
      %v1576 = vrot.slane %v406, 1
      %v1577 = vsel %vm580, %v1574, %v1576
      %1578 = vrot.lane.b32.xlu0 %v768, 36
      %v1579 = vpop.permute.xlu0 %1578
      %1580 = vrot.lane.b32.xlu0 %v770, 36
      %v1581 = vpop.permute.xlu0 %1580
      %1582 = vrot.lane.b32.xlu0 %v772, 36
      %v1583 = vpop.permute.xlu0 %1582
      %1584 = vrot.lane.b32.xlu0 %v774, 36
      %v1585 = vpop.permute.xlu0 %1584
      %1586 = vrot.lane.b32.xlu0 %v777, 36
      %v1587 = vpop.permute.xlu0 %1586
      %1588 = vrot.lane.b32.xlu0 %v779, 36
      %v1589 = vpop.permute.xlu0 %1588
      %1590 = vrot.lane.b32.xlu0 %v781, 36
      %v1591 = vpop.permute.xlu0 %1590
      %1592 = vrot.lane.b32.xlu0 %v783, 36
      %v1593 = vpop.permute.xlu0 %1592
      %1594 = vrot.lane.b32.xlu0 %v786, 36
      %v1595 = vpop.permute.xlu0 %1594
      %1596 = vrot.lane.b32.xlu0 %v788, 36
      %v1597 = vpop.permute.xlu0 %1596
      %1598 = vrot.lane.b32.xlu0 %v790, 36
      %v1599 = vpop.permute.xlu0 %1598
      %1600 = vrot.lane.b32.xlu0 %v792, 36
      %v1601 = vpop.permute.xlu0 %1600
      %1602 = vrot.lane.b32.xlu0 %v795, 36
      %v1603 = vpop.permute.xlu0 %1602
      %1604 = vrot.lane.b32.xlu0 %v797, 36
      %v1605 = vpop.permute.xlu0 %1604
      %1606 = vrot.lane.b32.xlu0 %v799, 36
      %v1607 = vpop.permute.xlu0 %1606
      %1608 = vrot.lane.b32.xlu0 %v801, 36
      %v1609 = vpop.permute.xlu0 %1608
      %1610 = vrot.lane.b32.xlu0 %v804, 36
      %v1611 = vpop.permute.xlu0 %1610
      %1612 = vrot.lane.b32.xlu0 %v806, 36
      %v1613 = vpop.permute.xlu0 %1612
      %1614 = vrot.lane.b32.xlu0 %v808, 36
      %v1615 = vpop.permute.xlu0 %1614
      %1616 = vrot.lane.b32.xlu0 %v810, 36
      %v1617 = vpop.permute.xlu0 %1616
      %1618 = vrot.lane.b32.xlu0 %v813, 36
      %v1619 = vpop.permute.xlu0 %1618
      %1620 = vrot.lane.b32.xlu0 %v815, 36
      %v1621 = vpop.permute.xlu0 %1620
      %1622 = vrot.lane.b32.xlu0 %v817, 36
      %v1623 = vpop.permute.xlu0 %1622
      %1624 = vrot.lane.b32.xlu0 %v819, 36
      %v1625 = vpop.permute.xlu0 %1624
      %1626 = vrot.lane.b32.xlu0 %v822, 36
      %v1627 = vpop.permute.xlu0 %1626
      %1628 = vrot.lane.b32.xlu0 %v824, 36
      %v1629 = vpop.permute.xlu0 %1628
      %1630 = vrot.lane.b32.xlu0 %v826, 36
      %v1631 = vpop.permute.xlu0 %1630
      %1632 = vrot.lane.b32.xlu0 %v828, 36
      %v1633 = vpop.permute.xlu0 %1632
      %1634 = vrot.lane.b32.xlu0 %v1571, 36
      %v1635 = vpop.permute.xlu0 %1634
      %1636 = vrot.lane.b32.xlu0 %v1573, 36
      %v1637 = vpop.permute.xlu0 %1636
      %1638 = vrot.lane.b32.xlu0 %v1575, 36
      %v1639 = vpop.permute.xlu0 %1638
      %1640 = vrot.lane.b32.xlu0 %v1577, 36
      %v1641 = vpop.permute.xlu0 %1640
      %v1674 = vrot.slane %v352, 2
      %v1675 = vrot.slane %v353, 2
      %v1676 = vsel %vm925, %v1674, %v1675
      %v1677 = vrot.slane %v354, 2
      %v1678 = vsel %vm925, %v1675, %v1677
      %v1679 = vrot.slane %v355, 2
      %v1680 = vsel %vm925, %v1677, %v1679
      %v1681 = vrot.slane %v356, 2
      %v1682 = vsel %vm925, %v1679, %v1681
      %1683 = vrot.lane.b32.xlu0 %v937, 40
      %v1684 = vpop.permute.xlu0 %1683
      %1685 = vrot.lane.b32.xlu0 %v939, 40
      %v1686 = vpop.permute.xlu0 %1685
      %1687 = vrot.lane.b32.xlu0 %v941, 40
      %v1688 = vpop.permute.xlu0 %1687
      %1689 = vrot.lane.b32.xlu0 %v943, 40
      %v1690 = vpop.permute.xlu0 %1689
      %1691 = vrot.lane.b32.xlu0 %v946, 40
      %v1692 = vpop.permute.xlu0 %1691
      %1693 = vrot.lane.b32.xlu0 %v948, 40
      %v1694 = vpop.permute.xlu0 %1693
      %1695 = vrot.lane.b32.xlu0 %v950, 40
      %v1696 = vpop.permute.xlu0 %1695
      %1697 = vrot.lane.b32.xlu0 %v952, 40
      %v1698 = vpop.permute.xlu0 %1697
      %1699 = vrot.lane.b32.xlu0 %v955, 40
      %v1700 = vpop.permute.xlu0 %1699
      %1701 = vrot.lane.b32.xlu0 %v957, 40
      %v1702 = vpop.permute.xlu0 %1701
      %1703 = vrot.lane.b32.xlu0 %v959, 40
      %v1704 = vpop.permute.xlu0 %1703
      %1705 = vrot.lane.b32.xlu0 %v961, 40
      %v1706 = vpop.permute.xlu0 %1705
      %1707 = vrot.lane.b32.xlu0 %v964, 40
      %v1708 = vpop.permute.xlu0 %1707
      %1709 = vrot.lane.b32.xlu0 %v966, 40
      %v1710 = vpop.permute.xlu0 %1709
      %1711 = vrot.lane.b32.xlu0 %v968, 40
      %v1712 = vpop.permute.xlu0 %1711
      %1713 = vrot.lane.b32.xlu0 %v970, 40
      %v1714 = vpop.permute.xlu0 %1713
      %1715 = vrot.lane.b32.xlu0 %v973, 40
      %v1716 = vpop.permute.xlu0 %1715
      %1717 = vrot.lane.b32.xlu0 %v975, 40
      %v1718 = vpop.permute.xlu0 %1717
      %1719 = vrot.lane.b32.xlu0 %v977, 40
      %v1720 = vpop.permute.xlu0 %1719
      %1721 = vrot.lane.b32.xlu0 %v979, 40
      %v1722 = vpop.permute.xlu0 %1721
      %1723 = vrot.lane.b32.xlu0 %v982, 40
      %v1724 = vpop.permute.xlu0 %1723
      %1725 = vrot.lane.b32.xlu0 %v984, 40
      %v1726 = vpop.permute.xlu0 %1725
      %1727 = vrot.lane.b32.xlu0 %v986, 40
      %v1728 = vpop.permute.xlu0 %1727
      %1729 = vrot.lane.b32.xlu0 %v988, 40
      %v1730 = vpop.permute.xlu0 %1729
      %1731 = vrot.lane.b32.xlu0 %v991, 40
      %v1732 = vpop.permute.xlu0 %1731
      %1733 = vrot.lane.b32.xlu0 %v993, 40
      %v1734 = vpop.permute.xlu0 %1733
      %1735 = vrot.lane.b32.xlu0 %v995, 40
      %v1736 = vpop.permute.xlu0 %1735
      %1737 = vrot.lane.b32.xlu0 %v997, 40
      %v1738 = vpop.permute.xlu0 %1737
      %1739 = vrot.lane.b32.xlu0 %v1676, 40
      %v1740 = vpop.permute.xlu0 %1739
      %1741 = vrot.lane.b32.xlu0 %v1678, 40
      %v1742 = vpop.permute.xlu0 %1741
      %1743 = vrot.lane.b32.xlu0 %v1680, 40
      %v1744 = vpop.permute.xlu0 %1743
      %1745 = vrot.lane.b32.xlu0 %v1682, 40
      %v1746 = vpop.permute.xlu0 %1745
      %v1779 = vrot.slane %v402, 2
      %v1780 = vrot.slane %v403, 2
      %v1781 = vsel %vm925, %v1779, %v1780
      %v1782 = vrot.slane %v404, 2
      %v1783 = vsel %vm925, %v1780, %v1782
      %v1784 = vrot.slane %v405, 2
      %v1785 = vsel %vm925, %v1782, %v1784
      %v1786 = vrot.slane %v406, 2
      %v1787 = vsel %vm925, %v1784, %v1786
      %1788 = vrot.lane.b32.xlu0 %v1105, 44
      %v1789 = vpop.permute.xlu0 %1788
      %1790 = vrot.lane.b32.xlu0 %v1107, 44
      %v1791 = vpop.permute.xlu0 %1790
      %1792 = vrot.lane.b32.xlu0 %v1109, 44
      %v1793 = vpop.permute.xlu0 %1792
      %1794 = vrot.lane.b32.xlu0 %v1111, 44
      %v1795 = vpop.permute.xlu0 %1794
      %1796 = vrot.lane.b32.xlu0 %v1114, 44
      %v1797 = vpop.permute.xlu0 %1796
      %1798 = vrot.lane.b32.xlu0 %v1116, 44
      %v1799 = vpop.permute.xlu0 %1798
      %1800 = vrot.lane.b32.xlu0 %v1118, 44
      %v1801 = vpop.permute.xlu0 %1800
      %1802 = vrot.lane.b32.xlu0 %v1120, 44
      %v1803 = vpop.permute.xlu0 %1802
      %1804 = vrot.lane.b32.xlu0 %v1123, 44
      %v1805 = vpop.permute.xlu0 %1804
      %1806 = vrot.lane.b32.xlu0 %v1125, 44
      %v1807 = vpop.permute.xlu0 %1806
      %1808 = vrot.lane.b32.xlu0 %v1127, 44
      %v1809 = vpop.permute.xlu0 %1808
      %1810 = vrot.lane.b32.xlu0 %v1129, 44
      %v1811 = vpop.permute.xlu0 %1810
      %1812 = vrot.lane.b32.xlu0 %v1132, 44
      %v1813 = vpop.permute.xlu0 %1812
      %1814 = vrot.lane.b32.xlu0 %v1134, 44
      %v1815 = vpop.permute.xlu0 %1814
      %1816 = vrot.lane.b32.xlu0 %v1136, 44
      %v1817 = vpop.permute.xlu0 %1816
      %1818 = vrot.lane.b32.xlu0 %v1138, 44
      %v1819 = vpop.permute.xlu0 %1818
      %1820 = vrot.lane.b32.xlu0 %v1141, 44
      %v1821 = vpop.permute.xlu0 %1820
      %1822 = vrot.lane.b32.xlu0 %v1143, 44
      %v1823 = vpop.permute.xlu0 %1822
      %1824 = vrot.lane.b32.xlu0 %v1145, 44
      %v1825 = vpop.permute.xlu0 %1824
      %1826 = vrot.lane.b32.xlu0 %v1147, 44
      %v1827 = vpop.permute.xlu0 %1826
      %1828 = vrot.lane.b32.xlu0 %v1150, 44
      %v1829 = vpop.permute.xlu0 %1828
      %1830 = vrot.lane.b32.xlu0 %v1152, 44
      %v1831 = vpop.permute.xlu0 %1830
      %1832 = vrot.lane.b32.xlu0 %v1154, 44
      %v1833 = vpop.permute.xlu0 %1832
      %1834 = vrot.lane.b32.xlu0 %v1156, 44
      %v1835 = vpop.permute.xlu0 %1834
      %1836 = vrot.lane.b32.xlu0 %v1159, 44
      %v1837 = vpop.permute.xlu0 %1836
      %1838 = vrot.lane.b32.xlu0 %v1161, 44
      %v1839 = vpop.permute.xlu0 %1838
      %1840 = vrot.lane.b32.xlu0 %v1163, 44
      %v1841 = vpop.permute.xlu0 %1840
      %1842 = vrot.lane.b32.xlu0 %v1165, 44
      %v1843 = vpop.permute.xlu0 %1842
      %1844 = vrot.lane.b32.xlu0 %v1781, 44
      %v1845 = vpop.permute.xlu0 %1844
      %1846 = vrot.lane.b32.xlu0 %v1783, 44
      %v1847 = vpop.permute.xlu0 %1846
      %1848 = vrot.lane.b32.xlu0 %v1785, 44
      %v1849 = vpop.permute.xlu0 %1848
      %1850 = vrot.lane.b32.xlu0 %v1787, 44
      %v1851 = vpop.permute.xlu0 %1850
      %1888 = vrot.lane.b32.xlu0 %v322, 48
      %v1889 = vpop.permute.xlu0 %1888
      %1890 = vrot.lane.b32.xlu0 %v323, 48
      %v1891 = vpop.permute.xlu0 %1890
      %1892 = vrot.lane.b32.xlu0 %v324, 48
      %v1893 = vpop.permute.xlu0 %1892
      %1894 = vrot.lane.b32.xlu0 %v325, 48
      %v1895 = vpop.permute.xlu0 %1894
      %1896 = vrot.lane.b32.xlu0 %v327, 48
      %v1897 = vpop.permute.xlu0 %1896
      %1898 = vrot.lane.b32.xlu0 %v328, 48
      %v1899 = vpop.permute.xlu0 %1898
      %1900 = vrot.lane.b32.xlu0 %v329, 48
      %v1901 = vpop.permute.xlu0 %1900
      %1902 = vrot.lane.b32.xlu0 %v330, 48
      %v1903 = vpop.permute.xlu0 %1902
      %1904 = vrot.lane.b32.xlu0 %v332, 48
      %v1905 = vpop.permute.xlu0 %1904
      %1906 = vrot.lane.b32.xlu0 %v333, 48
      %v1907 = vpop.permute.xlu0 %1906
      %1908 = vrot.lane.b32.xlu0 %v334, 48
      %v1909 = vpop.permute.xlu0 %1908
      %1910 = vrot.lane.b32.xlu0 %v335, 48
      %v1911 = vpop.permute.xlu0 %1910
      %1912 = vrot.lane.b32.xlu0 %v337, 48
      %v1913 = vpop.permute.xlu0 %1912
      %1914 = vrot.lane.b32.xlu0 %v338, 48
      %v1915 = vpop.permute.xlu0 %1914
      %1916 = vrot.lane.b32.xlu0 %v339, 48
      %v1917 = vpop.permute.xlu0 %1916
      %1918 = vrot.lane.b32.xlu0 %v340, 48
      %v1919 = vpop.permute.xlu0 %1918
      %1920 = vrot.lane.b32.xlu0 %v342, 48
      %v1921 = vpop.permute.xlu0 %1920
      %1922 = vrot.lane.b32.xlu0 %v343, 48
      %v1923 = vpop.permute.xlu0 %1922
      %1924 = vrot.lane.b32.xlu0 %v344, 48
      %v1925 = vpop.permute.xlu0 %1924
      %1926 = vrot.lane.b32.xlu0 %v345, 48
      %v1927 = vpop.permute.xlu0 %1926
      %1928 = vrot.lane.b32.xlu0 %v347, 48
      %v1929 = vpop.permute.xlu0 %1928
      %1930 = vrot.lane.b32.xlu0 %v348, 48
      %v1931 = vpop.permute.xlu0 %1930
      %1932 = vrot.lane.b32.xlu0 %v349, 48
      %v1933 = vpop.permute.xlu0 %1932
      %1934 = vrot.lane.b32.xlu0 %v350, 48
      %v1935 = vpop.permute.xlu0 %1934
      %1936 = vrot.lane.b32.xlu0 %v352, 48
      %v1937 = vpop.permute.xlu0 %1936
      %1938 = vrot.lane.b32.xlu0 %v353, 48
      %v1939 = vpop.permute.xlu0 %1938
      %1940 = vrot.lane.b32.xlu0 %v354, 48
      %v1941 = vpop.permute.xlu0 %1940
      %1942 = vrot.lane.b32.xlu0 %v355, 48
      %v1943 = vpop.permute.xlu0 %1942
      %1944 = vrot.lane.b32.xlu0 %v357, 48
      %v1945 = vpop.permute.xlu0 %1944
      %1946 = vrot.lane.b32.xlu0 %v358, 48
      %v1947 = vpop.permute.xlu0 %1946
      %1948 = vrot.lane.b32.xlu0 %v359, 48
      %v1949 = vpop.permute.xlu0 %1948
      %1950 = vrot.lane.b32.xlu0 %v360, 48
      %v1951 = vpop.permute.xlu0 %1950
      %1988 = vrot.lane.b32.xlu0 %v372, 52
      %v1989 = vpop.permute.xlu0 %1988
      %1990 = vrot.lane.b32.xlu0 %v373, 52
      %v1991 = vpop.permute.xlu0 %1990
      %1992 = vrot.lane.b32.xlu0 %v374, 52
      %v1993 = vpop.permute.xlu0 %1992
      %1994 = vrot.lane.b32.xlu0 %v375, 52
      %v1995 = vpop.permute.xlu0 %1994
      %1996 = vrot.lane.b32.xlu0 %v377, 52
      %v1997 = vpop.permute.xlu0 %1996
      %1998 = vrot.lane.b32.xlu0 %v378, 52
      %v1999 = vpop.permute.xlu0 %1998
      %2000 = vrot.lane.b32.xlu0 %v379, 52
      %v2001 = vpop.permute.xlu0 %2000
      %2002 = vrot.lane.b32.xlu0 %v380, 52
      %v2003 = vpop.permute.xlu0 %2002
      %2004 = vrot.lane.b32.xlu0 %v382, 52
      %v2005 = vpop.permute.xlu0 %2004
      %2006 = vrot.lane.b32.xlu0 %v383, 52
      %v2007 = vpop.permute.xlu0 %2006
      %2008 = vrot.lane.b32.xlu0 %v384, 52
      %v2009 = vpop.permute.xlu0 %2008
      %2010 = vrot.lane.b32.xlu0 %v385, 52
      %v2011 = vpop.permute.xlu0 %2010
      %2012 = vrot.lane.b32.xlu0 %v387, 52
      %v2013 = vpop.permute.xlu0 %2012
      %2014 = vrot.lane.b32.xlu0 %v388, 52
      %v2015 = vpop.permute.xlu0 %2014
      %2016 = vrot.lane.b32.xlu0 %v389, 52
      %v2017 = vpop.permute.xlu0 %2016
      %2018 = vrot.lane.b32.xlu0 %v390, 52
      %v2019 = vpop.permute.xlu0 %2018
      %2020 = vrot.lane.b32.xlu0 %v392, 52
      %v2021 = vpop.permute.xlu0 %2020
      %2022 = vrot.lane.b32.xlu0 %v393, 52
      %v2023 = vpop.permute.xlu0 %2022
      %2024 = vrot.lane.b32.xlu0 %v394, 52
      %v2025 = vpop.permute.xlu0 %2024
      %2026 = vrot.lane.b32.xlu0 %v395, 52
      %v2027 = vpop.permute.xlu0 %2026
      %2028 = vrot.lane.b32.xlu0 %v397, 52
      %v2029 = vpop.permute.xlu0 %2028
      %2030 = vrot.lane.b32.xlu0 %v398, 52
      %v2031 = vpop.permute.xlu0 %2030
      %2032 = vrot.lane.b32.xlu0 %v399, 52
      %v2033 = vpop.permute.xlu0 %2032
      %2034 = vrot.lane.b32.xlu0 %v400, 52
      %v2035 = vpop.permute.xlu0 %2034
      %2036 = vrot.lane.b32.xlu0 %v402, 52
      %v2037 = vpop.permute.xlu0 %2036
      %2038 = vrot.lane.b32.xlu0 %v403, 52
      %v2039 = vpop.permute.xlu0 %2038
      %2040 = vrot.lane.b32.xlu0 %v404, 52
      %v2041 = vpop.permute.xlu0 %2040
      %2042 = vrot.lane.b32.xlu0 %v405, 52
      %v2043 = vpop.permute.xlu0 %2042
      %2044 = vrot.lane.b32.xlu0 %v407, 52
      %v2045 = vpop.permute.xlu0 %2044
      %2046 = vrot.lane.b32.xlu0 %v408, 52
      %v2047 = vpop.permute.xlu0 %2046
      %2048 = vrot.lane.b32.xlu0 %v409, 52
      %v2049 = vpop.permute.xlu0 %2048
      %2050 = vrot.lane.b32.xlu0 %v410, 52
      %v2051 = vpop.permute.xlu0 %2050
      %v2085 = vrot.slane %v357, 1
      %v2086 = vrot.slane %v358, 1
      %v2087 = vsel %vm580, %v2085, %v2086
      %v2088 = vrot.slane %v359, 1
      %v2089 = vsel %vm580, %v2086, %v2088
      %v2090 = vrot.slane %v360, 1
      %v2091 = vsel %vm580, %v2088, %v2090
      %v2092 = vrot.slane %v361, 1
      %v2093 = vsel %vm580, %v2090, %v2092
      %2094 = vrot.lane.b32.xlu0 %v601, 56
      %v2095 = vpop.permute.xlu0 %2094
      %2096 = vrot.lane.b32.xlu0 %v603, 56
      %v2097 = vpop.permute.xlu0 %2096
      %2098 = vrot.lane.b32.xlu0 %v605, 56
      %v2099 = vpop.permute.xlu0 %2098
      %2100 = vrot.lane.b32.xlu0 %v607, 56
      %v2101 = vpop.permute.xlu0 %2100
      %2102 = vrot.lane.b32.xlu0 %v610, 56
      %v2103 = vpop.permute.xlu0 %2102
      %2104 = vrot.lane.b32.xlu0 %v612, 56
      %v2105 = vpop.permute.xlu0 %2104
      %2106 = vrot.lane.b32.xlu0 %v614, 56
      %v2107 = vpop.permute.xlu0 %2106
      %2108 = vrot.lane.b32.xlu0 %v616, 56
      %v2109 = vpop.permute.xlu0 %2108
      %2110 = vrot.lane.b32.xlu0 %v619, 56
      %v2111 = vpop.permute.xlu0 %2110
      %2112 = vrot.lane.b32.xlu0 %v621, 56
      %v2113 = vpop.permute.xlu0 %2112
      %2114 = vrot.lane.b32.xlu0 %v623, 56
      %v2115 = vpop.permute.xlu0 %2114
      %2116 = vrot.lane.b32.xlu0 %v625, 56
      %v2117 = vpop.permute.xlu0 %2116
      %2118 = vrot.lane.b32.xlu0 %v628, 56
      %v2119 = vpop.permute.xlu0 %2118
      %2120 = vrot.lane.b32.xlu0 %v630, 56
      %v2121 = vpop.permute.xlu0 %2120
      %2122 = vrot.lane.b32.xlu0 %v632, 56
      %v2123 = vpop.permute.xlu0 %2122
      %2124 = vrot.lane.b32.xlu0 %v634, 56
      %v2125 = vpop.permute.xlu0 %2124
      %2126 = vrot.lane.b32.xlu0 %v637, 56
      %v2127 = vpop.permute.xlu0 %2126
      %2128 = vrot.lane.b32.xlu0 %v639, 56
      %v2129 = vpop.permute.xlu0 %2128
      %2130 = vrot.lane.b32.xlu0 %v641, 56
      %v2131 = vpop.permute.xlu0 %2130
      %2132 = vrot.lane.b32.xlu0 %v643, 56
      %v2133 = vpop.permute.xlu0 %2132
      %2134 = vrot.lane.b32.xlu0 %v646, 56
      %v2135 = vpop.permute.xlu0 %2134
      %2136 = vrot.lane.b32.xlu0 %v648, 56
      %v2137 = vpop.permute.xlu0 %2136
      %2138 = vrot.lane.b32.xlu0 %v650, 56
      %v2139 = vpop.permute.xlu0 %2138
      %2140 = vrot.lane.b32.xlu0 %v652, 56
      %v2141 = vpop.permute.xlu0 %2140
      %2142 = vrot.lane.b32.xlu0 %v1465, 56
      %v2143 = vpop.permute.xlu0 %2142
      %2144 = vrot.lane.b32.xlu0 %v1467, 56
      %v2145 = vpop.permute.xlu0 %2144
      %2146 = vrot.lane.b32.xlu0 %v1469, 56
      %v2147 = vpop.permute.xlu0 %2146
      %2148 = vrot.lane.b32.xlu0 %v1471, 56
      %v2149 = vpop.permute.xlu0 %2148
      %2150 = vrot.lane.b32.xlu0 %v2087, 56
      %v2151 = vpop.permute.xlu0 %2150
      %2152 = vrot.lane.b32.xlu0 %v2089, 56
      %v2153 = vpop.permute.xlu0 %2152
      %2154 = vrot.lane.b32.xlu0 %v2091, 56
      %v2155 = vpop.permute.xlu0 %2154
      %2156 = vrot.lane.b32.xlu0 %v2093, 56
      %v2157 = vpop.permute.xlu0 %2156
      %v2191 = vrot.slane %v407, 1
      %v2192 = vrot.slane %v408, 1
      %v2193 = vsel %vm580, %v2191, %v2192
      %v2194 = vrot.slane %v409, 1
      %v2195 = vsel %vm580, %v2192, %v2194
      %v2196 = vrot.slane %v410, 1
      %v2197 = vsel %vm580, %v2194, %v2196
      %v2198 = vrot.slane %v411, 1
      %v2199 = vsel %vm580, %v2196, %v2198
      %2200 = vrot.lane.b32.xlu0 %v777, 60
      %v2201 = vpop.permute.xlu0 %2200
      %2202 = vrot.lane.b32.xlu0 %v779, 60
      %v2203 = vpop.permute.xlu0 %2202
      %2204 = vrot.lane.b32.xlu0 %v781, 60
      %v2205 = vpop.permute.xlu0 %2204
      %2206 = vrot.lane.b32.xlu0 %v783, 60
      %v2207 = vpop.permute.xlu0 %2206
      %2208 = vrot.lane.b32.xlu0 %v786, 60
      %v2209 = vpop.permute.xlu0 %2208
      %2210 = vrot.lane.b32.xlu0 %v788, 60
      %v2211 = vpop.permute.xlu0 %2210
      %2212 = vrot.lane.b32.xlu0 %v790, 60
      %v2213 = vpop.permute.xlu0 %2212
      %2214 = vrot.lane.b32.xlu0 %v792, 60
      %v2215 = vpop.permute.xlu0 %2214
      %2216 = vrot.lane.b32.xlu0 %v795, 60
      %v2217 = vpop.permute.xlu0 %2216
      %2218 = vrot.lane.b32.xlu0 %v797, 60
      %v2219 = vpop.permute.xlu0 %2218
      %2220 = vrot.lane.b32.xlu0 %v799, 60
      %v2221 = vpop.permute.xlu0 %2220
      %2222 = vrot.lane.b32.xlu0 %v801, 60
      %v2223 = vpop.permute.xlu0 %2222
      %2224 = vrot.lane.b32.xlu0 %v804, 60
      %v2225 = vpop.permute.xlu0 %2224
      %2226 = vrot.lane.b32.xlu0 %v806, 60
      %v2227 = vpop.permute.xlu0 %2226
      %2228 = vrot.lane.b32.xlu0 %v808, 60
      %v2229 = vpop.permute.xlu0 %2228
      %2230 = vrot.lane.b32.xlu0 %v810, 60
      %v2231 = vpop.permute.xlu0 %2230
      %2232 = vrot.lane.b32.xlu0 %v813, 60
      %v2233 = vpop.permute.xlu0 %2232
      %2234 = vrot.lane.b32.xlu0 %v815, 60
      %v2235 = vpop.permute.xlu0 %2234
      %2236 = vrot.lane.b32.xlu0 %v817, 60
      %v2237 = vpop.permute.xlu0 %2236
      %2238 = vrot.lane.b32.xlu0 %v819, 60
      %v2239 = vpop.permute.xlu0 %2238
      %2240 = vrot.lane.b32.xlu0 %v822, 60
      %v2241 = vpop.permute.xlu0 %2240
      %2242 = vrot.lane.b32.xlu0 %v824, 60
      %v2243 = vpop.permute.xlu0 %2242
      %2244 = vrot.lane.b32.xlu0 %v826, 60
      %v2245 = vpop.permute.xlu0 %2244
      %2246 = vrot.lane.b32.xlu0 %v828, 60
      %v2247 = vpop.permute.xlu0 %2246
      %2248 = vrot.lane.b32.xlu0 %v1571, 60
      %v2249 = vpop.permute.xlu0 %2248
      %2250 = vrot.lane.b32.xlu0 %v1573, 60
      %v2251 = vpop.permute.xlu0 %2250
      %2252 = vrot.lane.b32.xlu0 %v1575, 60
      %v2253 = vpop.permute.xlu0 %2252
      %2254 = vrot.lane.b32.xlu0 %v1577, 60
      %v2255 = vpop.permute.xlu0 %2254
      %2256 = vrot.lane.b32.xlu0 %v2193, 60
      %v2257 = vpop.permute.xlu0 %2256
      %2258 = vrot.lane.b32.xlu0 %v2195, 60
      %v2259 = vpop.permute.xlu0 %2258
      %2260 = vrot.lane.b32.xlu0 %v2197, 60
      %v2261 = vpop.permute.xlu0 %2260
      %2262 = vrot.lane.b32.xlu0 %v2199, 60
      %v2263 = vpop.permute.xlu0 %2262
      %vm2296 = vcmask 31744
      %v2297 = vsel %vm2296, %v312, %v445
      %v2298 = vsel %vm2296, %v313, %v447
      %v2299 = vsel %vm2296, %v314, %v449
      %v2300 = vsel %vm2296, %v315, %v451
      %v2301 = vsel %vm2296, %v317, %v453
      %v2302 = vsel %vm2296, %v318, %v455
      %v2303 = vsel %vm2296, %v319, %v457
      %v2304 = vsel %vm2296, %v320, %v459
      %v2305 = vsel %vm2296, %v322, %v461
      %v2306 = vsel %vm2296, %v323, %v463
      %v2307 = vsel %vm2296, %v324, %v465
      %v2308 = vsel %vm2296, %v325, %v467
      %v2309 = vsel %vm2296, %v327, %v469
      %v2310 = vsel %vm2296, %v328, %v471
      %v2311 = vsel %vm2296, %v329, %v473
      %v2312 = vsel %vm2296, %v330, %v475
      %v2313 = vsel %vm2296, %v332, %v477
      %v2314 = vsel %vm2296, %v333, %v479
      %v2315 = vsel %vm2296, %v334, %v481
      %v2316 = vsel %vm2296, %v335, %v483
      %v2317 = vsel %vm2296, %v337, %v485
      %v2318 = vsel %vm2296, %v338, %v487
      %v2319 = vsel %vm2296, %v339, %v489
      %v2320 = vsel %vm2296, %v340, %v491
      %v2321 = vsel %vm2296, %v342, %v493
      %v2322 = vsel %vm2296, %v343, %v495
      %v2323 = vsel %vm2296, %v344, %v497
      %v2324 = vsel %vm2296, %v345, %v499
      %v2325 = vsel %vm2296, %v347, %v501
      %v2326 = vsel %vm2296, %v348, %v503
      %v2327 = vsel %vm2296, %v349, %v505
      %v2328 = vsel %vm2296, %v350, %v507
      %vm2329 = vcmask 64512
      %v2330 = vsel %vm2329, %v2297, %v654
      %v2331 = vsel %vm2329, %v2298, %v656
      %v2332 = vsel %vm2329, %v2299, %v658
      %v2333 = vsel %vm2329, %v2300, %v660
      %v2334 = vsel %vm2329, %v2301, %v662
      %v2335 = vsel %vm2329, %v2302, %v664
      %v2336 = vsel %vm2329, %v2303, %v666
      %v2337 = vsel %vm2329, %v2304, %v668
      %v2338 = vsel %vm2329, %v2305, %v670
      %v2339 = vsel %vm2329, %v2306, %v672
      %v2340 = vsel %vm2329, %v2307, %v674
      %v2341 = vsel %vm2329, %v2308, %v676
      %v2342 = vsel %vm2329, %v2309, %v678
      %v2343 = vsel %vm2329, %v2310, %v680
      %v2344 = vsel %vm2329, %v2311, %v682
      %v2345 = vsel %vm2329, %v2312, %v684
      %v2346 = vsel %vm2329, %v2313, %v686
      %v2347 = vsel %vm2329, %v2314, %v688
      %v2348 = vsel %vm2329, %v2315, %v690
      %v2349 = vsel %vm2329, %v2316, %v692
      %v2350 = vsel %vm2329, %v2317, %v694
      %v2351 = vsel %vm2329, %v2318, %v696
      %v2352 = vsel %vm2329, %v2319, %v698
      %v2353 = vsel %vm2329, %v2320, %v700
      %v2354 = vsel %vm2329, %v2321, %v702
      %v2355 = vsel %vm2329, %v2322, %v704
      %v2356 = vsel %vm2329, %v2323, %v706
      %v2357 = vsel %vm2329, %v2324, %v708
      %v2358 = vsel %vm2329, %v2325, %v710
      %v2359 = vsel %vm2329, %v2326, %v712
      %v2360 = vsel %vm2329, %v2327, %v714
      %v2361 = vsel %vm2329, %v2328, %v716
      %vm2362 = vcmask 97280
      %v2363 = vsel %vm2362, %v2330, %v830
      %v2364 = vsel %vm2362, %v2331, %v832
      %v2365 = vsel %vm2362, %v2332, %v834
      %v2366 = vsel %vm2362, %v2333, %v836
      %v2367 = vsel %vm2362, %v2334, %v838
      %v2368 = vsel %vm2362, %v2335, %v840
      %v2369 = vsel %vm2362, %v2336, %v842
      %v2370 = vsel %vm2362, %v2337, %v844
      %v2371 = vsel %vm2362, %v2338, %v846
      %v2372 = vsel %vm2362, %v2339, %v848
      %v2373 = vsel %vm2362, %v2340, %v850
      %v2374 = vsel %vm2362, %v2341, %v852
      %v2375 = vsel %vm2362, %v2342, %v854
      %v2376 = vsel %vm2362, %v2343, %v856
      %v2377 = vsel %vm2362, %v2344, %v858
      %v2378 = vsel %vm2362, %v2345, %v860
      %v2379 = vsel %vm2362, %v2346, %v862
      %v2380 = vsel %vm2362, %v2347, %v864
      %v2381 = vsel %vm2362, %v2348, %v866
      %v2382 = vsel %vm2362, %v2349, %v868
      %v2383 = vsel %vm2362, %v2350, %v870
      %v2384 = vsel %vm2362, %v2351, %v872
      %v2385 = vsel %vm2362, %v2352, %v874
      %v2386 = vsel %vm2362, %v2353, %v876
      %v2387 = vsel %vm2362, %v2354, %v878
      %v2388 = vsel %vm2362, %v2355, %v880
      %v2389 = vsel %vm2362, %v2356, %v882
      %v2390 = vsel %vm2362, %v2357, %v884
      %v2391 = vsel %vm2362, %v2358, %v886
      %v2392 = vsel %vm2362, %v2359, %v888
      %v2393 = vsel %vm2362, %v2360, %v890
      %v2394 = vsel %vm2362, %v2361, %v892
      %vm2395 = vcmask 130048
      %v2396 = vsel %vm2395, %v2363, %v999
      %v2397 = vsel %vm2395, %v2364, %v1001
      %v2398 = vsel %vm2395, %v2365, %v1003
      %v2399 = vsel %vm2395, %v2366, %v1005
      %v2400 = vsel %vm2395, %v2367, %v1007
      %v2401 = vsel %vm2395, %v2368, %v1009
      %v2402 = vsel %vm2395, %v2369, %v1011
      %v2403 = vsel %vm2395, %v2370, %v1013
      %v2404 = vsel %vm2395, %v2371, %v1015
      %v2405 = vsel %vm2395, %v2372, %v1017
      %v2406 = vsel %vm2395, %v2373, %v1019
      %v2407 = vsel %vm2395, %v2374, %v1021
      %v2408 = vsel %vm2395, %v2375, %v1023
      %v2409 = vsel %vm2395, %v2376, %v1025
      %v2410 = vsel %vm2395, %v2377, %v1027
      %v2411 = vsel %vm2395, %v2378, %v1029
      %v2412 = vsel %vm2395, %v2379, %v1031
      %v2413 = vsel %vm2395, %v2380, %v1033
      %v2414 = vsel %vm2395, %v2381, %v1035
      %v2415 = vsel %vm2395, %v2382, %v1037
      %v2416 = vsel %vm2395, %v2383, %v1039
      %v2417 = vsel %vm2395, %v2384, %v1041
      %v2418 = vsel %vm2395, %v2385, %v1043
      %v2419 = vsel %vm2395, %v2386, %v1045
      %v2420 = vsel %vm2395, %v2387, %v1047
      %v2421 = vsel %vm2395, %v2388, %v1049
      %v2422 = vsel %vm2395, %v2389, %v1051
      %v2423 = vsel %vm2395, %v2390, %v1053
      %v2424 = vsel %vm2395, %v2391, %v1055
      %v2425 = vsel %vm2395, %v2392, %v1057
      %v2426 = vsel %vm2395, %v2393, %v1059
      %v2427 = vsel %vm2395, %v2394, %v1061
      %vm2428 = vcmask 162816
      %v2429 = vsel %vm2428, %v2396, %v1167
      %v2430 = vsel %vm2428, %v2397, %v1169
      %v2431 = vsel %vm2428, %v2398, %v1171
      %v2432 = vsel %vm2428, %v2399, %v1173
      %v2433 = vsel %vm2428, %v2400, %v1175
      %v2434 = vsel %vm2428, %v2401, %v1177
      %v2435 = vsel %vm2428, %v2402, %v1179
      %v2436 = vsel %vm2428, %v2403, %v1181
      %v2437 = vsel %vm2428, %v2404, %v1183
      %v2438 = vsel %vm2428, %v2405, %v1185
      %v2439 = vsel %vm2428, %v2406, %v1187
      %v2440 = vsel %vm2428, %v2407, %v1189
      %v2441 = vsel %vm2428, %v2408, %v1191
      %v2442 = vsel %vm2428, %v2409, %v1193
      %v2443 = vsel %vm2428, %v2410, %v1195
      %v2444 = vsel %vm2428, %v2411, %v1197
      %v2445 = vsel %vm2428, %v2412, %v1199
      %v2446 = vsel %vm2428, %v2413, %v1201
      %v2447 = vsel %vm2428, %v2414, %v1203
      %v2448 = vsel %vm2428, %v2415, %v1205
      %v2449 = vsel %vm2428, %v2416, %v1207
      %v2450 = vsel %vm2428, %v2417, %v1209
      %v2451 = vsel %vm2428, %v2418, %v1211
      %v2452 = vsel %vm2428, %v2419, %v1213
      %v2453 = vsel %vm2428, %v2420, %v1215
      %v2454 = vsel %vm2428, %v2421, %v1217
      %v2455 = vsel %vm2428, %v2422, %v1219
      %v2456 = vsel %vm2428, %v2423, %v1221
      %v2457 = vsel %vm2428, %v2424, %v1223
      %v2458 = vsel %vm2428, %v2425, %v1225
      %v2459 = vsel %vm2428, %v2426, %v1227
      %v2460 = vsel %vm2428, %v2427, %v1229
      %vm2461 = vcmask 195584
      %v2462 = vsel %vm2461, %v2429, %v1267
      %v2463 = vsel %vm2461, %v2430, %v1269
      %v2464 = vsel %vm2461, %v2431, %v1271
      %v2465 = vsel %vm2461, %v2432, %v1273
      %v2466 = vsel %vm2461, %v2433, %v1275
      %v2467 = vsel %vm2461, %v2434, %v1277
      %v2468 = vsel %vm2461, %v2435, %v1279
      %v2469 = vsel %vm2461, %v2436, %v1281
      %v2470 = vsel %vm2461, %v2437, %v1283
      %v2471 = vsel %vm2461, %v2438, %v1285
      %v2472 = vsel %vm2461, %v2439, %v1287
      %v2473 = vsel %vm2461, %v2440, %v1289
      %v2474 = vsel %vm2461, %v2441, %v1291
      %v2475 = vsel %vm2461, %v2442, %v1293
      %v2476 = vsel %vm2461, %v2443, %v1295
      %v2477 = vsel %vm2461, %v2444, %v1297
      %v2478 = vsel %vm2461, %v2445, %v1299
      %v2479 = vsel %vm2461, %v2446, %v1301
      %v2480 = vsel %vm2461, %v2447, %v1303
      %v2481 = vsel %vm2461, %v2448, %v1305
      %v2482 = vsel %vm2461, %v2449, %v1307
      %v2483 = vsel %vm2461, %v2450, %v1309
      %v2484 = vsel %vm2461, %v2451, %v1311
      %v2485 = vsel %vm2461, %v2452, %v1313
      %v2486 = vsel %vm2461, %v2453, %v1315
      %v2487 = vsel %vm2461, %v2454, %v1317
      %v2488 = vsel %vm2461, %v2455, %v1319
      %v2489 = vsel %vm2461, %v2456, %v1321
      %v2490 = vsel %vm2461, %v2457, %v1323
      %v2491 = vsel %vm2461, %v2458, %v1325
      %v2492 = vsel %vm2461, %v2459, %v1327
      %v2493 = vsel %vm2461, %v2460, %v1329
      %vm2494 = vcmask 228352
      %v2495 = vsel %vm2494, %v2462, %v1367
      %v2496 = vsel %vm2494, %v2463, %v1369
      %v2497 = vsel %vm2494, %v2464, %v1371
      %v2498 = vsel %vm2494, %v2465, %v1373
      %v2499 = vsel %vm2494, %v2466, %v1375
      %v2500 = vsel %vm2494, %v2467, %v1377
      %v2501 = vsel %vm2494, %v2468, %v1379
      %v2502 = vsel %vm2494, %v2469, %v1381
      %v2503 = vsel %vm2494, %v2470, %v1383
      %v2504 = vsel %vm2494, %v2471, %v1385
      %v2505 = vsel %vm2494, %v2472, %v1387
      %v2506 = vsel %vm2494, %v2473, %v1389
      %v2507 = vsel %vm2494, %v2474, %v1391
      %v2508 = vsel %vm2494, %v2475, %v1393
      %v2509 = vsel %vm2494, %v2476, %v1395
      %v2510 = vsel %vm2494, %v2477, %v1397
      %v2511 = vsel %vm2494, %v2478, %v1399
      %v2512 = vsel %vm2494, %v2479, %v1401
      %v2513 = vsel %vm2494, %v2480, %v1403
      %v2514 = vsel %vm2494, %v2481, %v1405
      %v2515 = vsel %vm2494, %v2482, %v1407
      %v2516 = vsel %vm2494, %v2483, %v1409
      %v2517 = vsel %vm2494, %v2484, %v1411
      %v2518 = vsel %vm2494, %v2485, %v1413
      %v2519 = vsel %vm2494, %v2486, %v1415
      %v2520 = vsel %vm2494, %v2487, %v1417
      %v2521 = vsel %vm2494, %v2488, %v1419
      %v2522 = vsel %vm2494, %v2489, %v1421
      %v2523 = vsel %vm2494, %v2490, %v1423
      %v2524 = vsel %vm2494, %v2491, %v1425
      %v2525 = vsel %vm2494, %v2492, %v1427
      %v2526 = vsel %vm2494, %v2493, %v1429
      %vm2527 = vcmask 261120
      %v2528 = vsel %vm2527, %v2495, %v1473
      %v2529 = vsel %vm2527, %v2496, %v1475
      %v2530 = vsel %vm2527, %v2497, %v1477
      %v2531 = vsel %vm2527, %v2498, %v1479
      %v2532 = vsel %vm2527, %v2499, %v1481
      %v2533 = vsel %vm2527, %v2500, %v1483
      %v2534 = vsel %vm2527, %v2501, %v1485
      %v2535 = vsel %vm2527, %v2502, %v1487
      %v2536 = vsel %vm2527, %v2503, %v1489
      %v2537 = vsel %vm2527, %v2504, %v1491
      %v2538 = vsel %vm2527, %v2505, %v1493
      %v2539 = vsel %vm2527, %v2506, %v1495
      %v2540 = vsel %vm2527, %v2507, %v1497
      %v2541 = vsel %vm2527, %v2508, %v1499
      %v2542 = vsel %vm2527, %v2509, %v1501
      %v2543 = vsel %vm2527, %v2510, %v1503
      %v2544 = vsel %vm2527, %v2511, %v1505
      %v2545 = vsel %vm2527, %v2512, %v1507
      %v2546 = vsel %vm2527, %v2513, %v1509
      %v2547 = vsel %vm2527, %v2514, %v1511
      %v2548 = vsel %vm2527, %v2515, %v1513
      %v2549 = vsel %vm2527, %v2516, %v1515
      %v2550 = vsel %vm2527, %v2517, %v1517
      %v2551 = vsel %vm2527, %v2518, %v1519
      %v2552 = vsel %vm2527, %v2519, %v1521
      %v2553 = vsel %vm2527, %v2520, %v1523
      %v2554 = vsel %vm2527, %v2521, %v1525
      %v2555 = vsel %vm2527, %v2522, %v1527
      %v2556 = vsel %vm2527, %v2523, %v1529
      %v2557 = vsel %vm2527, %v2524, %v1531
      %v2558 = vsel %vm2527, %v2525, %v1533
      %v2559 = vsel %vm2527, %v2526, %v1535
      %vm2560 = vcmask 293888
      %v2561 = vsel %vm2560, %v2528, %v1579
      %v2562 = vsel %vm2560, %v2529, %v1581
      %v2563 = vsel %vm2560, %v2530, %v1583
      %v2564 = vsel %vm2560, %v2531, %v1585
      %v2565 = vsel %vm2560, %v2532, %v1587
      %v2566 = vsel %vm2560, %v2533, %v1589
      %v2567 = vsel %vm2560, %v2534, %v1591
      %v2568 = vsel %vm2560, %v2535, %v1593
      %v2569 = vsel %vm2560, %v2536, %v1595
      %v2570 = vsel %vm2560, %v2537, %v1597
      %v2571 = vsel %vm2560, %v2538, %v1599
      %v2572 = vsel %vm2560, %v2539, %v1601
      %v2573 = vsel %vm2560, %v2540, %v1603
      %v2574 = vsel %vm2560, %v2541, %v1605
      %v2575 = vsel %vm2560, %v2542, %v1607
      %v2576 = vsel %vm2560, %v2543, %v1609
      %v2577 = vsel %vm2560, %v2544, %v1611
      %v2578 = vsel %vm2560, %v2545, %v1613
      %v2579 = vsel %vm2560, %v2546, %v1615
      %v2580 = vsel %vm2560, %v2547, %v1617
      %v2581 = vsel %vm2560, %v2548, %v1619
      %v2582 = vsel %vm2560, %v2549, %v1621
      %v2583 = vsel %vm2560, %v2550, %v1623
      %v2584 = vsel %vm2560, %v2551, %v1625
      %v2585 = vsel %vm2560, %v2552, %v1627
      %v2586 = vsel %vm2560, %v2553, %v1629
      %v2587 = vsel %vm2560, %v2554, %v1631
      %v2588 = vsel %vm2560, %v2555, %v1633
      %v2589 = vsel %vm2560, %v2556, %v1635
      %v2590 = vsel %vm2560, %v2557, %v1637
      %v2591 = vsel %vm2560, %v2558, %v1639
      %v2592 = vsel %vm2560, %v2559, %v1641
      %vm2593 = vcmask 326656
      %v2594 = vsel %vm2593, %v2561, %v1684
      %v2595 = vsel %vm2593, %v2562, %v1686
      %v2596 = vsel %vm2593, %v2563, %v1688
      %v2597 = vsel %vm2593, %v2564, %v1690
      %v2598 = vsel %vm2593, %v2565, %v1692
      %v2599 = vsel %vm2593, %v2566, %v1694
      %v2600 = vsel %vm2593, %v2567, %v1696
      %v2601 = vsel %vm2593, %v2568, %v1698
      %v2602 = vsel %vm2593, %v2569, %v1700
      %v2603 = vsel %vm2593, %v2570, %v1702
      %v2604 = vsel %vm2593, %v2571, %v1704
      %v2605 = vsel %vm2593, %v2572, %v1706
      %v2606 = vsel %vm2593, %v2573, %v1708
      %v2607 = vsel %vm2593, %v2574, %v1710
      %v2608 = vsel %vm2593, %v2575, %v1712
      %v2609 = vsel %vm2593, %v2576, %v1714
      %v2610 = vsel %vm2593, %v2577, %v1716
      %v2611 = vsel %vm2593, %v2578, %v1718
      %v2612 = vsel %vm2593, %v2579, %v1720
      %v2613 = vsel %vm2593, %v2580, %v1722
      %v2614 = vsel %vm2593, %v2581, %v1724
      %v2615 = vsel %vm2593, %v2582, %v1726
      %v2616 = vsel %vm2593, %v2583, %v1728
      %v2617 = vsel %vm2593, %v2584, %v1730
      %v2618 = vsel %vm2593, %v2585, %v1732
      %v2619 = vsel %vm2593, %v2586, %v1734
      %v2620 = vsel %vm2593, %v2587, %v1736
      %v2621 = vsel %vm2593, %v2588, %v1738
      %v2622 = vsel %vm2593, %v2589, %v1740
      %v2623 = vsel %vm2593, %v2590, %v1742
      %v2624 = vsel %vm2593, %v2591, %v1744
      %v2625 = vsel %vm2593, %v2592, %v1746
      %vm2626 = vcmask 359424
      %v2627 = vsel %vm2626, %v2594, %v1789
      %v2628 = vsel %vm2626, %v2595, %v1791
      %v2629 = vsel %vm2626, %v2596, %v1793
      %v2630 = vsel %vm2626, %v2597, %v1795
      %v2631 = vsel %vm2626, %v2598, %v1797
      %v2632 = vsel %vm2626, %v2599, %v1799
      %v2633 = vsel %vm2626, %v2600, %v1801
      %v2634 = vsel %vm2626, %v2601, %v1803
      %v2635 = vsel %vm2626, %v2602, %v1805
      %v2636 = vsel %vm2626, %v2603, %v1807
      %v2637 = vsel %vm2626, %v2604, %v1809
      %v2638 = vsel %vm2626, %v2605, %v1811
      %v2639 = vsel %vm2626, %v2606, %v1813
      %v2640 = vsel %vm2626, %v2607, %v1815
      %v2641 = vsel %vm2626, %v2608, %v1817
      %v2642 = vsel %vm2626, %v2609, %v1819
      %v2643 = vsel %vm2626, %v2610, %v1821
      %v2644 = vsel %vm2626, %v2611, %v1823
      %v2645 = vsel %vm2626, %v2612, %v1825
      %v2646 = vsel %vm2626, %v2613, %v1827
      %v2647 = vsel %vm2626, %v2614, %v1829
      %v2648 = vsel %vm2626, %v2615, %v1831
      %v2649 = vsel %vm2626, %v2616, %v1833
      %v2650 = vsel %vm2626, %v2617, %v1835
      %v2651 = vsel %vm2626, %v2618, %v1837
      %v2652 = vsel %vm2626, %v2619, %v1839
      %v2653 = vsel %vm2626, %v2620, %v1841
      %v2654 = vsel %vm2626, %v2621, %v1843
      %v2655 = vsel %vm2626, %v2622, %v1845
      %v2656 = vsel %vm2626, %v2623, %v1847
      %v2657 = vsel %vm2626, %v2624, %v1849
      %v2658 = vsel %vm2626, %v2625, %v1851
      %vm2659 = vcmask 392192
      %v2660 = vsel %vm2659, %v2627, %v1889
      %v2661 = vsel %vm2659, %v2628, %v1891
      %v2662 = vsel %vm2659, %v2629, %v1893
      %v2663 = vsel %vm2659, %v2630, %v1895
      %v2664 = vsel %vm2659, %v2631, %v1897
      %v2665 = vsel %vm2659, %v2632, %v1899
      %v2666 = vsel %vm2659, %v2633, %v1901
      %v2667 = vsel %vm2659, %v2634, %v1903
      %v2668 = vsel %vm2659, %v2635, %v1905
      %v2669 = vsel %vm2659, %v2636, %v1907
      %v2670 = vsel %vm2659, %v2637, %v1909
      %v2671 = vsel %vm2659, %v2638, %v1911
      %v2672 = vsel %vm2659, %v2639, %v1913
      %v2673 = vsel %vm2659, %v2640, %v1915
      %v2674 = vsel %vm2659, %v2641, %v1917
      %v2675 = vsel %vm2659, %v2642, %v1919
      %v2676 = vsel %vm2659, %v2643, %v1921
      %v2677 = vsel %vm2659, %v2644, %v1923
      %v2678 = vsel %vm2659, %v2645, %v1925
      %v2679 = vsel %vm2659, %v2646, %v1927
      %v2680 = vsel %vm2659, %v2647, %v1929
      %v2681 = vsel %vm2659, %v2648, %v1931
      %v2682 = vsel %vm2659, %v2649, %v1933
      %v2683 = vsel %vm2659, %v2650, %v1935
      %v2684 = vsel %vm2659, %v2651, %v1937
      %v2685 = vsel %vm2659, %v2652, %v1939
      %v2686 = vsel %vm2659, %v2653, %v1941
      %v2687 = vsel %vm2659, %v2654, %v1943
      %v2688 = vsel %vm2659, %v2655, %v1945
      %v2689 = vsel %vm2659, %v2656, %v1947
      %v2690 = vsel %vm2659, %v2657, %v1949
      %v2691 = vsel %vm2659, %v2658, %v1951
      %vm2692 = vcmask 424960
      %v2693 = vsel %vm2692, %v2660, %v1989
      %v2694 = vsel %vm2692, %v2661, %v1991
      %v2695 = vsel %vm2692, %v2662, %v1993
      %v2696 = vsel %vm2692, %v2663, %v1995
      %v2697 = vsel %vm2692, %v2664, %v1997
      %v2698 = vsel %vm2692, %v2665, %v1999
      %v2699 = vsel %vm2692, %v2666, %v2001
      %v2700 = vsel %vm2692, %v2667, %v2003
      %v2701 = vsel %vm2692, %v2668, %v2005
      %v2702 = vsel %vm2692, %v2669, %v2007
      %v2703 = vsel %vm2692, %v2670, %v2009
      %v2704 = vsel %vm2692, %v2671, %v2011
      %v2705 = vsel %vm2692, %v2672, %v2013
      %v2706 = vsel %vm2692, %v2673, %v2015
      %v2707 = vsel %vm2692, %v2674, %v2017
      %v2708 = vsel %vm2692, %v2675, %v2019
      %v2709 = vsel %vm2692, %v2676, %v2021
      %v2710 = vsel %vm2692, %v2677, %v2023
      %v2711 = vsel %vm2692, %v2678, %v2025
      %v2712 = vsel %vm2692, %v2679, %v2027
      %v2713 = vsel %vm2692, %v2680, %v2029
      %v2714 = vsel %vm2692, %v2681, %v2031
      %v2715 = vsel %vm2692, %v2682, %v2033
      %v2716 = vsel %vm2692, %v2683, %v2035
      %v2717 = vsel %vm2692, %v2684, %v2037
      %v2718 = vsel %vm2692, %v2685, %v2039
      %v2719 = vsel %vm2692, %v2686, %v2041
      %v2720 = vsel %vm2692, %v2687, %v2043
      %v2721 = vsel %vm2692, %v2688, %v2045
      %v2722 = vsel %vm2692, %v2689, %v2047
      %v2723 = vsel %vm2692, %v2690, %v2049
      %v2724 = vsel %vm2692, %v2691, %v2051
      %vm2725 = vcmask 457728
      %v2726 = vsel %vm2725, %v2693, %v2095
      %v2727 = vsel %vm2725, %v2694, %v2097
      %v2728 = vsel %vm2725, %v2695, %v2099
      %v2729 = vsel %vm2725, %v2696, %v2101
      %v2730 = vsel %vm2725, %v2697, %v2103
      %v2731 = vsel %vm2725, %v2698, %v2105
      %v2732 = vsel %vm2725, %v2699, %v2107
      %v2733 = vsel %vm2725, %v2700, %v2109
      %v2734 = vsel %vm2725, %v2701, %v2111
      %v2735 = vsel %vm2725, %v2702, %v2113
      %v2736 = vsel %vm2725, %v2703, %v2115
      %v2737 = vsel %vm2725, %v2704, %v2117
      %v2738 = vsel %vm2725, %v2705, %v2119
      %v2739 = vsel %vm2725, %v2706, %v2121
      %v2740 = vsel %vm2725, %v2707, %v2123
      %v2741 = vsel %vm2725, %v2708, %v2125
      %v2742 = vsel %vm2725, %v2709, %v2127
      %v2743 = vsel %vm2725, %v2710, %v2129
      %v2744 = vsel %vm2725, %v2711, %v2131
      %v2745 = vsel %vm2725, %v2712, %v2133
      %v2746 = vsel %vm2725, %v2713, %v2135
      %v2747 = vsel %vm2725, %v2714, %v2137
      %v2748 = vsel %vm2725, %v2715, %v2139
      %v2749 = vsel %vm2725, %v2716, %v2141
      %v2750 = vsel %vm2725, %v2717, %v2143
      %v2751 = vsel %vm2725, %v2718, %v2145
      %v2752 = vsel %vm2725, %v2719, %v2147
      %v2753 = vsel %vm2725, %v2720, %v2149
      %v2754 = vsel %vm2725, %v2721, %v2151
      %v2755 = vsel %vm2725, %v2722, %v2153
      %v2756 = vsel %vm2725, %v2723, %v2155
      %v2757 = vsel %vm2725, %v2724, %v2157
      %vm2758 = vcmask 490496
      %v2759 = vsel %vm2758, %v2726, %v2201
      %v2760 = vsel %vm2758, %v2727, %v2203
      %v2761 = vsel %vm2758, %v2728, %v2205
      %v2762 = vsel %vm2758, %v2729, %v2207
      %v2763 = vsel %vm2758, %v2730, %v2209
      %v2764 = vsel %vm2758, %v2731, %v2211
      %v2765 = vsel %vm2758, %v2732, %v2213
      %v2766 = vsel %vm2758, %v2733, %v2215
      %v2767 = vsel %vm2758, %v2734, %v2217
      %v2768 = vsel %vm2758, %v2735, %v2219
      %v2769 = vsel %vm2758, %v2736, %v2221
      %v2770 = vsel %vm2758, %v2737, %v2223
      %v2771 = vsel %vm2758, %v2738, %v2225
      %v2772 = vsel %vm2758, %v2739, %v2227
      %v2773 = vsel %vm2758, %v2740, %v2229
      %v2774 = vsel %vm2758, %v2741, %v2231
      %v2775 = vsel %vm2758, %v2742, %v2233
      %v2776 = vsel %vm2758, %v2743, %v2235
      %v2777 = vsel %vm2758, %v2744, %v2237
      %v2778 = vsel %vm2758, %v2745, %v2239
      %v2779 = vsel %vm2758, %v2746, %v2241
      %v2780 = vsel %vm2758, %v2747, %v2243
      %v2781 = vsel %vm2758, %v2748, %v2245
      %v2782 = vsel %vm2758, %v2749, %v2247
      %v2783 = vsel %vm2758, %v2750, %v2249
      %v2784 = vsel %vm2758, %v2751, %v2251
      %v2785 = vsel %vm2758, %v2752, %v2253
      %v2786 = vsel %vm2758, %v2753, %v2255
      %v2787 = vsel %vm2758, %v2754, %v2257
      %v2788 = vsel %vm2758, %v2755, %v2259
      %v2789 = vsel %vm2758, %v2756, %v2261
      %v2790 = vsel %vm2758, %v2757, %v2263
      %2791 = vrot.lane.b32.xlu0 %v376, 4
      %v2792 = vpop.permute.xlu0 %2791
      %2793 = vrot.lane.b32.xlu0 %v381, 4
      %v2794 = vpop.permute.xlu0 %2793
      %2795 = vrot.lane.b32.xlu0 %v386, 4
      %v2796 = vpop.permute.xlu0 %2795
      %2797 = vrot.lane.b32.xlu0 %v391, 4
      %v2798 = vpop.permute.xlu0 %2797
      %2799 = vrot.lane.b32.xlu0 %v396, 4
      %v2800 = vpop.permute.xlu0 %2799
      %2801 = vrot.lane.b32.xlu0 %v401, 4
      %v2802 = vpop.permute.xlu0 %2801
      %2803 = vrot.lane.b32.xlu0 %v402, 4
      %v2804 = vpop.permute.xlu0 %2803
      %2805 = vrot.lane.b32.xlu0 %v403, 4
      %v2806 = vpop.permute.xlu0 %2805
      %2807 = vrot.lane.b32.xlu0 %v404, 4
      %v2808 = vpop.permute.xlu0 %2807
      %2809 = vrot.lane.b32.xlu0 %v405, 4
      %v2810 = vpop.permute.xlu0 %2809
      %2811 = vrot.lane.b32.xlu0 %v406, 4
      %v2812 = vpop.permute.xlu0 %2811
      %2813 = vrot.lane.b32.xlu0 %v407, 4
      %v2814 = vpop.permute.xlu0 %2813
      %2815 = vrot.lane.b32.xlu0 %v408, 4
      %v2816 = vpop.permute.xlu0 %2815
      %2817 = vrot.lane.b32.xlu0 %v409, 4
      %v2818 = vpop.permute.xlu0 %2817
      %2819 = vrot.lane.b32.xlu0 %v410, 4
      %v2820 = vpop.permute.xlu0 %2819
      %2821 = vrot.lane.b32.xlu0 %v411, 4
      %v2822 = vpop.permute.xlu0 %2821
      %v2839 = vsel %vm2296, %v326, %v2792
      %v2840 = vsel %vm2296, %v331, %v2794
      %v2841 = vsel %vm2296, %v336, %v2796
      %v2842 = vsel %vm2296, %v341, %v2798
      %v2843 = vsel %vm2296, %v346, %v2800
      %v2844 = vsel %vm2296, %v351, %v2802
      %v2845 = vsel %vm2296, %v352, %v2804
      %v2846 = vsel %vm2296, %v353, %v2806
      %v2847 = vsel %vm2296, %v354, %v2808
      %v2848 = vsel %vm2296, %v355, %v2810
      %v2849 = vsel %vm2296, %v356, %v2812
      %v2850 = vsel %vm2296, %v357, %v2814
      %v2851 = vsel %vm2296, %v358, %v2816
      %v2852 = vsel %vm2296, %v359, %v2818
      %v2853 = vsel %vm2296, %v360, %v2820
      %v2854 = vsel %vm2296, %v361, %v2822
      %v2895 = vrot.slane %v2305, 2
      %v2896 = vrot.slane %v2306, 2
      %v2897 = vsel %vm925, %v2895, %v2896
      %v2898 = vrot.slane %v2307, 2
      %v2899 = vsel %vm925, %v2896, %v2898
      %v2900 = vrot.slane %v2308, 2
      %v2901 = vsel %vm925, %v2898, %v2900
      %v2902 = vrot.slane %v2839, 2
      %v2903 = vsel %vm925, %v2900, %v2902
      %v2904 = vrot.slane %v2309, 2
      %v2905 = vrot.slane %v2310, 2
      %v2906 = vsel %vm925, %v2904, %v2905
      %v2907 = vrot.slane %v2311, 2
      %v2908 = vsel %vm925, %v2905, %v2907
      %v2909 = vrot.slane %v2312, 2
      %v2910 = vsel %vm925, %v2907, %v2909
      %v2911 = vrot.slane %v2840, 2
      %v2912 = vsel %vm925, %v2909, %v2911
      %v2913 = vrot.slane %v2313, 2
      %v2914 = vrot.slane %v2314, 2
      %v2915 = vsel %vm925, %v2913, %v2914
      %v2916 = vrot.slane %v2315, 2
      %v2917 = vsel %vm925, %v2914, %v2916
      %v2918 = vrot.slane %v2316, 2
      %v2919 = vsel %vm925, %v2916, %v2918
      %v2920 = vrot.slane %v2841, 2
      %v2921 = vsel %vm925, %v2918, %v2920
      %v2922 = vrot.slane %v2317, 2
      %v2923 = vrot.slane %v2318, 2
      %v2924 = vsel %vm925, %v2922, %v2923
      %v2925 = vrot.slane %v2319, 2
      %v2926 = vsel %vm925, %v2923, %v2925
      %v2927 = vrot.slane %v2320, 2
      %v2928 = vsel %vm925, %v2925, %v2927
      %v2929 = vrot.slane %v2842, 2
      %v2930 = vsel %vm925, %v2927, %v2929
      %v2931 = vrot.slane %v2321, 2
      %v2932 = vrot.slane %v2322, 2
      %v2933 = vsel %vm925, %v2931, %v2932
      %v2934 = vrot.slane %v2323, 2
      %v2935 = vsel %vm925, %v2932, %v2934
      %v2936 = vrot.slane %v2324, 2
      %v2937 = vsel %vm925, %v2934, %v2936
      %v2938 = vrot.slane %v2843, 2
      %v2939 = vsel %vm925, %v2936, %v2938
      %v2940 = vrot.slane %v2325, 2
      %v2941 = vrot.slane %v2326, 2
      %v2942 = vsel %vm925, %v2940, %v2941
      %v2943 = vrot.slane %v2327, 2
      %v2944 = vsel %vm925, %v2941, %v2943
      %v2945 = vrot.slane %v2328, 2
      %v2946 = vsel %vm925, %v2943, %v2945
      %v2947 = vrot.slane %v2844, 2
      %v2948 = vsel %vm925, %v2945, %v2947
      %v2949 = vrot.slane %v2845, 2
      %v2950 = vrot.slane %v2846, 2
      %v2951 = vsel %vm925, %v2949, %v2950
      %v2952 = vrot.slane %v2847, 2
      %v2953 = vsel %vm925, %v2950, %v2952
      %v2954 = vrot.slane %v2848, 2
      %v2955 = vsel %vm925, %v2952, %v2954
      %v2956 = vrot.slane %v2849, 2
      %v2957 = vsel %vm925, %v2954, %v2956
      %v2958 = vrot.slane %v2850, 2
      %v2959 = vrot.slane %v2851, 2
      %v2960 = vsel %vm925, %v2958, %v2959
      %v2961 = vrot.slane %v2852, 2
      %v2962 = vsel %vm925, %v2959, %v2961
      %v2963 = vrot.slane %v2853, 2
      %v2964 = vsel %vm925, %v2961, %v2963
      %v2965 = vrot.slane %v2854, 2
      %v2966 = vsel %vm925, %v2963, %v2965
      %2967 = vrot.lane.b32.xlu0 %v2897, 64
      %v2968 = vpop.permute.xlu0 %2967
      %2969 = vrot.lane.b32.xlu0 %v2899, 64
      %v2970 = vpop.permute.xlu0 %2969
      %2971 = vrot.lane.b32.xlu0 %v2901, 64
      %v2972 = vpop.permute.xlu0 %2971
      %2973 = vrot.lane.b32.xlu0 %v2903, 64
      %v2974 = vpop.permute.xlu0 %2973
      %2975 = vrot.lane.b32.xlu0 %v2906, 64
      %v2976 = vpop.permute.xlu0 %2975
      %2977 = vrot.lane.b32.xlu0 %v2908, 64
      %v2978 = vpop.permute.xlu0 %2977
      %2979 = vrot.lane.b32.xlu0 %v2910, 64
      %v2980 = vpop.permute.xlu0 %2979
      %2981 = vrot.lane.b32.xlu0 %v2912, 64
      %v2982 = vpop.permute.xlu0 %2981
      %2983 = vrot.lane.b32.xlu0 %v2915, 64
      %v2984 = vpop.permute.xlu0 %2983
      %2985 = vrot.lane.b32.xlu0 %v2917, 64
      %v2986 = vpop.permute.xlu0 %2985
      %2987 = vrot.lane.b32.xlu0 %v2919, 64
      %v2988 = vpop.permute.xlu0 %2987
      %2989 = vrot.lane.b32.xlu0 %v2921, 64
      %v2990 = vpop.permute.xlu0 %2989
      %2991 = vrot.lane.b32.xlu0 %v2924, 64
      %v2992 = vpop.permute.xlu0 %2991
      %2993 = vrot.lane.b32.xlu0 %v2926, 64
      %v2994 = vpop.permute.xlu0 %2993
      %2995 = vrot.lane.b32.xlu0 %v2928, 64
      %v2996 = vpop.permute.xlu0 %2995
      %2997 = vrot.lane.b32.xlu0 %v2930, 64
      %v2998 = vpop.permute.xlu0 %2997
      %2999 = vrot.lane.b32.xlu0 %v2933, 64
      %v3000 = vpop.permute.xlu0 %2999
      %3001 = vrot.lane.b32.xlu0 %v2935, 64
      %v3002 = vpop.permute.xlu0 %3001
      %3003 = vrot.lane.b32.xlu0 %v2937, 64
      %v3004 = vpop.permute.xlu0 %3003
      %3005 = vrot.lane.b32.xlu0 %v2939, 64
      %v3006 = vpop.permute.xlu0 %3005
      %3007 = vrot.lane.b32.xlu0 %v2942, 64
      %v3008 = vpop.permute.xlu0 %3007
      %3009 = vrot.lane.b32.xlu0 %v2944, 64
      %v3010 = vpop.permute.xlu0 %3009
      %3011 = vrot.lane.b32.xlu0 %v2946, 64
      %v3012 = vpop.permute.xlu0 %3011
      %3013 = vrot.lane.b32.xlu0 %v2948, 64
      %v3014 = vpop.permute.xlu0 %3013
      %3015 = vrot.lane.b32.xlu0 %v2951, 64
      %v3016 = vpop.permute.xlu0 %3015
      %3017 = vrot.lane.b32.xlu0 %v2953, 64
      %v3018 = vpop.permute.xlu0 %3017
      %3019 = vrot.lane.b32.xlu0 %v2955, 64
      %v3020 = vpop.permute.xlu0 %3019
      %3021 = vrot.lane.b32.xlu0 %v2957, 64
      %v3022 = vpop.permute.xlu0 %3021
      %3023 = vrot.lane.b32.xlu0 %v2960, 64
      %v3024 = vpop.permute.xlu0 %3023
      %3025 = vrot.lane.b32.xlu0 %v2962, 64
      %v3026 = vpop.permute.xlu0 %3025
      %3027 = vrot.lane.b32.xlu0 %v2964, 64
      %v3028 = vpop.permute.xlu0 %3027
      %3029 = vrot.lane.b32.xlu0 %v2966, 64
      %v3030 = vpop.permute.xlu0 %3029
      %vm3063 = vcmask 523264
      %v3064 = vsel %vm3063, %v2759, %v2968
      %v3065 = vsel %vm3063, %v2760, %v2970
      %v3066 = vsel %vm3063, %v2761, %v2972
      %v3067 = vsel %vm3063, %v2762, %v2974
      %v3068 = vsel %vm3063, %v2763, %v2976
      %v3069 = vsel %vm3063, %v2764, %v2978
      %v3070 = vsel %vm3063, %v2765, %v2980
      %v3071 = vsel %vm3063, %v2766, %v2982
      %v3072 = vsel %vm3063, %v2767, %v2984
      %v3073 = vsel %vm3063, %v2768, %v2986
      %v3074 = vsel %vm3063, %v2769, %v2988
      %v3075 = vsel %vm3063, %v2770, %v2990
      %v3076 = vsel %vm3063, %v2771, %v2992
      %v3077 = vsel %vm3063, %v2772, %v2994
      %v3078 = vsel %vm3063, %v2773, %v2996
      %v3079 = vsel %vm3063, %v2774, %v2998
      %v3080 = vsel %vm3063, %v2775, %v3000
      %v3081 = vsel %vm3063, %v2776, %v3002
      %v3082 = vsel %vm3063, %v2777, %v3004
      %v3083 = vsel %vm3063, %v2778, %v3006
      %v3084 = vsel %vm3063, %v2779, %v3008
      %v3085 = vsel %vm3063, %v2780, %v3010
      %v3086 = vsel %vm3063, %v2781, %v3012
      %v3087 = vsel %vm3063, %v2782, %v3014
      %v3088 = vsel %vm3063, %v2783, %v3016
      %v3089 = vsel %vm3063, %v2784, %v3018
      %v3090 = vsel %vm3063, %v2785, %v3020
      %v3091 = vsel %vm3063, %v2786, %v3022
      %v3092 = vsel %vm3063, %v2787, %v3024
      %v3093 = vsel %vm3063, %v2788, %v3026
      %v3094 = vsel %vm3063, %v2789, %v3028
      %v3095 = vsel %vm3063, %v2790, %v3030
      %v3096 = vld [vmem:[%s2] sm:$0xff]
      %v3097 = vld [vmem:[%s2 + $0x8] sm:$0xff]
      %v3098 = vld [vmem:[%s2 + $0x10] sm:$0xff]
      %v3099 = vld [vmem:[%s2 + $0x18] sm:$0xff]
      %v3100 = vld [vmem:[%s2 + $0x20] sm:$0xff]
      %v3101 = vld [vmem:[%s2 + $0x28] sm:$0xff]
      %v3102 = vld [vmem:[%s2 + $0x30] sm:$0xff]
      %v3103 = vld [vmem:[%s2 + $0x38] sm:$0xff]
      %v3104 = vld [vmem:[%s2 + $0x40] sm:$0xff]
      %v3105 = vld [vmem:[%s3] sm:$0x1]
      %v3107 = vperm.slane %v3105, 0
      %vm3109 = vcmask 588800
      %v3111 = vsel %vm3109, %v3064, 0
      %v3114 = vsel %vm3109, %v3065, 0
      %v3117 = vsel %vm3109, %v3066, 0
      %v3120 = vsel %vm3109, %v3067, 0
      %v3123 = vsel %vm3109, %v3068, 0
      %v3126 = vsel %vm3109, %v3069, 0
      %v3129 = vsel %vm3109, %v3070, 0
      %v3132 = vsel %vm3109, %v3071, 0
      %v3135 = vsel %vm3109, %v3072, 0
      %v3138 = vsel %vm3109, %v3073, 0
      %v3141 = vsel %vm3109, %v3074, 0
      %v3144 = vsel %vm3109, %v3075, 0
      %v3147 = vsel %vm3109, %v3076, 0
      %v3150 = vsel %vm3109, %v3077, 0
      %v3153 = vsel %vm3109, %v3078, 0
      %v3156 = vsel %vm3109, %v3079, 0
      %v3159 = vsel %vm3109, %v3080, 0
      %v3162 = vsel %vm3109, %v3081, 0
      %v3165 = vsel %vm3109, %v3082, 0
      %v3168 = vsel %vm3109, %v3083, 0
      %v3171 = vsel %vm3109, %v3084, 0
      %v3174 = vsel %vm3109, %v3085, 0
      %v3177 = vsel %vm3109, %v3086, 0
      %v3180 = vsel %vm3109, %v3087, 0
      %v3183 = vsel %vm3109, %v3088, 0
      %v3186 = vsel %vm3109, %v3089, 0
      %v3189 = vsel %vm3109, %v3090, 0
      %v3192 = vsel %vm3109, %v3091, 0
      %v3195 = vsel %vm3109, %v3092, 0
      %v3198 = vsel %vm3109, %v3093, 0
      %v3201 = vsel %vm3109, %v3094, 0
      %v3204 = vsel %vm3109, %v3095, 0
      %3206 = vmatpush.msra.mxu0 0.0
      %3207 = vmatpush.msra.mxu0 0.0
      %3208 = vmatpush.msra.mxu0 0.0
      %3209 = vmatpush.msra.mxu0 0.0
      %3210 = vmatpush.msra.mxu0 0.0
      %3211 = vmatpush.msra.mxu0 0.0
      %3212 = vmatpush.msra.mxu0 0.0
      %3213 = vmatpush.msra.mxu0 %v3104
      %3214 = vmatpush.msra.mxu0 %v3103
      %3215 = vmatpush.msra.mxu0 %v3102
      %3216 = vmatpush.msra.mxu0 %v3101
      %3217 = vmatpush.msra.mxu0 %v3100
      %3218 = vmatpush.msra.mxu0 %v3099
      %3219 = vmatpush.msra.mxu0 %v3098
      %3220 = vmatpush.msra.mxu0 %v3097
      %3221 = vmatpush.msra.mxu0 %v3096
      %3222 = vmatmul.f32.gmra.mxu0 %v3111
      %v3223 = vpop.f32.mrf.mxu0
      %v3224 = vadd.f32 %v3107, %v3223
      %3225 = vmatmul.f32.gmra.mxu0 %v3114
      %v3226 = vpop.f32.mrf.mxu0
      %v3227 = vadd.f32 %v3107, %v3226
      %3228 = vmatmul.f32.gmra.mxu0 %v3117
      %v3229 = vpop.f32.mrf.mxu0
      %v3230 = vadd.f32 %v3107, %v3229
      %3231 = vmatmul.f32.gmra.mxu0 %v3120
      %v3232 = vpop.f32.mrf.mxu0
      %v3233 = vadd.f32 %v3107, %v3232
      %3234 = vmatmul.f32.gmra.mxu0 %v3123
      %v3235 = vpop.f32.mrf.mxu0
      %v3236 = vadd.f32 %v3107, %v3235
      %3237 = vmatmul.f32.gmra.mxu0 %v3126
      %v3238 = vpop.f32.mrf.mxu0
      %v3239 = vadd.f32 %v3107, %v3238
      %3240 = vmatmul.f32.gmra.mxu0 %v3129
      %v3241 = vpop.f32.mrf.mxu0
      %v3242 = vadd.f32 %v3107, %v3241
      %3243 = vmatmul.f32.gmra.mxu0 %v3132
      %v3244 = vpop.f32.mrf.mxu0
      %v3245 = vadd.f32 %v3107, %v3244
      %3246 = vmatmul.f32.gmra.mxu0 %v3135
      %v3247 = vpop.f32.mrf.mxu0
      %v3248 = vadd.f32 %v3107, %v3247
      %3249 = vmatmul.f32.gmra.mxu0 %v3138
      %v3250 = vpop.f32.mrf.mxu0
      %v3251 = vadd.f32 %v3107, %v3250
      %3252 = vmatmul.f32.gmra.mxu0 %v3141
      %v3253 = vpop.f32.mrf.mxu0
      %v3254 = vadd.f32 %v3107, %v3253
      %3255 = vmatmul.f32.gmra.mxu0 %v3144
      %v3256 = vpop.f32.mrf.mxu0
      %v3257 = vadd.f32 %v3107, %v3256
      %3258 = vmatmul.f32.gmra.mxu0 %v3147
      %v3259 = vpop.f32.mrf.mxu0
      %v3260 = vadd.f32 %v3107, %v3259
      %3261 = vmatmul.f32.gmra.mxu0 %v3150
      %v3262 = vpop.f32.mrf.mxu0
      %v3263 = vadd.f32 %v3107, %v3262
      %3264 = vmatmul.f32.gmra.mxu0 %v3153
      %v3265 = vpop.f32.mrf.mxu0
      %v3266 = vadd.f32 %v3107, %v3265
      %3267 = vmatmul.f32.gmra.mxu0 %v3156
      %v3268 = vpop.f32.mrf.mxu0
      %v3269 = vadd.f32 %v3107, %v3268
      %3270 = vmatmul.f32.gmra.mxu0 %v3159
      %v3271 = vpop.f32.mrf.mxu0
      %v3272 = vadd.f32 %v3107, %v3271
      %3273 = vmatmul.f32.gmra.mxu0 %v3162
      %v3274 = vpop.f32.mrf.mxu0
      %v3275 = vadd.f32 %v3107, %v3274
      %3276 = vmatmul.f32.gmra.mxu0 %v3165
      %v3277 = vpop.f32.mrf.mxu0
      %v3278 = vadd.f32 %v3107, %v3277
      %3279 = vmatmul.f32.gmra.mxu0 %v3168
      %v3280 = vpop.f32.mrf.mxu0
      %v3281 = vadd.f32 %v3107, %v3280
      %3282 = vmatmul.f32.gmra.mxu0 %v3171
      %v3283 = vpop.f32.mrf.mxu0
      %v3284 = vadd.f32 %v3107, %v3283
      %3285 = vmatmul.f32.gmra.mxu0 %v3174
      %v3286 = vpop.f32.mrf.mxu0
      %v3287 = vadd.f32 %v3107, %v3286
      %3288 = vmatmul.f32.gmra.mxu0 %v3177
      %v3289 = vpop.f32.mrf.mxu0
      %v3290 = vadd.f32 %v3107, %v3289
      %3291 = vmatmul.f32.gmra.mxu0 %v3180
      %v3292 = vpop.f32.mrf.mxu0
      %v3293 = vadd.f32 %v3107, %v3292
      %3294 = vmatmul.f32.gmra.mxu0 %v3183
      %v3295 = vpop.f32.mrf.mxu0
      %v3296 = vadd.f32 %v3107, %v3295
      %3297 = vmatmul.f32.gmra.mxu0 %v3186
      %v3298 = vpop.f32.mrf.mxu0
      %v3299 = vadd.f32 %v3107, %v3298
      %3300 = vmatmul.f32.gmra.mxu0 %v3189
      %v3301 = vpop.f32.mrf.mxu0
      %v3302 = vadd.f32 %v3107, %v3301
      %3303 = vmatmul.f32.gmra.mxu0 %v3192
      %v3304 = vpop.f32.mrf.mxu0
      %v3305 = vadd.f32 %v3107, %v3304
      %3306 = vmatmul.f32.gmra.mxu0 %v3195
      %v3307 = vpop.f32.mrf.mxu0
      %v3308 = vadd.f32 %v3107, %v3307
      %3309 = vmatmul.f32.gmra.mxu0 %v3198
      %v3310 = vpop.f32.mrf.mxu0
      %v3311 = vadd.f32 %v3107, %v3310
      %3312 = vmatmul.f32.gmra.mxu0 %v3201
      %v3313 = vpop.f32.mrf.mxu0
      %v3314 = vadd.f32 %v3107, %v3313
      %3315 = vmatmul.f32.gmra.mxu0 %v3204
      %v3316 = vpop.f32.mrf.mxu0
      %v3317 = vadd.f32 %v3107, %v3316
      %3318 = vdwg.mxu0
      %3319 = vst [vmem:[%s301] sm:$0xff] %v3224
      %3320 = vst [vmem:[%s301 + $0x8] sm:$0xff] %v3227
      %3321 = vst [vmem:[%s301 + $0x10] sm:$0xff] %v3230
      %3322 = vst [vmem:[%s301 + $0x18] sm:$0xff] %v3233
      %3323 = vst [vmem:[%s301 + $0x20] sm:$0xff] %v3236
      %3324 = vst [vmem:[%s301 + $0x28] sm:$0xff] %v3239
      %3325 = vst [vmem:[%s301 + $0x30] sm:$0xff] %v3242
      %3326 = vst [vmem:[%s301 + $0x38] sm:$0xff] %v3245
      %3327 = vst [vmem:[%s301 + $0x40] sm:$0xff] %v3248
      %3328 = vst [vmem:[%s301 + $0x48] sm:$0xff] %v3251
      %3329 = vst [vmem:[%s301 + $0x50] sm:$0xff] %v3254
      %3330 = vst [vmem:[%s301 + $0x58] sm:$0xff] %v3257
      %3331 = vst [vmem:[%s301 + $0x60] sm:$0xff] %v3260
      %3332 = vst [vmem:[%s301 + $0x68] sm:$0xff] %v3263
      %3333 = vst [vmem:[%s301 + $0x70] sm:$0xff] %v3266
      %3334 = vst [vmem:[%s301 + $0x78] sm:$0xff] %v3269
      %3335 = vst [vmem:[%s301 + $0x80] sm:$0xff] %v3272
      %3336 = vst [vmem:[%s301 + $0x88] sm:$0xff] %v3275
      %3337 = vst [vmem:[%s301 + $0x90] sm:$0xff] %v3278
      %3338 = vst [vmem:[%s301 + $0x98] sm:$0xff] %v3281
      %3339 = vst [vmem:[%s301 + $0xa0] sm:$0xff] %v3284
      %3340 = vst [vmem:[%s301 + $0xa8] sm:$0xff] %v3287
      %3341 = vst [vmem:[%s301 + $0xb0] sm:$0xff] %v3290
      %3342 = vst [vmem:[%s301 + $0xb8] sm:$0xff] %v3293
      %3343 = vst [vmem:[%s301 + $0xc0] sm:$0xff] %v3296
      %3344 = vst [vmem:[%s301 + $0xc8] sm:$0xff] %v3299
      %3345 = vst [vmem:[%s301 + $0xd0] sm:$0xff] %v3302
      %3346 = vst [vmem:[%s301 + $0xd8] sm:$0xff] %v3305
      %3347 = vst [vmem:[%s301 + $0xe0] sm:$0xff] %v3308
      %3348 = vst [vmem:[%s301 + $0xe8] sm:$0xff] %v3311
      %3349 = vst [vmem:[%s301 + $0xf0] sm:$0xff] %v3314
      %3350 = vst [vmem:[%s301 + $0xf8] sm:$0xff] %v3317
      %v3351 = vld [vmem:[#allocation2] sm:$0x1]
      %v3352 = vadd.f32 %v3224, %v3227
      %v3353 = vadd.f32 %v3352, %v3230
      %v3354 = vadd.f32 %v3353, %v3233
      %v3355 = vadd.f32 %v3354, %v3236
      %v3356 = vadd.f32 %v3355, %v3239
      %v3357 = vadd.f32 %v3356, %v3242
      %v3358 = vadd.f32 %v3357, %v3245
      %v3359 = vadd.f32 %v3358, %v3248
      %v3360 = vadd.f32 %v3359, %v3251
      %v3361 = vadd.f32 %v3360, %v3254
      %v3362 = vadd.f32 %v3361, %v3257
      %v3363 = vadd.f32 %v3362, %v3260
      %v3364 = vadd.f32 %v3363, %v3263
      %v3365 = vadd.f32 %v3364, %v3266
      %v3366 = vadd.f32 %v3365, %v3269
      %v3367 = vadd.f32 %v3366, %v3272
      %v3368 = vadd.f32 %v3367, %v3275
      %v3369 = vadd.f32 %v3368, %v3278
      %v3370 = vadd.f32 %v3369, %v3281
      %v3371 = vadd.f32 %v3370, %v3284
      %v3372 = vadd.f32 %v3371, %v3287
      %v3373 = vadd.f32 %v3372, %v3290
      %v3374 = vadd.f32 %v3373, %v3293
      %v3375 = vadd.f32 %v3374, %v3296
      %v3376 = vadd.f32 %v3375, %v3299
      %v3377 = vadd.f32 %v3376, %v3302
      %v3378 = vadd.f32 %v3377, %v3305
      %v3379 = vadd.f32 %v3378, %v3308
      %v3380 = vadd.f32 %v3379, %v3311
      %v3381 = vadd.f32 %v3380, %v3314
      %v3382 = vadd.f32 %v3381, %v3317
      %v3383 = vrot.slane %v3382, 4
      %v3384 = vadd.f32 %v3382, %v3383
      %v3385 = vrot.slane %v3384, 2
      %v3386 = vadd.f32 %v3384, %v3385
      %v3387 = vrot.slane %v3386, 1
      %v3388 = vadd.f32 %v3386, %v3387
      %v3389 = vadd.f32 %v3351, %v3388
      %3390 = vst [vmem:[#allocation2] sm:$0x1] %v3389
      %v3391 = vld [vmem:[#allocation2 + $0x1] sm:$0x1]
      %v3392 = vmul.f32 %v3224, %v3224
      %v3393 = vmul.f32 %v3227, %v3227
      %v3394 = vmul.f32 %v3230, %v3230
      %v3395 = vmul.f32 %v3233, %v3233
      %v3396 = vmul.f32 %v3236, %v3236
      %v3397 = vmul.f32 %v3239, %v3239
      %v3398 = vmul.f32 %v3242, %v3242
      %v3399 = vmul.f32 %v3245, %v3245
      %v3400 = vmul.f32 %v3248, %v3248
      %v3401 = vmul.f32 %v3251, %v3251
      %v3402 = vmul.f32 %v3254, %v3254
      %v3403 = vmul.f32 %v3257, %v3257
      %v3404 = vmul.f32 %v3260, %v3260
      %v3405 = vmul.f32 %v3263, %v3263
      %v3406 = vmul.f32 %v3266, %v3266
      %v3407 = vmul.f32 %v3269, %v3269
      %v3408 = vmul.f32 %v3272, %v3272
      %v3409 = vmul.f32 %v3275, %v3275
      %v3410 = vmul.f32 %v3278, %v3278
      %v3411 = vmul.f32 %v3281, %v3281
      %v3412 = vmul.f32 %v3284, %v3284
      %v3413 = vmul.f32 %v3287, %v3287
      %v3414 = vmul.f32 %v3290, %v3290
      %v3415 = vmul.f32 %v3293, %v3293
      %v3416 = vmul.f32 %v3296, %v3296
      %v3417 = vmul.f32 %v3299, %v3299
      %v3418 = vmul.f32 %v3302, %v3302
      %v3419 = vmul.f32 %v3305, %v3305
      %v3420 = vmul.f32 %v3308, %v3308
      %v3421 = vmul.f32 %v3311, %v3311
      %v3422 = vmul.f32 %v3314, %v3314
      %v3423 = vmul.f32 %v3317, %v3317
      %v3424 = vadd.f32 %v3392, %v3393
      %v3425 = vadd.f32 %v3424, %v3394
      %v3426 = vadd.f32 %v3425, %v3395
      %v3427 = vadd.f32 %v3426, %v3396
      %v3428 = vadd.f32 %v3427, %v3397
      %v3429 = vadd.f32 %v3428, %v3398
      %v3430 = vadd.f32 %v3429, %v3399
      %v3431 = vadd.f32 %v3430, %v3400
      %v3432 = vadd.f32 %v3431, %v3401
      %v3433 = vadd.f32 %v3432, %v3402
      %v3434 = vadd.f32 %v3433, %v3403
      %v3435 = vadd.f32 %v3434, %v3404
      %v3436 = vadd.f32 %v3435, %v3405
      %v3437 = vadd.f32 %v3436, %v3406
      %v3438 = vadd.f32 %v3437, %v3407
      %v3439 = vadd.f32 %v3438, %v3408
      %v3440 = vadd.f32 %v3439, %v3409
      %v3441 = vadd.f32 %v3440, %v3410
      %v3442 = vadd.f32 %v3441, %v3411
      %v3443 = vadd.f32 %v3442, %v3412
      %v3444 = vadd.f32 %v3443, %v3413
      %v3445 = vadd.f32 %v3444, %v3414
      %v3446 = vadd.f32 %v3445, %v3415
      %v3447 = vadd.f32 %v3446, %v3416
      %v3448 = vadd.f32 %v3447, %v3417
      %v3449 = vadd.f32 %v3448, %v3418
      %v3450 = vadd.f32 %v3449, %v3419
      %v3451 = vadd.f32 %v3450, %v3420
      %v3452 = vadd.f32 %v3451, %v3421
      %v3453 = vadd.f32 %v3452, %v3422
      %v3454 = vadd.f32 %v3453, %v3423
      %v3455 = vrot.slane %v3454, 4
      %v3456 = vadd.f32 %v3454, %v3455
      %v3457 = vrot.slane %v3456, 2
      %v3458 = vadd.f32 %v3456, %v3457
      %v3459 = vrot.slane %v3458, 1
      %v3460 = vadd.f32 %v3458, %v3459
      %v3461 = vadd.f32 %v3391, %v3460
      %3462 = vst [vmem:[#allocation2 + $0x1] sm:$0x1] %v3461
      %v3463 = vld [vmem:[#allocation2] sm:$0x3]
      %3464 = vst [vmem:[%s306] sm:$0x3] %v3463
      %s3465 = smul.u32 32, %s22
      %p3466 = scmp.lt.s32.totalorder %s21, 1
      %s3467 = scalar_select %p3466, %s21, 1
      %p3468 = scmp.lt.s32.totalorder %s3465, 127
      %s3469 = scalar_select %p3468, %s3465, 127
      %s3470 = smul.addr %s3467, 128
      %s3471 = sadd.s32 %s3469, %s3470
      %s3472 = smul.addr %s3471, 8
      %s3473 = scalar_lea.vmem %s4, %s3472
      %p3474 = scmp.lt.s32.totalorder %s21, 1
      %s3475 = scalar_select %p3474, %s21, 1
      %s3476 = smul.addr %s3475, 2
      %s3477 = scalar_lea.vmem %s5, %s3476
      // Predicated region
      $region41: #{decoder_block_forward.6} parent=35 // pred_check
        %p3478 = pneg %p147
      $region42: #{decoder_block_forward.6} parent=35 // pred_check_branch
        %3480 = sbr.rel (%p3478) target = $region44
      $region43: #{decoder_block_forward.6} parent=35 // pred_region
        %s3481 = smul.u32 32, %s22
      $region44: #{decoder_block_forward.6} parent=35 // pred_fallthru
        _
      // Predicated region
      $region45: #{decoder_block_forward.6} parent=35 // pred_check
        %p3482 = pneg %p173
      $region46: #{decoder_block_forward.6} parent=35 // pred_check_branch
        %3484 = sbr.rel (%p3482) target = $region48
      $region47: #{decoder_block_forward.6} parent=35 // pred_region
        _
      $region48: #{decoder_block_forward.6} parent=35 // pred_fallthru
        _
    $region36: #{decoder_block_forward.6} parent=5 // pred_fallthru
      _
    %p3485 = scmp.le.s32.totalorder 2, %s12
    // Predicated region
    $region49: #{decoder_block_forward.6} parent=5 // pred_check
      %p3486 = pneg %p3485
    $region50: #{decoder_block_forward.6} parent=5 // pred_check_branch
      %3488 = sbr.rel (%p3486) target = $region52
    $region51: #{decoder_block_forward.6} parent=5 // pred_region
      %s3489 = ssub.s32 %s12, 2
      // Predicated region
      $region53: #{decoder_block_forward.6} parent=51 // pred_check
        %p3490 = pneg %p153
      $region54: #{decoder_block_forward.6} parent=51 // pred_check_branch
        %3492 = sbr.rel (%p3490) target = $region56
      $region55: #{decoder_block_forward.6} parent=51 // pred_region
        %s3493 = smul.u32 32, %s24
        %p3494 = scmp.lt.s32.totalorder %s23, 1
        %s3495 = scalar_select %p3494, %s23, 1
        %p3496 = scmp.lt.s32.totalorder %s3493, 127
        %s3497 = scalar_select %p3496, %s3493, 127
        %s3498 = smul.addr %s3495, 128
        %s3499 = sadd.s32 %s3497, %s3498
        %s3500 = smul.addr %s3499, 8
        %s3501 = scalar_lea.vmem %s4, %s3500
      $region56: #{decoder_block_forward.6} parent=51 // pred_fallthru
        _
      // Predicated region
      $region57: #{decoder_block_forward.6} parent=51 // pred_check
        %p3502 = pneg %p179
      $region58: #{decoder_block_forward.6} parent=51 // pred_check_branch
        %3504 = sbr.rel (%p3502) target = $region60
      $region59: #{decoder_block_forward.6} parent=51 // pred_region
        %p3505 = scmp.lt.s32.totalorder %s23, 1
        %s3506 = scalar_select %p3505, %s23, 1
        %s3507 = smul.addr %s3506, 2
        %s3508 = scalar_lea.vmem %s5, %s3507
      $region60: #{decoder_block_forward.6} parent=51 // pred_fallthru
        _
    $region52: #{decoder_block_forward.6} parent=5 // pred_fallthru
      _
  $region6: #{decoder_block_forward.6} parent=0 // loop_footer
    %s16 = sadd.s32 1, %s12
  $region7: #{decoder_block_forward.6} parent=0 // loop_footer_branch
    %11 = sbr.rel target = $region3
  $region8: #{decoder_block_forward.6} parent=0 // loop_exit
    _

// kernel: decoder_block_forward.8
$region0: #{decoder_block_forward.8}
  #allocation0 [shape = 'u32[]', space=smem, size = 0x4, offset = 0x4, fixed_abs, tag = 'smem constant byte address 0x4 - core index']
  #allocation1 [shape = 'u32[72,128]{1,0:T(1,128)}', space=vmem, size = 0x9000, scoped, tag = 'internal scratch']
  #allocation2 [shape = 'f32[2,128]{1,0:T(2,128)}', space=vmem, size = 0x400, scoped, tag = 'scratch operand']
  %s0 = inlined_call_operand.vmem [shape: f32[2,4,10,34,4], index: 0, kind: input, shape index: {}]
  %s1 = inlined_call_operand.vmem [shape: f32[36,128], index: 1, kind: input, shape index: {}]
  %s2 = inlined_call_operand.vmem [shape: f32[1,128], index: 2, kind: input, shape index: {}]
  %s3 = inlined_call_operand.vmem [shape: f32[2,1024,128], index: 3, kind: output, shape index: {0}]
  %s4 = inlined_call_operand.vmem [shape: f32[2,2,128], index: 4, kind: output, shape index: {1}]
  %5 = xla_tuple %s3, %s4
  %s6 = sld [smem:[#allocation0]]
  $region57: #{decoder_block_forward.8} parent=0
    _
  %s8 = ssub.s32 1, %s6
  %s9 = scalar_select 0, %s8, %s6
  loop: start=0, step=1, limit=10
  $region2: #{decoder_block_forward.8} parent=0 // loop_pre_header
    _
  $region3: #{decoder_block_forward.8} parent=0 // loop_header
    %s11 = sphi 0, %s15
    %p12 = scmp.ge.s32.totalorder %s11, 10
    %s18 = sphi 0, %s30
    %s19 = sphi 0, %s26
    %s20 = sphi 0, %s18
    %s21 = sphi 0, %s19
    %s22 = sphi 0, %s20
    %s23 = sphi 0, %s21
    %s35 = sphi 0, %s37
    %s38 = sphi 0, %s35
    %s39 = sphi 0, %s38
    %s55 = sphi 0, %s39
    %s59 = sphi 0, %s59
    %s61 = sphi 0, %s59
    %s62 = sphi 0, %s61
    %s76 = sphi 0, %s62
    %s80 = sphi 0, %s80
    %s82 = sphi 0, %s80
    %s83 = sphi 0, %s82
    %s97 = sphi 0, %s83
    %s105 = sphi 0, %s107
    %s108 = sphi 0, %s105
    %s109 = sphi 0, %s108
    %s125 = sphi 0, %s109
    %s131 = sphi 0, %s133
    %s134 = sphi 0, %s131
    %s135 = sphi 0, %s134
    %s151 = sphi 0, %s135
  $region4: #{decoder_block_forward.8} parent=0 // loop_header_branch
    %14 = sbr.rel (%p12) target = $region8
  $region5: #{decoder_block_forward.8} parent=0 // loop_body
    %s16 = ssub.s32 %s11, 1
    %s17 = ssub.s32 %s11, 2
    %s24 = sadd.s32 1, %s19
    %p25 = scmp.ge.s32.totalorder %s24, 4
    %s26 = scalar_select %p25, 0, %s24
    %s27 = sadd.s32 1, %s18
    %s28 = scalar_select %p25, %s27, %s18
    %p29 = scmp.ge.s32.totalorder %s28, 2
    %s30 = scalar_select %p29, 0, %s28
    %s31 = ssub.s32 %s18, %s30
    %s32 = ssub.s32 %s19, %s26
    %s33 = sor.u32 %s31, %s32
    %p34 = scmp.eq.s32.totalorder %s33, 0
    %s36 = sadd.s32 %s35, 1
    %s37 = scalar_select %p34, %s35, %s36
    %p40 = pneg %p34
    %p41 = scmp.eq.s32.totalorder %s11, 7
    %p42 = por %p40, %p41
    %p43 = scmp.ne.s32.totalorder %s35, %s38
    %p44 = scmp.eq.s32.totalorder %s11, 0
    %p45 = por %p43, %p44
    %p46 = scmp.ne.s32.totalorder %s35, %s38
    %p47 = scmp.eq.s32.totalorder %s16, 7
    %p48 = por %p46, %p47
    %p49 = scmp.ne.s32.totalorder %s38, %s39
    %p50 = scmp.eq.s32.totalorder %s16, 0
    %p51 = por %p49, %p50
    %p52 = scmp.ne.s32.totalorder %s38, %s39
    %p53 = scmp.eq.s32.totalorder %s17, 7
    %p54 = por %p52, %p53
    %p56 = scmp.ne.s32.totalorder %s39, %s55
    %p57 = scmp.eq.s32.totalorder %s17, 0
    %p58 = por %p56, %p57
    %s60 = sadd.s32 %s59, 1
    %p63 = scmp.eq.s32.totalorder %s11, 7
    %p64 = scmp.ne.s32.totalorder %s59, %s61
    %p65 = scmp.eq.s32.totalorder %s11, 0
    %p66 = por %p64, %p65
    %p67 = scmp.ne.s32.totalorder %s59, %s61
    %p68 = scmp.eq.s32.totalorder %s16, 7
    %p69 = por %p67, %p68
    %p70 = scmp.ne.s32.totalorder %s61, %s62
    %p71 = scmp.eq.s32.totalorder %s16, 0
    %p72 = por %p70, %p71
    %p73 = scmp.ne.s32.totalorder %s61, %s62
    %p74 = scmp.eq.s32.totalorder %s17, 7
    %p75 = por %p73, %p74
    %p77 = scmp.ne.s32.totalorder %s62, %s76
    %p78 = scmp.eq.s32.totalorder %s17, 0
    %p79 = por %p77, %p78
    %s81 = sadd.s32 %s80, 1
    %p84 = scmp.eq.s32.totalorder %s11, 7
    %p85 = scmp.ne.s32.totalorder %s80, %s82
    %p86 = scmp.eq.s32.totalorder %s11, 0
    %p87 = por %p85, %p86
    %p88 = scmp.ne.s32.totalorder %s80, %s82
    %p89 = scmp.eq.s32.totalorder %s16, 7
    %p90 = por %p88, %p89
    %p91 = scmp.ne.s32.totalorder %s82, %s83
    %p92 = scmp.eq.s32.totalorder %s16, 0
    %p93 = por %p91, %p92
    %p94 = scmp.ne.s32.totalorder %s82, %s83
    %p95 = scmp.eq.s32.totalorder %s17, 7
    %p96 = por %p94, %p95
    %p98 = scmp.ne.s32.totalorder %s83, %s97
    %p99 = scmp.eq.s32.totalorder %s17, 0
    %p100 = por %p98, %p99
    %s101 = ssub.s32 %s18, %s30
    %s102 = ssub.s32 %s19, %s26
    %s103 = sor.u32 %s101, %s102
    %p104 = scmp.eq.s32.totalorder %s103, 0
    %s106 = sadd.s32 %s105, 1
    %s107 = scalar_select %p104, %s105, %s106
    %p110 = pneg %p104
    %p111 = scmp.eq.s32.totalorder %s11, 7
    %p112 = por %p110, %p111
    %p113 = scmp.ne.s32.totalorder %s105, %s108
    %p114 = scmp.eq.s32.totalorder %s11, 0
    %p115 = por %p113, %p114
    %p116 = scmp.ne.s32.totalorder %s105, %s108
    %p117 = scmp.eq.s32.totalorder %s16, 7
    %p118 = por %p116, %p117
    %p119 = scmp.ne.s32.totalorder %s108, %s109
    %p120 = scmp.eq.s32.totalorder %s16, 0
    %p121 = por %p119, %p120
    %p122 = scmp.ne.s32.totalorder %s108, %s109
    %p123 = scmp.eq.s32.totalorder %s17, 7
    %p124 = por %p122, %p123
    %p126 = scmp.ne.s32.totalorder %s109, %s125
    %p127 = scmp.eq.s32.totalorder %s17, 0
    %p128 = por %p126, %p127
    %s129 = ssub.s32 %s18, %s30
    %p130 = scmp.eq.s32.totalorder %s129, 0
    %s132 = sadd.s32 %s131, 1
    %s133 = scalar_select %p130, %s131, %s132
    %p136 = pneg %p130
    %p137 = scmp.eq.s32.totalorder %s11, 7
    %p138 = por %p136, %p137
    %p139 = scmp.ne.s32.totalorder %s131, %s134
    %p140 = scmp.eq.s32.totalorder %s11, 0
    %p141 = por %p139, %p140
    %p142 = scmp.ne.s32.totalorder %s131, %s134
    %p143 = scmp.eq.s32.totalorder %s16, 7
    %p144 = por %p142, %p143
    %p145 = scmp.ne.s32.totalorder %s134, %s135
    %p146 = scmp.eq.s32.totalorder %s16, 0
    %p147 = por %p145, %p146
    %p148 = scmp.ne.s32.totalorder %s134, %s135
    %p149 = scmp.eq.s32.totalorder %s17, 7
    %p150 = por %p148, %p149
    %p152 = scmp.ne.s32.totalorder %s135, %s151
    %p153 = scmp.eq.s32.totalorder %s17, 0
    %p154 = por %p152, %p153
    %p155 = scmp.le.s32.totalorder 1, %s11
    %p156 = scmp.lt.s32.totalorder %s11, 9
    %p157 = pnand %p155, %p156
    %p158 = pneg %p157
    // Predicated region
    $region9: #{decoder_block_forward.8} parent=5 // pred_check
      _
    $region10: #{decoder_block_forward.8} parent=5 // pred_check_branch
      %160 = sbr.rel (%p157) target = $region12
    $region11: #{decoder_block_forward.8} parent=5 // pred_region
      %s161 = ssub.s32 %s11, 1
      // Predicated region
      $region13: #{decoder_block_forward.8} parent=11 // pred_check
        %p162 = pneg %p72
      $region14: #{decoder_block_forward.8} parent=11 // pred_check_branch
        %164 = sbr.rel (%p162) target = $region16
      $region15: #{decoder_block_forward.8} parent=11 // pred_region
        _
      $region16: #{decoder_block_forward.8} parent=11 // pred_fallthru
        _
      // Predicated region
      $region17: #{decoder_block_forward.8} parent=11 // pred_check
        %p165 = pneg %p93
      $region18: #{decoder_block_forward.8} parent=11 // pred_check_branch
        %167 = sbr.rel (%p165) target = $region20
      $region19: #{decoder_block_forward.8} parent=11 // pred_region
        _
      $region20: #{decoder_block_forward.8} parent=11 // pred_fallthru
        _
    $region12: #{decoder_block_forward.8} parent=5 // pred_fallthru
      _
    %p168 = scmp.lt.s32.totalorder %s11, 8
    // Predicated region
    $region21: #{decoder_block_forward.8} parent=5 // pred_check
      %p169 = pneg %p168
    $region22: #{decoder_block_forward.8} parent=5 // pred_check_branch
      %171 = sbr.rel (%p169) target = $region24
    $region23: #{decoder_block_forward.8} parent=5 // pred_region
      // Predicated region
      $region25: #{decoder_block_forward.8} parent=23 // pred_check
        %p172 = pneg %p45
      $region26: #{decoder_block_forward.8} parent=23 // pred_check_branch
        %174 = sbr.rel (%p172) target = $region28
      $region27: #{decoder_block_forward.8} parent=23 // pred_region
        %p175 = scmp.lt.s32.totalorder %s18, 1
        %s176 = scalar_select %p175, %s18, 1
        %p177 = scmp.lt.s32.totalorder %s19, 3
        %s178 = scalar_select %p177, %s19, 3
        %s179 = smul.addr %s178, 50
        %s180 = smul.addr %s176, 200
        %s181 = sadd.s32 %s179, %s180
        %s182 = smul.addr %s181, 8
        %s183 = scalar_lea.vmem %s0, %s182
      $region28: #{decoder_block_forward.8} parent=23 // pred_fallthru
        _
    $region24: #{decoder_block_forward.8} parent=5 // pred_fallthru
      _
    %p184 = scmp.le.s32.totalorder 1, %s11
    %p185 = scmp.lt.s32.totalorder %s11, 9
    %p186 = pnand %p184, %p185
    %p187 = pneg %p186
    // Predicated region
    $region29: #{decoder_block_forward.8} parent=5 // pred_check
      _
    $region30: #{decoder_block_forward.8} parent=5 // pred_check_branch
      %189 = sbr.rel (%p186) target = $region32
    $region31: #{decoder_block_forward.8} parent=5 // pred_region
      %s190 = ssub.s32 %s11, 1
      %p191 = scmp.lt.s32.totalorder %s20, 1
      %s192 = scalar_select %p191, %s20, 1
      %p193 = scmp.lt.s32.totalorder %s21, 3
      %s194 = scalar_select %p193, %s21, 3
      %s195 = smul.addr %s194, 50
      %s196 = smul.addr %s192, 200
      %s197 = sadd.s32 %s195, %s196
      %s198 = smul.addr %s197, 8
      %s199 = scalar_lea.vmem %s0, %s198
      %p200 = pneg %p51
      %p201 = pneg %p48
      %p202 = pneg %p72
      %p203 = pneg %p69
      %p204 = pneg %p93
      %p205 = pneg %p90
      %p206 = pneg %p121
      %p207 = pneg %p118
      %s208 = smul.u32 32, %s21
      %p209 = scmp.lt.s32.totalorder %s20, 1
      %s210 = scalar_select %p209, %s20, 1
      %p211 = scmp.lt.s32.totalorder %s208, 127
      %s212 = scalar_select %p211, %s208, 127
      %s213 = smul.addr %s210, 128
      %s214 = sadd.s32 %s212, %s213
      %s215 = smul.addr %s214, 8
      %s216 = scalar_lea.vmem %s3, %s215
      %p217 = pneg %p147
      %p218 = pneg %p144
      %p219 = scmp.lt.s32.totalorder %s20, 1
      %s220 = scalar_select %p219, %s20, 1
      %s221 = smul.addr %s220, 2
      %s222 = scalar_lea.vmem %s4, %s221
      %p223 = scmp.lt.s32.totalorder %s20, 1
      %s224 = scalar_select %p223, %s20, 1
      %p225 = scmp.lt.s32.totalorder %s21, 3
      %s226 = scalar_select %p225, %s21, 3
      %s227 = smul.addr %s226, 50
      %s228 = smul.addr %s224, 200
      %s229 = sadd.s32 %s227, %s228
      %s230 = smul.addr %s229, 8
      %s231 = scalar_lea.vmem %s0, %s230
      %s232 = smul.u32 32, %s21
      %p233 = scmp.lt.s32.totalorder %s20, 1
      %s234 = scalar_select %p233, %s20, 1
      %p235 = scmp.lt.s32.totalorder %s232, 127
      %s236 = scalar_select %p235, %s232, 127
      %s237 = smul.addr %s234, 128
      %s238 = sadd.s32 %s236, %s237
      %s239 = smul.addr %s238, 8
      %s240 = scalar_lea.vmem %s3, %s239
      %s241 = smul.u32 32, %s21
      %p242 = scmp.lt.s32.totalorder %s20, 1
      %s243 = scalar_select %p242, %s20, 1
      %s244 = smul.addr %s243, 2
      %s245 = scalar_lea.vmem %s4, %s244
      %p246 = scmp.eq.s32.totalorder %s21, 0
      // Predicated region
      $region33: #{decoder_block_forward.8} parent=31 // pred_check
        %p247 = pneg %p246
      $region34: #{decoder_block_forward.8} parent=31 // pred_check_branch
        %249 = sbr.rel (%p247) target = $region36
      $region35: #{decoder_block_forward.8} parent=31 // pred_region
        %250 = vst [vmem:[#allocation2] sm:$0x3] 0.0
      $region36: #{decoder_block_forward.8} parent=31 // pred_fallthru
        _
      %v251 = vld [vmem:[%s231] sm:$0xff]
      %v252 = vld [vmem:[%s231 + $0x8] sm:$0xff]
      %v253 = vld [vmem:[%s231 + $0x10] sm:$0xff]
      %v254 = vld [vmem:[%s231 + $0x18] sm:$0xff]
      %v255 = vld [vmem:[%s231 + $0x20] sm:$0x3]
      %v256 = vld [vmem:[%s231 + $0x28] sm:$0xff]
      %v257 = vld [vmem:[%s231 + $0x30] sm:$0xff]
      %v258 = vld [vmem:[%s231 + $0x38] sm:$0xff]
      %v259 = vld [vmem:[%s231 + $0x40] sm:$0xff]
      %v260 = vld [vmem:[%s231 + $0x48] sm:$0x3]
      %v261 = vld [vmem:[%s231 + $0x50] sm:$0xff]
      %v262 = vld [vmem:[%s231 + $0x58] sm:$0xff]
      %v263 = vld [vmem:[%s231 + $0x60] sm:$0xff]
      %v264 = vld [vmem:[%s231 + $0x68] sm:$0xff]
      %v265 = vld [vmem:[%s231 + $0x70] sm:$0x3]
      %v266 = vld [vmem:[%s231 + $0x78] sm:$0xff]
      %v267 = vld [vmem:[%s231 + $0x80] sm:$0xff]
      %v268 = vld [vmem:[%s231 + $0x88] sm:$0xff]
      %v269 = vld [vmem:[%s231 + $0x90] sm:$0xff]
      %v270 = vld [vmem:[%s231 + $0x98] sm:$0x3]
      %v271 = vld [vmem:[%s231 + $0xa0] sm:$0xff]
      %v272 = vld [vmem:[%s231 + $0xa8] sm:$0xff]
      %v273 = vld [vmem:[%s231 + $0xb0] sm:$0xff]
      %v274 = vld [vmem:[%s231 + $0xb8] sm:$0xff]
      %v275 = vld [vmem:[%s231 + $0xc0] sm:$0x3]
      %v276 = vld [vmem:[%s231 + $0xc8] sm:$0xff]
      %v277 = vld [vmem:[%s231 + $0xd0] sm:$0xff]
      %v278 = vld [vmem:[%s231 + $0xd8] sm:$0xff]
      %v279 = vld [vmem:[%s231 + $0xe0] sm:$0xff]
      %v280 = vld [vmem:[%s231 + $0xe8] sm:$0x3]
      %v281 = vld [vmem:[%s231 + $0xf0] sm:$0xff]
      %v282 = vld [vmem:[%s231 + $0xf8] sm:$0xff]
      %v283 = vld [vmem:[%s231 + $0x100] sm:$0xff]
      %v284 = vld [vmem:[%s231 + $0x108] sm:$0xff]
      %v285 = vld [vmem:[%s231 + $0x110] sm:$0x3]
      %v286 = vld [vmem:[%s231 + $0x118] sm:$0xff]
      %v287 = vld [vmem:[%s231 + $0x120] sm:$0xff]
      %v288 = vld [vmem:[%s231 + $0x128] sm:$0xff]
      %v289 = vld [vmem:[%s231 + $0x130] sm:$0xff]
      %v290 = vld [vmem:[%s231 + $0x138] sm:$0x3]
      %v291 = vld [vmem:[%s231 + $0x140] sm:$0xff]
      %v292 = vld [vmem:[%s231 + $0x148] sm:$0xff]
      %v293 = vld [vmem:[%s231 + $0x150] sm:$0xff]
      %v294 = vld [vmem:[%s231 + $0x158] sm:$0xff]
      %v295 = vld [vmem:[%s231 + $0x160] sm:$0x3]
      %v296 = vld [vmem:[%s231 + $0x168] sm:$0xff]
      %v297 = vld [vmem:[%s231 + $0x170] sm:$0xff]
      %v298 = vld [vmem:[%s231 + $0x178] sm:$0xff]
      %v299 = vld [vmem:[%s231 + $0x180] sm:$0xff]
      %v300 = vld [vmem:[%s231 + $0x188] sm:$0x3]
      %vm341 = vcmask 1046528
      %v342 = vrot.slane %v251, 1
      %v343 = vrot.slane %v252, 1
      %v344 = vsel %vm341, %v342, %v343
      %v345 = vrot.slane %v253, 1
      %v346 = vsel %vm341, %v343, %v345
      %v347 = vrot.slane %v254, 1
      %v348 = vsel %vm341, %v345, %v347
      %v349 = vrot.slane %v255, 1
      %v350 = vsel %vm341, %v347, %v349
      %v351 = vrot.slane %v256, 1
      %v352 = vrot.slane %v257, 1
      %v353 = vsel %vm341, %v351, %v352
      %v354 = vrot.slane %v258, 1
      %v355 = vsel %vm341, %v352, %v354
      %v356 = vrot.slane %v259, 1
      %v357 = vsel %vm341, %v354, %v356
      %v358 = vrot.slane %v260, 1
      %v359 = vsel %vm341, %v356, %v358
      %v360 = vrot.slane %v261, 1
      %v361 = vrot.slane %v262, 1
      %v362 = vsel %vm341, %v360, %v361
      %v363 = vrot.slane %v263, 1
      %v364 = vsel %vm341, %v361, %v363
      %v365 = vrot.slane %v264, 1
      %v366 = vsel %vm341, %v363, %v365
      %v367 = vrot.slane %v265, 1
      %v368 = vsel %vm341, %v365, %v367
      %v369 = vrot.slane %v266, 1
      %v370 = vrot.slane %v267, 1
      %v371 = vsel %vm341, %v369, %v370
      %v372 = vrot.slane %v268, 1
      %v373 = vsel %vm341, %v370, %v372
      %v374 = vrot.slane %v269, 1
      %v375 = vsel %vm341, %v372, %v374
      %v376 = vrot.slane %v270, 1
      %v377 = vsel %vm341, %v374, %v376
      %v378 = vrot.slane %v271, 1
      %v379 = vrot.slane %v272, 1
      %v380 = vsel %vm341, %v378, %v379
      %v381 = vrot.slane %v273, 1
      %v382 = vsel %vm341, %v379, %v381
      %v383 = vrot.slane %v274, 1
      %v384 = vsel %vm341, %v381, %v383
      %v385 = vrot.slane %v275, 1
      %v386 = vsel %vm341, %v383, %v385
      %v387 = vrot.slane %v276, 1
      %v388 = vrot.slane %v277, 1
      %v389 = vsel %vm341, %v387, %v388
      %v390 = vrot.slane %v278, 1
      %v391 = vsel %vm341, %v388, %v390
      %v392 = vrot.slane %v279, 1
      %v393 = vsel %vm341, %v390, %v392
      %v394 = vrot.slane %v280, 1
      %v395 = vsel %vm341, %v392, %v394
      %v396 = vrot.slane %v281, 1
      %v397 = vrot.slane %v282, 1
      %v398 = vsel %vm341, %v396, %v397
      %v399 = vrot.slane %v283, 1
      %v400 = vsel %vm341, %v397, %v399
      %v401 = vrot.slane %v284, 1
      %v402 = vsel %vm341, %v399, %v401
      %v403 = vrot.slane %v285, 1
      %v404 = vsel %vm341, %v401, %v403
      %v405 = vrot.slane %v286, 1
      %v406 = vrot.slane %v287, 1
      %v407 = vsel %vm341, %v405, %v406
      %v408 = vrot.slane %v288, 1
      %v409 = vsel %vm341, %v406, %v408
      %v410 = vrot.slane %v289, 1
      %v411 = vsel %vm341, %v408, %v410
      %v412 = vrot.slane %v290, 1
      %v413 = vsel %vm341, %v410, %v412
      %414 = vrot.lane.b32.xlu0 %v344, 4
      %v415 = vpop.permute.xlu0 %414
      %416 = vrot.lane.b32.xlu0 %v346, 4
      %v417 = vpop.permute.xlu0 %416
      %418 = vrot.lane.b32.xlu0 %v348, 4
      %v419 = vpop.permute.xlu0 %418
      %420 = vrot.lane.b32.xlu0 %v350, 4
      %v421 = vpop.permute.xlu0 %420
      %422 = vrot.lane.b32.xlu0 %v353, 4
      %v423 = vpop.permute.xlu0 %422
      %424 = vrot.lane.b32.xlu0 %v355, 4
      %v425 = vpop.permute.xlu0 %424
      %426 = vrot.lane.b32.xlu0 %v357, 4
      %v427 = vpop.permute.xlu0 %426
      %428 = vrot.lane.b32.xlu0 %v359, 4
      %v429 = vpop.permute.xlu0 %428
      %430 = vrot.lane.b32.xlu0 %v362, 4
      %v431 = vpop.permute.xlu0 %430
      %432 = vrot.lane.b32.xlu0 %v364, 4
      %v433 = vpop.permute.xlu0 %432
      %434 = vrot.lane.b32.xlu0 %v366, 4
      %v435 = vpop.permute.xlu0 %434
      %436 = vrot.lane.b32.xlu0 %v368, 4
      %v437 = vpop.permute.xlu0 %436
      %438 = vrot.lane.b32.xlu0 %v371, 4
      %v439 = vpop.permute.xlu0 %438
      %440 = vrot.lane.b32.xlu0 %v373, 4
      %v441 = vpop.permute.xlu0 %440
      %442 = vrot.lane.b32.xlu0 %v375, 4
      %v443 = vpop.permute.xlu0 %442
      %444 = vrot.lane.b32.xlu0 %v377, 4
      %v445 = vpop.permute.xlu0 %444
      %446 = vrot.lane.b32.xlu0 %v380, 4
      %v447 = vpop.permute.xlu0 %446
      %448 = vrot.lane.b32.xlu0 %v382, 4
      %v449 = vpop.permute.xlu0 %448
      %450 = vrot.lane.b32.xlu0 %v384, 4
      %v451 = vpop.permute.xlu0 %450
      %452 = vrot.lane.b32.xlu0 %v386, 4
      %v453 = vpop.permute.xlu0 %452
      %454 = vrot.lane.b32.xlu0 %v389, 4
      %v455 = vpop.permute.xlu0 %454
      %456 = vrot.lane.b32.xlu0 %v391, 4
      %v457 = vpop.permute.xlu0 %456
      %458 = vrot.lane.b32.xlu0 %v393, 4
      %v459 = vpop.permute.xlu0 %458
      %460 = vrot.lane.b32.xlu0 %v395, 4
      %v461 = vpop.permute.xlu0 %460
      %462 = vrot.lane.b32.xlu0 %v398, 4
      %v463 = vpop.permute.xlu0 %462
      %464 = vrot.lane.b32.xlu0 %v400, 4
      %v465 = vpop.permute.xlu0 %464
      %466 = vrot.lane.b32.xlu0 %v402, 4
      %v467 = vpop.permute.xlu0 %466
      %468 = vrot.lane.b32.xlu0 %v404, 4
      %v469 = vpop.permute.xlu0 %468
      %470 = vrot.lane.b32.xlu0 %v407, 4
      %v471 = vpop.permute.xlu0 %470
      %472 = vrot.lane.b32.xlu0 %v409, 4
      %v473 = vpop.permute.xlu0 %472
      %474 = vrot.lane.b32.xlu0 %v411, 4
      %v475 = vpop.permute.xlu0 %474
      %476 = vrot.lane.b32.xlu0 %v413, 4
      %v477 = vpop.permute.xlu0 %476
      %vm510 = vcmask 1045504
      %v511 = vrot.slane %v251, 2
      %v512 = vrot.slane %v252, 2
      %v513 = vsel %vm510, %v511, %v512
      %v514 = vrot.slane %v253, 2
      %v515 = vsel %vm510, %v512, %v514
      %v516 = vrot.slane %v254, 2
      %v517 = vsel %vm510, %v514, %v516
      %v518 = vrot.slane %v255, 2
      %v519 = vsel %vm510, %v516, %v518
      %v520 = vrot.slane %v256, 2
      %v521 = vrot.slane %v257, 2
      %v522 = vsel %vm510, %v520, %v521
      %v523 = vrot.slane %v258, 2
      %v524 = vsel %vm510, %v521, %v523
      %v525 = vrot.slane %v259, 2
      %v526 = vsel %vm510, %v523, %v525
      %v527 = vrot.slane %v260, 2
      %v528 = vsel %vm510, %v525, %v527
      %v529 = vrot.slane %v261, 2
      %v530 = vrot.slane %v262, 2
      %v531 = vsel %vm510, %v529, %v530
      %v532 = vrot.slane %v263, 2
      %v533 = vsel %vm510, %v530, %v532
      %v534 = vrot.slane %v264, 2
      %v535 = vsel %vm510, %v532, %v534
      %v536 = vrot.slane %v265, 2
      %v537 = vsel %vm510, %v534, %v536
      %v538 = vrot.slane %v266, 2
      %v539 = vrot.slane %v267, 2
      %v540 = vsel %vm510, %v538, %v539
      %v541 = vrot.slane %v268, 2
      %v542 = vsel %vm510, %v539, %v541
      %v543 = vrot.slane %v269, 2
      %v544 = vsel %vm510, %v541, %v543
      %v545 = vrot.slane %v270, 2
      %v546 = vsel %vm510, %v543, %v545
      %v547 = vrot.slane %v271, 2
      %v548 = vrot.slane %v272, 2
      %v549 = vsel %vm510, %v547, %v548
      %v550 = vrot.slane %v273, 2
      %v551 = vsel %vm510, %v548, %v550
      %v552 = vrot.slane %v274, 2
      %v553 = vsel %vm510, %v550, %v552
      %v554 = vrot.slane %v275, 2
      %v555 = vsel %vm510, %v552, %v554
      %v556 = vrot.slane %v276, 2
      %v557 = vrot.slane %v277, 2
      %v558 = vsel %vm510, %v556, %v557
      %v559 = vrot.slane %v278, 2
      %v560 = vsel %vm510, %v557, %v559
      %v561 = vrot.slane %v279, 2
      %v562 = vsel %vm510, %v559, %v561
      %v563 = vrot.slane %v280, 2
      %v564 = vsel %vm510, %v561, %v563
      %v565 = vrot.slane %v281, 2
      %v566 = vrot.slane %v282, 2
      %v567 = vsel %vm510, %v565, %v566
      %v568 = vrot.slane %v283, 2
      %v569 = vsel %vm510, %v566, %v568
      %v570 = vrot.slane %v284, 2
      %v571 = vsel %vm510, %v568, %v570
      %v572 = vrot.slane %v285, 2
      %v573 = vsel %vm510, %v570, %v572
      %v574 = vrot.slane %v286, 2
      %v575 = vrot.slane %v287, 2
      %v576 = vsel %vm510, %v574, %v575
      %v577 = vrot.slane %v288, 2
      %v578 = vsel %vm510, %v575, %v577
      %v579 = vrot.slane %v289, 2
      %v580 = vsel %vm510, %v577, %v579
      %v581 = vrot.slane %v290, 2
      %v582 = vsel %vm510, %v579, %v581
      %583 = vrot.lane.b32.xlu0 %v513, 8
      %v584 = vpop.permute.xlu0 %583
      %585 = vrot.lane.b32.xlu0 %v515, 8
      %v586 = vpop.permute.xlu0 %585
      %587 = vrot.lane.b32.xlu0 %v517, 8
      %v588 = vpop.permute.xlu0 %587
      %589 = vrot.lane.b32.xlu0 %v519, 8
      %v590 = vpop.permute.xlu0 %589
      %591 = vrot.lane.b32.xlu0 %v522, 8
      %v592 = vpop.permute.xlu0 %591
      %593 = vrot.lane.b32.xlu0 %v524, 8
      %v594 = vpop.permute.xlu0 %593
      %595 = vrot.lane.b32.xlu0 %v526, 8
      %v596 = vpop.permute.xlu0 %595
      %597 = vrot.lane.b32.xlu0 %v528, 8
      %v598 = vpop.permute.xlu0 %597
      %599 = vrot.lane.b32.xlu0 %v531, 8
      %v600 = vpop.permute.xlu0 %599
      %601 = vrot.lane.b32.xlu0 %v533, 8
      %v602 = vpop.permute.xlu0 %601
      %603 = vrot.lane.b32.xlu0 %v535, 8
      %v604 = vpop.permute.xlu0 %603
      %605 = vrot.lane.b32.xlu0 %v537, 8
      %v606 = vpop.permute.xlu0 %605
      %607 = vrot.lane.b32.xlu0 %v540, 8
      %v608 = vpop.permute.xlu0 %607
      %609 = vrot.lane.b32.xlu0 %v542, 8
      %v610 = vpop.permute.xlu0 %609
      %611 = vrot.lane.b32.xlu0 %v544, 8
      %v612 = vpop.permute.xlu0 %611
      %613 = vrot.lane.b32.xlu0 %v546, 8
      %v614 = vpop.permute.xlu0 %613
      %615 = vrot.lane.b32.xlu0 %v549, 8
      %v616 = vpop.permute.xlu0 %615
      %617 = vrot.lane.b32.xlu0 %v551, 8
      %v618 = vpop.permute.xlu0 %617
      %619 = vrot.lane.b32.xlu0 %v553, 8
      %v620 = vpop.permute.xlu0 %619
      %621 = vrot.lane.b32.xlu0 %v555, 8
      %v622 = vpop.permute.xlu0 %621
      %623 = vrot.lane.b32.xlu0 %v558, 8
      %v624 = vpop.permute.xlu0 %623
      %625 = vrot.lane.b32.xlu0 %v560, 8
      %v626 = vpop.permute.xlu0 %625
      %627 = vrot.lane.b32.xlu0 %v562, 8
      %v628 = vpop.permute.xlu0 %627
      %629 = vrot.lane.b32.xlu0 %v564, 8
      %v630 = vpop.permute.xlu0 %629
      %631 = vrot.lane.b32.xlu0 %v567, 8
      %v632 = vpop.permute.xlu0 %631
      %633 = vrot.lane.b32.xlu0 %v569, 8
      %v634 = vpop.permute.xlu0 %633
      %635 = vrot.lane.b32.xlu0 %v571, 8
      %v636 = vpop.permute.xlu0 %635
      %637 = vrot.lane.b32.xlu0 %v573, 8
      %v638 = vpop.permute.xlu0 %637
      %639 = vrot.lane.b32.xlu0 %v576, 8
      %v640 = vpop.permute.xlu0 %639
      %641 = vrot.lane.b32.xlu0 %v578, 8
      %v642 = vpop.permute.xlu0 %641
      %643 = vrot.lane.b32.xlu0 %v580, 8
      %v644 = vpop.permute.xlu0 %643
      %645 = vrot.lane.b32.xlu0 %v582, 8
      %v646 = vpop.permute.xlu0 %645
      %683 = vrot.lane.b32.xlu0 %v256, 12
      %v684 = vpop.permute.xlu0 %683
      %685 = vrot.lane.b32.xlu0 %v257, 12
      %v686 = vpop.permute.xlu0 %685
      %687 = vrot.lane.b32.xlu0 %v258, 12
      %v688 = vpop.permute.xlu0 %687
      %689 = vrot.lane.b32.xlu0 %v259, 12
      %v690 = vpop.permute.xlu0 %689
      %691 = vrot.lane.b32.xlu0 %v261, 12
      %v692 = vpop.permute.xlu0 %691
      %693 = vrot.lane.b32.xlu0 %v262, 12
      %v694 = vpop.permute.xlu0 %693
      %695 = vrot.lane.b32.xlu0 %v263, 12
      %v696 = vpop.permute.xlu0 %695
      %697 = vrot.lane.b32.xlu0 %v264, 12
      %v698 = vpop.permute.xlu0 %697
      %699 = vrot.lane.b32.xlu0 %v266, 12
      %v700 = vpop.permute.xlu0 %699
      %701 = vrot.lane.b32.xlu0 %v267, 12
      %v702 = vpop.permute.xlu0 %701
      %703 = vrot.lane.b32.xlu0 %v268, 12
      %v704 = vpop.permute.xlu0 %703
      %705 = vrot.lane.b32.xlu0 %v269, 12
      %v706 = vpop.permute.xlu0 %705
      %707 = vrot.lane.b32.xlu0 %v271, 12
      %v708 = vpop.permute.xlu0 %707
      %709 = vrot.lane.b32.xlu0 %v272, 12
      %v710 = vpop.permute.xlu0 %709
      %711 = vrot.lane.b32.xlu0 %v273, 12
      %v712 = vpop.permute.xlu0 %711
      %713 = vrot.lane.b32.xlu0 %v274, 12
      %v714 = vpop.permute.xlu0 %713
      %715 = vrot.lane.b32.xlu0 %v276, 12
      %v716 = vpop.permute.xlu0 %715
      %717 = vrot.lane.b32.xlu0 %v277, 12
      %v718 = vpop.permute.xlu0 %717
      %719 = vrot.lane.b32.xlu0 %v278, 12
      %v720 = vpop.permute.xlu0 %719
      %721 = vrot.lane.b32.xlu0 %v279, 12
      %v722 = vpop.permute.xlu0 %721
      %723 = vrot.lane.b32.xlu0 %v281, 12
      %v724 = vpop.permute.xlu0 %723
      %725 = vrot.lane.b32.xlu0 %v282, 12
      %v726 = vpop.permute.xlu0 %725
      %727 = vrot.lane.b32.xlu0 %v283, 12
      %v728 = vpop.permute.xlu0 %727
      %729 = vrot.lane.b32.xlu0 %v284, 12
      %v730 = vpop.permute.xlu0 %729
      %731 = vrot.lane.b32.xlu0 %v286, 12
      %v732 = vpop.permute.xlu0 %731
      %733 = vrot.lane.b32.xlu0 %v287, 12
      %v734 = vpop.permute.xlu0 %733
      %735 = vrot.lane.b32.xlu0 %v288, 12
      %v736 = vpop.permute.xlu0 %735
      %737 = vrot.lane.b32.xlu0 %v289, 12
      %v738 = vpop.permute.xlu0 %737
      %739 = vrot.lane.b32.xlu0 %v291, 12
      %v740 = vpop.permute.xlu0 %739
      %741 = vrot.lane.b32.xlu0 %v292, 12
      %v742 = vpop.permute.xlu0 %741
      %743 = vrot.lane.b32.xlu0 %v293, 12
      %v744 = vpop.permute.xlu0 %743
      %745 = vrot.lane.b32.xlu0 %v294, 12
      %v746 = vpop.permute.xlu0 %745
      %v780 = vrot.slane %v291, 1
      %v781 = vrot.slane %v292, 1
      %v782 = vsel %vm341, %v780, %v781
      %v783 = vrot.slane %v293, 1
      %v784 = vsel %vm341, %v781, %v783
      %v785 = vrot.slane %v294, 1
      %v786 = vsel %vm341, %v783, %v785
      %v787 = vrot.slane %v295, 1
      %v788 = vsel %vm341, %v785, %v787
      %789 = vrot.lane.b32.xlu0 %v353, 16
      %v790 = vpop.permute.xlu0 %789
      %791 = vrot.lane.b32.xlu0 %v355, 16
      %v792 = vpop.permute.xlu0 %791
      %793 = vrot.lane.b32.xlu0 %v357, 16
      %v794 = vpop.permute.xlu0 %793
      %795 = vrot.lane.b32.xlu0 %v359, 16
      %v796 = vpop.permute.xlu0 %795
      %797 = vrot.lane.b32.xlu0 %v362, 16
      %v798 = vpop.permute.xlu0 %797
      %799 = vrot.lane.b32.xlu0 %v364, 16
      %v800 = vpop.permute.xlu0 %799
      %801 = vrot.lane.b32.xlu0 %v366, 16
      %v802 = vpop.permute.xlu0 %801
      %803 = vrot.lane.b32.xlu0 %v368, 16
      %v804 = vpop.permute.xlu0 %803
      %805 = vrot.lane.b32.xlu0 %v371, 16
      %v806 = vpop.permute.xlu0 %805
      %807 = vrot.lane.b32.xlu0 %v373, 16
      %v808 = vpop.permute.xlu0 %807
      %809 = vrot.lane.b32.xlu0 %v375, 16
      %v810 = vpop.permute.xlu0 %809
      %811 = vrot.lane.b32.xlu0 %v377, 16
      %v812 = vpop.permute.xlu0 %811
      %813 = vrot.lane.b32.xlu0 %v380, 16
      %v814 = vpop.permute.xlu0 %813
      %815 = vrot.lane.b32.xlu0 %v382, 16
      %v816 = vpop.permute.xlu0 %815
      %817 = vrot.lane.b32.xlu0 %v384, 16
      %v818 = vpop.permute.xlu0 %817
      %819 = vrot.lane.b32.xlu0 %v386, 16
      %v820 = vpop.permute.xlu0 %819
      %821 = vrot.lane.b32.xlu0 %v389, 16
      %v822 = vpop.permute.xlu0 %821
      %823 = vrot.lane.b32.xlu0 %v391, 16
      %v824 = vpop.permute.xlu0 %823
      %825 = vrot.lane.b32.xlu0 %v393, 16
      %v826 = vpop.permute.xlu0 %825
      %827 = vrot.lane.b32.xlu0 %v395, 16
      %v828 = vpop.permute.xlu0 %827
      %829 = vrot.lane.b32.xlu0 %v398, 16
      %v830 = vpop.permute.xlu0 %829
      %831 = vrot.lane.b32.xlu0 %v400, 16
      %v832 = vpop.permute.xlu0 %831
      %833 = vrot.lane.b32.xlu0 %v402, 16
      %v834 = vpop.permute.xlu0 %833
      %835 = vrot.lane.b32.xlu0 %v404, 16
      %v836 = vpop.permute.xlu0 %835
      %837 = vrot.lane.b32.xlu0 %v407, 16
      %v838 = vpop.permute.xlu0 %837
      %839 = vrot.lane.b32.xlu0 %v409, 16
      %v840 = vpop.permute.xlu0 %839
      %841 = vrot.lane.b32.xlu0 %v411, 16
      %v842 = vpop.permute.xlu0 %841
      %843 = vrot.lane.b32.xlu0 %v413, 16
      %v844 = vpop.permute.xlu0 %843
      %845 = vrot.lane.b32.xlu0 %v782, 16
      %v846 = vpop.permute.xlu0 %845
      %847 = vrot.lane.b32.xlu0 %v784, 16
      %v848 = vpop.permute.xlu0 %847
      %849 = vrot.lane.b32.xlu0 %v786, 16
      %v850 = vpop.permute.xlu0 %849
      %851 = vrot.lane.b32.xlu0 %v788, 16
      %v852 = vpop.permute.xlu0 %851
      %v885 = vrot.slane %v291, 2
      %v886 = vrot.slane %v292, 2
      %v887 = vsel %vm510, %v885, %v886
      %v888 = vrot.slane %v293, 2
      %v889 = vsel %vm510, %v886, %v888
      %v890 = vrot.slane %v294, 2
      %v891 = vsel %vm510, %v888, %v890
      %v892 = vrot.slane %v295, 2
      %v893 = vsel %vm510, %v890, %v892
      %894 = vrot.lane.b32.xlu0 %v522, 20
      %v895 = vpop.permute.xlu0 %894
      %896 = vrot.lane.b32.xlu0 %v524, 20
      %v897 = vpop.permute.xlu0 %896
      %898 = vrot.lane.b32.xlu0 %v526, 20
      %v899 = vpop.permute.xlu0 %898
      %900 = vrot.lane.b32.xlu0 %v528, 20
      %v901 = vpop.permute.xlu0 %900
      %902 = vrot.lane.b32.xlu0 %v531, 20
      %v903 = vpop.permute.xlu0 %902
      %904 = vrot.lane.b32.xlu0 %v533, 20
      %v905 = vpop.permute.xlu0 %904
      %906 = vrot.lane.b32.xlu0 %v535, 20
      %v907 = vpop.permute.xlu0 %906
      %908 = vrot.lane.b32.xlu0 %v537, 20
      %v909 = vpop.permute.xlu0 %908
      %910 = vrot.lane.b32.xlu0 %v540, 20
      %v911 = vpop.permute.xlu0 %910
      %912 = vrot.lane.b32.xlu0 %v542, 20
      %v913 = vpop.permute.xlu0 %912
      %914 = vrot.lane.b32.xlu0 %v544, 20
      %v915 = vpop.permute.xlu0 %914
      %916 = vrot.lane.b32.xlu0 %v546, 20
      %v917 = vpop.permute.xlu0 %916
      %918 = vrot.lane.b32.xlu0 %v549, 20
      %v919 = vpop.permute.xlu0 %918
      %920 = vrot.lane.b32.xlu0 %v551, 20
      %v921 = vpop.permute.xlu0 %920
      %922 = vrot.lane.b32.xlu0 %v553, 20
      %v923 = vpop.permute.xlu0 %922
      %924 = vrot.lane.b32.xlu0 %v555, 20
      %v925 = vpop.permute.xlu0 %924
      %926 = vrot.lane.b32.xlu0 %v558, 20
      %v927 = vpop.permute.xlu0 %926
      %928 = vrot.lane.b32.xlu0 %v560, 20
      %v929 = vpop.permute.xlu0 %928
      %930 = vrot.lane.b32.xlu0 %v562, 20
      %v931 = vpop.permute.xlu0 %930
      %932 = vrot.lane.b32.xlu0 %v564, 20
      %v933 = vpop.permute.xlu0 %932
      %934 = vrot.lane.b32.xlu0 %v567, 20
      %v935 = vpop.permute.xlu0 %934
      %936 = vrot.lane.b32.xlu0 %v569, 20
      %v937 = vpop.permute.xlu0 %936
      %938 = vrot.lane.b32.xlu0 %v571, 20
      %v939 = vpop.permute.xlu0 %938
      %940 = vrot.lane.b32.xlu0 %v573, 20
      %v941 = vpop.permute.xlu0 %940
      %942 = vrot.lane.b32.xlu0 %v576, 20
      %v943 = vpop.permute.xlu0 %942
      %944 = vrot.lane.b32.xlu0 %v578, 20
      %v945 = vpop.permute.xlu0 %944
      %946 = vrot.lane.b32.xlu0 %v580, 20
      %v947 = vpop.permute.xlu0 %946
      %948 = vrot.lane.b32.xlu0 %v582, 20
      %v949 = vpop.permute.xlu0 %948
      %950 = vrot.lane.b32.xlu0 %v887, 20
      %v951 = vpop.permute.xlu0 %950
      %952 = vrot.lane.b32.xlu0 %v889, 20
      %v953 = vpop.permute.xlu0 %952
      %954 = vrot.lane.b32.xlu0 %v891, 20
      %v955 = vpop.permute.xlu0 %954
      %956 = vrot.lane.b32.xlu0 %v893, 20
      %v957 = vpop.permute.xlu0 %956
      %994 = vrot.lane.b32.xlu0 %v261, 24
      %v995 = vpop.permute.xlu0 %994
      %996 = vrot.lane.b32.xlu0 %v262, 24
      %v997 = vpop.permute.xlu0 %996
      %998 = vrot.lane.b32.xlu0 %v263, 24
      %v999 = vpop.permute.xlu0 %998
      %1000 = vrot.lane.b32.xlu0 %v264, 24
      %v1001 = vpop.permute.xlu0 %1000
      %1002 = vrot.lane.b32.xlu0 %v266, 24
      %v1003 = vpop.permute.xlu0 %1002
      %1004 = vrot.lane.b32.xlu0 %v267, 24
      %v1005 = vpop.permute.xlu0 %1004
      %1006 = vrot.lane.b32.xlu0 %v268, 24
      %v1007 = vpop.permute.xlu0 %1006
      %1008 = vrot.lane.b32.xlu0 %v269, 24
      %v1009 = vpop.permute.xlu0 %1008
      %1010 = vrot.lane.b32.xlu0 %v271, 24
      %v1011 = vpop.permute.xlu0 %1010
      %1012 = vrot.lane.b32.xlu0 %v272, 24
      %v1013 = vpop.permute.xlu0 %1012
      %1014 = vrot.lane.b32.xlu0 %v273, 24
      %v1015 = vpop.permute.xlu0 %1014
      %1016 = vrot.lane.b32.xlu0 %v274, 24
      %v1017 = vpop.permute.xlu0 %1016
      %1018 = vrot.lane.b32.xlu0 %v276, 24
      %v1019 = vpop.permute.xlu0 %1018
      %1020 = vrot.lane.b32.xlu0 %v277, 24
      %v1021 = vpop.permute.xlu0 %1020
      %1022 = vrot.lane.b32.xlu0 %v278, 24
      %v1023 = vpop.permute.xlu0 %1022
      %1024 = vrot.lane.b32.xlu0 %v279, 24
      %v1025 = vpop.permute.xlu0 %1024
      %1026 = vrot.lane.b32.xlu0 %v281, 24
      %v1027 = vpop.permute.xlu0 %1026
      %1028 = vrot.lane.b32.xlu0 %v282, 24
      %v1029 = vpop.permute.xlu0 %1028
      %1030 = vrot.lane.b32.xlu0 %v283, 24
      %v1031 = vpop.permute.xlu0 %1030
      %1032 = vrot.lane.b32.xlu0 %v284, 24
      %v1033 = vpop.permute.xlu0 %1032
      %1034 = vrot.lane.b32.xlu0 %v286, 24
      %v1035 = vpop.permute.xlu0 %1034
      %1036 = vrot.lane.b32.xlu0 %v287, 24
      %v1037 = vpop.permute.xlu0 %1036
      %1038 = vrot.lane.b32.xlu0 %v288, 24
      %v1039 = vpop.permute.xlu0 %1038
      %1040 = vrot.lane.b32.xlu0 %v289, 24
      %v1041 = vpop.permute.xlu0 %1040
      %1042 = vrot.lane.b32.xlu0 %v291, 24
      %v1043 = vpop.permute.xlu0 %1042
      %1044 = vrot.lane.b32.xlu0 %v292, 24
      %v1045 = vpop.permute.xlu0 %1044
      %1046 = vrot.lane.b32.xlu0 %v293, 24
      %v1047 = vpop.permute.xlu0 %1046
      %1048 = vrot.lane.b32.xlu0 %v294, 24
      %v1049 = vpop.permute.xlu0 %1048
      %1050 = vrot.lane.b32.xlu0 %v296, 24
      %v1051 = vpop.permute.xlu0 %1050
      %1052 = vrot.lane.b32.xlu0 %v297, 24
      %v1053 = vpop.permute.xlu0 %1052
      %1054 = vrot.lane.b32.xlu0 %v298, 24
      %v1055 = vpop.permute.xlu0 %1054
      %1056 = vrot.lane.b32.xlu0 %v299, 24
      %v1057 = vpop.permute.xlu0 %1056
      %v1091 = vrot.slane %v296, 1
      %v1092 = vrot.slane %v297, 1
      %v1093 = vsel %vm341, %v1091, %v1092
      %v1094 = vrot.slane %v298, 1
      %v1095 = vsel %vm341, %v1092, %v1094
      %v1096 = vrot.slane %v299, 1
      %v1097 = vsel %vm341, %v1094, %v1096
      %v1098 = vrot.slane %v300, 1
      %v1099 = vsel %vm341, %v1096, %v1098
      %1100 = vrot.lane.b32.xlu0 %v362, 28
      %v1101 = vpop.permute.xlu0 %1100
      %1102 = vrot.lane.b32.xlu0 %v364, 28
      %v1103 = vpop.permute.xlu0 %1102
      %1104 = vrot.lane.b32.xlu0 %v366, 28
      %v1105 = vpop.permute.xlu0 %1104
      %1106 = vrot.lane.b32.xlu0 %v368, 28
      %v1107 = vpop.permute.xlu0 %1106
      %1108 = vrot.lane.b32.xlu0 %v371, 28
      %v1109 = vpop.permute.xlu0 %1108
      %1110 = vrot.lane.b32.xlu0 %v373, 28
      %v1111 = vpop.permute.xlu0 %1110
      %1112 = vrot.lane.b32.xlu0 %v375, 28
      %v1113 = vpop.permute.xlu0 %1112
      %1114 = vrot.lane.b32.xlu0 %v377, 28
      %v1115 = vpop.permute.xlu0 %1114
      %1116 = vrot.lane.b32.xlu0 %v380, 28
      %v1117 = vpop.permute.xlu0 %1116
      %1118 = vrot.lane.b32.xlu0 %v382, 28
      %v1119 = vpop.permute.xlu0 %1118
      %1120 = vrot.lane.b32.xlu0 %v384, 28
      %v1121 = vpop.permute.xlu0 %1120
      %1122 = vrot.lane.b32.xlu0 %v386, 28
      %v1123 = vpop.permute.xlu0 %1122
      %1124 = vrot.lane.b32.xlu0 %v389, 28
      %v1125 = vpop.permute.xlu0 %1124
      %1126 = vrot.lane.b32.xlu0 %v391, 28
      %v1127 = vpop.permute.xlu0 %1126
      %1128 = vrot.lane.b32.xlu0 %v393, 28
      %v1129 = vpop.permute.xlu0 %1128
      %1130 = vrot.lane.b32.xlu0 %v395, 28
      %v1131 = vpop.permute.xlu0 %1130
      %1132 = vrot.lane.b32.xlu0 %v398, 28
      %v1133 = vpop.permute.xlu0 %1132
      %1134 = vrot.lane.b32.xlu0 %v400, 28
      %v1135 = vpop.permute.xlu0 %1134
      %1136 = vrot.lane.b32.xlu0 %v402, 28
      %v1137 = vpop.permute.xlu0 %1136
      %1138 = vrot.lane.b32.xlu0 %v404, 28
      %v1139 = vpop.permute.xlu0 %1138
      %1140 = vrot.lane.b32.xlu0 %v407, 28
      %v1141 = vpop.permute.xlu0 %1140
      %1142 = vrot.lane.b32.xlu0 %v409, 28
      %v1143 = vpop.permute.xlu0 %1142
      %1144 = vrot.lane.b32.xlu0 %v411, 28
      %v1145 = vpop.permute.xlu0 %1144
      %1146 = vrot.lane.b32.xlu0 %v413, 28
      %v1147 = vpop.permute.xlu0 %1146
      %1148 = vrot.lane.b32.xlu0 %v782, 28
      %v1149 = vpop.permute.xlu0 %1148
      %1150 = vrot.lane.b32.xlu0 %v784, 28
      %v1151 = vpop.permute.xlu0 %1150
      %1152 = vrot.lane.b32.xlu0 %v786, 28
      %v1153 = vpop.permute.xlu0 %1152
      %1154 = vrot.lane.b32.xlu0 %v788, 28
      %v1155 = vpop.permute.xlu0 %1154
      %1156 = vrot.lane.b32.xlu0 %v1093, 28
      %v1157 = vpop.permute.xlu0 %1156
      %1158 = vrot.lane.b32.xlu0 %v1095, 28
      %v1159 = vpop.permute.xlu0 %1158
      %1160 = vrot.lane.b32.xlu0 %v1097, 28
      %v1161 = vpop.permute.xlu0 %1160
      %1162 = vrot.lane.b32.xlu0 %v1099, 28
      %v1163 = vpop.permute.xlu0 %1162
      %v1196 = vrot.slane %v296, 2
      %v1197 = vrot.slane %v297, 2
      %v1198 = vsel %vm510, %v1196, %v1197
      %v1199 = vrot.slane %v298, 2
      %v1200 = vsel %vm510, %v1197, %v1199
      %v1201 = vrot.slane %v299, 2
      %v1202 = vsel %vm510, %v1199, %v1201
      %v1203 = vrot.slane %v300, 2
      %v1204 = vsel %vm510, %v1201, %v1203
      %1205 = vrot.lane.b32.xlu0 %v531, 32
      %v1206 = vpop.permute.xlu0 %1205
      %1207 = vrot.lane.b32.xlu0 %v533, 32
      %v1208 = vpop.permute.xlu0 %1207
      %1209 = vrot.lane.b32.xlu0 %v535, 32
      %v1210 = vpop.permute.xlu0 %1209
      %1211 = vrot.lane.b32.xlu0 %v537, 32
      %v1212 = vpop.permute.xlu0 %1211
      %1213 = vrot.lane.b32.xlu0 %v540, 32
      %v1214 = vpop.permute.xlu0 %1213
      %1215 = vrot.lane.b32.xlu0 %v542, 32
      %v1216 = vpop.permute.xlu0 %1215
      %1217 = vrot.lane.b32.xlu0 %v544, 32
      %v1218 = vpop.permute.xlu0 %1217
      %1219 = vrot.lane.b32.xlu0 %v546, 32
      %v1220 = vpop.permute.xlu0 %1219
      %1221 = vrot.lane.b32.xlu0 %v549, 32
      %v1222 = vpop.permute.xlu0 %1221
      %1223 = vrot.lane.b32.xlu0 %v551, 32
      %v1224 = vpop.permute.xlu0 %1223
      %1225 = vrot.lane.b32.xlu0 %v553, 32
      %v1226 = vpop.permute.xlu0 %1225
      %1227 = vrot.lane.b32.xlu0 %v555, 32
      %v1228 = vpop.permute.xlu0 %1227
      %1229 = vrot.lane.b32.xlu0 %v558, 32
      %v1230 = vpop.permute.xlu0 %1229
      %1231 = vrot.lane.b32.xlu0 %v560, 32
      %v1232 = vpop.permute.xlu0 %1231
      %1233 = vrot.lane.b32.xlu0 %v562, 32
      %v1234 = vpop.permute.xlu0 %1233
      %1235 = vrot.lane.b32.xlu0 %v564, 32
      %v1236 = vpop.permute.xlu0 %1235
      %1237 = vrot.lane.b32.xlu0 %v567, 32
      %v1238 = vpop.permute.xlu0 %1237
      %1239 = vrot.lane.b32.xlu0 %v569, 32
      %v1240 = vpop.permute.xlu0 %1239
      %1241 = vrot.lane.b32.xlu0 %v571, 32
      %v1242 = vpop.permute.xlu0 %1241
      %1243 = vrot.lane.b32.xlu0 %v573, 32
      %v1244 = vpop.permute.xlu0 %1243
      %1245 = vrot.lane.b32.xlu0 %v576, 32
      %v1246 = vpop.permute.xlu0 %1245
      %1247 = vrot.lane.b32.xlu0 %v578, 32
      %v1248 = vpop.permute.xlu0 %1247
      %1249 = vrot.lane.b32.xlu0 %v580, 32
      %v1250 = vpop.permute.xlu0 %1249
      %1251 = vrot.lane.b32.xlu0 %v582, 32
      %v1252 = vpop.permute.xlu0 %1251
      %1253 = vrot.lane.b32.xlu0 %v887, 32
      %v1254 = vpop.permute.xlu0 %1253
      %1255 = vrot.lane.b32.xlu0 %v889, 32
      %v1256 = vpop.permute.xlu0 %1255
      %1257 = vrot.lane.b32.xlu0 %v891, 32
      %v1258 = vpop.permute.xlu0 %1257
      %1259 = vrot.lane.b32.xlu0 %v893, 32
      %v1260 = vpop.permute.xlu0 %1259
      %1261 = vrot.lane.b32.xlu0 %v1198, 32
      %v1262 = vpop.permute.xlu0 %1261
      %1263 = vrot.lane.b32.xlu0 %v1200, 32
      %v1264 = vpop.permute.xlu0 %1263
      %1265 = vrot.lane.b32.xlu0 %v1202, 32
      %v1266 = vpop.permute.xlu0 %1265
      %1267 = vrot.lane.b32.xlu0 %v1204, 32
      %v1268 = vpop.permute.xlu0 %1267
      %vm1301 = vcmask 31744
      %v1302 = vsel %vm1301, %v251, %v415
      %v1303 = vsel %vm1301, %v252, %v417
      %v1304 = vsel %vm1301, %v253, %v419
      %v1305 = vsel %vm1301, %v254, %v421
      %v1306 = vsel %vm1301, %v256, %v423
      %v1307 = vsel %vm1301, %v257, %v425
      %v1308 = vsel %vm1301, %v258, %v427
      %v1309 = vsel %vm1301, %v259, %v429
      %v1310 = vsel %vm1301, %v261, %v431
      %v1311 = vsel %vm1301, %v262, %v433
      %v1312 = vsel %vm1301, %v263, %v435
      %v1313 = vsel %vm1301, %v264, %v437
      %v1314 = vsel %vm1301, %v266, %v439
      %v1315 = vsel %vm1301, %v267, %v441
      %v1316 = vsel %vm1301, %v268, %v443
      %v1317 = vsel %vm1301, %v269, %v445
      %v1318 = vsel %vm1301, %v271, %v447
      %v1319 = vsel %vm1301, %v272, %v449
      %v1320 = vsel %vm1301, %v273, %v451
      %v1321 = vsel %vm1301, %v274, %v453
      %v1322 = vsel %vm1301, %v276, %v455
      %v1323 = vsel %vm1301, %v277, %v457
      %v1324 = vsel %vm1301, %v278, %v459
      %v1325 = vsel %vm1301, %v279, %v461
      %v1326 = vsel %vm1301, %v281, %v463
      %v1327 = vsel %vm1301, %v282, %v465
      %v1328 = vsel %vm1301, %v283, %v467
      %v1329 = vsel %vm1301, %v284, %v469
      %v1330 = vsel %vm1301, %v286, %v471
      %v1331 = vsel %vm1301, %v287, %v473
      %v1332 = vsel %vm1301, %v288, %v475
      %v1333 = vsel %vm1301, %v289, %v477
      %vm1334 = vcmask 64512
      %v1335 = vsel %vm1334, %v1302, %v584
      %v1336 = vsel %vm1334, %v1303, %v586
      %v1337 = vsel %vm1334, %v1304, %v588
      %v1338 = vsel %vm1334, %v1305, %v590
      %v1339 = vsel %vm1334, %v1306, %v592
      %v1340 = vsel %vm1334, %v1307, %v594
      %v1341 = vsel %vm1334, %v1308, %v596
      %v1342 = vsel %vm1334, %v1309, %v598
      %v1343 = vsel %vm1334, %v1310, %v600
      %v1344 = vsel %vm1334, %v1311, %v602
      %v1345 = vsel %vm1334, %v1312, %v604
      %v1346 = vsel %vm1334, %v1313, %v606
      %v1347 = vsel %vm1334, %v1314, %v608
      %v1348 = vsel %vm1334, %v1315, %v610
      %v1349 = vsel %vm1334, %v1316, %v612
      %v1350 = vsel %vm1334, %v1317, %v614
      %v1351 = vsel %vm1334, %v1318, %v616
      %v1352 = vsel %vm1334, %v1319, %v618
      %v1353 = vsel %vm1334, %v1320, %v620
      %v1354 = vsel %vm1334, %v1321, %v622
      %v1355 = vsel %vm1334, %v1322, %v624
      %v1356 = vsel %vm1334, %v1323, %v626
      %v1357 = vsel %vm1334, %v1324, %v628
      %v1358 = vsel %vm1334, %v1325, %v630
      %v1359 = vsel %vm1334, %v1326, %v632
      %v1360 = vsel %vm1334, %v1327, %v634
      %v1361 = vsel %vm1334, %v1328, %v636
      %v1362 = vsel %vm1334, %v1329, %v638
      %v1363 = vsel %vm1334, %v1330, %v640
      %v1364 = vsel %vm1334, %v1331, %v642
      %v1365 = vsel %vm1334, %v1332, %v644
      %v1366 = vsel %vm1334, %v1333, %v646
      %vm1367 = vcmask 97280
      %v1368 = vsel %vm1367, %v1335, %v684
      %v1369 = vsel %vm1367, %v1336, %v686
      %v1370 = vsel %vm1367, %v1337, %v688
      %v1371 = vsel %vm1367, %v1338, %v690
      %v1372 = vsel %vm1367, %v1339, %v692
      %v1373 = vsel %vm1367, %v1340, %v694
      %v1374 = vsel %vm1367, %v1341, %v696
      %v1375 = vsel %vm1367, %v1342, %v698
      %v1376 = vsel %vm1367, %v1343, %v700
      %v1377 = vsel %vm1367, %v1344, %v702
      %v1378 = vsel %vm1367, %v1345, %v704
      %v1379 = vsel %vm1367, %v1346, %v706
      %v1380 = vsel %vm1367, %v1347, %v708
      %v1381 = vsel %vm1367, %v1348, %v710
      %v1382 = vsel %vm1367, %v1349, %v712
      %v1383 = vsel %vm1367, %v1350, %v714
      %v1384 = vsel %vm1367, %v1351, %v716
      %v1385 = vsel %vm1367, %v1352, %v718
      %v1386 = vsel %vm1367, %v1353, %v720
      %v1387 = vsel %vm1367, %v1354, %v722
      %v1388 = vsel %vm1367, %v1355, %v724
      %v1389 = vsel %vm1367, %v1356, %v726
      %v1390 = vsel %vm1367, %v1357, %v728
      %v1391 = vsel %vm1367, %v1358, %v730
      %v1392 = vsel %vm1367, %v1359, %v732
      %v1393 = vsel %vm1367, %v1360, %v734
      %v1394 = vsel %vm1367, %v1361, %v736
      %v1395 = vsel %vm1367, %v1362, %v738
      %v1396 = vsel %vm1367, %v1363, %v740
      %v1397 = vsel %vm1367, %v1364, %v742
      %v1398 = vsel %vm1367, %v1365, %v744
      %v1399 = vsel %vm1367, %v1366, %v746
      %vm1400 = vcmask 130048
      %v1401 = vsel %vm1400, %v1368, %v790
      %v1402 = vsel %vm1400, %v1369, %v792
      %v1403 = vsel %vm1400, %v1370, %v794
      %v1404 = vsel %vm1400, %v1371, %v796
      %v1405 = vsel %vm1400, %v1372, %v798
      %v1406 = vsel %vm1400, %v1373, %v800
      %v1407 = vsel %vm1400, %v1374, %v802
      %v1408 = vsel %vm1400, %v1375, %v804
      %v1409 = vsel %vm1400, %v1376, %v806
      %v1410 = vsel %vm1400, %v1377, %v808
      %v1411 = vsel %vm1400, %v1378, %v810
      %v1412 = vsel %vm1400, %v1379, %v812
      %v1413 = vsel %vm1400, %v1380, %v814
      %v1414 = vsel %vm1400, %v1381, %v816
      %v1415 = vsel %vm1400, %v1382, %v818
      %v1416 = vsel %vm1400, %v1383, %v820
      %v1417 = vsel %vm1400, %v1384, %v822
      %v1418 = vsel %vm1400, %v1385, %v824
      %v1419 = vsel %vm1400, %v1386, %v826
      %v1420 = vsel %vm1400, %v1387, %v828
      %v1421 = vsel %vm1400, %v1388, %v830
      %v1422 = vsel %vm1400, %v1389, %v832
      %v1423 = vsel %vm1400, %v1390, %v834
      %v1424 = vsel %vm1400, %v1391, %v836
      %v1425 = vsel %vm1400, %v1392, %v838
      %v1426 = vsel %vm1400, %v1393, %v840
      %v1427 = vsel %vm1400, %v1394, %v842
      %v1428 = vsel %vm1400, %v1395, %v844
      %v1429 = vsel %vm1400, %v1396, %v846
      %v1430 = vsel %vm1400, %v1397, %v848
      %v1431 = vsel %vm1400, %v1398, %v850
      %v1432 = vsel %vm1400, %v1399, %v852
      %vm1433 = vcmask 162816
      %v1434 = vsel %vm1433, %v1401, %v895
      %v1435 = vsel %vm1433, %v1402, %v897
      %v1436 = vsel %vm1433, %v1403, %v899
      %v1437 = vsel %vm1433, %v1404, %v901
      %v1438 = vsel %vm1433, %v1405, %v903
      %v1439 = vsel %vm1433, %v1406, %v905
      %v1440 = vsel %vm1433, %v1407, %v907
      %v1441 = vsel %vm1433, %v1408, %v909
      %v1442 = vsel %vm1433, %v1409, %v911
      %v1443 = vsel %vm1433, %v1410, %v913
      %v1444 = vsel %vm1433, %v1411, %v915
      %v1445 = vsel %vm1433, %v1412, %v917
      %v1446 = vsel %vm1433, %v1413, %v919
      %v1447 = vsel %vm1433, %v1414, %v921
      %v1448 = vsel %vm1433, %v1415, %v923
      %v1449 = vsel %vm1433, %v1416, %v925
      %v1450 = vsel %vm1433, %v1417, %v927
      %v1451 = vsel %vm1433, %v1418, %v929
      %v1452 = vsel %vm1433, %v1419, %v931
      %v1453 = vsel %vm1433, %v1420, %v933
      %v1454 = vsel %vm1433, %v1421, %v935
      %v1455 = vsel %vm1433, %v1422, %v937
      %v1456 = vsel %vm1433, %v1423, %v939
      %v1457 = vsel %vm1433, %v1424, %v941
      %v1458 = vsel %vm1433, %v1425, %v943
      %v1459 = vsel %vm1433, %v1426, %v945
      %v1460 = vsel %vm1433, %v1427, %v947
      %v1461 = vsel %vm1433, %v1428, %v949
      %v1462 = vsel %vm1433, %v1429, %v951
      %v1463 = vsel %vm1433, %v1430, %v953
      %v1464 = vsel %vm1433, %v1431, %v955
      %v1465 = vsel %vm1433, %v1432, %v957
      %vm1466 = vcmask 195584
      %v1467 = vsel %vm1466, %v1434, %v995
      %v1468 = vsel %vm1466, %v1435, %v997
      %v1469 = vsel %vm1466, %v1436, %v999
      %v1470 = vsel %vm1466, %v1437, %v1001
      %v1471 = vsel %vm1466, %v1438, %v1003
      %v1472 = vsel %vm1466, %v1439, %v1005
      %v1473 = vsel %vm1466, %v1440, %v1007
      %v1474 = vsel %vm1466, %v1441, %v1009
      %v1475 = vsel %vm1466, %v1442, %v1011
      %v1476 = vsel %vm1466, %v1443, %v1013
      %v1477 = vsel %vm1466, %v1444, %v1015
      %v1478 = vsel %vm1466, %v1445, %v1017
      %v1479 = vsel %vm1466, %v1446, %v1019
      %v1480 = vsel %vm1466, %v1447, %v1021
      %v1481 = vsel %vm1466, %v1448, %v1023
      %v1482 = vsel %vm1466, %v1449, %v1025
      %v1483 = vsel %vm1466, %v1450, %v1027
      %v1484 = vsel %vm1466, %v1451, %v1029
      %v1485 = vsel %vm1466, %v1452, %v1031
      %v1486 = vsel %vm1466, %v1453, %v1033
      %v1487 = vsel %vm1466, %v1454, %v1035
      %v1488 = vsel %vm1466, %v1455, %v1037
      %v1489 = vsel %vm1466, %v1456, %v1039
      %v1490 = vsel %vm1466, %v1457, %v1041
      %v1491 = vsel %vm1466, %v1458, %v1043
      %v1492 = vsel %vm1466, %v1459, %v1045
      %v1493 = vsel %vm1466, %v1460, %v1047
      %v1494 = vsel %vm1466, %v1461, %v1049
      %v1495 = vsel %vm1466, %v1462, %v1051
      %v1496 = vsel %vm1466, %v1463, %v1053
      %v1497 = vsel %vm1466, %v1464, %v1055
      %v1498 = vsel %vm1466, %v1465, %v1057
      %vm1499 = vcmask 228352
      %v1500 = vsel %vm1499, %v1467, %v1101
      %v1501 = vsel %vm1499, %v1468, %v1103
      %v1502 = vsel %vm1499, %v1469, %v1105
      %v1503 = vsel %vm1499, %v1470, %v1107
      %v1504 = vsel %vm1499, %v1471, %v1109
      %v1505 = vsel %vm1499, %v1472, %v1111
      %v1506 = vsel %vm1499, %v1473, %v1113
      %v1507 = vsel %vm1499, %v1474, %v1115
      %v1508 = vsel %vm1499, %v1475, %v1117
      %v1509 = vsel %vm1499, %v1476, %v1119
      %v1510 = vsel %vm1499, %v1477, %v1121
      %v1511 = vsel %vm1499, %v1478, %v1123
      %v1512 = vsel %vm1499, %v1479, %v1125
      %v1513 = vsel %vm1499, %v1480, %v1127
      %v1514 = vsel %vm1499, %v1481, %v1129
      %v1515 = vsel %vm1499, %v1482, %v1131
      %v1516 = vsel %vm1499, %v1483, %v1133
      %v1517 = vsel %vm1499, %v1484, %v1135
      %v1518 = vsel %vm1499, %v1485, %v1137
      %v1519 = vsel %vm1499, %v1486, %v1139
      %v1520 = vsel %vm1499, %v1487, %v1141
      %v1521 = vsel %vm1499, %v1488, %v1143
      %v1522 = vsel %vm1499, %v1489, %v1145
      %v1523 = vsel %vm1499, %v1490, %v1147
      %v1524 = vsel %vm1499, %v1491, %v1149
      %v1525 = vsel %vm1499, %v1492, %v1151
      %v1526 = vsel %vm1499, %v1493, %v1153
      %v1527 = vsel %vm1499, %v1494, %v1155
      %v1528 = vsel %vm1499, %v1495, %v1157
      %v1529 = vsel %vm1499, %v1496, %v1159
      %v1530 = vsel %vm1499, %v1497, %v1161
      %v1531 = vsel %vm1499, %v1498, %v1163
      %vm1532 = vcmask 261120
      %v1533 = vsel %vm1532, %v1500, %v1206
      %v1534 = vsel %vm1532, %v1501, %v1208
      %v1535 = vsel %vm1532, %v1502, %v1210
      %v1536 = vsel %vm1532, %v1503, %v1212
      %v1537 = vsel %vm1532, %v1504, %v1214
      %v1538 = vsel %vm1532, %v1505, %v1216
      %v1539 = vsel %vm1532, %v1506, %v1218
      %v1540 = vsel %vm1532, %v1507, %v1220
      %v1541 = vsel %vm1532, %v1508, %v1222
      %v1542 = vsel %vm1532, %v1509, %v1224
      %v1543 = vsel %vm1532, %v1510, %v1226
      %v1544 = vsel %vm1532, %v1511, %v1228
      %v1545 = vsel %vm1532, %v1512, %v1230
      %v1546 = vsel %vm1532, %v1513, %v1232
      %v1547 = vsel %vm1532, %v1514, %v1234
      %v1548 = vsel %vm1532, %v1515, %v1236
      %v1549 = vsel %vm1532, %v1516, %v1238
      %v1550 = vsel %vm1532, %v1517, %v1240
      %v1551 = vsel %vm1532, %v1518, %v1242
      %v1552 = vsel %vm1532, %v1519, %v1244
      %v1553 = vsel %vm1532, %v1520, %v1246
      %v1554 = vsel %vm1532, %v1521, %v1248
      %v1555 = vsel %vm1532, %v1522, %v1250
      %v1556 = vsel %vm1532, %v1523, %v1252
      %v1557 = vsel %vm1532, %v1524, %v1254
      %v1558 = vsel %vm1532, %v1525, %v1256
      %v1559 = vsel %vm1532, %v1526, %v1258
      %v1560 = vsel %vm1532, %v1527, %v1260
      %v1561 = vsel %vm1532, %v1528, %v1262
      %v1562 = vsel %vm1532, %v1529, %v1264
      %v1563 = vsel %vm1532, %v1530, %v1266
      %v1564 = vsel %vm1532, %v1531, %v1268
      %v1565 = vld [vmem:[%s1] sm:$0xff]
      %v1566 = vld [vmem:[%s1 + $0x8] sm:$0xff]
      %v1567 = vld [vmem:[%s1 + $0x10] sm:$0xff]
      %v1568 = vld [vmem:[%s1 + $0x18] sm:$0xff]
      %v1569 = vld [vmem:[%s1 + $0x20] sm:$0xf]
      %v1570 = vld [vmem:[%s2] sm:$0x1]
      %v1572 = vperm.slane %v1570, 0
      %vm1574 = vcmask 293888
      %v1576 = vsel %vm1574, %v1533, 0
      %v1579 = vsel %vm1574, %v1534, 0
      %v1582 = vsel %vm1574, %v1535, 0
      %v1585 = vsel %vm1574, %v1536, 0
      %v1588 = vsel %vm1574, %v1537, 0
      %v1591 = vsel %vm1574, %v1538, 0
      %v1594 = vsel %vm1574, %v1539, 0
      %v1597 = vsel %vm1574, %v1540, 0
      %v1600 = vsel %vm1574, %v1541, 0
      %v1603 = vsel %vm1574, %v1542, 0
      %v1606 = vsel %vm1574, %v1543, 0
      %v1609 = vsel %vm1574, %v1544, 0
      %v1612 = vsel %vm1574, %v1545, 0
      %v1615 = vsel %vm1574, %v1546, 0
      %v1618 = vsel %vm1574, %v1547, 0
      %v1621 = vsel %vm1574, %v1548, 0
      %v1624 = vsel %vm1574, %v1549, 0
      %v1627 = vsel %vm1574, %v1550, 0
      %v1630 = vsel %vm1574, %v1551, 0
      %v1633 = vsel %vm1574, %v1552, 0
      %v1636 = vsel %vm1574, %v1553, 0
      %v1639 = vsel %vm1574, %v1554, 0
      %v1642 = vsel %vm1574, %v1555, 0
      %v1645 = vsel %vm1574, %v1556, 0
      %v1648 = vsel %vm1574, %v1557, 0
      %v1651 = vsel %vm1574, %v1558, 0
      %v1654 = vsel %vm1574, %v1559, 0
      %v1657 = vsel %vm1574, %v1560, 0
      %v1660 = vsel %vm1574, %v1561, 0
      %v1663 = vsel %vm1574, %v1562, 0
      %v1666 = vsel %vm1574, %v1563, 0
      %v1669 = vsel %vm1574, %v1564, 0
      %vm1671 = vcmask 1043456
      %v1673 = vsel %vm1671, %v1569, 0
      %1675 = vmatpush.msra.mxu0 0.0
      %1676 = vmatpush.msra.mxu0 0.0
      %1677 = vmatpush.msra.mxu0 0.0
      %1678 = vmatpush.msra.mxu0 0.0
      %1679 = vmatpush.msra.mxu0 0.0
      %1680 = vmatpush.msra.mxu0 0.0
      %1681 = vmatpush.msra.mxu0 0.0
      %1682 = vmatpush.msra.mxu0 0.0
      %1683 = vmatpush.msra.mxu0 0.0
      %1684 = vmatpush.msra.mxu0 0.0
      %1685 = vmatpush.msra.mxu0 0.0
      %1686 = vmatpush.msra.mxu0 %v1673
      %1687 = vmatpush.msra.mxu0 %v1568
      %1688 = vmatpush.msra.mxu0 %v1567
      %1689 = vmatpush.msra.mxu0 %v1566
      %1690 = vmatpush.msra.mxu0 %v1565
      %1691 = vmatmul.f32.gmra.mxu0 %v1576
      %v1692 = vpop.f32.mrf.mxu0
      %v1693 = vadd.f32 %v1572, %v1692
      %1694 = vmatmul.f32.gmra.mxu0 %v1579
      %v1695 = vpop.f32.mrf.mxu0
      %v1696 = vadd.f32 %v1572, %v1695
      %1697 = vmatmul.f32.gmra.mxu0 %v1582
      %v1698 = vpop.f32.mrf.mxu0
      %v1699 = vadd.f32 %v1572, %v1698
      %1700 = vmatmul.f32.gmra.mxu0 %v1585
      %v1701 = vpop.f32.mrf.mxu0
      %v1702 = vadd.f32 %v1572, %v1701
      %1703 = vmatmul.f32.gmra.mxu0 %v1588
      %v1704 = vpop.f32.mrf.mxu0
      %v1705 = vadd.f32 %v1572, %v1704
      %1706 = vmatmul.f32.gmra.mxu0 %v1591
      %v1707 = vpop.f32.mrf.mxu0
      %v1708 = vadd.f32 %v1572, %v1707
      %1709 = vmatmul.f32.gmra.mxu0 %v1594
      %v1710 = vpop.f32.mrf.mxu0
      %v1711 = vadd.f32 %v1572, %v1710
      %1712 = vmatmul.f32.gmra.mxu0 %v1597
      %v1713 = vpop.f32.mrf.mxu0
      %v1714 = vadd.f32 %v1572, %v1713
      %1715 = vmatmul.f32.gmra.mxu0 %v1600
      %v1716 = vpop.f32.mrf.mxu0
      %v1717 = vadd.f32 %v1572, %v1716
      %1718 = vmatmul.f32.gmra.mxu0 %v1603
      %v1719 = vpop.f32.mrf.mxu0
      %v1720 = vadd.f32 %v1572, %v1719
      %1721 = vmatmul.f32.gmra.mxu0 %v1606
      %v1722 = vpop.f32.mrf.mxu0
      %v1723 = vadd.f32 %v1572, %v1722
      %1724 = vmatmul.f32.gmra.mxu0 %v1609
      %v1725 = vpop.f32.mrf.mxu0
      %v1726 = vadd.f32 %v1572, %v1725
      %1727 = vmatmul.f32.gmra.mxu0 %v1612
      %v1728 = vpop.f32.mrf.mxu0
      %v1729 = vadd.f32 %v1572, %v1728
      %1730 = vmatmul.f32.gmra.mxu0 %v1615
      %v1731 = vpop.f32.mrf.mxu0
      %v1732 = vadd.f32 %v1572, %v1731
      %1733 = vmatmul.f32.gmra.mxu0 %v1618
      %v1734 = vpop.f32.mrf.mxu0
      %v1735 = vadd.f32 %v1572, %v1734
      %1736 = vmatmul.f32.gmra.mxu0 %v1621
      %v1737 = vpop.f32.mrf.mxu0
      %v1738 = vadd.f32 %v1572, %v1737
      %1739 = vmatmul.f32.gmra.mxu0 %v1624
      %v1740 = vpop.f32.mrf.mxu0
      %v1741 = vadd.f32 %v1572, %v1740
      %1742 = vmatmul.f32.gmra.mxu0 %v1627
      %v1743 = vpop.f32.mrf.mxu0
      %v1744 = vadd.f32 %v1572, %v1743
      %1745 = vmatmul.f32.gmra.mxu0 %v1630
      %v1746 = vpop.f32.mrf.mxu0
      %v1747 = vadd.f32 %v1572, %v1746
      %1748 = vmatmul.f32.gmra.mxu0 %v1633
      %v1749 = vpop.f32.mrf.mxu0
      %v1750 = vadd.f32 %v1572, %v1749
      %1751 = vmatmul.f32.gmra.mxu0 %v1636
      %v1752 = vpop.f32.mrf.mxu0
      %v1753 = vadd.f32 %v1572, %v1752
      %1754 = vmatmul.f32.gmra.mxu0 %v1639
      %v1755 = vpop.f32.mrf.mxu0
      %v1756 = vadd.f32 %v1572, %v1755
      %1757 = vmatmul.f32.gmra.mxu0 %v1642
      %v1758 = vpop.f32.mrf.mxu0
      %v1759 = vadd.f32 %v1572, %v1758
      %1760 = vmatmul.f32.gmra.mxu0 %v1645
      %v1761 = vpop.f32.mrf.mxu0
      %v1762 = vadd.f32 %v1572, %v1761
      %1763 = vmatmul.f32.gmra.mxu0 %v1648
      %v1764 = vpop.f32.mrf.mxu0
      %v1765 = vadd.f32 %v1572, %v1764
      %1766 = vmatmul.f32.gmra.mxu0 %v1651
      %v1767 = vpop.f32.mrf.mxu0
      %v1768 = vadd.f32 %v1572, %v1767
      %1769 = vmatmul.f32.gmra.mxu0 %v1654
      %v1770 = vpop.f32.mrf.mxu0
      %v1771 = vadd.f32 %v1572, %v1770
      %1772 = vmatmul.f32.gmra.mxu0 %v1657
      %v1773 = vpop.f32.mrf.mxu0
      %v1774 = vadd.f32 %v1572, %v1773
      %1775 = vmatmul.f32.gmra.mxu0 %v1660
      %v1776 = vpop.f32.mrf.mxu0
      %v1777 = vadd.f32 %v1572, %v1776
      %1778 = vmatmul.f32.gmra.mxu0 %v1663
      %v1779 = vpop.f32.mrf.mxu0
      %v1780 = vadd.f32 %v1572, %v1779
      %1781 = vmatmul.f32.gmra.mxu0 %v1666
      %v1782 = vpop.f32.mrf.mxu0
      %v1783 = vadd.f32 %v1572, %v1782
      %1784 = vmatmul.f32.gmra.mxu0 %v1669
      %v1785 = vpop.f32.mrf.mxu0
      %v1786 = vadd.f32 %v1572, %v1785
      %1787 = vdwg.mxu0
      %1788 = vst [vmem:[%s240] sm:$0xff] %v1693
      %1789 = vst [vmem:[%s240 + $0x8] sm:$0xff] %v1696
      %1790 = vst [vmem:[%s240 + $0x10] sm:$0xff] %v1699
      %1791 = vst [vmem:[%s240 + $0x18] sm:$0xff] %v1702
      %1792 = vst [vmem:[%s240 + $0x20] sm:$0xff] %v1705
      %1793 = vst [vmem:[%s240 + $0x28] sm:$0xff] %v1708
      %1794 = vst [vmem:[%s240 + $0x30] sm:$0xff] %v1711
      %1795 = vst [vmem:[%s240 + $0x38] sm:$0xff] %v1714
      %1796 = vst [vmem:[%s240 + $0x40] sm:$0xff] %v1717
      %1797 = vst [vmem:[%s240 + $0x48] sm:$0xff] %v1720
      %1798 = vst [vmem:[%s240 + $0x50] sm:$0xff] %v1723
      %1799 = vst [vmem:[%s240 + $0x58] sm:$0xff] %v1726
      %1800 = vst [vmem:[%s240 + $0x60] sm:$0xff] %v1729
      %1801 = vst [vmem:[%s240 + $0x68] sm:$0xff] %v1732
      %1802 = vst [vmem:[%s240 + $0x70] sm:$0xff] %v1735
      %1803 = vst [vmem:[%s240 + $0x78] sm:$0xff] %v1738
      %1804 = vst [vmem:[%s240 + $0x80] sm:$0xff] %v1741
      %1805 = vst [vmem:[%s240 + $0x88] sm:$0xff] %v1744
      %1806 = vst [vmem:[%s240 + $0x90] sm:$0xff] %v1747
      %1807 = vst [vmem:[%s240 + $0x98] sm:$0xff] %v1750
      %1808 = vst [vmem:[%s240 + $0xa0] sm:$0xff] %v1753
      %1809 = vst [vmem:[%s240 + $0xa8] sm:$0xff] %v1756
      %1810 = vst [vmem:[%s240 + $0xb0] sm:$0xff] %v1759
      %1811 = vst [vmem:[%s240 + $0xb8] sm:$0xff] %v1762
      %1812 = vst [vmem:[%s240 + $0xc0] sm:$0xff] %v1765
      %1813 = vst [vmem:[%s240 + $0xc8] sm:$0xff] %v1768
      %1814 = vst [vmem:[%s240 + $0xd0] sm:$0xff] %v1771
      %1815 = vst [vmem:[%s240 + $0xd8] sm:$0xff] %v1774
      %1816 = vst [vmem:[%s240 + $0xe0] sm:$0xff] %v1777
      %1817 = vst [vmem:[%s240 + $0xe8] sm:$0xff] %v1780
      %1818 = vst [vmem:[%s240 + $0xf0] sm:$0xff] %v1783
      %1819 = vst [vmem:[%s240 + $0xf8] sm:$0xff] %v1786
      %v1820 = vld [vmem:[#allocation2] sm:$0x1]
      %v1821 = vadd.f32 %v1693, %v1696
      %v1822 = vadd.f32 %v1821, %v1699
      %v1823 = vadd.f32 %v1822, %v1702
      %v1824 = vadd.f32 %v1823, %v1705
      %v1825 = vadd.f32 %v1824, %v1708
      %v1826 = vadd.f32 %v1825, %v1711
      %v1827 = vadd.f32 %v1826, %v1714
      %v1828 = vadd.f32 %v1827, %v1717
      %v1829 = vadd.f32 %v1828, %v1720
      %v1830 = vadd.f32 %v1829, %v1723
      %v1831 = vadd.f32 %v1830, %v1726
      %v1832 = vadd.f32 %v1831, %v1729
      %v1833 = vadd.f32 %v1832, %v1732
      %v1834 = vadd.f32 %v1833, %v1735
      %v1835 = vadd.f32 %v1834, %v1738
      %v1836 = vadd.f32 %v1835, %v1741
      %v1837 = vadd.f32 %v1836, %v1744
      %v1838 = vadd.f32 %v1837, %v1747
      %v1839 = vadd.f32 %v1838, %v1750
      %v1840 = vadd.f32 %v1839, %v1753
      %v1841 = vadd.f32 %v1840, %v1756
      %v1842 = vadd.f32 %v1841, %v1759
      %v1843 = vadd.f32 %v1842, %v1762
      %v1844 = vadd.f32 %v1843, %v1765
      %v1845 = vadd.f32 %v1844, %v1768
      %v1846 = vadd.f32 %v1845, %v1771
      %v1847 = vadd.f32 %v1846, %v1774
      %v1848 = vadd.f32 %v1847, %v1777
      %v1849 = vadd.f32 %v1848, %v1780
      %v1850 = vadd.f32 %v1849, %v1783
      %v1851 = vadd.f32 %v1850, %v1786
      %v1852 = vrot.slane %v1851, 4
      %v1853 = vadd.f32 %v1851, %v1852
      %v1854 = vrot.slane %v1853, 2
      %v1855 = vadd.f32 %v1853, %v1854
      %v1856 = vrot.slane %v1855, 1
      %v1857 = vadd.f32 %v1855, %v1856
      %v1858 = vadd.f32 %v1820, %v1857
      %1859 = vst [vmem:[#allocation2] sm:$0x1] %v1858
      %v1860 = vld [vmem:[#allocation2 + $0x1] sm:$0x1]
      %v1861 = vmul.f32 %v1693, %v1693
      %v1862 = vmul.f32 %v1696, %v1696
      %v1863 = vmul.f32 %v1699, %v1699
      %v1864 = vmul.f32 %v1702, %v1702
      %v1865 = vmul.f32 %v1705, %v1705
      %v1866 = vmul.f32 %v1708, %v1708
      %v1867 = vmul.f32 %v1711, %v1711
      %v1868 = vmul.f32 %v1714, %v1714
      %v1869 = vmul.f32 %v1717, %v1717
      %v1870 = vmul.f32 %v1720, %v1720
      %v1871 = vmul.f32 %v1723, %v1723
      %v1872 = vmul.f32 %v1726, %v1726
      %v1873 = vmul.f32 %v1729, %v1729
      %v1874 = vmul.f32 %v1732, %v1732
      %v1875 = vmul.f32 %v1735, %v1735
      %v1876 = vmul.f32 %v1738, %v1738
      %v1877 = vmul.f32 %v1741, %v1741
      %v1878 = vmul.f32 %v1744, %v1744
      %v1879 = vmul.f32 %v1747, %v1747
      %v1880 = vmul.f32 %v1750, %v1750
      %v1881 = vmul.f32 %v1753, %v1753
      %v1882 = vmul.f32 %v1756, %v1756
      %v1883 = vmul.f32 %v1759, %v1759
      %v1884 = vmul.f32 %v1762, %v1762
      %v1885 = vmul.f32 %v1765, %v1765
      %v1886 = vmul.f32 %v1768, %v1768
      %v1887 = vmul.f32 %v1771, %v1771
      %v1888 = vmul.f32 %v1774, %v1774
      %v1889 = vmul.f32 %v1777, %v1777
      %v1890 = vmul.f32 %v1780, %v1780
      %v1891 = vmul.f32 %v1783, %v1783
      %v1892 = vmul.f32 %v1786, %v1786
      %v1893 = vadd.f32 %v1861, %v1862
      %v1894 = vadd.f32 %v1893, %v1863
      %v1895 = vadd.f32 %v1894, %v1864
      %v1896 = vadd.f32 %v1895, %v1865
      %v1897 = vadd.f32 %v1896, %v1866
      %v1898 = vadd.f32 %v1897, %v1867
      %v1899 = vadd.f32 %v1898, %v1868
      %v1900 = vadd.f32 %v1899, %v1869
      %v1901 = vadd.f32 %v1900, %v1870
      %v1902 = vadd.f32 %v1901, %v1871
      %v1903 = vadd.f32 %v1902, %v1872
      %v1904 = vadd.f32 %v1903, %v1873
      %v1905 = vadd.f32 %v1904, %v1874
      %v1906 = vadd.f32 %v1905, %v1875
      %v1907 = vadd.f32 %v1906, %v1876
      %v1908 = vadd.f32 %v1907, %v1877
      %v1909 = vadd.f32 %v1908, %v1878
      %v1910 = vadd.f32 %v1909, %v1879
      %v1911 = vadd.f32 %v1910, %v1880
      %v1912 = vadd.f32 %v1911, %v1881
      %v1913 = vadd.f32 %v1912, %v1882
      %v1914 = vadd.f32 %v1913, %v1883
      %v1915 = vadd.f32 %v1914, %v1884
      %v1916 = vadd.f32 %v1915, %v1885
      %v1917 = vadd.f32 %v1916, %v1886
      %v1918 = vadd.f32 %v1917, %v1887
      %v1919 = vadd.f32 %v1918, %v1888
      %v1920 = vadd.f32 %v1919, %v1889
      %v1921 = vadd.f32 %v1920, %v1890
      %v1922 = vadd.f32 %v1921, %v1891
      %v1923 = vadd.f32 %v1922, %v1892
      %v1924 = vrot.slane %v1923, 4
      %v1925 = vadd.f32 %v1923, %v1924
      %v1926 = vrot.slane %v1925, 2
      %v1927 = vadd.f32 %v1925, %v1926
      %v1928 = vrot.slane %v1927, 1
      %v1929 = vadd.f32 %v1927, %v1928
      %v1930 = vadd.f32 %v1860, %v1929
      %1931 = vst [vmem:[#allocation2 + $0x1] sm:$0x1] %v1930
      %v1932 = vld [vmem:[#allocation2] sm:$0x3]
      %1933 = vst [vmem:[%s245] sm:$0x3] %v1932
      %s1934 = smul.u32 32, %s21
      %p1935 = scmp.lt.s32.totalorder %s20, 1
      %s1936 = scalar_select %p1935, %s20, 1
      %p1937 = scmp.lt.s32.totalorder %s1934, 127
      %s1938 = scalar_select %p1937, %s1934, 127
      %s1939 = smul.addr %s1936, 128
      %s1940 = sadd.s32 %s1938, %s1939
      %s1941 = smul.addr %s1940, 8
      %s1942 = scalar_lea.vmem %s3, %s1941
      %p1943 = scmp.lt.s32.totalorder %s20, 1
      %s1944 = scalar_select %p1943, %s20, 1
      %s1945 = smul.addr %s1944, 2
      %s1946 = scalar_lea.vmem %s4, %s1945
      // Predicated region
      $region37: #{decoder_block_forward.8} parent=31 // pred_check
        %p1947 = pneg %p118
      $region38: #{decoder_block_forward.8} parent=31 // pred_check_branch
        %1949 = sbr.rel (%p1947) target = $region40
      $region39: #{decoder_block_forward.8} parent=31 // pred_region
        %s1950 = smul.u32 32, %s21
      $region40: #{decoder_block_forward.8} parent=31 // pred_fallthru
        _
      // Predicated region
      $region41: #{decoder_block_forward.8} parent=31 // pred_check
        %p1951 = pneg %p144
      $region42: #{decoder_block_forward.8} parent=31 // pred_check_branch
        %1953 = sbr.rel (%p1951) target = $region44
      $region43: #{decoder_block_forward.8} parent=31 // pred_region
        _
      $region44: #{decoder_block_forward.8} parent=31 // pred_fallthru
        _
    $region32: #{decoder_block_forward.8} parent=5 // pred_fallthru
      _
    %p1954 = scmp.le.s32.totalorder 2, %s11
    // Predicated region
    $region45: #{decoder_block_forward.8} parent=5 // pred_check
      %p1955 = pneg %p1954
    $region46: #{decoder_block_forward.8} parent=5 // pred_check_branch
      %1957 = sbr.rel (%p1955) target = $region48
    $region47: #{decoder_block_forward.8} parent=5 // pred_region
      %s1958 = ssub.s32 %s11, 2
      // Predicated region
      $region49: #{decoder_block_forward.8} parent=47 // pred_check
        %p1959 = pneg %p124
      $region50: #{decoder_block_forward.8} parent=47 // pred_check_branch
        %1961 = sbr.rel (%p1959) target = $region52
      $region51: #{decoder_block_forward.8} parent=47 // pred_region
        %s1962 = smul.u32 32, %s23
        %p1963 = scmp.lt.s32.totalorder %s22, 1
        %s1964 = scalar_select %p1963, %s22, 1
        %p1965 = scmp.lt.s32.totalorder %s1962, 127
        %s1966 = scalar_select %p1965, %s1962, 127
        %s1967 = smul.addr %s1964, 128
        %s1968 = sadd.s32 %s1966, %s1967
        %s1969 = smul.addr %s1968, 8
        %s1970 = scalar_lea.vmem %s3, %s1969
      $region52: #{decoder_block_forward.8} parent=47 // pred_fallthru
        _
      // Predicated region
      $region53: #{decoder_block_forward.8} parent=47 // pred_check
        %p1971 = pneg %p150
      $region54: #{decoder_block_forward.8} parent=47 // pred_check_branch
        %1973 = sbr.rel (%p1971) target = $region56
      $region55: #{decoder_block_forward.8} parent=47 // pred_region
        %p1974 = scmp.lt.s32.totalorder %s22, 1
        %s1975 = scalar_select %p1974, %s22, 1
        %s1976 = smul.addr %s1975, 2
        %s1977 = scalar_lea.vmem %s4, %s1976
      $region56: #{decoder_block_forward.8} parent=47 // pred_fallthru
        _
    $region48: #{decoder_block_forward.8} parent=5 // pred_fallthru
      _
  $region6: #{decoder_block_forward.8} parent=0 // loop_footer
    %s15 = sadd.s32 1, %s11
  $region7: #{decoder_block_forward.8} parent=0 // loop_footer_branch
    %10 = sbr.rel target = $region3
  $region8: #{decoder_block_forward.8} parent=0 // loop_exit
    _

</llo_original>
